<compile_context>
chip_gen: v5e
topology: v5e:2x2
jax: 0.10.0
libtpu: 0.0.40
codegen_flags: <defaults>
</compile_context>

<pallas_src>
import jax
import jax.numpy as jnp
from jax.experimental import pallas as pl
from jax.experimental.pallas import tpu as pltpu


# ----------------------------- Pallas kernel -------------------------------

def _gru_sex_kernel(x_ref,
                    wih0_ref, whh0_ref, bx0_ref, bhn0_ref,
                    wih1_ref, whh1_ref, bx1_ref, bhn1_ref,
                    linw_ref, linb_ref, h0_ref,
                    y_ref, a_ref,
                    l0f_scr, l0r_scr, l1f_scr, l1r_scr):
    """Fused 2-layer bidirectional GRU + linear head.

    x_ref:      [T, B, D_in]            (time-major input)
    wihL_ref:   [2, D_l, 3H]            input weights (dir, in, gates r|z|n)
    whhL_ref:   [2, 3, H, H]            recurrent weights (dir, gate, in, out)
    bxL_ref:    [2, 1, 3H]              b_ih (+ b_hh for r,z) folded
    bhnL_ref:   [2, 1, H]               b_hh of the n gate (needed inside r*(.))
    linw_ref:   [1, 2H], linb_ref: [1,1]
    h0_ref:     [4, B, H]               initial hidden (l0f, l0r, l1f, l1r)
    y_ref:      [T, B]                  head output (time-major, squeezed)
    a_ref:      [4, B, H]               final hidden states
    l*_scr:     [T, B, H]               per-(layer,dir) sequence outputs (VMEM)
    """
    T, B, D_in = x_ref.shape
    H = whh0_ref.shape[-1]

    def run_bidir_layer(x_flat, wih, whh, bx, bhn, h0_f, h0_r,
                        out_f_ref, out_r_ref, a_idx):
        # ---- hoisted input projection (one matmul per direction) ----
        def input_gates(d):
            gx = jnp.dot(x_flat, wih[d],
                         preferred_element_type=jnp.float32) + bx[d]   # [T*B,3H]
            gxr = gx[:, 0:H].reshape(T, B, H)
            gxz = gx[:, H:2 * H].reshape(T, B, H)
            gxn = gx[:, 2 * H:3 * H].reshape(T, B, H)
            return gxr, gxz, gxn

        gxr_f, gxz_f, gxn_f = input_gates(0)
        gxr_r, gxz_r, gxn_r = input_gates(1)

        w_fr, w_fz, w_fn = whh[0, 0], whh[0, 1], whh[0, 2]
        w_rr, w_rz, w_rn = whh[1, 0], whh[1, 1], whh[1, 2]
        bhn_f, bhn_r = bhn[0], bhn[1]

        h_f = h0_f
        h_r = h0_r
        # Static unroll: T is a small compile-time constant. Forward and
        # reverse directions are interleaved so their dots/EUP ops overlap.
        for i in range(T):
            tf, tr = i, T - 1 - i

            ghr_f = jnp.dot(h_f, w_fr, preferred_element_type=jnp.float32)
            ghz_f = jnp.dot(h_f, w_fz, preferred_element_type=jnp.float32)
            ghn_f = jnp.dot(h_f, w_fn, preferred_element_type=jnp.float32)
            ghr_r = jnp.dot(h_r, w_rr, preferred_element_type=jnp.float32)
            ghz_r = jnp.dot(h_r, w_rz, preferred_element_type=jnp.float32)
            ghn_r = jnp.dot(h_r, w_rn, preferred_element_type=jnp.float32)

            r_f = jax.nn.sigmoid(gxr_f[tf] + ghr_f)
            z_f = jax.nn.sigmoid(gxz_f[tf] + ghz_f)
            n_f = jnp.tanh(gxn_f[tf] + r_f * (ghn_f + bhn_f))
            h_f = (1.0 - z_f) * n_f + z_f * h_f

            r_r = jax.nn.sigmoid(gxr_r[tr] + ghr_r)
            z_r = jax.nn.sigmoid(gxz_r[tr] + ghz_r)
            n_r = jnp.tanh(gxn_r[tr] + r_r * (ghn_r + bhn_r))
            h_r = (1.0 - z_r) * n_r + z_r * h_r

            out_f_ref[tf] = h_f
            out_r_ref[tr] = h_r

        a_ref[a_idx] = h_f.astype(a_ref.dtype)
        a_ref[a_idx + 1] = h_r.astype(a_ref.dtype)

    h0 = h0_ref[...].astype(jnp.float32)

    # ---------------- layer 0 ----------------
    x_flat0 = x_ref[...].astype(jnp.float32).reshape(T * B, D_in)
    run_bidir_layer(x_flat0, wih0_ref[...], whh0_ref[...], bx0_ref[...],
                    bhn0_ref[...], h0[0], h0[1], l0f_scr, l0r_scr, 0)

    # ---------------- layer 1 (input = concat(fwd, rev) of layer-0 output) ---
    l0 = jnp.concatenate([l0f_scr[...], l0r_scr[...]], axis=-1)       # [T,B,2H]
    x_flat1 = l0.reshape(T * B, 2 * H)
    run_bidir_layer(x_flat1, wih1_ref[...], whh1_ref[...], bx1_ref[...],
                    bhn1_ref[...], h0[2], h0[3], l1f_scr, l1r_scr, 2)

    # ---------------- fused linear head ----------------
    l1 = jnp.concatenate([l1f_scr[...], l1r_scr[...]], axis=-1)       # [T,B,2H]
    w = linw_ref[...]                                                  # [1, 2H]
    y_tb = jnp.sum(l1 * w[None, :, :], axis=-1) + linb_ref[...]        # [T, B]
    y_ref[...] = y_tb.astype(y_ref.dtype)


# ----------------------------- wrapper --------------------------------------

def _vmem():
    return pl.BlockSpec(memory_space=pltpu.MemorySpace.VMEM)


def gru_sex_forward(packed, x, a_in=None):
    """x: [B, T, in_ax] (batch_first). Returns (y_pred [B,T,1], a_out [4,B,H])."""
    B, T, _ = x.shape
    l0, l1 = packed["layers"]
    H = l0["whh"].shape[-1]
    if a_in is None:
        a_in = jnp.zeros((4, B, H), jnp.float32)
    x_tbd = jnp.transpose(x, (1, 0, 2)).astype(jnp.float32)           # [T, B, D]

    y_tb, a_out = pl.pallas_call(
        _gru_sex_kernel,
        out_shape=(jax.ShapeDtypeStruct((T, B), jnp.float32),
                   jax.ShapeDtypeStruct((4, B, H), jnp.float32)),
        in_specs=[_vmem() for _ in range(12)],
        out_specs=(_vmem(), _vmem()),
        scratch_shapes=[pltpu.VMEM((T, B, H), jnp.float32)] * 4,
    )(x_tbd,
      l0["wih"], l0["whh"], l0["bx"], l0["bhn"],
      l1["wih"], l1["whh"], l1["bx"], l1["bhn"],
      packed["lin_w"], packed["lin_b"], a_in)

    y_pred = jnp.transpose(y_tb, (1, 0))[:, :, None]                  # [B, T, 1]
    return y_pred, a_out


# ----------------------------- parameters ------------------------------------

def init_gru_sex_params(key, in_ax=1, hidden=32, num_layers=2,
                        bidirectional=True):
    num_dirs = 2 if bidirectional else 1
    k = 1.0 / float(hidden) ** 0.5
    gru = []
    for layer in range(num_layers):
        layer_in = in_ax if layer == 0 else hidden * num_dirs
        dirs = []
        for _ in range(num_dirs):
            key, k0, k1, k2, k3 = jax.random.split(key, 5)
            w_ih = jax.random.uniform(k0, (3 * hidden, layer_in),
                                      minval=-k, maxval=k, dtype=jnp.float32)
            w_hh = jax.random.uniform(k1, (3 * hidden, hidden),
                                      minval=-k, maxval=k, dtype=jnp.float32)
            b_ih = jax.random.uniform(k2, (3 * hidden,),
                                      minval=-k, maxval=k, dtype=jnp.float32)
            b_hh = jax.random.uniform(k3, (3 * hidden,),
                                      minval=-k, maxval=k, dtype=jnp.float32)
            dirs.append((w_ih, w_hh, b_ih, b_hh))
        gru.append(dirs)
    in_features = hidden * num_dirs
    kl = 1.0 / float(in_features) ** 0.5
    key, ka, kb = jax.random.split(key, 3)
    lin_w = jax.random.uniform(ka, (1, in_features), minval=-kl, maxval=kl,
                               dtype=jnp.float32)
    lin_b = jax.random.uniform(kb, (1,), minval=-kl, maxval=kl,
                               dtype=jnp.float32)
    return {"gru": gru, "linear_w": lin_w, "linear_b": lin_b}


def pack_gru_sex_params(params):
    """Pre-transpose / gate-reorder weights and pre-fold biases (done once)."""
    packed_layers = []
    for layer_dirs in params["gru"]:
        wih_l, whh_l, bx_l, bhn_l = [], [], [], []
        for (w_ih, w_hh, b_ih, b_hh) in layer_dirs:
            H = w_hh.shape[-1]
            wih_l.append(w_ih.T)                                        # [Din, 3H]
            whh_l.append(jnp.stack(
                [w_hh[g * H:(g + 1) * H, :].T for g in range(3)], 0))   # [3, H, H]
            bx_l.append(jnp.concatenate(
                [b_ih[:2 * H] + b_hh[:2 * H], b_ih[2 * H:]])[None, :])  # [1, 3H]
            bhn_l.append(b_hh[2 * H:][None, :])                         # [1, H]
        packed_layers.append(dict(wih=jnp.stack(wih_l), whh=jnp.stack(whh_l),
                                  bx=jnp.stack(bx_l), bhn=jnp.stack(bhn_l)))
    return {"layers": packed_layers,
            "lin_w": params["linear_w"],
            "lin_b": params["linear_b"].reshape(1, 1)}


# ----------------------------- pure-JAX reference ----------------------------

def _ref_cell(x_t, h, w_ih, w_hh, b_ih, b_hh):
    H = h.shape[-1]
    gx = x_t @ w_ih.T + b_ih
    gh = h @ w_hh.T + b_hh
    r = jax.nn.sigmoid(gx[:, :H] + gh[:, :H])
    z = jax.nn.sigmoid(gx[:, H:2 * H] + gh[:, H:2 * H])
    n = jnp.tanh(gx[:, 2 * H:] + r * gh[:, 2 * H:])
    return (1.0 - z) * n + z * h


def gru_sex_reference(params, x, a_in=None):
    B, T, _ = x.shape
    num_layers = len(params["gru"])
    num_dirs = len(params["gru"][0])
    H = params["gru"][0][0][1].shape[-1]
    if a_in is None:
        a_in = jnp.zeros((num_layers * num_dirs, B, H), jnp.float32)
    layer_in = jnp.transpose(x, (1, 0, 2)).astype(jnp.float32)
    h_finals = []
    for layer in range(num_layers):
        outs = []
        for d in range(num_dirs):
            w_ih, w_hh, b_ih, b_hh = params["gru"][layer][d]
            h = a_in[layer * num_dirs + d]
            seq = range(T - 1, -1, -1) if d == 1 else range(T)
            buf = [None] * T
            for t in seq:
                h = _ref_cell(layer_in[t], h, w_ih, w_hh, b_ih, b_hh)
                buf[t] = h
            outs.append(jnp.stack(buf, axis=0))
            h_finals.append(h)
        layer_in = jnp.concatenate(outs, axis=-1) if num_dirs == 2 else outs[0]
    gru_out = jnp.transpose(layer_in, (1, 0, 2))
    a_out = jnp.stack(h_finals, axis=0)
    y = gru_out @ params["linear_w"].T + params["linear_b"]
    return y, a_out


# ----------------------------- main ------------------------------------------

if __name__ == "__main__":
    key = jax.random.PRNGKey(0)
    kp, kx = jax.random.split(key)

    B, T, IN_AX, HIDDEN = 2, 8, 1, 32
    params = init_gru_sex_params(kp, in_ax=IN_AX, hidden=HIDDEN,
                                 num_layers=2, bidirectional=True)
    packed = pack_gru_sex_params(params)
    x = jax.random.normal(kx, (B, T, IN_AX), dtype=jnp.float32)

    y_pred, a_out = gru_sex_forward(packed, x)
    y_pred = jax.block_until_ready(y_pred)
    a_out = jax.block_until_ready(a_out)

    assert y_pred.shape == (B, T, 1)
    assert a_out.shape == (4, B, HIDDEN)

    y_ref, a_ref = gru_sex_reference(params, x)
    assert jnp.allclose(y_pred, y_ref, rtol=1e-2, atol=1e-2)
    assert jnp.allclose(a_out, a_ref, rtol=1e-2, atol=1e-2)

    print("KERNEL_OK")
</pallas_src>

<mosaic_0001>
module attributes {stable_mosaic.version = 11 : i64} {
  func.func @_gru_sex_kernel(%arg0: memref<8x2x1xf32, #tpu.memory_space<vmem>>, %arg1: memref<2x1x96xf32, #tpu.memory_space<vmem>>, %arg2: memref<2x3x32x32xf32, #tpu.memory_space<vmem>>, %arg3: memref<2x1x96xf32, #tpu.memory_space<vmem>>, %arg4: memref<2x1x32xf32, #tpu.memory_space<vmem>>, %arg5: memref<2x64x96xf32, #tpu.memory_space<vmem>>, %arg6: memref<2x3x32x32xf32, #tpu.memory_space<vmem>>, %arg7: memref<2x1x96xf32, #tpu.memory_space<vmem>>, %arg8: memref<2x1x32xf32, #tpu.memory_space<vmem>>, %arg9: memref<1x64xf32, #tpu.memory_space<vmem>>, %arg10: memref<1x1xf32, #tpu.memory_space<vmem>>, %arg11: memref<4x2x32xf32, #tpu.memory_space<vmem>>, %arg12: memref<8x2xf32, #tpu.memory_space<vmem>>, %arg13: memref<4x2x32xf32, #tpu.memory_space<vmem>>, %arg14: memref<8x2x32xf32, #tpu.memory_space<vmem>>, %arg15: memref<8x2x32xf32, #tpu.memory_space<vmem>>, %arg16: memref<8x2x32xf32, #tpu.memory_space<vmem>>, %arg17: memref<8x2x32xf32, #tpu.memory_space<vmem>>) attributes {dimension_semantics = [], scalar_prefetch = 0 : i64, scratch_operands = 4 : i64, tpu.core_type = #tpu.core_type<tc>} {
    %c0 = arith.constant 0 : index
    %c0_0 = arith.constant 0 : index
    %c0_1 = arith.constant 0 : index
    %0 = vector.load %arg11[%c0, %c0_0, %c0_1] : memref<4x2x32xf32, #tpu.memory_space<vmem>>, vector<4x2x32xf32>
    %c0_2 = arith.constant 0 : index
    %c0_3 = arith.constant 0 : index
    %c0_4 = arith.constant 0 : index
    %1 = vector.load %arg0[%c0_2, %c0_3, %c0_4] : memref<8x2x1xf32, #tpu.memory_space<vmem>>, vector<8x2x1xf32>
    %2 = vector.shape_cast %1 : vector<8x2x1xf32> to vector<16x1xf32>
    %c0_5 = arith.constant 0 : index
    %c0_6 = arith.constant 0 : index
    %c0_7 = arith.constant 0 : index
    %3 = vector.load %arg1[%c0_5, %c0_6, %c0_7] : memref<2x1x96xf32, #tpu.memory_space<vmem>>, vector<2x1x96xf32>
    %c0_8 = arith.constant 0 : index
    %c0_9 = arith.constant 0 : index
    %c0_10 = arith.constant 0 : index
    %c0_11 = arith.constant 0 : index
    %4 = vector.load %arg2[%c0_8, %c0_9, %c0_10, %c0_11] : memref<2x3x32x32xf32, #tpu.memory_space<vmem>>, vector<2x3x32x32xf32>
    %c0_12 = arith.constant 0 : index
    %c0_13 = arith.constant 0 : index
    %c0_14 = arith.constant 0 : index
    %5 = vector.load %arg3[%c0_12, %c0_13, %c0_14] : memref<2x1x96xf32, #tpu.memory_space<vmem>>, vector<2x1x96xf32>
    %c0_15 = arith.constant 0 : index
    %c0_16 = arith.constant 0 : index
    %c0_17 = arith.constant 0 : index
    %6 = vector.load %arg4[%c0_15, %c0_16, %c0_17] : memref<2x1x32xf32, #tpu.memory_space<vmem>>, vector<2x1x32xf32>
    %7 = vector.extract_strided_slice %0 {offsets = [0, 0, 0], sizes = [1, 2, 32], strides = [1, 1, 1]} : vector<4x2x32xf32> to vector<1x2x32xf32>
    %8 = vector.shape_cast %7 : vector<1x2x32xf32> to vector<2x32xf32>
    %9 = vector.extract_strided_slice %0 {offsets = [1, 0, 0], sizes = [1, 2, 32], strides = [1, 1, 1]} : vector<4x2x32xf32> to vector<1x2x32xf32>
    %10 = vector.shape_cast %9 : vector<1x2x32xf32> to vector<2x32xf32>
    %11 = vector.extract_strided_slice %3 {offsets = [0, 0, 0], sizes = [1, 1, 96], strides = [1, 1, 1]} : vector<2x1x96xf32> to vector<1x1x96xf32>
    %12 = vector.shape_cast %11 : vector<1x1x96xf32> to vector<1x96xf32>
    %cst = arith.constant dense<0.000000e+00> : vector<16x96xf32>
    %13 = tpu.matmul %2, %12, %cst {dimension_numbers = #tpu.dot_dimension_numbers<[1], [0], [0], [1], [0, 0, 1, 1], [], []>} : vector<16x1xf32>, vector<1x96xf32>, vector<16x96xf32> -> vector<16x96xf32>
    %14 = vector.extract_strided_slice %5 {offsets = [0, 0, 0], sizes = [1, 1, 96], strides = [1, 1, 1]} : vector<2x1x96xf32> to vector<1x1x96xf32>
    %15 = vector.shape_cast %14 : vector<1x1x96xf32> to vector<1x96xf32>
    %16 = vector.broadcast %15 : vector<1x96xf32> to vector<16x96xf32>
    %17 = arith.addf %13, %16 : vector<16x96xf32>
    %18 = vector.extract_strided_slice %17 {offsets = [0, 0], sizes = [16, 32], strides = [1, 1]} : vector<16x96xf32> to vector<16x32xf32>
    %19 = vector.shape_cast %18 : vector<16x32xf32> to vector<8x2x32xf32>
    %20 = vector.extract_strided_slice %17 {offsets = [0, 32], sizes = [16, 32], strides = [1, 1]} : vector<16x96xf32> to vector<16x32xf32>
    %21 = vector.shape_cast %20 : vector<16x32xf32> to vector<8x2x32xf32>
    %22 = vector.extract_strided_slice %17 {offsets = [0, 64], sizes = [16, 32], strides = [1, 1]} : vector<16x96xf32> to vector<16x32xf32>
    %23 = vector.shape_cast %22 : vector<16x32xf32> to vector<8x2x32xf32>
    %24 = vector.extract_strided_slice %3 {offsets = [1, 0, 0], sizes = [1, 1, 96], strides = [1, 1, 1]} : vector<2x1x96xf32> to vector<1x1x96xf32>
    %25 = vector.shape_cast %24 : vector<1x1x96xf32> to vector<1x96xf32>
    %cst_18 = arith.constant dense<0.000000e+00> : vector<16x96xf32>
    %26 = tpu.matmul %2, %25, %cst_18 {dimension_numbers = #tpu.dot_dimension_numbers<[1], [0], [0], [1], [0, 0, 1, 1], [], []>} : vector<16x1xf32>, vector<1x96xf32>, vector<16x96xf32> -> vector<16x96xf32>
    %27 = vector.extract_strided_slice %5 {offsets = [1, 0, 0], sizes = [1, 1, 96], strides = [1, 1, 1]} : vector<2x1x96xf32> to vector<1x1x96xf32>
    %28 = vector.shape_cast %27 : vector<1x1x96xf32> to vector<1x96xf32>
    %29 = vector.broadcast %28 : vector<1x96xf32> to vector<16x96xf32>
    %30 = arith.addf %26, %29 : vector<16x96xf32>
    %31 = vector.extract_strided_slice %30 {offsets = [0, 0], sizes = [16, 32], strides = [1, 1]} : vector<16x96xf32> to vector<16x32xf32>
    %32 = vector.shape_cast %31 : vector<16x32xf32> to vector<8x2x32xf32>
    %33 = vector.extract_strided_slice %30 {offsets = [0, 32], sizes = [16, 32], strides = [1, 1]} : vector<16x96xf32> to vector<16x32xf32>
    %34 = vector.shape_cast %33 : vector<16x32xf32> to vector<8x2x32xf32>
    %35 = vector.extract_strided_slice %30 {offsets = [0, 64], sizes = [16, 32], strides = [1, 1]} : vector<16x96xf32> to vector<16x32xf32>
    %36 = vector.shape_cast %35 : vector<16x32xf32> to vector<8x2x32xf32>
    %37 = vector.extract_strided_slice %4 {offsets = [0, 0, 0, 0], sizes = [1, 1, 32, 32], strides = [1, 1, 1, 1]} : vector<2x3x32x32xf32> to vector<1x1x32x32xf32>
    %38 = vector.shape_cast %37 : vector<1x1x32x32xf32> to vector<32x32xf32>
    %39 = vector.extract_strided_slice %4 {offsets = [0, 1, 0, 0], sizes = [1, 1, 32, 32], strides = [1, 1, 1, 1]} : vector<2x3x32x32xf32> to vector<1x1x32x32xf32>
    %40 = vector.shape_cast %39 : vector<1x1x32x32xf32> to vector<32x32xf32>
    %41 = vector.extract_strided_slice %4 {offsets = [0, 2, 0, 0], sizes = [1, 1, 32, 32], strides = [1, 1, 1, 1]} : vector<2x3x32x32xf32> to vector<1x1x32x32xf32>
    %42 = vector.shape_cast %41 : vector<1x1x32x32xf32> to vector<32x32xf32>
    %43 = vector.extract_strided_slice %4 {offsets = [1, 0, 0, 0], sizes = [1, 1, 32, 32], strides = [1, 1, 1, 1]} : vector<2x3x32x32xf32> to vector<1x1x32x32xf32>
    %44 = vector.shape_cast %43 : vector<1x1x32x32xf32> to vector<32x32xf32>
    %45 = vector.extract_strided_slice %4 {offsets = [1, 1, 0, 0], sizes = [1, 1, 32, 32], strides = [1, 1, 1, 1]} : vector<2x3x32x32xf32> to vector<1x1x32x32xf32>
    %46 = vector.shape_cast %45 : vector<1x1x32x32xf32> to vector<32x32xf32>
    %47 = vector.extract_strided_slice %4 {offsets = [1, 2, 0, 0], sizes = [1, 1, 32, 32], strides = [1, 1, 1, 1]} : vector<2x3x32x32xf32> to vector<1x1x32x32xf32>
    %48 = vector.shape_cast %47 : vector<1x1x32x32xf32> to vector<32x32xf32>
    %49 = vector.extract_strided_slice %6 {offsets = [0, 0, 0], sizes = [1, 1, 32], strides = [1, 1, 1]} : vector<2x1x32xf32> to vector<1x1x32xf32>
    %50 = vector.shape_cast %49 : vector<1x1x32xf32> to vector<1x32xf32>
    %51 = vector.extract_strided_slice %6 {offsets = [1, 0, 0], sizes = [1, 1, 32], strides = [1, 1, 1]} : vector<2x1x32xf32> to vector<1x1x32xf32>
    %52 = vector.shape_cast %51 : vector<1x1x32xf32> to vector<1x32xf32>
    %cst_19 = arith.constant dense<0.000000e+00> : vector<2x32xf32>
    %53 = tpu.matmul %8, %38, %cst_19 {dimension_numbers = #tpu.dot_dimension_numbers<[1], [0], [0], [1], [0, 0, 1, 1], [], []>} : vector<2x32xf32>, vector<32x32xf32>, vector<2x32xf32> -> vector<2x32xf32>
    %cst_20 = arith.constant dense<0.000000e+00> : vector<2x32xf32>
    %54 = tpu.matmul %8, %40, %cst_20 {dimension_numbers = #tpu.dot_dimension_numbers<[1], [0], [0], [1], [0, 0, 1, 1], [], []>} : vector<2x32xf32>, vector<32x32xf32>, vector<2x32xf32> -> vector<2x32xf32>
    %cst_21 = arith.constant dense<0.000000e+00> : vector<2x32xf32>
    %55 = tpu.matmul %8, %42, %cst_21 {dimension_numbers = #tpu.dot_dimension_numbers<[1], [0], [0], [1], [0, 0, 1, 1], [], []>} : vector<2x32xf32>, vector<32x32xf32>, vector<2x32xf32> -> vector<2x32xf32>
    %cst_22 = arith.constant dense<0.000000e+00> : vector<2x32xf32>
    %56 = tpu.matmul %10, %44, %cst_22 {dimension_numbers = #tpu.dot_dimension_numbers<[1], [0], [0], [1], [0, 0, 1, 1], [], []>} : vector<2x32xf32>, vector<32x32xf32>, vector<2x32xf32> -> vector<2x32xf32>
    %cst_23 = arith.constant dense<0.000000e+00> : vector<2x32xf32>
    %57 = tpu.matmul %10, %46, %cst_23 {dimension_numbers = #tpu.dot_dimension_numbers<[1], [0], [0], [1], [0, 0, 1, 1], [], []>} : vector<2x32xf32>, vector<32x32xf32>, vector<2x32xf32> -> vector<2x32xf32>
    %cst_24 = arith.constant dense<0.000000e+00> : vector<2x32xf32>
    %58 = tpu.matmul %10, %48, %cst_24 {dimension_numbers = #tpu.dot_dimension_numbers<[1], [0], [0], [1], [0, 0, 1, 1], [], []>} : vector<2x32xf32>, vector<32x32xf32>, vector<2x32xf32> -> vector<2x32xf32>
    %59 = vector.extract_strided_slice %19 {offsets = [0, 0, 0], sizes = [1, 2, 32], strides = [1, 1, 1]} : vector<8x2x32xf32> to vector<1x2x32xf32>
    %60 = vector.shape_cast %59 : vector<1x2x32xf32> to vector<2x32xf32>
    %61 = arith.addf %60, %53 : vector<2x32xf32>
    %62 = arith.negf %61 : vector<2x32xf32>
    %63 = math.exp %62 : vector<2x32xf32>
    %cst_25 = arith.constant 1.000000e+00 : f32
    %64 = vector.broadcast %cst_25 : f32 to vector<2x32xf32>
    %65 = arith.addf %64, %63 : vector<2x32xf32>
    %66 = arith.divf %64, %65 : vector<2x32xf32>
    %67 = vector.extract_strided_slice %21 {offsets = [0, 0, 0], sizes = [1, 2, 32], strides = [1, 1, 1]} : vector<8x2x32xf32> to vector<1x2x32xf32>
    %68 = vector.shape_cast %67 : vector<1x2x32xf32> to vector<2x32xf32>
    %69 = arith.addf %68, %54 : vector<2x32xf32>
    %70 = arith.negf %69 : vector<2x32xf32>
    %71 = math.exp %70 : vector<2x32xf32>
    %cst_26 = arith.constant 1.000000e+00 : f32
    %72 = vector.broadcast %cst_26 : f32 to vector<2x32xf32>
    %73 = arith.addf %72, %71 : vector<2x32xf32>
    %74 = arith.divf %72, %73 : vector<2x32xf32>
    %75 = vector.extract_strided_slice %23 {offsets = [0, 0, 0], sizes = [1, 2, 32], strides = [1, 1, 1]} : vector<8x2x32xf32> to vector<1x2x32xf32>
    %76 = vector.shape_cast %75 : vector<1x2x32xf32> to vector<2x32xf32>
    %77 = vector.broadcast %50 : vector<1x32xf32> to vector<2x32xf32>
    %78 = arith.addf %55, %77 : vector<2x32xf32>
    %79 = arith.mulf %66, %78 : vector<2x32xf32>
    %80 = arith.addf %76, %79 : vector<2x32xf32>
    %81 = math.tanh %80 : vector<2x32xf32>
    %cst_27 = arith.constant 1.000000e+00 : f32
    %82 = vector.broadcast %cst_27 : f32 to vector<2x32xf32>
    %83 = arith.subf %82, %74 : vector<2x32xf32>
    %84 = arith.mulf %83, %81 : vector<2x32xf32>
    %85 = arith.mulf %74, %8 : vector<2x32xf32>
    %86 = arith.addf %84, %85 : vector<2x32xf32>
    %87 = vector.extract_strided_slice %32 {offsets = [7, 0, 0], sizes = [1, 2, 32], strides = [1, 1, 1]} : vector<8x2x32xf32> to vector<1x2x32xf32>
    %88 = vector.shape_cast %87 : vector<1x2x32xf32> to vector<2x32xf32>
    %89 = arith.addf %88, %56 : vector<2x32xf32>
    %90 = arith.negf %89 : vector<2x32xf32>
    %91 = math.exp %90 : vector<2x32xf32>
    %cst_28 = arith.constant 1.000000e+00 : f32
    %92 = vector.broadcast %cst_28 : f32 to vector<2x32xf32>
    %93 = arith.addf %92, %91 : vector<2x32xf32>
    %94 = arith.divf %92, %93 : vector<2x32xf32>
    %95 = vector.extract_strided_slice %34 {offsets = [7, 0, 0], sizes = [1, 2, 32], strides = [1, 1, 1]} : vector<8x2x32xf32> to vector<1x2x32xf32>
    %96 = vector.shape_cast %95 : vector<1x2x32xf32> to vector<2x32xf32>
    %97 = arith.addf %96, %57 : vector<2x32xf32>
    %98 = arith.negf %97 : vector<2x32xf32>
    %99 = math.exp %98 : vector<2x32xf32>
    %cst_29 = arith.constant 1.000000e+00 : f32
    %100 = vector.broadcast %cst_29 : f32 to vector<2x32xf32>
    %101 = arith.addf %100, %99 : vector<2x32xf32>
    %102 = arith.divf %100, %101 : vector<2x32xf32>
    %103 = vector.extract_strided_slice %36 {offsets = [7, 0, 0], sizes = [1, 2, 32], strides = [1, 1, 1]} : vector<8x2x32xf32> to vector<1x2x32xf32>
    %104 = vector.shape_cast %103 : vector<1x2x32xf32> to vector<2x32xf32>
    %105 = vector.broadcast %52 : vector<1x32xf32> to vector<2x32xf32>
    %106 = arith.addf %58, %105 : vector<2x32xf32>
    %107 = arith.mulf %94, %106 : vector<2x32xf32>
    %108 = arith.addf %104, %107 : vector<2x32xf32>
    %109 = math.tanh %108 : vector<2x32xf32>
    %cst_30 = arith.constant 1.000000e+00 : f32
    %110 = vector.broadcast %cst_30 : f32 to vector<2x32xf32>
    %111 = arith.subf %110, %102 : vector<2x32xf32>
    %112 = arith.mulf %111, %109 : vector<2x32xf32>
    %113 = arith.mulf %102, %10 : vector<2x32xf32>
    %114 = arith.addf %112, %113 : vector<2x32xf32>
    %c0_31 = arith.constant 0 : index
    %c0_32 = arith.constant 0 : index
    %c0_33 = arith.constant 0 : index
    %115 = vector.load %arg14[%c0_31, %c0_32, %c0_33] : memref<8x2x32xf32, #tpu.memory_space<vmem>>, vector<1x2x32xf32>
    %116 = vector.shape_cast %115 : vector<1x2x32xf32> to vector<2x32xf32>
    %117 = vector.shape_cast %86 : vector<2x32xf32> to vector<1x2x32xf32>
    tpu.vector_store %arg14[%c0_31, %c0_32, %c0_33], %117 {strides = array<i32>} : memref<8x2x32xf32, #tpu.memory_space<vmem>>, vector<1x2x32xf32>,
    %c7 = arith.constant 7 : index
    %c0_34 = arith.constant 0 : index
    %c0_35 = arith.constant 0 : index
    %118 = vector.load %arg15[%c7, %c0_34, %c0_35] : memref<8x2x32xf32, #tpu.memory_space<vmem>>, vector<1x2x32xf32>
    %119 = vector.shape_cast %118 : vector<1x2x32xf32> to vector<2x32xf32>
    %120 = vector.shape_cast %114 : vector<2x32xf32> to vector<1x2x32xf32>
    tpu.vector_store %arg15[%c7, %c0_34, %c0_35], %120 {strides = array<i32>} : memref<8x2x32xf32, #tpu.memory_space<vmem>>, vector<1x2x32xf32>,
    %cst_36 = arith.constant dense<0.000000e+00> : vector<2x32xf32>
    %121 = tpu.matmul %86, %38, %cst_36 {dimension_numbers = #tpu.dot_dimension_numbers<[1], [0], [0], [1], [0, 0, 1, 1], [], []>} : vector<2x32xf32>, vector<32x32xf32>, vector<2x32xf32> -> vector<2x32xf32>
    %cst_37 = arith.constant dense<0.000000e+00> : vector<2x32xf32>
    %122 = tpu.matmul %86, %40, %cst_37 {dimension_numbers = #tpu.dot_dimension_numbers<[1], [0], [0], [1], [0, 0, 1, 1], [], []>} : vector<2x32xf32>, vector<32x32xf32>, vector<2x32xf32> -> vector<2x32xf32>
    %cst_38 = arith.constant dense<0.000000e+00> : vector<2x32xf32>
    %123 = tpu.matmul %86, %42, %cst_38 {dimension_numbers = #tpu.dot_dimension_numbers<[1], [0], [0], [1], [0, 0, 1, 1], [], []>} : vector<2x32xf32>, vector<32x32xf32>, vector<2x32xf32> -> vector<2x32xf32>
    %cst_39 = arith.constant dense<0.000000e+00> : vector<2x32xf32>
    %124 = tpu.matmul %114, %44, %cst_39 {dimension_numbers = #tpu.dot_dimension_numbers<[1], [0], [0], [1], [0, 0, 1, 1], [], []>} : vector<2x32xf32>, vector<32x32xf32>, vector<2x32xf32> -> vector<2x32xf32>
    %cst_40 = arith.constant dense<0.000000e+00> : vector<2x32xf32>
    %125 = tpu.matmul %114, %46, %cst_40 {dimension_numbers = #tpu.dot_dimension_numbers<[1], [0], [0], [1], [0, 0, 1, 1], [], []>} : vector<2x32xf32>, vector<32x32xf32>, vector<2x32xf32> -> vector<2x32xf32>
    %cst_41 = arith.constant dense<0.000000e+00> : vector<2x32xf32>
    %126 = tpu.matmul %114, %48, %cst_41 {dimension_numbers = #tpu.dot_dimension_numbers<[1], [0], [0], [1], [0, 0, 1, 1], [], []>} : vector<2x32xf32>, vector<32x32xf32>, vector<2x32xf32> -> vector<2x32xf32>
    %127 = vector.extract_strided_slice %19 {offsets = [1, 0, 0], sizes = [1, 2, 32], strides = [1, 1, 1]} : vector<8x2x32xf32> to vector<1x2x32xf32>
    %128 = vector.shape_cast %127 : vector<1x2x32xf32> to vector<2x32xf32>
    %129 = arith.addf %128, %121 : vector<2x32xf32>
    %130 = arith.negf %129 : vector<2x32xf32>
    %131 = math.exp %130 : vector<2x32xf32>
    %cst_42 = arith.constant 1.000000e+00 : f32
    %132 = vector.broadcast %cst_42 : f32 to vector<2x32xf32>
    %133 = arith.addf %132, %131 : vector<2x32xf32>
    %134 = arith.divf %132, %133 : vector<2x32xf32>
    %135 = vector.extract_strided_slice %21 {offsets = [1, 0, 0], sizes = [1, 2, 32], strides = [1, 1, 1]} : vector<8x2x32xf32> to vector<1x2x32xf32>
    %136 = vector.shape_cast %135 : vector<1x2x32xf32> to vector<2x32xf32>
    %137 = arith.addf %136, %122 : vector<2x32xf32>
    %138 = arith.negf %137 : vector<2x32xf32>
    %139 = math.exp %138 : vector<2x32xf32>
    %cst_43 = arith.constant 1.000000e+00 : f32
    %140 = vector.broadcast %cst_43 : f32 to vector<2x32xf32>
    %141 = arith.addf %140, %139 : vector<2x32xf32>
    %142 = arith.divf %140, %141 : vector<2x32xf32>
    %143 = vector.extract_strided_slice %23 {offsets = [1, 0, 0], sizes = [1, 2, 32], strides = [1, 1, 1]} : vector<8x2x32xf32> to vector<1x2x32xf32>
    %144 = vector.shape_cast %143 : vector<1x2x32xf32> to vector<2x32xf32>
    %145 = vector.broadcast %50 : vector<1x32xf32> to vector<2x32xf32>
    %146 = arith.addf %123, %145 : vector<2x32xf32>
    %147 = arith.mulf %134, %146 : vector<2x32xf32>
    %148 = arith.addf %144, %147 : vector<2x32xf32>
    %149 = math.tanh %148 : vector<2x32xf32>
    %cst_44 = arith.constant 1.000000e+00 : f32
    %150 = vector.broadcast %cst_44 : f32 to vector<2x32xf32>
    %151 = arith.subf %150, %142 : vector<2x32xf32>
    %152 = arith.mulf %151, %149 : vector<2x32xf32>
    %153 = arith.mulf %142, %86 : vector<2x32xf32>
    %154 = arith.addf %152, %153 : vector<2x32xf32>
    %155 = vector.extract_strided_slice %32 {offsets = [6, 0, 0], sizes = [1, 2, 32], strides = [1, 1, 1]} : vector<8x2x32xf32> to vector<1x2x32xf32>
    %156 = vector.shape_cast %155 : vector<1x2x32xf32> to vector<2x32xf32>
    %157 = arith.addf %156, %124 : vector<2x32xf32>
    %158 = arith.negf %157 : vector<2x32xf32>
    %159 = math.exp %158 : vector<2x32xf32>
    %cst_45 = arith.constant 1.000000e+00 : f32
    %160 = vector.broadcast %cst_45 : f32 to vector<2x32xf32>
    %161 = arith.addf %160, %159 : vector<2x32xf32>
    %162 = arith.divf %160, %161 : vector<2x32xf32>
    %163 = vector.extract_strided_slice %34 {offsets = [6, 0, 0], sizes = [1, 2, 32], strides = [1, 1, 1]} : vector<8x2x32xf32> to vector<1x2x32xf32>
    %164 = vector.shape_cast %163 : vector<1x2x32xf32> to vector<2x32xf32>
    %165 = arith.addf %164, %125 : vector<2x32xf32>
    %166 = arith.negf %165 : vector<2x32xf32>
    %167 = math.exp %166 : vector<2x32xf32>
    %cst_46 = arith.constant 1.000000e+00 : f32
    %168 = vector.broadcast %cst_46 : f32 to vector<2x32xf32>
    %169 = arith.addf %168, %167 : vector<2x32xf32>
    %170 = arith.divf %168, %169 : vector<2x32xf32>
    %171 = vector.extract_strided_slice %36 {offsets = [6, 0, 0], sizes = [1, 2, 32], strides = [1, 1, 1]} : vector<8x2x32xf32> to vector<1x2x32xf32>
    %172 = vector.shape_cast %171 : vector<1x2x32xf32> to vector<2x32xf32>
    %173 = vector.broadcast %52 : vector<1x32xf32> to vector<2x32xf32>
    %174 = arith.addf %126, %173 : vector<2x32xf32>
    %175 = arith.mulf %162, %174 : vector<2x32xf32>
    %176 = arith.addf %172, %175 : vector<2x32xf32>
    %177 = math.tanh %176 : vector<2x32xf32>
    %cst_47 = arith.constant 1.000000e+00 : f32
    %178 = vector.broadcast %cst_47 : f32 to vector<2x32xf32>
    %179 = arith.subf %178, %170 : vector<2x32xf32>
    %180 = arith.mulf %179, %177 : vector<2x32xf32>
    %181 = arith.mulf %170, %114 : vector<2x32xf32>
    %182 = arith.addf %180, %181 : vector<2x32xf32>
    %c1 = arith.constant 1 : index
    %c0_48 = arith.constant 0 : index
    %c0_49 = arith.constant 0 : index
    %183 = vector.load %arg14[%c1, %c0_48, %c0_49] : memref<8x2x32xf32, #tpu.memory_space<vmem>>, vector<1x2x32xf32>
    %184 = vector.shape_cast %183 : vector<1x2x32xf32> to vector<2x32xf32>
    %185 = vector.shape_cast %154 : vector<2x32xf32> to vector<1x2x32xf32>
    tpu.vector_store %arg14[%c1, %c0_48, %c0_49], %185 {strides = array<i32>} : memref<8x2x32xf32, #tpu.memory_space<vmem>>, vector<1x2x32xf32>,
    %c6 = arith.constant 6 : index
    %c0_50 = arith.constant 0 : index
    %c0_51 = arith.constant 0 : index
    %186 = vector.load %arg15[%c6, %c0_50, %c0_51] : memref<8x2x32xf32, #tpu.memory_space<vmem>>, vector<1x2x32xf32>
    %187 = vector.shape_cast %186 : vector<1x2x32xf32> to vector<2x32xf32>
    %188 = vector.shape_cast %182 : vector<2x32xf32> to vector<1x2x32xf32>
    tpu.vector_store %arg15[%c6, %c0_50, %c0_51], %188 {strides = array<i32>} : memref<8x2x32xf32, #tpu.memory_space<vmem>>, vector<1x2x32xf32>,
    %cst_52 = arith.constant dense<0.000000e+00> : vector<2x32xf32>
    %189 = tpu.matmul %154, %38, %cst_52 {dimension_numbers = #tpu.dot_dimension_numbers<[1], [0], [0], [1], [0, 0, 1, 1], [], []>} : vector<2x32xf32>, vector<32x32xf32>, vector<2x32xf32> -> vector<2x32xf32>
    %cst_53 = arith.constant dense<0.000000e+00> : vector<2x32xf32>
    %190 = tpu.matmul %154, %40, %cst_53 {dimension_numbers = #tpu.dot_dimension_numbers<[1], [0], [0], [1], [0, 0, 1, 1], [], []>} : vector<2x32xf32>, vector<32x32xf32>, vector<2x32xf32> -> vector<2x32xf32>
    %cst_54 = arith.constant dense<0.000000e+00> : vector<2x32xf32>
    %191 = tpu.matmul %154, %42, %cst_54 {dimension_numbers = #tpu.dot_dimension_numbers<[1], [0], [0], [1], [0, 0, 1, 1], [], []>} : vector<2x32xf32>, vector<32x32xf32>, vector<2x32xf32> -> vector<2x32xf32>
    %cst_55 = arith.constant dense<0.000000e+00> : vector<2x32xf32>
    %192 = tpu.matmul %182, %44, %cst_55 {dimension_numbers = #tpu.dot_dimension_numbers<[1], [0], [0], [1], [0, 0, 1, 1], [], []>} : vector<2x32xf32>, vector<32x32xf32>, vector<2x32xf32> -> vector<2x32xf32>
    %cst_56 = arith.constant dense<0.000000e+00> : vector<2x32xf32>
    %193 = tpu.matmul %182, %46, %cst_56 {dimension_numbers = #tpu.dot_dimension_numbers<[1], [0], [0], [1], [0, 0, 1, 1], [], []>} : vector<2x32xf32>, vector<32x32xf32>, vector<2x32xf32> -> vector<2x32xf32>
    %cst_57 = arith.constant dense<0.000000e+00> : vector<2x32xf32>
    %194 = tpu.matmul %182, %48, %cst_57 {dimension_numbers = #tpu.dot_dimension_numbers<[1], [0], [0], [1], [0, 0, 1, 1], [], []>} : vector<2x32xf32>, vector<32x32xf32>, vector<2x32xf32> -> vector<2x32xf32>
    %195 = vector.extract_strided_slice %19 {offsets = [2, 0, 0], sizes = [1, 2, 32], strides = [1, 1, 1]} : vector<8x2x32xf32> to vector<1x2x32xf32>
    %196 = vector.shape_cast %195 : vector<1x2x32xf32> to vector<2x32xf32>
    %197 = arith.addf %196, %189 : vector<2x32xf32>
    %198 = arith.negf %197 : vector<2x32xf32>
    %199 = math.exp %198 : vector<2x32xf32>
    %cst_58 = arith.constant 1.000000e+00 : f32
    %200 = vector.broadcast %cst_58 : f32 to vector<2x32xf32>
    %201 = arith.addf %200, %199 : vector<2x32xf32>
    %202 = arith.divf %200, %201 : vector<2x32xf32>
    %203 = vector.extract_strided_slice %21 {offsets = [2, 0, 0], sizes = [1, 2, 32], strides = [1, 1, 1]} : vector<8x2x32xf32> to vector<1x2x32xf32>
    %204 = vector.shape_cast %203 : vector<1x2x32xf32> to vector<2x32xf32>
    %205 = arith.addf %204, %190 : vector<2x32xf32>
    %206 = arith.negf %205 : vector<2x32xf32>
    %207 = math.exp %206 : vector<2x32xf32>
    %cst_59 = arith.constant 1.000000e+00 : f32
    %208 = vector.broadcast %cst_59 : f32 to vector<2x32xf32>
    %209 = arith.addf %208, %207 : vector<2x32xf32>
    %210 = arith.divf %208, %209 : vector<2x32xf32>
    %211 = vector.extract_strided_slice %23 {offsets = [2, 0, 0], sizes = [1, 2, 32], strides = [1, 1, 1]} : vector<8x2x32xf32> to vector<1x2x32xf32>
    %212 = vector.shape_cast %211 : vector<1x2x32xf32> to vector<2x32xf32>
    %213 = vector.broadcast %50 : vector<1x32xf32> to vector<2x32xf32>
    %214 = arith.addf %191, %213 : vector<2x32xf32>
    %215 = arith.mulf %202, %214 : vector<2x32xf32>
    %216 = arith.addf %212, %215 : vector<2x32xf32>
    %217 = math.tanh %216 : vector<2x32xf32>
    %cst_60 = arith.constant 1.000000e+00 : f32
    %218 = vector.broadcast %cst_60 : f32 to vector<2x32xf32>
    %219 = arith.subf %218, %210 : vector<2x32xf32>
    %220 = arith.mulf %219, %217 : vector<2x32xf32>
    %221 = arith.mulf %210, %154 : vector<2x32xf32>
    %222 = arith.addf %220, %221 : vector<2x32xf32>
    %223 = vector.extract_strided_slice %32 {offsets = [5, 0, 0], sizes = [1, 2, 32], strides = [1, 1, 1]} : vector<8x2x32xf32> to vector<1x2x32xf32>
    %224 = vector.shape_cast %223 : vector<1x2x32xf32> to vector<2x32xf32>
    %225 = arith.addf %224, %192 : vector<2x32xf32>
    %226 = arith.negf %225 : vector<2x32xf32>
    %227 = math.exp %226 : vector<2x32xf32>
    %cst_61 = arith.constant 1.000000e+00 : f32
    %228 = vector.broadcast %cst_61 : f32 to vector<2x32xf32>
    %229 = arith.addf %228, %227 : vector<2x32xf32>
    %230 = arith.divf %228, %229 : vector<2x32xf32>
    %231 = vector.extract_strided_slice %34 {offsets = [5, 0, 0], sizes = [1, 2, 32], strides = [1, 1, 1]} : vector<8x2x32xf32> to vector<1x2x32xf32>
    %232 = vector.shape_cast %231 : vector<1x2x32xf32> to vector<2x32xf32>
    %233 = arith.addf %232, %193 : vector<2x32xf32>
    %234 = arith.negf %233 : vector<2x32xf32>
    %235 = math.exp %234 : vector<2x32xf32>
    %cst_62 = arith.constant 1.000000e+00 : f32
    %236 = vector.broadcast %cst_62 : f32 to vector<2x32xf32>
    %237 = arith.addf %236, %235 : vector<2x32xf32>
    %238 = arith.divf %236, %237 : vector<2x32xf32>
    %239 = vector.extract_strided_slice %36 {offsets = [5, 0, 0], sizes = [1, 2, 32], strides = [1, 1, 1]} : vector<8x2x32xf32> to vector<1x2x32xf32>
    %240 = vector.shape_cast %239 : vector<1x2x32xf32> to vector<2x32xf32>
    %241 = vector.broadcast %52 : vector<1x32xf32> to vector<2x32xf32>
    %242 = arith.addf %194, %241 : vector<2x32xf32>
    %243 = arith.mulf %230, %242 : vector<2x32xf32>
    %244 = arith.addf %240, %243 : vector<2x32xf32>
    %245 = math.tanh %244 : vector<2x32xf32>
    %cst_63 = arith.constant 1.000000e+00 : f32
    %246 = vector.broadcast %cst_63 : f32 to vector<2x32xf32>
    %247 = arith.subf %246, %238 : vector<2x32xf32>
    %248 = arith.mulf %247, %245 : vector<2x32xf32>
    %249 = arith.mulf %238, %182 : vector<2x32xf32>
    %250 = arith.addf %248, %249 : vector<2x32xf32>
    %c2 = arith.constant 2 : index
    %c0_64 = arith.constant 0 : index
    %c0_65 = arith.constant 0 : index
    %251 = vector.load %arg14[%c2, %c0_64, %c0_65] : memref<8x2x32xf32, #tpu.memory_space<vmem>>, vector<1x2x32xf32>
    %252 = vector.shape_cast %251 : vector<1x2x32xf32> to vector<2x32xf32>
    %253 = vector.shape_cast %222 : vector<2x32xf32> to vector<1x2x32xf32>
    tpu.vector_store %arg14[%c2, %c0_64, %c0_65], %253 {strides = array<i32>} : memref<8x2x32xf32, #tpu.memory_space<vmem>>, vector<1x2x32xf32>,
    %c5 = arith.constant 5 : index
    %c0_66 = arith.constant 0 : index
    %c0_67 = arith.constant 0 : index
    %254 = vector.load %arg15[%c5, %c0_66, %c0_67] : memref<8x2x32xf32, #tpu.memory_space<vmem>>, vector<1x2x32xf32>
    %255 = vector.shape_cast %254 : vector<1x2x32xf32> to vector<2x32xf32>
    %256 = vector.shape_cast %250 : vector<2x32xf32> to vector<1x2x32xf32>
    tpu.vector_store %arg15[%c5, %c0_66, %c0_67], %256 {strides = array<i32>} : memref<8x2x32xf32, #tpu.memory_space<vmem>>, vector<1x2x32xf32>,
    %cst_68 = arith.constant dense<0.000000e+00> : vector<2x32xf32>
    %257 = tpu.matmul %222, %38, %cst_68 {dimension_numbers = #tpu.dot_dimension_numbers<[1], [0], [0], [1], [0, 0, 1, 1], [], []>} : vector<2x32xf32>, vector<32x32xf32>, vector<2x32xf32> -> vector<2x32xf32>
    %cst_69 = arith.constant dense<0.000000e+00> : vector<2x32xf32>
    %258 = tpu.matmul %222, %40, %cst_69 {dimension_numbers = #tpu.dot_dimension_numbers<[1], [0], [0], [1], [0, 0, 1, 1], [], []>} : vector<2x32xf32>, vector<32x32xf32>, vector<2x32xf32> -> vector<2x32xf32>
    %cst_70 = arith.constant dense<0.000000e+00> : vector<2x32xf32>
    %259 = tpu.matmul %222, %42, %cst_70 {dimension_numbers = #tpu.dot_dimension_numbers<[1], [0], [0], [1], [0, 0, 1, 1], [], []>} : vector<2x32xf32>, vector<32x32xf32>, vector<2x32xf32> -> vector<2x32xf32>
    %cst_71 = arith.constant dense<0.000000e+00> : vector<2x32xf32>
    %260 = tpu.matmul %250, %44, %cst_71 {dimension_numbers = #tpu.dot_dimension_numbers<[1], [0], [0], [1], [0, 0, 1, 1], [], []>} : vector<2x32xf32>, vector<32x32xf32>, vector<2x32xf32> -> vector<2x32xf32>
    %cst_72 = arith.constant dense<0.000000e+00> : vector<2x32xf32>
    %261 = tpu.matmul %250, %46, %cst_72 {dimension_numbers = #tpu.dot_dimension_numbers<[1], [0], [0], [1], [0, 0, 1, 1], [], []>} : vector<2x32xf32>, vector<32x32xf32>, vector<2x32xf32> -> vector<2x32xf32>
    %cst_73 = arith.constant dense<0.000000e+00> : vector<2x32xf32>
    %262 = tpu.matmul %250, %48, %cst_73 {dimension_numbers = #tpu.dot_dimension_numbers<[1], [0], [0], [1], [0, 0, 1, 1], [], []>} : vector<2x32xf32>, vector<32x32xf32>, vector<2x32xf32> -> vector<2x32xf32>
    %263 = vector.extract_strided_slice %19 {offsets = [3, 0, 0], sizes = [1, 2, 32], strides = [1, 1, 1]} : vector<8x2x32xf32> to vector<1x2x32xf32>
    %264 = vector.shape_cast %263 : vector<1x2x32xf32> to vector<2x32xf32>
    %265 = arith.addf %264, %257 : vector<2x32xf32>
    %266 = arith.negf %265 : vector<2x32xf32>
    %267 = math.exp %266 : vector<2x32xf32>
    %cst_74 = arith.constant 1.000000e+00 : f32
    %268 = vector.broadcast %cst_74 : f32 to vector<2x32xf32>
    %269 = arith.addf %268, %267 : vector<2x32xf32>
    %270 = arith.divf %268, %269 : vector<2x32xf32>
    %271 = vector.extract_strided_slice %21 {offsets = [3, 0, 0], sizes = [1, 2, 32], strides = [1, 1, 1]} : vector<8x2x32xf32> to vector<1x2x32xf32>
    %272 = vector.shape_cast %271 : vector<1x2x32xf32> to vector<2x32xf32>
    %273 = arith.addf %272, %258 : vector<2x32xf32>
    %274 = arith.negf %273 : vector<2x32xf32>
    %275 = math.exp %274 : vector<2x32xf32>
    %cst_75 = arith.constant 1.000000e+00 : f32
    %276 = vector.broadcast %cst_75 : f32 to vector<2x32xf32>
    %277 = arith.addf %276, %275 : vector<2x32xf32>
    %278 = arith.divf %276, %277 : vector<2x32xf32>
    %279 = vector.extract_strided_slice %23 {offsets = [3, 0, 0], sizes = [1, 2, 32], strides = [1, 1, 1]} : vector<8x2x32xf32> to vector<1x2x32xf32>
    %280 = vector.shape_cast %279 : vector<1x2x32xf32> to vector<2x32xf32>
    %281 = vector.broadcast %50 : vector<1x32xf32> to vector<2x32xf32>
    %282 = arith.addf %259, %281 : vector<2x32xf32>
    %283 = arith.mulf %270, %282 : vector<2x32xf32>
    %284 = arith.addf %280, %283 : vector<2x32xf32>
    %285 = math.tanh %284 : vector<2x32xf32>
    %cst_76 = arith.constant 1.000000e+00 : f32
    %286 = vector.broadcast %cst_76 : f32 to vector<2x32xf32>
    %287 = arith.subf %286, %278 : vector<2x32xf32>
    %288 = arith.mulf %287, %285 : vector<2x32xf32>
    %289 = arith.mulf %278, %222 : vector<2x32xf32>
    %290 = arith.addf %288, %289 : vector<2x32xf32>
    %291 = vector.extract_strided_slice %32 {offsets = [4, 0, 0], sizes = [1, 2, 32], strides = [1, 1, 1]} : vector<8x2x32xf32> to vector<1x2x32xf32>
    %292 = vector.shape_cast %291 : vector<1x2x32xf32> to vector<2x32xf32>
    %293 = arith.addf %292, %260 : vector<2x32xf32>
    %294 = arith.negf %293 : vector<2x32xf32>
    %295 = math.exp %294 : vector<2x32xf32>
    %cst_77 = arith.constant 1.000000e+00 : f32
    %296 = vector.broadcast %cst_77 : f32 to vector<2x32xf32>
    %297 = arith.addf %296, %295 : vector<2x32xf32>
    %298 = arith.divf %296, %297 : vector<2x32xf32>
    %299 = vector.extract_strided_slice %34 {offsets = [4, 0, 0], sizes = [1, 2, 32], strides = [1, 1, 1]} : vector<8x2x32xf32> to vector<1x2x32xf32>
    %300 = vector.shape_cast %299 : vector<1x2x32xf32> to vector<2x32xf32>
    %301 = arith.addf %300, %261 : vector<2x32xf32>
    %302 = arith.negf %301 : vector<2x32xf32>
    %303 = math.exp %302 : vector<2x32xf32>
    %cst_78 = arith.constant 1.000000e+00 : f32
    %304 = vector.broadcast %cst_78 : f32 to vector<2x32xf32>
    %305 = arith.addf %304, %303 : vector<2x32xf32>
    %306 = arith.divf %304, %305 : vector<2x32xf32>
    %307 = vector.extract_strided_slice %36 {offsets = [4, 0, 0], sizes = [1, 2, 32], strides = [1, 1, 1]} : vector<8x2x32xf32> to vector<1x2x32xf32>
    %308 = vector.shape_cast %307 : vector<1x2x32xf32> to vector<2x32xf32>
    %309 = vector.broadcast %52 : vector<1x32xf32> to vector<2x32xf32>
    %310 = arith.addf %262, %309 : vector<2x32xf32>
    %311 = arith.mulf %298, %310 : vector<2x32xf32>
    %312 = arith.addf %308, %311 : vector<2x32xf32>
    %313 = math.tanh %312 : vector<2x32xf32>
    %cst_79 = arith.constant 1.000000e+00 : f32
    %314 = vector.broadcast %cst_79 : f32 to vector<2x32xf32>
    %315 = arith.subf %314, %306 : vector<2x32xf32>
    %316 = arith.mulf %315, %313 : vector<2x32xf32>
    %317 = arith.mulf %306, %250 : vector<2x32xf32>
    %318 = arith.addf %316, %317 : vector<2x32xf32>
    %c3 = arith.constant 3 : index
    %c0_80 = arith.constant 0 : index
    %c0_81 = arith.constant 0 : index
    %319 = vector.load %arg14[%c3, %c0_80, %c0_81] : memref<8x2x32xf32, #tpu.memory_space<vmem>>, vector<1x2x32xf32>
    %320 = vector.shape_cast %319 : vector<1x2x32xf32> to vector<2x32xf32>
    %321 = vector.shape_cast %290 : vector<2x32xf32> to vector<1x2x32xf32>
    tpu.vector_store %arg14[%c3, %c0_80, %c0_81], %321 {strides = array<i32>} : memref<8x2x32xf32, #tpu.memory_space<vmem>>, vector<1x2x32xf32>,
    %c4 = arith.constant 4 : index
    %c0_82 = arith.constant 0 : index
    %c0_83 = arith.constant 0 : index
    %322 = vector.load %arg15[%c4, %c0_82, %c0_83] : memref<8x2x32xf32, #tpu.memory_space<vmem>>, vector<1x2x32xf32>
    %323 = vector.shape_cast %322 : vector<1x2x32xf32> to vector<2x32xf32>
    %324 = vector.shape_cast %318 : vector<2x32xf32> to vector<1x2x32xf32>
    tpu.vector_store %arg15[%c4, %c0_82, %c0_83], %324 {strides = array<i32>} : memref<8x2x32xf32, #tpu.memory_space<vmem>>, vector<1x2x32xf32>,
    %cst_84 = arith.constant dense<0.000000e+00> : vector<2x32xf32>
    %325 = tpu.matmul %290, %38, %cst_84 {dimension_numbers = #tpu.dot_dimension_numbers<[1], [0], [0], [1], [0, 0, 1, 1], [], []>} : vector<2x32xf32>, vector<32x32xf32>, vector<2x32xf32> -> vector<2x32xf32>
    %cst_85 = arith.constant dense<0.000000e+00> : vector<2x32xf32>
    %326 = tpu.matmul %290, %40, %cst_85 {dimension_numbers = #tpu.dot_dimension_numbers<[1], [0], [0], [1], [0, 0, 1, 1], [], []>} : vector<2x32xf32>, vector<32x32xf32>, vector<2x32xf32> -> vector<2x32xf32>
    %cst_86 = arith.constant dense<0.000000e+00> : vector<2x32xf32>
    %327 = tpu.matmul %290, %42, %cst_86 {dimension_numbers = #tpu.dot_dimension_numbers<[1], [0], [0], [1], [0, 0, 1, 1], [], []>} : vector<2x32xf32>, vector<32x32xf32>, vector<2x32xf32> -> vector<2x32xf32>
    %cst_87 = arith.constant dense<0.000000e+00> : vector<2x32xf32>
    %328 = tpu.matmul %318, %44, %cst_87 {dimension_numbers = #tpu.dot_dimension_numbers<[1], [0], [0], [1], [0, 0, 1, 1], [], []>} : vector<2x32xf32>, vector<32x32xf32>, vector<2x32xf32> -> vector<2x32xf32>
    %cst_88 = arith.constant dense<0.000000e+00> : vector<2x32xf32>
    %329 = tpu.matmul %318, %46, %cst_88 {dimension_numbers = #tpu.dot_dimension_numbers<[1], [0], [0], [1], [0, 0, 1, 1], [], []>} : vector<2x32xf32>, vector<32x32xf32>, vector<2x32xf32> -> vector<2x32xf32>
    %cst_89 = arith.constant dense<0.000000e+00> : vector<2x32xf32>
    %330 = tpu.matmul %318, %48, %cst_89 {dimension_numbers = #tpu.dot_dimension_numbers<[1], [0], [0], [1], [0, 0, 1, 1], [], []>} : vector<2x32xf32>, vector<32x32xf32>, vector<2x32xf32> -> vector<2x32xf32>
    %331 = vector.extract_strided_slice %19 {offsets = [4, 0, 0], sizes = [1, 2, 32], strides = [1, 1, 1]} : vector<8x2x32xf32> to vector<1x2x32xf32>
    %332 = vector.shape_cast %331 : vector<1x2x32xf32> to vector<2x32xf32>
    %333 = arith.addf %332, %325 : vector<2x32xf32>
    %334 = arith.negf %333 : vector<2x32xf32>
    %335 = math.exp %334 : vector<2x32xf32>
    %cst_90 = arith.constant 1.000000e+00 : f32
    %336 = vector.broadcast %cst_90 : f32 to vector<2x32xf32>
    %337 = arith.addf %336, %335 : vector<2x32xf32>
    %338 = arith.divf %336, %337 : vector<2x32xf32>
    %339 = vector.extract_strided_slice %21 {offsets = [4, 0, 0], sizes = [1, 2, 32], strides = [1, 1, 1]} : vector<8x2x32xf32> to vector<1x2x32xf32>
    %340 = vector.shape_cast %339 : vector<1x2x32xf32> to vector<2x32xf32>
    %341 = arith.addf %340, %326 : vector<2x32xf32>
    %342 = arith.negf %341 : vector<2x32xf32>
    %343 = math.exp %342 : vector<2x32xf32>
    %cst_91 = arith.constant 1.000000e+00 : f32
    %344 = vector.broadcast %cst_91 : f32 to vector<2x32xf32>
    %345 = arith.addf %344, %343 : vector<2x32xf32>
    %346 = arith.divf %344, %345 : vector<2x32xf32>
    %347 = vector.extract_strided_slice %23 {offsets = [4, 0, 0], sizes = [1, 2, 32], strides = [1, 1, 1]} : vector<8x2x32xf32> to vector<1x2x32xf32>
    %348 = vector.shape_cast %347 : vector<1x2x32xf32> to vector<2x32xf32>
    %349 = vector.broadcast %50 : vector<1x32xf32> to vector<2x32xf32>
    %350 = arith.addf %327, %349 : vector<2x32xf32>
    %351 = arith.mulf %338, %350 : vector<2x32xf32>
    %352 = arith.addf %348, %351 : vector<2x32xf32>
    %353 = math.tanh %352 : vector<2x32xf32>
    %cst_92 = arith.constant 1.000000e+00 : f32
    %354 = vector.broadcast %cst_92 : f32 to vector<2x32xf32>
    %355 = arith.subf %354, %346 : vector<2x32xf32>
    %356 = arith.mulf %355, %353 : vector<2x32xf32>
    %357 = arith.mulf %346, %290 : vector<2x32xf32>
    %358 = arith.addf %356, %357 : vector<2x32xf32>
    %359 = vector.extract_strided_slice %32 {offsets = [3, 0, 0], sizes = [1, 2, 32], strides = [1, 1, 1]} : vector<8x2x32xf32> to vector<1x2x32xf32>
    %360 = vector.shape_cast %359 : vector<1x2x32xf32> to vector<2x32xf32>
    %361 = arith.addf %360, %328 : vector<2x32xf32>
    %362 = arith.negf %361 : vector<2x32xf32>
    %363 = math.exp %362 : vector<2x32xf32>
    %cst_93 = arith.constant 1.000000e+00 : f32
    %364 = vector.broadcast %cst_93 : f32 to vector<2x32xf32>
    %365 = arith.addf %364, %363 : vector<2x32xf32>
    %366 = arith.divf %364, %365 : vector<2x32xf32>
    %367 = vector.extract_strided_slice %34 {offsets = [3, 0, 0], sizes = [1, 2, 32], strides = [1, 1, 1]} : vector<8x2x32xf32> to vector<1x2x32xf32>
    %368 = vector.shape_cast %367 : vector<1x2x32xf32> to vector<2x32xf32>
    %369 = arith.addf %368, %329 : vector<2x32xf32>
    %370 = arith.negf %369 : vector<2x32xf32>
    %371 = math.exp %370 : vector<2x32xf32>
    %cst_94 = arith.constant 1.000000e+00 : f32
    %372 = vector.broadcast %cst_94 : f32 to vector<2x32xf32>
    %373 = arith.addf %372, %371 : vector<2x32xf32>
    %374 = arith.divf %372, %373 : vector<2x32xf32>
    %375 = vector.extract_strided_slice %36 {offsets = [3, 0, 0], sizes = [1, 2, 32], strides = [1, 1, 1]} : vector<8x2x32xf32> to vector<1x2x32xf32>
    %376 = vector.shape_cast %375 : vector<1x2x32xf32> to vector<2x32xf32>
    %377 = vector.broadcast %52 : vector<1x32xf32> to vector<2x32xf32>
    %378 = arith.addf %330, %377 : vector<2x32xf32>
    %379 = arith.mulf %366, %378 : vector<2x32xf32>
    %380 = arith.addf %376, %379 : vector<2x32xf32>
    %381 = math.tanh %380 : vector<2x32xf32>
    %cst_95 = arith.constant 1.000000e+00 : f32
    %382 = vector.broadcast %cst_95 : f32 to vector<2x32xf32>
    %383 = arith.subf %382, %374 : vector<2x32xf32>
    %384 = arith.mulf %383, %381 : vector<2x32xf32>
    %385 = arith.mulf %374, %318 : vector<2x32xf32>
    %386 = arith.addf %384, %385 : vector<2x32xf32>
    %c4_96 = arith.constant 4 : index
    %c0_97 = arith.constant 0 : index
    %c0_98 = arith.constant 0 : index
    %387 = vector.load %arg14[%c4_96, %c0_97, %c0_98] : memref<8x2x32xf32, #tpu.memory_space<vmem>>, vector<1x2x32xf32>
    %388 = vector.shape_cast %387 : vector<1x2x32xf32> to vector<2x32xf32>
    %389 = vector.shape_cast %358 : vector<2x32xf32> to vector<1x2x32xf32>
    tpu.vector_store %arg14[%c4_96, %c0_97, %c0_98], %389 {strides = array<i32>} : memref<8x2x32xf32, #tpu.memory_space<vmem>>, vector<1x2x32xf32>,
    %c3_99 = arith.constant 3 : index
    %c0_100 = arith.constant 0 : index
    %c0_101 = arith.constant 0 : index
    %390 = vector.load %arg15[%c3_99, %c0_100, %c0_101] : memref<8x2x32xf32, #tpu.memory_space<vmem>>, vector<1x2x32xf32>
    %391 = vector.shape_cast %390 : vector<1x2x32xf32> to vector<2x32xf32>
    %392 = vector.shape_cast %386 : vector<2x32xf32> to vector<1x2x32xf32>
    tpu.vector_store %arg15[%c3_99, %c0_100, %c0_101], %392 {strides = array<i32>} : memref<8x2x32xf32, #tpu.memory_space<vmem>>, vector<1x2x32xf32>,
    %cst_102 = arith.constant dense<0.000000e+00> : vector<2x32xf32>
    %393 = tpu.matmul %358, %38, %cst_102 {dimension_numbers = #tpu.dot_dimension_numbers<[1], [0], [0], [1], [0, 0, 1, 1], [], []>} : vector<2x32xf32>, vector<32x32xf32>, vector<2x32xf32> -> vector<2x32xf32>
    %cst_103 = arith.constant dense<0.000000e+00> : vector<2x32xf32>
    %394 = tpu.matmul %358, %40, %cst_103 {dimension_numbers = #tpu.dot_dimension_numbers<[1], [0], [0], [1], [0, 0, 1, 1], [], []>} : vector<2x32xf32>, vector<32x32xf32>, vector<2x32xf32> -> vector<2x32xf32>
    %cst_104 = arith.constant dense<0.000000e+00> : vector<2x32xf32>
    %395 = tpu.matmul %358, %42, %cst_104 {dimension_numbers = #tpu.dot_dimension_numbers<[1], [0], [0], [1], [0, 0, 1, 1], [], []>} : vector<2x32xf32>, vector<32x32xf32>, vector<2x32xf32> -> vector<2x32xf32>
    %cst_105 = arith.constant dense<0.000000e+00> : vector<2x32xf32>
    %396 = tpu.matmul %386, %44, %cst_105 {dimension_numbers = #tpu.dot_dimension_numbers<[1], [0], [0], [1], [0, 0, 1, 1], [], []>} : vector<2x32xf32>, vector<32x32xf32>, vector<2x32xf32> -> vector<2x32xf32>
    %cst_106 = arith.constant dense<0.000000e+00> : vector<2x32xf32>
    %397 = tpu.matmul %386, %46, %cst_106 {dimension_numbers = #tpu.dot_dimension_numbers<[1], [0], [0], [1], [0, 0, 1, 1], [], []>} : vector<2x32xf32>, vector<32x32xf32>, vector<2x32xf32> -> vector<2x32xf32>
    %cst_107 = arith.constant dense<0.000000e+00> : vector<2x32xf32>
    %398 = tpu.matmul %386, %48, %cst_107 {dimension_numbers = #tpu.dot_dimension_numbers<[1], [0], [0], [1], [0, 0, 1, 1], [], []>} : vector<2x32xf32>, vector<32x32xf32>, vector<2x32xf32> -> vector<2x32xf32>
    %399 = vector.extract_strided_slice %19 {offsets = [5, 0, 0], sizes = [1, 2, 32], strides = [1, 1, 1]} : vector<8x2x32xf32> to vector<1x2x32xf32>
    %400 = vector.shape_cast %399 : vector<1x2x32xf32> to vector<2x32xf32>
    %401 = arith.addf %400, %393 : vector<2x32xf32>
    %402 = arith.negf %401 : vector<2x32xf32>
    %403 = math.exp %402 : vector<2x32xf32>
    %cst_108 = arith.constant 1.000000e+00 : f32
    %404 = vector.broadcast %cst_108 : f32 to vector<2x32xf32>
    %405 = arith.addf %404, %403 : vector<2x32xf32>
    %406 = arith.divf %404, %405 : vector<2x32xf32>
    %407 = vector.extract_strided_slice %21 {offsets = [5, 0, 0], sizes = [1, 2, 32], strides = [1, 1, 1]} : vector<8x2x32xf32> to vector<1x2x32xf32>
    %408 = vector.shape_cast %407 : vector<1x2x32xf32> to vector<2x32xf32>
    %409 = arith.addf %408, %394 : vector<2x32xf32>
    %410 = arith.negf %409 : vector<2x32xf32>
    %411 = math.exp %410 : vector<2x32xf32>
    %cst_109 = arith.constant 1.000000e+00 : f32
    %412 = vector.broadcast %cst_109 : f32 to vector<2x32xf32>
    %413 = arith.addf %412, %411 : vector<2x32xf32>
    %414 = arith.divf %412, %413 : vector<2x32xf32>
    %415 = vector.extract_strided_slice %23 {offsets = [5, 0, 0], sizes = [1, 2, 32], strides = [1, 1, 1]} : vector<8x2x32xf32> to vector<1x2x32xf32>
    %416 = vector.shape_cast %415 : vector<1x2x32xf32> to vector<2x32xf32>
    %417 = vector.broadcast %50 : vector<1x32xf32> to vector<2x32xf32>
    %418 = arith.addf %395, %417 : vector<2x32xf32>
    %419 = arith.mulf %406, %418 : vector<2x32xf32>
    %420 = arith.addf %416, %419 : vector<2x32xf32>
    %421 = math.tanh %420 : vector<2x32xf32>
    %cst_110 = arith.constant 1.000000e+00 : f32
    %422 = vector.broadcast %cst_110 : f32 to vector<2x32xf32>
    %423 = arith.subf %422, %414 : vector<2x32xf32>
    %424 = arith.mulf %423, %421 : vector<2x32xf32>
    %425 = arith.mulf %414, %358 : vector<2x32xf32>
    %426 = arith.addf %424, %425 : vector<2x32xf32>
    %427 = vector.extract_strided_slice %32 {offsets = [2, 0, 0], sizes = [1, 2, 32], strides = [1, 1, 1]} : vector<8x2x32xf32> to vector<1x2x32xf32>
    %428 = vector.shape_cast %427 : vector<1x2x32xf32> to vector<2x32xf32>
    %429 = arith.addf %428, %396 : vector<2x32xf32>
    %430 = arith.negf %429 : vector<2x32xf32>
    %431 = math.exp %430 : vector<2x32xf32>
    %cst_111 = arith.constant 1.000000e+00 : f32
    %432 = vector.broadcast %cst_111 : f32 to vector<2x32xf32>
    %433 = arith.addf %432, %431 : vector<2x32xf32>
    %434 = arith.divf %432, %433 : vector<2x32xf32>
    %435 = vector.extract_strided_slice %34 {offsets = [2, 0, 0], sizes = [1, 2, 32], strides = [1, 1, 1]} : vector<8x2x32xf32> to vector<1x2x32xf32>
    %436 = vector.shape_cast %435 : vector<1x2x32xf32> to vector<2x32xf32>
    %437 = arith.addf %436, %397 : vector<2x32xf32>
    %438 = arith.negf %437 : vector<2x32xf32>
    %439 = math.exp %438 : vector<2x32xf32>
    %cst_112 = arith.constant 1.000000e+00 : f32
    %440 = vector.broadcast %cst_112 : f32 to vector<2x32xf32>
    %441 = arith.addf %440, %439 : vector<2x32xf32>
    %442 = arith.divf %440, %441 : vector<2x32xf32>
    %443 = vector.extract_strided_slice %36 {offsets = [2, 0, 0], sizes = [1, 2, 32], strides = [1, 1, 1]} : vector<8x2x32xf32> to vector<1x2x32xf32>
    %444 = vector.shape_cast %443 : vector<1x2x32xf32> to vector<2x32xf32>
    %445 = vector.broadcast %52 : vector<1x32xf32> to vector<2x32xf32>
    %446 = arith.addf %398, %445 : vector<2x32xf32>
    %447 = arith.mulf %434, %446 : vector<2x32xf32>
    %448 = arith.addf %444, %447 : vector<2x32xf32>
    %449 = math.tanh %448 : vector<2x32xf32>
    %cst_113 = arith.constant 1.000000e+00 : f32
    %450 = vector.broadcast %cst_113 : f32 to vector<2x32xf32>
    %451 = arith.subf %450, %442 : vector<2x32xf32>
    %452 = arith.mulf %451, %449 : vector<2x32xf32>
    %453 = arith.mulf %442, %386 : vector<2x32xf32>
    %454 = arith.addf %452, %453 : vector<2x32xf32>
    %c5_114 = arith.constant 5 : index
    %c0_115 = arith.constant 0 : index
    %c0_116 = arith.constant 0 : index
    %455 = vector.load %arg14[%c5_114, %c0_115, %c0_116] : memref<8x2x32xf32, #tpu.memory_space<vmem>>, vector<1x2x32xf32>
    %456 = vector.shape_cast %455 : vector<1x2x32xf32> to vector<2x32xf32>
    %457 = vector.shape_cast %426 : vector<2x32xf32> to vector<1x2x32xf32>
    tpu.vector_store %arg14[%c5_114, %c0_115, %c0_116], %457 {strides = array<i32>} : memref<8x2x32xf32, #tpu.memory_space<vmem>>, vector<1x2x32xf32>,
    %c2_117 = arith.constant 2 : index
    %c0_118 = arith.constant 0 : index
    %c0_119 = arith.constant 0 : index
    %458 = vector.load %arg15[%c2_117, %c0_118, %c0_119] : memref<8x2x32xf32, #tpu.memory_space<vmem>>, vector<1x2x32xf32>
    %459 = vector.shape_cast %458 : vector<1x2x32xf32> to vector<2x32xf32>
    %460 = vector.shape_cast %454 : vector<2x32xf32> to vector<1x2x32xf32>
    tpu.vector_store %arg15[%c2_117, %c0_118, %c0_119], %460 {strides = array<i32>} : memref<8x2x32xf32, #tpu.memory_space<vmem>>, vector<1x2x32xf32>,
    %cst_120 = arith.constant dense<0.000000e+00> : vector<2x32xf32>
    %461 = tpu.matmul %426, %38, %cst_120 {dimension_numbers = #tpu.dot_dimension_numbers<[1], [0], [0], [1], [0, 0, 1, 1], [], []>} : vector<2x32xf32>, vector<32x32xf32>, vector<2x32xf32> -> vector<2x32xf32>
    %cst_121 = arith.constant dense<0.000000e+00> : vector<2x32xf32>
    %462 = tpu.matmul %426, %40, %cst_121 {dimension_numbers = #tpu.dot_dimension_numbers<[1], [0], [0], [1], [0, 0, 1, 1], [], []>} : vector<2x32xf32>, vector<32x32xf32>, vector<2x32xf32> -> vector<2x32xf32>
    %cst_122 = arith.constant dense<0.000000e+00> : vector<2x32xf32>
    %463 = tpu.matmul %426, %42, %cst_122 {dimension_numbers = #tpu.dot_dimension_numbers<[1], [0], [0], [1], [0, 0, 1, 1], [], []>} : vector<2x32xf32>, vector<32x32xf32>, vector<2x32xf32> -> vector<2x32xf32>
    %cst_123 = arith.constant dense<0.000000e+00> : vector<2x32xf32>
    %464 = tpu.matmul %454, %44, %cst_123 {dimension_numbers = #tpu.dot_dimension_numbers<[1], [0], [0], [1], [0, 0, 1, 1], [], []>} : vector<2x32xf32>, vector<32x32xf32>, vector<2x32xf32> -> vector<2x32xf32>
    %cst_124 = arith.constant dense<0.000000e+00> : vector<2x32xf32>
    %465 = tpu.matmul %454, %46, %cst_124 {dimension_numbers = #tpu.dot_dimension_numbers<[1], [0], [0], [1], [0, 0, 1, 1], [], []>} : vector<2x32xf32>, vector<32x32xf32>, vector<2x32xf32> -> vector<2x32xf32>
    %cst_125 = arith.constant dense<0.000000e+00> : vector<2x32xf32>
    %466 = tpu.matmul %454, %48, %cst_125 {dimension_numbers = #tpu.dot_dimension_numbers<[1], [0], [0], [1], [0, 0, 1, 1], [], []>} : vector<2x32xf32>, vector<32x32xf32>, vector<2x32xf32> -> vector<2x32xf32>
    %467 = vector.extract_strided_slice %19 {offsets = [6, 0, 0], sizes = [1, 2, 32], strides = [1, 1, 1]} : vector<8x2x32xf32> to vector<1x2x32xf32>
    %468 = vector.shape_cast %467 : vector<1x2x32xf32> to vector<2x32xf32>
    %469 = arith.addf %468, %461 : vector<2x32xf32>
    %470 = arith.negf %469 : vector<2x32xf32>
    %471 = math.exp %470 : vector<2x32xf32>
    %cst_126 = arith.constant 1.000000e+00 : f32
    %472 = vector.broadcast %cst_126 : f32 to vector<2x32xf32>
    %473 = arith.addf %472, %471 : vector<2x32xf32>
    %474 = arith.divf %472, %473 : vector<2x32xf32>
    %475 = vector.extract_strided_slice %21 {offsets = [6, 0, 0], sizes = [1, 2, 32], strides = [1, 1, 1]} : vector<8x2x32xf32> to vector<1x2x32xf32>
    %476 = vector.shape_cast %475 : vector<1x2x32xf32> to vector<2x32xf32>
    %477 = arith.addf %476, %462 : vector<2x32xf32>
    %478 = arith.negf %477 : vector<2x32xf32>
    %479 = math.exp %478 : vector<2x32xf32>
    %cst_127 = arith.constant 1.000000e+00 : f32
    %480 = vector.broadcast %cst_127 : f32 to vector<2x32xf32>
    %481 = arith.addf %480, %479 : vector<2x32xf32>
    %482 = arith.divf %480, %481 : vector<2x32xf32>
    %483 = vector.extract_strided_slice %23 {offsets = [6, 0, 0], sizes = [1, 2, 32], strides = [1, 1, 1]} : vector<8x2x32xf32> to vector<1x2x32xf32>
    %484 = vector.shape_cast %483 : vector<1x2x32xf32> to vector<2x32xf32>
    %485 = vector.broadcast %50 : vector<1x32xf32> to vector<2x32xf32>
    %486 = arith.addf %463, %485 : vector<2x32xf32>
    %487 = arith.mulf %474, %486 : vector<2x32xf32>
    %488 = arith.addf %484, %487 : vector<2x32xf32>
    %489 = math.tanh %488 : vector<2x32xf32>
    %cst_128 = arith.constant 1.000000e+00 : f32
    %490 = vector.broadcast %cst_128 : f32 to vector<2x32xf32>
    %491 = arith.subf %490, %482 : vector<2x32xf32>
    %492 = arith.mulf %491, %489 : vector<2x32xf32>
    %493 = arith.mulf %482, %426 : vector<2x32xf32>
    %494 = arith.addf %492, %493 : vector<2x32xf32>
    %495 = vector.extract_strided_slice %32 {offsets = [1, 0, 0], sizes = [1, 2, 32], strides = [1, 1, 1]} : vector<8x2x32xf32> to vector<1x2x32xf32>
    %496 = vector.shape_cast %495 : vector<1x2x32xf32> to vector<2x32xf32>
    %497 = arith.addf %496, %464 : vector<2x32xf32>
    %498 = arith.negf %497 : vector<2x32xf32>
    %499 = math.exp %498 : vector<2x32xf32>
    %cst_129 = arith.constant 1.000000e+00 : f32
    %500 = vector.broadcast %cst_129 : f32 to vector<2x32xf32>
    %501 = arith.addf %500, %499 : vector<2x32xf32>
    %502 = arith.divf %500, %501 : vector<2x32xf32>
    %503 = vector.extract_strided_slice %34 {offsets = [1, 0, 0], sizes = [1, 2, 32], strides = [1, 1, 1]} : vector<8x2x32xf32> to vector<1x2x32xf32>
    %504 = vector.shape_cast %503 : vector<1x2x32xf32> to vector<2x32xf32>
    %505 = arith.addf %504, %465 : vector<2x32xf32>
    %506 = arith.negf %505 : vector<2x32xf32>
    %507 = math.exp %506 : vector<2x32xf32>
    %cst_130 = arith.constant 1.000000e+00 : f32
    %508 = vector.broadcast %cst_130 : f32 to vector<2x32xf32>
    %509 = arith.addf %508, %507 : vector<2x32xf32>
    %510 = arith.divf %508, %509 : vector<2x32xf32>
    %511 = vector.extract_strided_slice %36 {offsets = [1, 0, 0], sizes = [1, 2, 32], strides = [1, 1, 1]} : vector<8x2x32xf32> to vector<1x2x32xf32>
    %512 = vector.shape_cast %511 : vector<1x2x32xf32> to vector<2x32xf32>
    %513 = vector.broadcast %52 : vector<1x32xf32> to vector<2x32xf32>
    %514 = arith.addf %466, %513 : vector<2x32xf32>
    %515 = arith.mulf %502, %514 : vector<2x32xf32>
    %516 = arith.addf %512, %515 : vector<2x32xf32>
    %517 = math.tanh %516 : vector<2x32xf32>
    %cst_131 = arith.constant 1.000000e+00 : f32
    %518 = vector.broadcast %cst_131 : f32 to vector<2x32xf32>
    %519 = arith.subf %518, %510 : vector<2x32xf32>
    %520 = arith.mulf %519, %517 : vector<2x32xf32>
    %521 = arith.mulf %510, %454 : vector<2x32xf32>
    %522 = arith.addf %520, %521 : vector<2x32xf32>
    %c6_132 = arith.constant 6 : index
    %c0_133 = arith.constant 0 : index
    %c0_134 = arith.constant 0 : index
    %523 = vector.load %arg14[%c6_132, %c0_133, %c0_134] : memref<8x2x32xf32, #tpu.memory_space<vmem>>, vector<1x2x32xf32>
    %524 = vector.shape_cast %523 : vector<1x2x32xf32> to vector<2x32xf32>
    %525 = vector.shape_cast %494 : vector<2x32xf32> to vector<1x2x32xf32>
    tpu.vector_store %arg14[%c6_132, %c0_133, %c0_134], %525 {strides = array<i32>} : memref<8x2x32xf32, #tpu.memory_space<vmem>>, vector<1x2x32xf32>,
    %c1_135 = arith.constant 1 : index
    %c0_136 = arith.constant 0 : index
    %c0_137 = arith.constant 0 : index
    %526 = vector.load %arg15[%c1_135, %c0_136, %c0_137] : memref<8x2x32xf32, #tpu.memory_space<vmem>>, vector<1x2x32xf32>
    %527 = vector.shape_cast %526 : vector<1x2x32xf32> to vector<2x32xf32>
    %528 = vector.shape_cast %522 : vector<2x32xf32> to vector<1x2x32xf32>
    tpu.vector_store %arg15[%c1_135, %c0_136, %c0_137], %528 {strides = array<i32>} : memref<8x2x32xf32, #tpu.memory_space<vmem>>, vector<1x2x32xf32>,
    %cst_138 = arith.constant dense<0.000000e+00> : vector<2x32xf32>
    %529 = tpu.matmul %494, %38, %cst_138 {dimension_numbers = #tpu.dot_dimension_numbers<[1], [0], [0], [1], [0, 0, 1, 1], [], []>} : vector<2x32xf32>, vector<32x32xf32>, vector<2x32xf32> -> vector<2x32xf32>
    %cst_139 = arith.constant dense<0.000000e+00> : vector<2x32xf32>
    %530 = tpu.matmul %494, %40, %cst_139 {dimension_numbers = #tpu.dot_dimension_numbers<[1], [0], [0], [1], [0, 0, 1, 1], [], []>} : vector<2x32xf32>, vector<32x32xf32>, vector<2x32xf32> -> vector<2x32xf32>
    %cst_140 = arith.constant dense<0.000000e+00> : vector<2x32xf32>
    %531 = tpu.matmul %494, %42, %cst_140 {dimension_numbers = #tpu.dot_dimension_numbers<[1], [0], [0], [1], [0, 0, 1, 1], [], []>} : vector<2x32xf32>, vector<32x32xf32>, vector<2x32xf32> -> vector<2x32xf32>
    %cst_141 = arith.constant dense<0.000000e+00> : vector<2x32xf32>
    %532 = tpu.matmul %522, %44, %cst_141 {dimension_numbers = #tpu.dot_dimension_numbers<[1], [0], [0], [1], [0, 0, 1, 1], [], []>} : vector<2x32xf32>, vector<32x32xf32>, vector<2x32xf32> -> vector<2x32xf32>
    %cst_142 = arith.constant dense<0.000000e+00> : vector<2x32xf32>
    %533 = tpu.matmul %522, %46, %cst_142 {dimension_numbers = #tpu.dot_dimension_numbers<[1], [0], [0], [1], [0, 0, 1, 1], [], []>} : vector<2x32xf32>, vector<32x32xf32>, vector<2x32xf32> -> vector<2x32xf32>
    %cst_143 = arith.constant dense<0.000000e+00> : vector<2x32xf32>
    %534 = tpu.matmul %522, %48, %cst_143 {dimension_numbers = #tpu.dot_dimension_numbers<[1], [0], [0], [1], [0, 0, 1, 1], [], []>} : vector<2x32xf32>, vector<32x32xf32>, vector<2x32xf32> -> vector<2x32xf32>
    %535 = vector.extract_strided_slice %19 {offsets = [7, 0, 0], sizes = [1, 2, 32], strides = [1, 1, 1]} : vector<8x2x32xf32> to vector<1x2x32xf32>
    %536 = vector.shape_cast %535 : vector<1x2x32xf32> to vector<2x32xf32>
    %537 = arith.addf %536, %529 : vector<2x32xf32>
    %538 = arith.negf %537 : vector<2x32xf32>
    %539 = math.exp %538 : vector<2x32xf32>
    %cst_144 = arith.constant 1.000000e+00 : f32
    %540 = vector.broadcast %cst_144 : f32 to vector<2x32xf32>
    %541 = arith.addf %540, %539 : vector<2x32xf32>
    %542 = arith.divf %540, %541 : vector<2x32xf32>
    %543 = vector.extract_strided_slice %21 {offsets = [7, 0, 0], sizes = [1, 2, 32], strides = [1, 1, 1]} : vector<8x2x32xf32> to vector<1x2x32xf32>
    %544 = vector.shape_cast %543 : vector<1x2x32xf32> to vector<2x32xf32>
    %545 = arith.addf %544, %530 : vector<2x32xf32>
    %546 = arith.negf %545 : vector<2x32xf32>
    %547 = math.exp %546 : vector<2x32xf32>
    %cst_145 = arith.constant 1.000000e+00 : f32
    %548 = vector.broadcast %cst_145 : f32 to vector<2x32xf32>
    %549 = arith.addf %548, %547 : vector<2x32xf32>
    %550 = arith.divf %548, %549 : vector<2x32xf32>
    %551 = vector.extract_strided_slice %23 {offsets = [7, 0, 0], sizes = [1, 2, 32], strides = [1, 1, 1]} : vector<8x2x32xf32> to vector<1x2x32xf32>
    %552 = vector.shape_cast %551 : vector<1x2x32xf32> to vector<2x32xf32>
    %553 = vector.broadcast %50 : vector<1x32xf32> to vector<2x32xf32>
    %554 = arith.addf %531, %553 : vector<2x32xf32>
    %555 = arith.mulf %542, %554 : vector<2x32xf32>
    %556 = arith.addf %552, %555 : vector<2x32xf32>
    %557 = math.tanh %556 : vector<2x32xf32>
    %cst_146 = arith.constant 1.000000e+00 : f32
    %558 = vector.broadcast %cst_146 : f32 to vector<2x32xf32>
    %559 = arith.subf %558, %550 : vector<2x32xf32>
    %560 = arith.mulf %559, %557 : vector<2x32xf32>
    %561 = arith.mulf %550, %494 : vector<2x32xf32>
    %562 = arith.addf %560, %561 : vector<2x32xf32>
    %563 = vector.extract_strided_slice %32 {offsets = [0, 0, 0], sizes = [1, 2, 32], strides = [1, 1, 1]} : vector<8x2x32xf32> to vector<1x2x32xf32>
    %564 = vector.shape_cast %563 : vector<1x2x32xf32> to vector<2x32xf32>
    %565 = arith.addf %564, %532 : vector<2x32xf32>
    %566 = arith.negf %565 : vector<2x32xf32>
    %567 = math.exp %566 : vector<2x32xf32>
    %cst_147 = arith.constant 1.000000e+00 : f32
    %568 = vector.broadcast %cst_147 : f32 to vector<2x32xf32>
    %569 = arith.addf %568, %567 : vector<2x32xf32>
    %570 = arith.divf %568, %569 : vector<2x32xf32>
    %571 = vector.extract_strided_slice %34 {offsets = [0, 0, 0], sizes = [1, 2, 32], strides = [1, 1, 1]} : vector<8x2x32xf32> to vector<1x2x32xf32>
    %572 = vector.shape_cast %571 : vector<1x2x32xf32> to vector<2x32xf32>
    %573 = arith.addf %572, %533 : vector<2x32xf32>
    %574 = arith.negf %573 : vector<2x32xf32>
    %575 = math.exp %574 : vector<2x32xf32>
    %cst_148 = arith.constant 1.000000e+00 : f32
    %576 = vector.broadcast %cst_148 : f32 to vector<2x32xf32>
    %577 = arith.addf %576, %575 : vector<2x32xf32>
    %578 = arith.divf %576, %577 : vector<2x32xf32>
    %579 = vector.extract_strided_slice %36 {offsets = [0, 0, 0], sizes = [1, 2, 32], strides = [1, 1, 1]} : vector<8x2x32xf32> to vector<1x2x32xf32>
    %580 = vector.shape_cast %579 : vector<1x2x32xf32> to vector<2x32xf32>
    %581 = vector.broadcast %52 : vector<1x32xf32> to vector<2x32xf32>
    %582 = arith.addf %534, %581 : vector<2x32xf32>
    %583 = arith.mulf %570, %582 : vector<2x32xf32>
    %584 = arith.addf %580, %583 : vector<2x32xf32>
    %585 = math.tanh %584 : vector<2x32xf32>
    %cst_149 = arith.constant 1.000000e+00 : f32
    %586 = vector.broadcast %cst_149 : f32 to vector<2x32xf32>
    %587 = arith.subf %586, %578 : vector<2x32xf32>
    %588 = arith.mulf %587, %585 : vector<2x32xf32>
    %589 = arith.mulf %578, %522 : vector<2x32xf32>
    %590 = arith.addf %588, %589 : vector<2x32xf32>
    %c7_150 = arith.constant 7 : index
    %c0_151 = arith.constant 0 : index
    %c0_152 = arith.constant 0 : index
    %591 = vector.load %arg14[%c7_150, %c0_151, %c0_152] : memref<8x2x32xf32, #tpu.memory_space<vmem>>, vector<1x2x32xf32>
    %592 = vector.shape_cast %591 : vector<1x2x32xf32> to vector<2x32xf32>
    %593 = vector.shape_cast %562 : vector<2x32xf32> to vector<1x2x32xf32>
    tpu.vector_store %arg14[%c7_150, %c0_151, %c0_152], %593 {strides = array<i32>} : memref<8x2x32xf32, #tpu.memory_space<vmem>>, vector<1x2x32xf32>,
    %c0_153 = arith.constant 0 : index
    %c0_154 = arith.constant 0 : index
    %c0_155 = arith.constant 0 : index
    %594 = vector.load %arg15[%c0_153, %c0_154, %c0_155] : memref<8x2x32xf32, #tpu.memory_space<vmem>>, vector<1x2x32xf32>
    %595 = vector.shape_cast %594 : vector<1x2x32xf32> to vector<2x32xf32>
    %596 = vector.shape_cast %590 : vector<2x32xf32> to vector<1x2x32xf32>
    tpu.vector_store %arg15[%c0_153, %c0_154, %c0_155], %596 {strides = array<i32>} : memref<8x2x32xf32, #tpu.memory_space<vmem>>, vector<1x2x32xf32>,
    %c0_156 = arith.constant 0 : index
    %c0_157 = arith.constant 0 : index
    %c0_158 = arith.constant 0 : index
    %597 = vector.load %arg13[%c0_156, %c0_157, %c0_158] : memref<4x2x32xf32, #tpu.memory_space<vmem>>, vector<1x2x32xf32>
    %598 = vector.shape_cast %597 : vector<1x2x32xf32> to vector<2x32xf32>
    %599 = vector.shape_cast %562 : vector<2x32xf32> to vector<1x2x32xf32>
    tpu.vector_store %arg13[%c0_156, %c0_157, %c0_158], %599 {strides = array<i32>} : memref<4x2x32xf32, #tpu.memory_space<vmem>>, vector<1x2x32xf32>,
    %c1_159 = arith.constant 1 : index
    %c0_160 = arith.constant 0 : index
    %c0_161 = arith.constant 0 : index
    %600 = vector.load %arg13[%c1_159, %c0_160, %c0_161] : memref<4x2x32xf32, #tpu.memory_space<vmem>>, vector<1x2x32xf32>
    %601 = vector.shape_cast %600 : vector<1x2x32xf32> to vector<2x32xf32>
    %602 = vector.shape_cast %590 : vector<2x32xf32> to vector<1x2x32xf32>
    tpu.vector_store %arg13[%c1_159, %c0_160, %c0_161], %602 {strides = array<i32>} : memref<4x2x32xf32, #tpu.memory_space<vmem>>, vector<1x2x32xf32>,
    %c0_162 = arith.constant 0 : index
    %c0_163 = arith.constant 0 : index
    %c0_164 = arith.constant 0 : index
    %603 = vector.load %arg14[%c0_162, %c0_163, %c0_164] : memref<8x2x32xf32, #tpu.memory_space<vmem>>, vector<8x2x32xf32>
    %c0_165 = arith.constant 0 : index
    %c0_166 = arith.constant 0 : index
    %c0_167 = arith.constant 0 : index
    %604 = vector.load %arg15[%c0_165, %c0_166, %c0_167] : memref<8x2x32xf32, #tpu.memory_space<vmem>>, vector<8x2x32xf32>
    %605 = tpu.concatenate %603, %604 in 2 : vector<8x2x32xf32>, vector<8x2x32xf32> -> vector<8x2x64xf32>
    %606 = vector.shape_cast %605 : vector<8x2x64xf32> to vector<16x64xf32>
    %c0_168 = arith.constant 0 : index
    %c0_169 = arith.constant 0 : index
    %c0_170 = arith.constant 0 : index
    %607 = vector.load %arg5[%c0_168, %c0_169, %c0_170] : memref<2x64x96xf32, #tpu.memory_space<vmem>>, vector<2x64x96xf32>
    %c0_171 = arith.constant 0 : index
    %c0_172 = arith.constant 0 : index
    %c0_173 = arith.constant 0 : index
    %c0_174 = arith.constant 0 : index
    %608 = vector.load %arg6[%c0_171, %c0_172, %c0_173, %c0_174] : memref<2x3x32x32xf32, #tpu.memory_space<vmem>>, vector<2x3x32x32xf32>
    %c0_175 = arith.constant 0 : index
    %c0_176 = arith.constant 0 : index
    %c0_177 = arith.constant 0 : index
    %609 = vector.load %arg7[%c0_175, %c0_176, %c0_177] : memref<2x1x96xf32, #tpu.memory_space<vmem>>, vector<2x1x96xf32>
    %c0_178 = arith.constant 0 : index
    %c0_179 = arith.constant 0 : index
    %c0_180 = arith.constant 0 : index
    %610 = vector.load %arg8[%c0_178, %c0_179, %c0_180] : memref<2x1x32xf32, #tpu.memory_space<vmem>>, vector<2x1x32xf32>
    %611 = vector.extract_strided_slice %0 {offsets = [2, 0, 0], sizes = [1, 2, 32], strides = [1, 1, 1]} : vector<4x2x32xf32> to vector<1x2x32xf32>
    %612 = vector.shape_cast %611 : vector<1x2x32xf32> to vector<2x32xf32>
    %613 = vector.extract_strided_slice %0 {offsets = [3, 0, 0], sizes = [1, 2, 32], strides = [1, 1, 1]} : vector<4x2x32xf32> to vector<1x2x32xf32>
    %614 = vector.shape_cast %613 : vector<1x2x32xf32> to vector<2x32xf32>
    %615 = vector.extract_strided_slice %607 {offsets = [0, 0, 0], sizes = [1, 64, 96], strides = [1, 1, 1]} : vector<2x64x96xf32> to vector<1x64x96xf32>
    %616 = vector.shape_cast %615 : vector<1x64x96xf32> to vector<64x96xf32>
    %cst_181 = arith.constant dense<0.000000e+00> : vector<16x96xf32>
    %617 = tpu.matmul %606, %616, %cst_181 {dimension_numbers = #tpu.dot_dimension_numbers<[1], [0], [0], [1], [0, 0, 1, 1], [], []>} : vector<16x64xf32>, vector<64x96xf32>, vector<16x96xf32> -> vector<16x96xf32>
    %618 = vector.extract_strided_slice %609 {offsets = [0, 0, 0], sizes = [1, 1, 96], strides = [1, 1, 1]} : vector<2x1x96xf32> to vector<1x1x96xf32>
    %619 = vector.shape_cast %618 : vector<1x1x96xf32> to vector<1x96xf32>
    %620 = vector.broadcast %619 : vector<1x96xf32> to vector<16x96xf32>
    %621 = arith.addf %617, %620 : vector<16x96xf32>
    %622 = vector.extract_strided_slice %621 {offsets = [0, 0], sizes = [16, 32], strides = [1, 1]} : vector<16x96xf32> to vector<16x32xf32>
    %623 = vector.shape_cast %622 : vector<16x32xf32> to vector<8x2x32xf32>
    %624 = vector.extract_strided_slice %621 {offsets = [0, 32], sizes = [16, 32], strides = [1, 1]} : vector<16x96xf32> to vector<16x32xf32>
    %625 = vector.shape_cast %624 : vector<16x32xf32> to vector<8x2x32xf32>
    %626 = vector.extract_strided_slice %621 {offsets = [0, 64], sizes = [16, 32], strides = [1, 1]} : vector<16x96xf32> to vector<16x32xf32>
    %627 = vector.shape_cast %626 : vector<16x32xf32> to vector<8x2x32xf32>
    %628 = vector.extract_strided_slice %607 {offsets = [1, 0, 0], sizes = [1, 64, 96], strides = [1, 1, 1]} : vector<2x64x96xf32> to vector<1x64x96xf32>
    %629 = vector.shape_cast %628 : vector<1x64x96xf32> to vector<64x96xf32>
    %cst_182 = arith.constant dense<0.000000e+00> : vector<16x96xf32>
    %630 = tpu.matmul %606, %629, %cst_182 {dimension_numbers = #tpu.dot_dimension_numbers<[1], [0], [0], [1], [0, 0, 1, 1], [], []>} : vector<16x64xf32>, vector<64x96xf32>, vector<16x96xf32> -> vector<16x96xf32>
    %631 = vector.extract_strided_slice %609 {offsets = [1, 0, 0], sizes = [1, 1, 96], strides = [1, 1, 1]} : vector<2x1x96xf32> to vector<1x1x96xf32>
    %632 = vector.shape_cast %631 : vector<1x1x96xf32> to vector<1x96xf32>
    %633 = vector.broadcast %632 : vector<1x96xf32> to vector<16x96xf32>
    %634 = arith.addf %630, %633 : vector<16x96xf32>
    %635 = vector.extract_strided_slice %634 {offsets = [0, 0], sizes = [16, 32], strides = [1, 1]} : vector<16x96xf32> to vector<16x32xf32>
    %636 = vector.shape_cast %635 : vector<16x32xf32> to vector<8x2x32xf32>
    %637 = vector.extract_strided_slice %634 {offsets = [0, 32], sizes = [16, 32], strides = [1, 1]} : vector<16x96xf32> to vector<16x32xf32>
    %638 = vector.shape_cast %637 : vector<16x32xf32> to vector<8x2x32xf32>
    %639 = vector.extract_strided_slice %634 {offsets = [0, 64], sizes = [16, 32], strides = [1, 1]} : vector<16x96xf32> to vector<16x32xf32>
    %640 = vector.shape_cast %639 : vector<16x32xf32> to vector<8x2x32xf32>
    %641 = vector.extract_strided_slice %608 {offsets = [0, 0, 0, 0], sizes = [1, 1, 32, 32], strides = [1, 1, 1, 1]} : vector<2x3x32x32xf32> to vector<1x1x32x32xf32>
    %642 = vector.shape_cast %641 : vector<1x1x32x32xf32> to vector<32x32xf32>
    %643 = vector.extract_strided_slice %608 {offsets = [0, 1, 0, 0], sizes = [1, 1, 32, 32], strides = [1, 1, 1, 1]} : vector<2x3x32x32xf32> to vector<1x1x32x32xf32>
    %644 = vector.shape_cast %643 : vector<1x1x32x32xf32> to vector<32x32xf32>
    %645 = vector.extract_strided_slice %608 {offsets = [0, 2, 0, 0], sizes = [1, 1, 32, 32], strides = [1, 1, 1, 1]} : vector<2x3x32x32xf32> to vector<1x1x32x32xf32>
    %646 = vector.shape_cast %645 : vector<1x1x32x32xf32> to vector<32x32xf32>
    %647 = vector.extract_strided_slice %608 {offsets = [1, 0, 0, 0], sizes = [1, 1, 32, 32], strides = [1, 1, 1, 1]} : vector<2x3x32x32xf32> to vector<1x1x32x32xf32>
    %648 = vector.shape_cast %647 : vector<1x1x32x32xf32> to vector<32x32xf32>
    %649 = vector.extract_strided_slice %608 {offsets = [1, 1, 0, 0], sizes = [1, 1, 32, 32], strides = [1, 1, 1, 1]} : vector<2x3x32x32xf32> to vector<1x1x32x32xf32>
    %650 = vector.shape_cast %649 : vector<1x1x32x32xf32> to vector<32x32xf32>
    %651 = vector.extract_strided_slice %608 {offsets = [1, 2, 0, 0], sizes = [1, 1, 32, 32], strides = [1, 1, 1, 1]} : vector<2x3x32x32xf32> to vector<1x1x32x32xf32>
    %652 = vector.shape_cast %651 : vector<1x1x32x32xf32> to vector<32x32xf32>
    %653 = vector.extract_strided_slice %610 {offsets = [0, 0, 0], sizes = [1, 1, 32], strides = [1, 1, 1]} : vector<2x1x32xf32> to vector<1x1x32xf32>
    %654 = vector.shape_cast %653 : vector<1x1x32xf32> to vector<1x32xf32>
    %655 = vector.extract_strided_slice %610 {offsets = [1, 0, 0], sizes = [1, 1, 32], strides = [1, 1, 1]} : vector<2x1x32xf32> to vector<1x1x32xf32>
    %656 = vector.shape_cast %655 : vector<1x1x32xf32> to vector<1x32xf32>
    %cst_183 = arith.constant dense<0.000000e+00> : vector<2x32xf32>
    %657 = tpu.matmul %612, %642, %cst_183 {dimension_numbers = #tpu.dot_dimension_numbers<[1], [0], [0], [1], [0, 0, 1, 1], [], []>} : vector<2x32xf32>, vector<32x32xf32>, vector<2x32xf32> -> vector<2x32xf32>
    %cst_184 = arith.constant dense<0.000000e+00> : vector<2x32xf32>
    %658 = tpu.matmul %612, %644, %cst_184 {dimension_numbers = #tpu.dot_dimension_numbers<[1], [0], [0], [1], [0, 0, 1, 1], [], []>} : vector<2x32xf32>, vector<32x32xf32>, vector<2x32xf32> -> vector<2x32xf32>
    %cst_185 = arith.constant dense<0.000000e+00> : vector<2x32xf32>
    %659 = tpu.matmul %612, %646, %cst_185 {dimension_numbers = #tpu.dot_dimension_numbers<[1], [0], [0], [1], [0, 0, 1, 1], [], []>} : vector<2x32xf32>, vector<32x32xf32>, vector<2x32xf32> -> vector<2x32xf32>
    %cst_186 = arith.constant dense<0.000000e+00> : vector<2x32xf32>
    %660 = tpu.matmul %614, %648, %cst_186 {dimension_numbers = #tpu.dot_dimension_numbers<[1], [0], [0], [1], [0, 0, 1, 1], [], []>} : vector<2x32xf32>, vector<32x32xf32>, vector<2x32xf32> -> vector<2x32xf32>
    %cst_187 = arith.constant dense<0.000000e+00> : vector<2x32xf32>
    %661 = tpu.matmul %614, %650, %cst_187 {dimension_numbers = #tpu.dot_dimension_numbers<[1], [0], [0], [1], [0, 0, 1, 1], [], []>} : vector<2x32xf32>, vector<32x32xf32>, vector<2x32xf32> -> vector<2x32xf32>
    %cst_188 = arith.constant dense<0.000000e+00> : vector<2x32xf32>
    %662 = tpu.matmul %614, %652, %cst_188 {dimension_numbers = #tpu.dot_dimension_numbers<[1], [0], [0], [1], [0, 0, 1, 1], [], []>} : vector<2x32xf32>, vector<32x32xf32>, vector<2x32xf32> -> vector<2x32xf32>
    %663 = vector.extract_strided_slice %623 {offsets = [0, 0, 0], sizes = [1, 2, 32], strides = [1, 1, 1]} : vector<8x2x32xf32> to vector<1x2x32xf32>
    %664 = vector.shape_cast %663 : vector<1x2x32xf32> to vector<2x32xf32>
    %665 = arith.addf %664, %657 : vector<2x32xf32>
    %666 = arith.negf %665 : vector<2x32xf32>
    %667 = math.exp %666 : vector<2x32xf32>
    %cst_189 = arith.constant 1.000000e+00 : f32
    %668 = vector.broadcast %cst_189 : f32 to vector<2x32xf32>
    %669 = arith.addf %668, %667 : vector<2x32xf32>
    %670 = arith.divf %668, %669 : vector<2x32xf32>
    %671 = vector.extract_strided_slice %625 {offsets = [0, 0, 0], sizes = [1, 2, 32], strides = [1, 1, 1]} : vector<8x2x32xf32> to vector<1x2x32xf32>
    %672 = vector.shape_cast %671 : vector<1x2x32xf32> to vector<2x32xf32>
    %673 = arith.addf %672, %658 : vector<2x32xf32>
    %674 = arith.negf %673 : vector<2x32xf32>
    %675 = math.exp %674 : vector<2x32xf32>
    %cst_190 = arith.constant 1.000000e+00 : f32
    %676 = vector.broadcast %cst_190 : f32 to vector<2x32xf32>
    %677 = arith.addf %676, %675 : vector<2x32xf32>
    %678 = arith.divf %676, %677 : vector<2x32xf32>
    %679 = vector.extract_strided_slice %627 {offsets = [0, 0, 0], sizes = [1, 2, 32], strides = [1, 1, 1]} : vector<8x2x32xf32> to vector<1x2x32xf32>
    %680 = vector.shape_cast %679 : vector<1x2x32xf32> to vector<2x32xf32>
    %681 = vector.broadcast %654 : vector<1x32xf32> to vector<2x32xf32>
    %682 = arith.addf %659, %681 : vector<2x32xf32>
    %683 = arith.mulf %670, %682 : vector<2x32xf32>
    %684 = arith.addf %680, %683 : vector<2x32xf32>
    %685 = math.tanh %684 : vector<2x32xf32>
    %cst_191 = arith.constant 1.000000e+00 : f32
    %686 = vector.broadcast %cst_191 : f32 to vector<2x32xf32>
    %687 = arith.subf %686, %678 : vector<2x32xf32>
    %688 = arith.mulf %687, %685 : vector<2x32xf32>
    %689 = arith.mulf %678, %612 : vector<2x32xf32>
    %690 = arith.addf %688, %689 : vector<2x32xf32>
    %691 = vector.extract_strided_slice %636 {offsets = [7, 0, 0], sizes = [1, 2, 32], strides = [1, 1, 1]} : vector<8x2x32xf32> to vector<1x2x32xf32>
    %692 = vector.shape_cast %691 : vector<1x2x32xf32> to vector<2x32xf32>
    %693 = arith.addf %692, %660 : vector<2x32xf32>
    %694 = arith.negf %693 : vector<2x32xf32>
    %695 = math.exp %694 : vector<2x32xf32>
    %cst_192 = arith.constant 1.000000e+00 : f32
    %696 = vector.broadcast %cst_192 : f32 to vector<2x32xf32>
    %697 = arith.addf %696, %695 : vector<2x32xf32>
    %698 = arith.divf %696, %697 : vector<2x32xf32>
    %699 = vector.extract_strided_slice %638 {offsets = [7, 0, 0], sizes = [1, 2, 32], strides = [1, 1, 1]} : vector<8x2x32xf32> to vector<1x2x32xf32>
    %700 = vector.shape_cast %699 : vector<1x2x32xf32> to vector<2x32xf32>
    %701 = arith.addf %700, %661 : vector<2x32xf32>
    %702 = arith.negf %701 : vector<2x32xf32>
    %703 = math.exp %702 : vector<2x32xf32>
    %cst_193 = arith.constant 1.000000e+00 : f32
    %704 = vector.broadcast %cst_193 : f32 to vector<2x32xf32>
    %705 = arith.addf %704, %703 : vector<2x32xf32>
    %706 = arith.divf %704, %705 : vector<2x32xf32>
    %707 = vector.extract_strided_slice %640 {offsets = [7, 0, 0], sizes = [1, 2, 32], strides = [1, 1, 1]} : vector<8x2x32xf32> to vector<1x2x32xf32>
    %708 = vector.shape_cast %707 : vector<1x2x32xf32> to vector<2x32xf32>
    %709 = vector.broadcast %656 : vector<1x32xf32> to vector<2x32xf32>
    %710 = arith.addf %662, %709 : vector<2x32xf32>
    %711 = arith.mulf %698, %710 : vector<2x32xf32>
    %712 = arith.addf %708, %711 : vector<2x32xf32>
    %713 = math.tanh %712 : vector<2x32xf32>
    %cst_194 = arith.constant 1.000000e+00 : f32
    %714 = vector.broadcast %cst_194 : f32 to vector<2x32xf32>
    %715 = arith.subf %714, %706 : vector<2x32xf32>
    %716 = arith.mulf %715, %713 : vector<2x32xf32>
    %717 = arith.mulf %706, %614 : vector<2x32xf32>
    %718 = arith.addf %716, %717 : vector<2x32xf32>
    %c0_195 = arith.constant 0 : index
    %c0_196 = arith.constant 0 : index
    %c0_197 = arith.constant 0 : index
    %719 = vector.load %arg16[%c0_195, %c0_196, %c0_197] : memref<8x2x32xf32, #tpu.memory_space<vmem>>, vector<1x2x32xf32>
    %720 = vector.shape_cast %719 : vector<1x2x32xf32> to vector<2x32xf32>
    %721 = vector.shape_cast %690 : vector<2x32xf32> to vector<1x2x32xf32>
    tpu.vector_store %arg16[%c0_195, %c0_196, %c0_197], %721 {strides = array<i32>} : memref<8x2x32xf32, #tpu.memory_space<vmem>>, vector<1x2x32xf32>,
    %c7_198 = arith.constant 7 : index
    %c0_199 = arith.constant 0 : index
    %c0_200 = arith.constant 0 : index
    %722 = vector.load %arg17[%c7_198, %c0_199, %c0_200] : memref<8x2x32xf32, #tpu.memory_space<vmem>>, vector<1x2x32xf32>
    %723 = vector.shape_cast %722 : vector<1x2x32xf32> to vector<2x32xf32>
    %724 = vector.shape_cast %718 : vector<2x32xf32> to vector<1x2x32xf32>
    tpu.vector_store %arg17[%c7_198, %c0_199, %c0_200], %724 {strides = array<i32>} : memref<8x2x32xf32, #tpu.memory_space<vmem>>, vector<1x2x32xf32>,
    %cst_201 = arith.constant dense<0.000000e+00> : vector<2x32xf32>
    %725 = tpu.matmul %690, %642, %cst_201 {dimension_numbers = #tpu.dot_dimension_numbers<[1], [0], [0], [1], [0, 0, 1, 1], [], []>} : vector<2x32xf32>, vector<32x32xf32>, vector<2x32xf32> -> vector<2x32xf32>
    %cst_202 = arith.constant dense<0.000000e+00> : vector<2x32xf32>
    %726 = tpu.matmul %690, %644, %cst_202 {dimension_numbers = #tpu.dot_dimension_numbers<[1], [0], [0], [1], [0, 0, 1, 1], [], []>} : vector<2x32xf32>, vector<32x32xf32>, vector<2x32xf32> -> vector<2x32xf32>
    %cst_203 = arith.constant dense<0.000000e+00> : vector<2x32xf32>
    %727 = tpu.matmul %690, %646, %cst_203 {dimension_numbers = #tpu.dot_dimension_numbers<[1], [0], [0], [1], [0, 0, 1, 1], [], []>} : vector<2x32xf32>, vector<32x32xf32>, vector<2x32xf32> -> vector<2x32xf32>
    %cst_204 = arith.constant dense<0.000000e+00> : vector<2x32xf32>
    %728 = tpu.matmul %718, %648, %cst_204 {dimension_numbers = #tpu.dot_dimension_numbers<[1], [0], [0], [1], [0, 0, 1, 1], [], []>} : vector<2x32xf32>, vector<32x32xf32>, vector<2x32xf32> -> vector<2x32xf32>
    %cst_205 = arith.constant dense<0.000000e+00> : vector<2x32xf32>
    %729 = tpu.matmul %718, %650, %cst_205 {dimension_numbers = #tpu.dot_dimension_numbers<[1], [0], [0], [1], [0, 0, 1, 1], [], []>} : vector<2x32xf32>, vector<32x32xf32>, vector<2x32xf32> -> vector<2x32xf32>
    %cst_206 = arith.constant dense<0.000000e+00> : vector<2x32xf32>
    %730 = tpu.matmul %718, %652, %cst_206 {dimension_numbers = #tpu.dot_dimension_numbers<[1], [0], [0], [1], [0, 0, 1, 1], [], []>} : vector<2x32xf32>, vector<32x32xf32>, vector<2x32xf32> -> vector<2x32xf32>
    %731 = vector.extract_strided_slice %623 {offsets = [1, 0, 0], sizes = [1, 2, 32], strides = [1, 1, 1]} : vector<8x2x32xf32> to vector<1x2x32xf32>
    %732 = vector.shape_cast %731 : vector<1x2x32xf32> to vector<2x32xf32>
    %733 = arith.addf %732, %725 : vector<2x32xf32>
    %734 = arith.negf %733 : vector<2x32xf32>
    %735 = math.exp %734 : vector<2x32xf32>
    %cst_207 = arith.constant 1.000000e+00 : f32
    %736 = vector.broadcast %cst_207 : f32 to vector<2x32xf32>
    %737 = arith.addf %736, %735 : vector<2x32xf32>
    %738 = arith.divf %736, %737 : vector<2x32xf32>
    %739 = vector.extract_strided_slice %625 {offsets = [1, 0, 0], sizes = [1, 2, 32], strides = [1, 1, 1]} : vector<8x2x32xf32> to vector<1x2x32xf32>
    %740 = vector.shape_cast %739 : vector<1x2x32xf32> to vector<2x32xf32>
    %741 = arith.addf %740, %726 : vector<2x32xf32>
    %742 = arith.negf %741 : vector<2x32xf32>
    %743 = math.exp %742 : vector<2x32xf32>
    %cst_208 = arith.constant 1.000000e+00 : f32
    %744 = vector.broadcast %cst_208 : f32 to vector<2x32xf32>
    %745 = arith.addf %744, %743 : vector<2x32xf32>
    %746 = arith.divf %744, %745 : vector<2x32xf32>
    %747 = vector.extract_strided_slice %627 {offsets = [1, 0, 0], sizes = [1, 2, 32], strides = [1, 1, 1]} : vector<8x2x32xf32> to vector<1x2x32xf32>
    %748 = vector.shape_cast %747 : vector<1x2x32xf32> to vector<2x32xf32>
    %749 = vector.broadcast %654 : vector<1x32xf32> to vector<2x32xf32>
    %750 = arith.addf %727, %749 : vector<2x32xf32>
    %751 = arith.mulf %738, %750 : vector<2x32xf32>
    %752 = arith.addf %748, %751 : vector<2x32xf32>
    %753 = math.tanh %752 : vector<2x32xf32>
    %cst_209 = arith.constant 1.000000e+00 : f32
    %754 = vector.broadcast %cst_209 : f32 to vector<2x32xf32>
    %755 = arith.subf %754, %746 : vector<2x32xf32>
    %756 = arith.mulf %755, %753 : vector<2x32xf32>
    %757 = arith.mulf %746, %690 : vector<2x32xf32>
    %758 = arith.addf %756, %757 : vector<2x32xf32>
    %759 = vector.extract_strided_slice %636 {offsets = [6, 0, 0], sizes = [1, 2, 32], strides = [1, 1, 1]} : vector<8x2x32xf32> to vector<1x2x32xf32>
    %760 = vector.shape_cast %759 : vector<1x2x32xf32> to vector<2x32xf32>
    %761 = arith.addf %760, %728 : vector<2x32xf32>
    %762 = arith.negf %761 : vector<2x32xf32>
    %763 = math.exp %762 : vector<2x32xf32>
    %cst_210 = arith.constant 1.000000e+00 : f32
    %764 = vector.broadcast %cst_210 : f32 to vector<2x32xf32>
    %765 = arith.addf %764, %763 : vector<2x32xf32>
    %766 = arith.divf %764, %765 : vector<2x32xf32>
    %767 = vector.extract_strided_slice %638 {offsets = [6, 0, 0], sizes = [1, 2, 32], strides = [1, 1, 1]} : vector<8x2x32xf32> to vector<1x2x32xf32>
    %768 = vector.shape_cast %767 : vector<1x2x32xf32> to vector<2x32xf32>
    %769 = arith.addf %768, %729 : vector<2x32xf32>
    %770 = arith.negf %769 : vector<2x32xf32>
    %771 = math.exp %770 : vector<2x32xf32>
    %cst_211 = arith.constant 1.000000e+00 : f32
    %772 = vector.broadcast %cst_211 : f32 to vector<2x32xf32>
    %773 = arith.addf %772, %771 : vector<2x32xf32>
    %774 = arith.divf %772, %773 : vector<2x32xf32>
    %775 = vector.extract_strided_slice %640 {offsets = [6, 0, 0], sizes = [1, 2, 32], strides = [1, 1, 1]} : vector<8x2x32xf32> to vector<1x2x32xf32>
    %776 = vector.shape_cast %775 : vector<1x2x32xf32> to vector<2x32xf32>
    %777 = vector.broadcast %656 : vector<1x32xf32> to vector<2x32xf32>
    %778 = arith.addf %730, %777 : vector<2x32xf32>
    %779 = arith.mulf %766, %778 : vector<2x32xf32>
    %780 = arith.addf %776, %779 : vector<2x32xf32>
    %781 = math.tanh %780 : vector<2x32xf32>
    %cst_212 = arith.constant 1.000000e+00 : f32
    %782 = vector.broadcast %cst_212 : f32 to vector<2x32xf32>
    %783 = arith.subf %782, %774 : vector<2x32xf32>
    %784 = arith.mulf %783, %781 : vector<2x32xf32>
    %785 = arith.mulf %774, %718 : vector<2x32xf32>
    %786 = arith.addf %784, %785 : vector<2x32xf32>
    %c1_213 = arith.constant 1 : index
    %c0_214 = arith.constant 0 : index
    %c0_215 = arith.constant 0 : index
    %787 = vector.load %arg16[%c1_213, %c0_214, %c0_215] : memref<8x2x32xf32, #tpu.memory_space<vmem>>, vector<1x2x32xf32>
    %788 = vector.shape_cast %787 : vector<1x2x32xf32> to vector<2x32xf32>
    %789 = vector.shape_cast %758 : vector<2x32xf32> to vector<1x2x32xf32>
    tpu.vector_store %arg16[%c1_213, %c0_214, %c0_215], %789 {strides = array<i32>} : memref<8x2x32xf32, #tpu.memory_space<vmem>>, vector<1x2x32xf32>,
    %c6_216 = arith.constant 6 : index
    %c0_217 = arith.constant 0 : index
    %c0_218 = arith.constant 0 : index
    %790 = vector.load %arg17[%c6_216, %c0_217, %c0_218] : memref<8x2x32xf32, #tpu.memory_space<vmem>>, vector<1x2x32xf32>
    %791 = vector.shape_cast %790 : vector<1x2x32xf32> to vector<2x32xf32>
    %792 = vector.shape_cast %786 : vector<2x32xf32> to vector<1x2x32xf32>
    tpu.vector_store %arg17[%c6_216, %c0_217, %c0_218], %792 {strides = array<i32>} : memref<8x2x32xf32, #tpu.memory_space<vmem>>, vector<1x2x32xf32>,
    %cst_219 = arith.constant dense<0.000000e+00> : vector<2x32xf32>
    %793 = tpu.matmul %758, %642, %cst_219 {dimension_numbers = #tpu.dot_dimension_numbers<[1], [0], [0], [1], [0, 0, 1, 1], [], []>} : vector<2x32xf32>, vector<32x32xf32>, vector<2x32xf32> -> vector<2x32xf32>
    %cst_220 = arith.constant dense<0.000000e+00> : vector<2x32xf32>
    %794 = tpu.matmul %758, %644, %cst_220 {dimension_numbers = #tpu.dot_dimension_numbers<[1], [0], [0], [1], [0, 0, 1, 1], [], []>} : vector<2x32xf32>, vector<32x32xf32>, vector<2x32xf32> -> vector<2x32xf32>
    %cst_221 = arith.constant dense<0.000000e+00> : vector<2x32xf32>
    %795 = tpu.matmul %758, %646, %cst_221 {dimension_numbers = #tpu.dot_dimension_numbers<[1], [0], [0], [1], [0, 0, 1, 1], [], []>} : vector<2x32xf32>, vector<32x32xf32>, vector<2x32xf32> -> vector<2x32xf32>
    %cst_222 = arith.constant dense<0.000000e+00> : vector<2x32xf32>
    %796 = tpu.matmul %786, %648, %cst_222 {dimension_numbers = #tpu.dot_dimension_numbers<[1], [0], [0], [1], [0, 0, 1, 1], [], []>} : vector<2x32xf32>, vector<32x32xf32>, vector<2x32xf32> -> vector<2x32xf32>
    %cst_223 = arith.constant dense<0.000000e+00> : vector<2x32xf32>
    %797 = tpu.matmul %786, %650, %cst_223 {dimension_numbers = #tpu.dot_dimension_numbers<[1], [0], [0], [1], [0, 0, 1, 1], [], []>} : vector<2x32xf32>, vector<32x32xf32>, vector<2x32xf32> -> vector<2x32xf32>
    %cst_224 = arith.constant dense<0.000000e+00> : vector<2x32xf32>
    %798 = tpu.matmul %786, %652, %cst_224 {dimension_numbers = #tpu.dot_dimension_numbers<[1], [0], [0], [1], [0, 0, 1, 1], [], []>} : vector<2x32xf32>, vector<32x32xf32>, vector<2x32xf32> -> vector<2x32xf32>
    %799 = vector.extract_strided_slice %623 {offsets = [2, 0, 0], sizes = [1, 2, 32], strides = [1, 1, 1]} : vector<8x2x32xf32> to vector<1x2x32xf32>
    %800 = vector.shape_cast %799 : vector<1x2x32xf32> to vector<2x32xf32>
    %801 = arith.addf %800, %793 : vector<2x32xf32>
    %802 = arith.negf %801 : vector<2x32xf32>
    %803 = math.exp %802 : vector<2x32xf32>
    %cst_225 = arith.constant 1.000000e+00 : f32
    %804 = vector.broadcast %cst_225 : f32 to vector<2x32xf32>
    %805 = arith.addf %804, %803 : vector<2x32xf32>
    %806 = arith.divf %804, %805 : vector<2x32xf32>
    %807 = vector.extract_strided_slice %625 {offsets = [2, 0, 0], sizes = [1, 2, 32], strides = [1, 1, 1]} : vector<8x2x32xf32> to vector<1x2x32xf32>
    %808 = vector.shape_cast %807 : vector<1x2x32xf32> to vector<2x32xf32>
    %809 = arith.addf %808, %794 : vector<2x32xf32>
    %810 = arith.negf %809 : vector<2x32xf32>
    %811 = math.exp %810 : vector<2x32xf32>
    %cst_226 = arith.constant 1.000000e+00 : f32
    %812 = vector.broadcast %cst_226 : f32 to vector<2x32xf32>
    %813 = arith.addf %812, %811 : vector<2x32xf32>
    %814 = arith.divf %812, %813 : vector<2x32xf32>
    %815 = vector.extract_strided_slice %627 {offsets = [2, 0, 0], sizes = [1, 2, 32], strides = [1, 1, 1]} : vector<8x2x32xf32> to vector<1x2x32xf32>
    %816 = vector.shape_cast %815 : vector<1x2x32xf32> to vector<2x32xf32>
    %817 = vector.broadcast %654 : vector<1x32xf32> to vector<2x32xf32>
    %818 = arith.addf %795, %817 : vector<2x32xf32>
    %819 = arith.mulf %806, %818 : vector<2x32xf32>
    %820 = arith.addf %816, %819 : vector<2x32xf32>
    %821 = math.tanh %820 : vector<2x32xf32>
    %cst_227 = arith.constant 1.000000e+00 : f32
    %822 = vector.broadcast %cst_227 : f32 to vector<2x32xf32>
    %823 = arith.subf %822, %814 : vector<2x32xf32>
    %824 = arith.mulf %823, %821 : vector<2x32xf32>
    %825 = arith.mulf %814, %758 : vector<2x32xf32>
    %826 = arith.addf %824, %825 : vector<2x32xf32>
    %827 = vector.extract_strided_slice %636 {offsets = [5, 0, 0], sizes = [1, 2, 32], strides = [1, 1, 1]} : vector<8x2x32xf32> to vector<1x2x32xf32>
    %828 = vector.shape_cast %827 : vector<1x2x32xf32> to vector<2x32xf32>
    %829 = arith.addf %828, %796 : vector<2x32xf32>
    %830 = arith.negf %829 : vector<2x32xf32>
    %831 = math.exp %830 : vector<2x32xf32>
    %cst_228 = arith.constant 1.000000e+00 : f32
    %832 = vector.broadcast %cst_228 : f32 to vector<2x32xf32>
    %833 = arith.addf %832, %831 : vector<2x32xf32>
    %834 = arith.divf %832, %833 : vector<2x32xf32>
    %835 = vector.extract_strided_slice %638 {offsets = [5, 0, 0], sizes = [1, 2, 32], strides = [1, 1, 1]} : vector<8x2x32xf32> to vector<1x2x32xf32>
    %836 = vector.shape_cast %835 : vector<1x2x32xf32> to vector<2x32xf32>
    %837 = arith.addf %836, %797 : vector<2x32xf32>
    %838 = arith.negf %837 : vector<2x32xf32>
    %839 = math.exp %838 : vector<2x32xf32>
    %cst_229 = arith.constant 1.000000e+00 : f32
    %840 = vector.broadcast %cst_229 : f32 to vector<2x32xf32>
    %841 = arith.addf %840, %839 : vector<2x32xf32>
    %842 = arith.divf %840, %841 : vector<2x32xf32>
    %843 = vector.extract_strided_slice %640 {offsets = [5, 0, 0], sizes = [1, 2, 32], strides = [1, 1, 1]} : vector<8x2x32xf32> to vector<1x2x32xf32>
    %844 = vector.shape_cast %843 : vector<1x2x32xf32> to vector<2x32xf32>
    %845 = vector.broadcast %656 : vector<1x32xf32> to vector<2x32xf32>
    %846 = arith.addf %798, %845 : vector<2x32xf32>
    %847 = arith.mulf %834, %846 : vector<2x32xf32>
    %848 = arith.addf %844, %847 : vector<2x32xf32>
    %849 = math.tanh %848 : vector<2x32xf32>
    %cst_230 = arith.constant 1.000000e+00 : f32
    %850 = vector.broadcast %cst_230 : f32 to vector<2x32xf32>
    %851 = arith.subf %850, %842 : vector<2x32xf32>
    %852 = arith.mulf %851, %849 : vector<2x32xf32>
    %853 = arith.mulf %842, %786 : vector<2x32xf32>
    %854 = arith.addf %852, %853 : vector<2x32xf32>
    %c2_231 = arith.constant 2 : index
    %c0_232 = arith.constant 0 : index
    %c0_233 = arith.constant 0 : index
    %855 = vector.load %arg16[%c2_231, %c0_232, %c0_233] : memref<8x2x32xf32, #tpu.memory_space<vmem>>, vector<1x2x32xf32>
    %856 = vector.shape_cast %855 : vector<1x2x32xf32> to vector<2x32xf32>
    %857 = vector.shape_cast %826 : vector<2x32xf32> to vector<1x2x32xf32>
    tpu.vector_store %arg16[%c2_231, %c0_232, %c0_233], %857 {strides = array<i32>} : memref<8x2x32xf32, #tpu.memory_space<vmem>>, vector<1x2x32xf32>,
    %c5_234 = arith.constant 5 : index
    %c0_235 = arith.constant 0 : index
    %c0_236 = arith.constant 0 : index
    %858 = vector.load %arg17[%c5_234, %c0_235, %c0_236] : memref<8x2x32xf32, #tpu.memory_space<vmem>>, vector<1x2x32xf32>
    %859 = vector.shape_cast %858 : vector<1x2x32xf32> to vector<2x32xf32>
    %860 = vector.shape_cast %854 : vector<2x32xf32> to vector<1x2x32xf32>
    tpu.vector_store %arg17[%c5_234, %c0_235, %c0_236], %860 {strides = array<i32>} : memref<8x2x32xf32, #tpu.memory_space<vmem>>, vector<1x2x32xf32>,
    %cst_237 = arith.constant dense<0.000000e+00> : vector<2x32xf32>
    %861 = tpu.matmul %826, %642, %cst_237 {dimension_numbers = #tpu.dot_dimension_numbers<[1], [0], [0], [1], [0, 0, 1, 1], [], []>} : vector<2x32xf32>, vector<32x32xf32>, vector<2x32xf32> -> vector<2x32xf32>
    %cst_238 = arith.constant dense<0.000000e+00> : vector<2x32xf32>
    %862 = tpu.matmul %826, %644, %cst_238 {dimension_numbers = #tpu.dot_dimension_numbers<[1], [0], [0], [1], [0, 0, 1, 1], [], []>} : vector<2x32xf32>, vector<32x32xf32>, vector<2x32xf32> -> vector<2x32xf32>
    %cst_239 = arith.constant dense<0.000000e+00> : vector<2x32xf32>
    %863 = tpu.matmul %826, %646, %cst_239 {dimension_numbers = #tpu.dot_dimension_numbers<[1], [0], [0], [1], [0, 0, 1, 1], [], []>} : vector<2x32xf32>, vector<32x32xf32>, vector<2x32xf32> -> vector<2x32xf32>
    %cst_240 = arith.constant dense<0.000000e+00> : vector<2x32xf32>
    %864 = tpu.matmul %854, %648, %cst_240 {dimension_numbers = #tpu.dot_dimension_numbers<[1], [0], [0], [1], [0, 0, 1, 1], [], []>} : vector<2x32xf32>, vector<32x32xf32>, vector<2x32xf32> -> vector<2x32xf32>
    %cst_241 = arith.constant dense<0.000000e+00> : vector<2x32xf32>
    %865 = tpu.matmul %854, %650, %cst_241 {dimension_numbers = #tpu.dot_dimension_numbers<[1], [0], [0], [1], [0, 0, 1, 1], [], []>} : vector<2x32xf32>, vector<32x32xf32>, vector<2x32xf32> -> vector<2x32xf32>
    %cst_242 = arith.constant dense<0.000000e+00> : vector<2x32xf32>
    %866 = tpu.matmul %854, %652, %cst_242 {dimension_numbers = #tpu.dot_dimension_numbers<[1], [0], [0], [1], [0, 0, 1, 1], [], []>} : vector<2x32xf32>, vector<32x32xf32>, vector<2x32xf32> -> vector<2x32xf32>
    %867 = vector.extract_strided_slice %623 {offsets = [3, 0, 0], sizes = [1, 2, 32], strides = [1, 1, 1]} : vector<8x2x32xf32> to vector<1x2x32xf32>
    %868 = vector.shape_cast %867 : vector<1x2x32xf32> to vector<2x32xf32>
    %869 = arith.addf %868, %861 : vector<2x32xf32>
    %870 = arith.negf %869 : vector<2x32xf32>
    %871 = math.exp %870 : vector<2x32xf32>
    %cst_243 = arith.constant 1.000000e+00 : f32
    %872 = vector.broadcast %cst_243 : f32 to vector<2x32xf32>
    %873 = arith.addf %872, %871 : vector<2x32xf32>
    %874 = arith.divf %872, %873 : vector<2x32xf32>
    %875 = vector.extract_strided_slice %625 {offsets = [3, 0, 0], sizes = [1, 2, 32], strides = [1, 1, 1]} : vector<8x2x32xf32> to vector<1x2x32xf32>
    %876 = vector.shape_cast %875 : vector<1x2x32xf32> to vector<2x32xf32>
    %877 = arith.addf %876, %862 : vector<2x32xf32>
    %878 = arith.negf %877 : vector<2x32xf32>
    %879 = math.exp %878 : vector<2x32xf32>
    %cst_244 = arith.constant 1.000000e+00 : f32
    %880 = vector.broadcast %cst_244 : f32 to vector<2x32xf32>
    %881 = arith.addf %880, %879 : vector<2x32xf32>
    %882 = arith.divf %880, %881 : vector<2x32xf32>
    %883 = vector.extract_strided_slice %627 {offsets = [3, 0, 0], sizes = [1, 2, 32], strides = [1, 1, 1]} : vector<8x2x32xf32> to vector<1x2x32xf32>
    %884 = vector.shape_cast %883 : vector<1x2x32xf32> to vector<2x32xf32>
    %885 = vector.broadcast %654 : vector<1x32xf32> to vector<2x32xf32>
    %886 = arith.addf %863, %885 : vector<2x32xf32>
    %887 = arith.mulf %874, %886 : vector<2x32xf32>
    %888 = arith.addf %884, %887 : vector<2x32xf32>
    %889 = math.tanh %888 : vector<2x32xf32>
    %cst_245 = arith.constant 1.000000e+00 : f32
    %890 = vector.broadcast %cst_245 : f32 to vector<2x32xf32>
    %891 = arith.subf %890, %882 : vector<2x32xf32>
    %892 = arith.mulf %891, %889 : vector<2x32xf32>
    %893 = arith.mulf %882, %826 : vector<2x32xf32>
    %894 = arith.addf %892, %893 : vector<2x32xf32>
    %895 = vector.extract_strided_slice %636 {offsets = [4, 0, 0], sizes = [1, 2, 32], strides = [1, 1, 1]} : vector<8x2x32xf32> to vector<1x2x32xf32>
    %896 = vector.shape_cast %895 : vector<1x2x32xf32> to vector<2x32xf32>
    %897 = arith.addf %896, %864 : vector<2x32xf32>
    %898 = arith.negf %897 : vector<2x32xf32>
    %899 = math.exp %898 : vector<2x32xf32>
    %cst_246 = arith.constant 1.000000e+00 : f32
    %900 = vector.broadcast %cst_246 : f32 to vector<2x32xf32>
    %901 = arith.addf %900, %899 : vector<2x32xf32>
    %902 = arith.divf %900, %901 : vector<2x32xf32>
    %903 = vector.extract_strided_slice %638 {offsets = [4, 0, 0], sizes = [1, 2, 32], strides = [1, 1, 1]} : vector<8x2x32xf32> to vector<1x2x32xf32>
    %904 = vector.shape_cast %903 : vector<1x2x32xf32> to vector<2x32xf32>
    %905 = arith.addf %904, %865 : vector<2x32xf32>
    %906 = arith.negf %905 : vector<2x32xf32>
    %907 = math.exp %906 : vector<2x32xf32>
    %cst_247 = arith.constant 1.000000e+00 : f32
    %908 = vector.broadcast %cst_247 : f32 to vector<2x32xf32>
    %909 = arith.addf %908, %907 : vector<2x32xf32>
    %910 = arith.divf %908, %909 : vector<2x32xf32>
    %911 = vector.extract_strided_slice %640 {offsets = [4, 0, 0], sizes = [1, 2, 32], strides = [1, 1, 1]} : vector<8x2x32xf32> to vector<1x2x32xf32>
    %912 = vector.shape_cast %911 : vector<1x2x32xf32> to vector<2x32xf32>
    %913 = vector.broadcast %656 : vector<1x32xf32> to vector<2x32xf32>
    %914 = arith.addf %866, %913 : vector<2x32xf32>
    %915 = arith.mulf %902, %914 : vector<2x32xf32>
    %916 = arith.addf %912, %915 : vector<2x32xf32>
    %917 = math.tanh %916 : vector<2x32xf32>
    %cst_248 = arith.constant 1.000000e+00 : f32
    %918 = vector.broadcast %cst_248 : f32 to vector<2x32xf32>
    %919 = arith.subf %918, %910 : vector<2x32xf32>
    %920 = arith.mulf %919, %917 : vector<2x32xf32>
    %921 = arith.mulf %910, %854 : vector<2x32xf32>
    %922 = arith.addf %920, %921 : vector<2x32xf32>
    %c3_249 = arith.constant 3 : index
    %c0_250 = arith.constant 0 : index
    %c0_251 = arith.constant 0 : index
    %923 = vector.load %arg16[%c3_249, %c0_250, %c0_251] : memref<8x2x32xf32, #tpu.memory_space<vmem>>, vector<1x2x32xf32>
    %924 = vector.shape_cast %923 : vector<1x2x32xf32> to vector<2x32xf32>
    %925 = vector.shape_cast %894 : vector<2x32xf32> to vector<1x2x32xf32>
    tpu.vector_store %arg16[%c3_249, %c0_250, %c0_251], %925 {strides = array<i32>} : memref<8x2x32xf32, #tpu.memory_space<vmem>>, vector<1x2x32xf32>,
    %c4_252 = arith.constant 4 : index
    %c0_253 = arith.constant 0 : index
    %c0_254 = arith.constant 0 : index
    %926 = vector.load %arg17[%c4_252, %c0_253, %c0_254] : memref<8x2x32xf32, #tpu.memory_space<vmem>>, vector<1x2x32xf32>
    %927 = vector.shape_cast %926 : vector<1x2x32xf32> to vector<2x32xf32>
    %928 = vector.shape_cast %922 : vector<2x32xf32> to vector<1x2x32xf32>
    tpu.vector_store %arg17[%c4_252, %c0_253, %c0_254], %928 {strides = array<i32>} : memref<8x2x32xf32, #tpu.memory_space<vmem>>, vector<1x2x32xf32>,
    %cst_255 = arith.constant dense<0.000000e+00> : vector<2x32xf32>
    %929 = tpu.matmul %894, %642, %cst_255 {dimension_numbers = #tpu.dot_dimension_numbers<[1], [0], [0], [1], [0, 0, 1, 1], [], []>} : vector<2x32xf32>, vector<32x32xf32>, vector<2x32xf32> -> vector<2x32xf32>
    %cst_256 = arith.constant dense<0.000000e+00> : vector<2x32xf32>
    %930 = tpu.matmul %894, %644, %cst_256 {dimension_numbers = #tpu.dot_dimension_numbers<[1], [0], [0], [1], [0, 0, 1, 1], [], []>} : vector<2x32xf32>, vector<32x32xf32>, vector<2x32xf32> -> vector<2x32xf32>
    %cst_257 = arith.constant dense<0.000000e+00> : vector<2x32xf32>
    %931 = tpu.matmul %894, %646, %cst_257 {dimension_numbers = #tpu.dot_dimension_numbers<[1], [0], [0], [1], [0, 0, 1, 1], [], []>} : vector<2x32xf32>, vector<32x32xf32>, vector<2x32xf32> -> vector<2x32xf32>
    %cst_258 = arith.constant dense<0.000000e+00> : vector<2x32xf32>
    %932 = tpu.matmul %922, %648, %cst_258 {dimension_numbers = #tpu.dot_dimension_numbers<[1], [0], [0], [1], [0, 0, 1, 1], [], []>} : vector<2x32xf32>, vector<32x32xf32>, vector<2x32xf32> -> vector<2x32xf32>
    %cst_259 = arith.constant dense<0.000000e+00> : vector<2x32xf32>
    %933 = tpu.matmul %922, %650, %cst_259 {dimension_numbers = #tpu.dot_dimension_numbers<[1], [0], [0], [1], [0, 0, 1, 1], [], []>} : vector<2x32xf32>, vector<32x32xf32>, vector<2x32xf32> -> vector<2x32xf32>
    %cst_260 = arith.constant dense<0.000000e+00> : vector<2x32xf32>
    %934 = tpu.matmul %922, %652, %cst_260 {dimension_numbers = #tpu.dot_dimension_numbers<[1], [0], [0], [1], [0, 0, 1, 1], [], []>} : vector<2x32xf32>, vector<32x32xf32>, vector<2x32xf32> -> vector<2x32xf32>
    %935 = vector.extract_strided_slice %623 {offsets = [4, 0, 0], sizes = [1, 2, 32], strides = [1, 1, 1]} : vector<8x2x32xf32> to vector<1x2x32xf32>
    %936 = vector.shape_cast %935 : vector<1x2x32xf32> to vector<2x32xf32>
    %937 = arith.addf %936, %929 : vector<2x32xf32>
    %938 = arith.negf %937 : vector<2x32xf32>
    %939 = math.exp %938 : vector<2x32xf32>
    %cst_261 = arith.constant 1.000000e+00 : f32
    %940 = vector.broadcast %cst_261 : f32 to vector<2x32xf32>
    %941 = arith.addf %940, %939 : vector<2x32xf32>
    %942 = arith.divf %940, %941 : vector<2x32xf32>
    %943 = vector.extract_strided_slice %625 {offsets = [4, 0, 0], sizes = [1, 2, 32], strides = [1, 1, 1]} : vector<8x2x32xf32> to vector<1x2x32xf32>
    %944 = vector.shape_cast %943 : vector<1x2x32xf32> to vector<2x32xf32>
    %945 = arith.addf %944, %930 : vector<2x32xf32>
    %946 = arith.negf %945 : vector<2x32xf32>
    %947 = math.exp %946 : vector<2x32xf32>
    %cst_262 = arith.constant 1.000000e+00 : f32
    %948 = vector.broadcast %cst_262 : f32 to vector<2x32xf32>
    %949 = arith.addf %948, %947 : vector<2x32xf32>
    %950 = arith.divf %948, %949 : vector<2x32xf32>
    %951 = vector.extract_strided_slice %627 {offsets = [4, 0, 0], sizes = [1, 2, 32], strides = [1, 1, 1]} : vector<8x2x32xf32> to vector<1x2x32xf32>
    %952 = vector.shape_cast %951 : vector<1x2x32xf32> to vector<2x32xf32>
    %953 = vector.broadcast %654 : vector<1x32xf32> to vector<2x32xf32>
    %954 = arith.addf %931, %953 : vector<2x32xf32>
    %955 = arith.mulf %942, %954 : vector<2x32xf32>
    %956 = arith.addf %952, %955 : vector<2x32xf32>
    %957 = math.tanh %956 : vector<2x32xf32>
    %cst_263 = arith.constant 1.000000e+00 : f32
    %958 = vector.broadcast %cst_263 : f32 to vector<2x32xf32>
    %959 = arith.subf %958, %950 : vector<2x32xf32>
    %960 = arith.mulf %959, %957 : vector<2x32xf32>
    %961 = arith.mulf %950, %894 : vector<2x32xf32>
    %962 = arith.addf %960, %961 : vector<2x32xf32>
    %963 = vector.extract_strided_slice %636 {offsets = [3, 0, 0], sizes = [1, 2, 32], strides = [1, 1, 1]} : vector<8x2x32xf32> to vector<1x2x32xf32>
    %964 = vector.shape_cast %963 : vector<1x2x32xf32> to vector<2x32xf32>
    %965 = arith.addf %964, %932 : vector<2x32xf32>
    %966 = arith.negf %965 : vector<2x32xf32>
    %967 = math.exp %966 : vector<2x32xf32>
    %cst_264 = arith.constant 1.000000e+00 : f32
    %968 = vector.broadcast %cst_264 : f32 to vector<2x32xf32>
    %969 = arith.addf %968, %967 : vector<2x32xf32>
    %970 = arith.divf %968, %969 : vector<2x32xf32>
    %971 = vector.extract_strided_slice %638 {offsets = [3, 0, 0], sizes = [1, 2, 32], strides = [1, 1, 1]} : vector<8x2x32xf32> to vector<1x2x32xf32>
    %972 = vector.shape_cast %971 : vector<1x2x32xf32> to vector<2x32xf32>
    %973 = arith.addf %972, %933 : vector<2x32xf32>
    %974 = arith.negf %973 : vector<2x32xf32>
    %975 = math.exp %974 : vector<2x32xf32>
    %cst_265 = arith.constant 1.000000e+00 : f32
    %976 = vector.broadcast %cst_265 : f32 to vector<2x32xf32>
    %977 = arith.addf %976, %975 : vector<2x32xf32>
    %978 = arith.divf %976, %977 : vector<2x32xf32>
    %979 = vector.extract_strided_slice %640 {offsets = [3, 0, 0], sizes = [1, 2, 32], strides = [1, 1, 1]} : vector<8x2x32xf32> to vector<1x2x32xf32>
    %980 = vector.shape_cast %979 : vector<1x2x32xf32> to vector<2x32xf32>
    %981 = vector.broadcast %656 : vector<1x32xf32> to vector<2x32xf32>
    %982 = arith.addf %934, %981 : vector<2x32xf32>
    %983 = arith.mulf %970, %982 : vector<2x32xf32>
    %984 = arith.addf %980, %983 : vector<2x32xf32>
    %985 = math.tanh %984 : vector<2x32xf32>
    %cst_266 = arith.constant 1.000000e+00 : f32
    %986 = vector.broadcast %cst_266 : f32 to vector<2x32xf32>
    %987 = arith.subf %986, %978 : vector<2x32xf32>
    %988 = arith.mulf %987, %985 : vector<2x32xf32>
    %989 = arith.mulf %978, %922 : vector<2x32xf32>
    %990 = arith.addf %988, %989 : vector<2x32xf32>
    %c4_267 = arith.constant 4 : index
    %c0_268 = arith.constant 0 : index
    %c0_269 = arith.constant 0 : index
    %991 = vector.load %arg16[%c4_267, %c0_268, %c0_269] : memref<8x2x32xf32, #tpu.memory_space<vmem>>, vector<1x2x32xf32>
    %992 = vector.shape_cast %991 : vector<1x2x32xf32> to vector<2x32xf32>
    %993 = vector.shape_cast %962 : vector<2x32xf32> to vector<1x2x32xf32>
    tpu.vector_store %arg16[%c4_267, %c0_268, %c0_269], %993 {strides = array<i32>} : memref<8x2x32xf32, #tpu.memory_space<vmem>>, vector<1x2x32xf32>,
    %c3_270 = arith.constant 3 : index
    %c0_271 = arith.constant 0 : index
    %c0_272 = arith.constant 0 : index
    %994 = vector.load %arg17[%c3_270, %c0_271, %c0_272] : memref<8x2x32xf32, #tpu.memory_space<vmem>>, vector<1x2x32xf32>
    %995 = vector.shape_cast %994 : vector<1x2x32xf32> to vector<2x32xf32>
    %996 = vector.shape_cast %990 : vector<2x32xf32> to vector<1x2x32xf32>
    tpu.vector_store %arg17[%c3_270, %c0_271, %c0_272], %996 {strides = array<i32>} : memref<8x2x32xf32, #tpu.memory_space<vmem>>, vector<1x2x32xf32>,
    %cst_273 = arith.constant dense<0.000000e+00> : vector<2x32xf32>
    %997 = tpu.matmul %962, %642, %cst_273 {dimension_numbers = #tpu.dot_dimension_numbers<[1], [0], [0], [1], [0, 0, 1, 1], [], []>} : vector<2x32xf32>, vector<32x32xf32>, vector<2x32xf32> -> vector<2x32xf32>
    %cst_274 = arith.constant dense<0.000000e+00> : vector<2x32xf32>
    %998 = tpu.matmul %962, %644, %cst_274 {dimension_numbers = #tpu.dot_dimension_numbers<[1], [0], [0], [1], [0, 0, 1, 1], [], []>} : vector<2x32xf32>, vector<32x32xf32>, vector<2x32xf32> -> vector<2x32xf32>
    %cst_275 = arith.constant dense<0.000000e+00> : vector<2x32xf32>
    %999 = tpu.matmul %962, %646, %cst_275 {dimension_numbers = #tpu.dot_dimension_numbers<[1], [0], [0], [1], [0, 0, 1, 1], [], []>} : vector<2x32xf32>, vector<32x32xf32>, vector<2x32xf32> -> vector<2x32xf32>
    %cst_276 = arith.constant dense<0.000000e+00> : vector<2x32xf32>
    %1000 = tpu.matmul %990, %648, %cst_276 {dimension_numbers = #tpu.dot_dimension_numbers<[1], [0], [0], [1], [0, 0, 1, 1], [], []>} : vector<2x32xf32>, vector<32x32xf32>, vector<2x32xf32> -> vector<2x32xf32>
    %cst_277 = arith.constant dense<0.000000e+00> : vector<2x32xf32>
    %1001 = tpu.matmul %990, %650, %cst_277 {dimension_numbers = #tpu.dot_dimension_numbers<[1], [0], [0], [1], [0, 0, 1, 1], [], []>} : vector<2x32xf32>, vector<32x32xf32>, vector<2x32xf32> -> vector<2x32xf32>
    %cst_278 = arith.constant dense<0.000000e+00> : vector<2x32xf32>
    %1002 = tpu.matmul %990, %652, %cst_278 {dimension_numbers = #tpu.dot_dimension_numbers<[1], [0], [0], [1], [0, 0, 1, 1], [], []>} : vector<2x32xf32>, vector<32x32xf32>, vector<2x32xf32> -> vector<2x32xf32>
    %1003 = vector.extract_strided_slice %623 {offsets = [5, 0, 0], sizes = [1, 2, 32], strides = [1, 1, 1]} : vector<8x2x32xf32> to vector<1x2x32xf32>
    %1004 = vector.shape_cast %1003 : vector<1x2x32xf32> to vector<2x32xf32>
    %1005 = arith.addf %1004, %997 : vector<2x32xf32>
    %1006 = arith.negf %1005 : vector<2x32xf32>
    %1007 = math.exp %1006 : vector<2x32xf32>
    %cst_279 = arith.constant 1.000000e+00 : f32
    %1008 = vector.broadcast %cst_279 : f32 to vector<2x32xf32>
    %1009 = arith.addf %1008, %1007 : vector<2x32xf32>
    %1010 = arith.divf %1008, %1009 : vector<2x32xf32>
    %1011 = vector.extract_strided_slice %625 {offsets = [5, 0, 0], sizes = [1, 2, 32], strides = [1, 1, 1]} : vector<8x2x32xf32> to vector<1x2x32xf32>
    %1012 = vector.shape_cast %1011 : vector<1x2x32xf32> to vector<2x32xf32>
    %1013 = arith.addf %1012, %998 : vector<2x32xf32>
    %1014 = arith.negf %1013 : vector<2x32xf32>
    %1015 = math.exp %1014 : vector<2x32xf32>
    %cst_280 = arith.constant 1.000000e+00 : f32
    %1016 = vector.broadcast %cst_280 : f32 to vector<2x32xf32>
    %1017 = arith.addf %1016, %1015 : vector<2x32xf32>
    %1018 = arith.divf %1016, %1017 : vector<2x32xf32>
    %1019 = vector.extract_strided_slice %627 {offsets = [5, 0, 0], sizes = [1, 2, 32], strides = [1, 1, 1]} : vector<8x2x32xf32> to vector<1x2x32xf32>
    %1020 = vector.shape_cast %1019 : vector<1x2x32xf32> to vector<2x32xf32>
    %1021 = vector.broadcast %654 : vector<1x32xf32> to vector<2x32xf32>
    %1022 = arith.addf %999, %1021 : vector<2x32xf32>
    %1023 = arith.mulf %1010, %1022 : vector<2x32xf32>
    %1024 = arith.addf %1020, %1023 : vector<2x32xf32>
    %1025 = math.tanh %1024 : vector<2x32xf32>
    %cst_281 = arith.constant 1.000000e+00 : f32
    %1026 = vector.broadcast %cst_281 : f32 to vector<2x32xf32>
    %1027 = arith.subf %1026, %1018 : vector<2x32xf32>
    %1028 = arith.mulf %1027, %1025 : vector<2x32xf32>
    %1029 = arith.mulf %1018, %962 : vector<2x32xf32>
    %1030 = arith.addf %1028, %1029 : vector<2x32xf32>
    %1031 = vector.extract_strided_slice %636 {offsets = [2, 0, 0], sizes = [1, 2, 32], strides = [1, 1, 1]} : vector<8x2x32xf32> to vector<1x2x32xf32>
    %1032 = vector.shape_cast %1031 : vector<1x2x32xf32> to vector<2x32xf32>
    %1033 = arith.addf %1032, %1000 : vector<2x32xf32>
    %1034 = arith.negf %1033 : vector<2x32xf32>
    %1035 = math.exp %1034 : vector<2x32xf32>
    %cst_282 = arith.constant 1.000000e+00 : f32
    %1036 = vector.broadcast %cst_282 : f32 to vector<2x32xf32>
    %1037 = arith.addf %1036, %1035 : vector<2x32xf32>
    %1038 = arith.divf %1036, %1037 : vector<2x32xf32>
    %1039 = vector.extract_strided_slice %638 {offsets = [2, 0, 0], sizes = [1, 2, 32], strides = [1, 1, 1]} : vector<8x2x32xf32> to vector<1x2x32xf32>
    %1040 = vector.shape_cast %1039 : vector<1x2x32xf32> to vector<2x32xf32>
    %1041 = arith.addf %1040, %1001 : vector<2x32xf32>
    %1042 = arith.negf %1041 : vector<2x32xf32>
    %1043 = math.exp %1042 : vector<2x32xf32>
    %cst_283 = arith.constant 1.000000e+00 : f32
    %1044 = vector.broadcast %cst_283 : f32 to vector<2x32xf32>
    %1045 = arith.addf %1044, %1043 : vector<2x32xf32>
    %1046 = arith.divf %1044, %1045 : vector<2x32xf32>
    %1047 = vector.extract_strided_slice %640 {offsets = [2, 0, 0], sizes = [1, 2, 32], strides = [1, 1, 1]} : vector<8x2x32xf32> to vector<1x2x32xf32>
    %1048 = vector.shape_cast %1047 : vector<1x2x32xf32> to vector<2x32xf32>
    %1049 = vector.broadcast %656 : vector<1x32xf32> to vector<2x32xf32>
    %1050 = arith.addf %1002, %1049 : vector<2x32xf32>
    %1051 = arith.mulf %1038, %1050 : vector<2x32xf32>
    %1052 = arith.addf %1048, %1051 : vector<2x32xf32>
    %1053 = math.tanh %1052 : vector<2x32xf32>
    %cst_284 = arith.constant 1.000000e+00 : f32
    %1054 = vector.broadcast %cst_284 : f32 to vector<2x32xf32>
    %1055 = arith.subf %1054, %1046 : vector<2x32xf32>
    %1056 = arith.mulf %1055, %1053 : vector<2x32xf32>
    %1057 = arith.mulf %1046, %990 : vector<2x32xf32>
    %1058 = arith.addf %1056, %1057 : vector<2x32xf32>
    %c5_285 = arith.constant 5 : index
    %c0_286 = arith.constant 0 : index
    %c0_287 = arith.constant 0 : index
    %1059 = vector.load %arg16[%c5_285, %c0_286, %c0_287] : memref<8x2x32xf32, #tpu.memory_space<vmem>>, vector<1x2x32xf32>
    %1060 = vector.shape_cast %1059 : vector<1x2x32xf32> to vector<2x32xf32>
    %1061 = vector.shape_cast %1030 : vector<2x32xf32> to vector<1x2x32xf32>
    tpu.vector_store %arg16[%c5_285, %c0_286, %c0_287], %1061 {strides = array<i32>} : memref<8x2x32xf32, #tpu.memory_space<vmem>>, vector<1x2x32xf32>,
    %c2_288 = arith.constant 2 : index
    %c0_289 = arith.constant 0 : index
    %c0_290 = arith.constant 0 : index
    %1062 = vector.load %arg17[%c2_288, %c0_289, %c0_290] : memref<8x2x32xf32, #tpu.memory_space<vmem>>, vector<1x2x32xf32>
    %1063 = vector.shape_cast %1062 : vector<1x2x32xf32> to vector<2x32xf32>
    %1064 = vector.shape_cast %1058 : vector<2x32xf32> to vector<1x2x32xf32>
    tpu.vector_store %arg17[%c2_288, %c0_289, %c0_290], %1064 {strides = array<i32>} : memref<8x2x32xf32, #tpu.memory_space<vmem>>, vector<1x2x32xf32>,
    %cst_291 = arith.constant dense<0.000000e+00> : vector<2x32xf32>
    %1065 = tpu.matmul %1030, %642, %cst_291 {dimension_numbers = #tpu.dot_dimension_numbers<[1], [0], [0], [1], [0, 0, 1, 1], [], []>} : vector<2x32xf32>, vector<32x32xf32>, vector<2x32xf32> -> vector<2x32xf32>
    %cst_292 = arith.constant dense<0.000000e+00> : vector<2x32xf32>
    %1066 = tpu.matmul %1030, %644, %cst_292 {dimension_numbers = #tpu.dot_dimension_numbers<[1], [0], [0], [1], [0, 0, 1, 1], [], []>} : vector<2x32xf32>, vector<32x32xf32>, vector<2x32xf32> -> vector<2x32xf32>
    %cst_293 = arith.constant dense<0.000000e+00> : vector<2x32xf32>
    %1067 = tpu.matmul %1030, %646, %cst_293 {dimension_numbers = #tpu.dot_dimension_numbers<[1], [0], [0], [1], [0, 0, 1, 1], [], []>} : vector<2x32xf32>, vector<32x32xf32>, vector<2x32xf32> -> vector<2x32xf32>
    %cst_294 = arith.constant dense<0.000000e+00> : vector<2x32xf32>
    %1068 = tpu.matmul %1058, %648, %cst_294 {dimension_numbers = #tpu.dot_dimension_numbers<[1], [0], [0], [1], [0, 0, 1, 1], [], []>} : vector<2x32xf32>, vector<32x32xf32>, vector<2x32xf32> -> vector<2x32xf32>
    %cst_295 = arith.constant dense<0.000000e+00> : vector<2x32xf32>
    %1069 = tpu.matmul %1058, %650, %cst_295 {dimension_numbers = #tpu.dot_dimension_numbers<[1], [0], [0], [1], [0, 0, 1, 1], [], []>} : vector<2x32xf32>, vector<32x32xf32>, vector<2x32xf32> -> vector<2x32xf32>
    %cst_296 = arith.constant dense<0.000000e+00> : vector<2x32xf32>
    %1070 = tpu.matmul %1058, %652, %cst_296 {dimension_numbers = #tpu.dot_dimension_numbers<[1], [0], [0], [1], [0, 0, 1, 1], [], []>} : vector<2x32xf32>, vector<32x32xf32>, vector<2x32xf32> -> vector<2x32xf32>
    %1071 = vector.extract_strided_slice %623 {offsets = [6, 0, 0], sizes = [1, 2, 32], strides = [1, 1, 1]} : vector<8x2x32xf32> to vector<1x2x32xf32>
    %1072 = vector.shape_cast %1071 : vector<1x2x32xf32> to vector<2x32xf32>
    %1073 = arith.addf %1072, %1065 : vector<2x32xf32>
    %1074 = arith.negf %1073 : vector<2x32xf32>
    %1075 = math.exp %1074 : vector<2x32xf32>
    %cst_297 = arith.constant 1.000000e+00 : f32
    %1076 = vector.broadcast %cst_297 : f32 to vector<2x32xf32>
    %1077 = arith.addf %1076, %1075 : vector<2x32xf32>
    %1078 = arith.divf %1076, %1077 : vector<2x32xf32>
    %1079 = vector.extract_strided_slice %625 {offsets = [6, 0, 0], sizes = [1, 2, 32], strides = [1, 1, 1]} : vector<8x2x32xf32> to vector<1x2x32xf32>
    %1080 = vector.shape_cast %1079 : vector<1x2x32xf32> to vector<2x32xf32>
    %1081 = arith.addf %1080, %1066 : vector<2x32xf32>
    %1082 = arith.negf %1081 : vector<2x32xf32>
    %1083 = math.exp %1082 : vector<2x32xf32>
    %cst_298 = arith.constant 1.000000e+00 : f32
    %1084 = vector.broadcast %cst_298 : f32 to vector<2x32xf32>
    %1085 = arith.addf %1084, %1083 : vector<2x32xf32>
    %1086 = arith.divf %1084, %1085 : vector<2x32xf32>
    %1087 = vector.extract_strided_slice %627 {offsets = [6, 0, 0], sizes = [1, 2, 32], strides = [1, 1, 1]} : vector<8x2x32xf32> to vector<1x2x32xf32>
    %1088 = vector.shape_cast %1087 : vector<1x2x32xf32> to vector<2x32xf32>
    %1089 = vector.broadcast %654 : vector<1x32xf32> to vector<2x32xf32>
    %1090 = arith.addf %1067, %1089 : vector<2x32xf32>
    %1091 = arith.mulf %1078, %1090 : vector<2x32xf32>
    %1092 = arith.addf %1088, %1091 : vector<2x32xf32>
    %1093 = math.tanh %1092 : vector<2x32xf32>
    %cst_299 = arith.constant 1.000000e+00 : f32
    %1094 = vector.broadcast %cst_299 : f32 to vector<2x32xf32>
    %1095 = arith.subf %1094, %1086 : vector<2x32xf32>
    %1096 = arith.mulf %1095, %1093 : vector<2x32xf32>
    %1097 = arith.mulf %1086, %1030 : vector<2x32xf32>
    %1098 = arith.addf %1096, %1097 : vector<2x32xf32>
    %1099 = vector.extract_strided_slice %636 {offsets = [1, 0, 0], sizes = [1, 2, 32], strides = [1, 1, 1]} : vector<8x2x32xf32> to vector<1x2x32xf32>
    %1100 = vector.shape_cast %1099 : vector<1x2x32xf32> to vector<2x32xf32>
    %1101 = arith.addf %1100, %1068 : vector<2x32xf32>
    %1102 = arith.negf %1101 : vector<2x32xf32>
    %1103 = math.exp %1102 : vector<2x32xf32>
    %cst_300 = arith.constant 1.000000e+00 : f32
    %1104 = vector.broadcast %cst_300 : f32 to vector<2x32xf32>
    %1105 = arith.addf %1104, %1103 : vector<2x32xf32>
    %1106 = arith.divf %1104, %1105 : vector<2x32xf32>
    %1107 = vector.extract_strided_slice %638 {offsets = [1, 0, 0], sizes = [1, 2, 32], strides = [1, 1, 1]} : vector<8x2x32xf32> to vector<1x2x32xf32>
    %1108 = vector.shape_cast %1107 : vector<1x2x32xf32> to vector<2x32xf32>
    %1109 = arith.addf %1108, %1069 : vector<2x32xf32>
    %1110 = arith.negf %1109 : vector<2x32xf32>
    %1111 = math.exp %1110 : vector<2x32xf32>
    %cst_301 = arith.constant 1.000000e+00 : f32
    %1112 = vector.broadcast %cst_301 : f32 to vector<2x32xf32>
    %1113 = arith.addf %1112, %1111 : vector<2x32xf32>
    %1114 = arith.divf %1112, %1113 : vector<2x32xf32>
    %1115 = vector.extract_strided_slice %640 {offsets = [1, 0, 0], sizes = [1, 2, 32], strides = [1, 1, 1]} : vector<8x2x32xf32> to vector<1x2x32xf32>
    %1116 = vector.shape_cast %1115 : vector<1x2x32xf32> to vector<2x32xf32>
    %1117 = vector.broadcast %656 : vector<1x32xf32> to vector<2x32xf32>
    %1118 = arith.addf %1070, %1117 : vector<2x32xf32>
    %1119 = arith.mulf %1106, %1118 : vector<2x32xf32>
    %1120 = arith.addf %1116, %1119 : vector<2x32xf32>
    %1121 = math.tanh %1120 : vector<2x32xf32>
    %cst_302 = arith.constant 1.000000e+00 : f32
    %1122 = vector.broadcast %cst_302 : f32 to vector<2x32xf32>
    %1123 = arith.subf %1122, %1114 : vector<2x32xf32>
    %1124 = arith.mulf %1123, %1121 : vector<2x32xf32>
    %1125 = arith.mulf %1114, %1058 : vector<2x32xf32>
    %1126 = arith.addf %1124, %1125 : vector<2x32xf32>
    %c6_303 = arith.constant 6 : index
    %c0_304 = arith.constant 0 : index
    %c0_305 = arith.constant 0 : index
    %1127 = vector.load %arg16[%c6_303, %c0_304, %c0_305] : memref<8x2x32xf32, #tpu.memory_space<vmem>>, vector<1x2x32xf32>
    %1128 = vector.shape_cast %1127 : vector<1x2x32xf32> to vector<2x32xf32>
    %1129 = vector.shape_cast %1098 : vector<2x32xf32> to vector<1x2x32xf32>
    tpu.vector_store %arg16[%c6_303, %c0_304, %c0_305], %1129 {strides = array<i32>} : memref<8x2x32xf32, #tpu.memory_space<vmem>>, vector<1x2x32xf32>,
    %c1_306 = arith.constant 1 : index
    %c0_307 = arith.constant 0 : index
    %c0_308 = arith.constant 0 : index
    %1130 = vector.load %arg17[%c1_306, %c0_307, %c0_308] : memref<8x2x32xf32, #tpu.memory_space<vmem>>, vector<1x2x32xf32>
    %1131 = vector.shape_cast %1130 : vector<1x2x32xf32> to vector<2x32xf32>
    %1132 = vector.shape_cast %1126 : vector<2x32xf32> to vector<1x2x32xf32>
    tpu.vector_store %arg17[%c1_306, %c0_307, %c0_308], %1132 {strides = array<i32>} : memref<8x2x32xf32, #tpu.memory_space<vmem>>, vector<1x2x32xf32>,
    %cst_309 = arith.constant dense<0.000000e+00> : vector<2x32xf32>
    %1133 = tpu.matmul %1098, %642, %cst_309 {dimension_numbers = #tpu.dot_dimension_numbers<[1], [0], [0], [1], [0, 0, 1, 1], [], []>} : vector<2x32xf32>, vector<32x32xf32>, vector<2x32xf32> -> vector<2x32xf32>
    %cst_310 = arith.constant dense<0.000000e+00> : vector<2x32xf32>
    %1134 = tpu.matmul %1098, %644, %cst_310 {dimension_numbers = #tpu.dot_dimension_numbers<[1], [0], [0], [1], [0, 0, 1, 1], [], []>} : vector<2x32xf32>, vector<32x32xf32>, vector<2x32xf32> -> vector<2x32xf32>
    %cst_311 = arith.constant dense<0.000000e+00> : vector<2x32xf32>
    %1135 = tpu.matmul %1098, %646, %cst_311 {dimension_numbers = #tpu.dot_dimension_numbers<[1], [0], [0], [1], [0, 0, 1, 1], [], []>} : vector<2x32xf32>, vector<32x32xf32>, vector<2x32xf32> -> vector<2x32xf32>
    %cst_312 = arith.constant dense<0.000000e+00> : vector<2x32xf32>
    %1136 = tpu.matmul %1126, %648, %cst_312 {dimension_numbers = #tpu.dot_dimension_numbers<[1], [0], [0], [1], [0, 0, 1, 1], [], []>} : vector<2x32xf32>, vector<32x32xf32>, vector<2x32xf32> -> vector<2x32xf32>
    %cst_313 = arith.constant dense<0.000000e+00> : vector<2x32xf32>
    %1137 = tpu.matmul %1126, %650, %cst_313 {dimension_numbers = #tpu.dot_dimension_numbers<[1], [0], [0], [1], [0, 0, 1, 1], [], []>} : vector<2x32xf32>, vector<32x32xf32>, vector<2x32xf32> -> vector<2x32xf32>
    %cst_314 = arith.constant dense<0.000000e+00> : vector<2x32xf32>
    %1138 = tpu.matmul %1126, %652, %cst_314 {dimension_numbers = #tpu.dot_dimension_numbers<[1], [0], [0], [1], [0, 0, 1, 1], [], []>} : vector<2x32xf32>, vector<32x32xf32>, vector<2x32xf32> -> vector<2x32xf32>
    %1139 = vector.extract_strided_slice %623 {offsets = [7, 0, 0], sizes = [1, 2, 32], strides = [1, 1, 1]} : vector<8x2x32xf32> to vector<1x2x32xf32>
    %1140 = vector.shape_cast %1139 : vector<1x2x32xf32> to vector<2x32xf32>
    %1141 = arith.addf %1140, %1133 : vector<2x32xf32>
    %1142 = arith.negf %1141 : vector<2x32xf32>
    %1143 = math.exp %1142 : vector<2x32xf32>
    %cst_315 = arith.constant 1.000000e+00 : f32
    %1144 = vector.broadcast %cst_315 : f32 to vector<2x32xf32>
    %1145 = arith.addf %1144, %1143 : vector<2x32xf32>
    %1146 = arith.divf %1144, %1145 : vector<2x32xf32>
    %1147 = vector.extract_strided_slice %625 {offsets = [7, 0, 0], sizes = [1, 2, 32], strides = [1, 1, 1]} : vector<8x2x32xf32> to vector<1x2x32xf32>
    %1148 = vector.shape_cast %1147 : vector<1x2x32xf32> to vector<2x32xf32>
    %1149 = arith.addf %1148, %1134 : vector<2x32xf32>
    %1150 = arith.negf %1149 : vector<2x32xf32>
    %1151 = math.exp %1150 : vector<2x32xf32>
    %cst_316 = arith.constant 1.000000e+00 : f32
    %1152 = vector.broadcast %cst_316 : f32 to vector<2x32xf32>
    %1153 = arith.addf %1152, %1151 : vector<2x32xf32>
    %1154 = arith.divf %1152, %1153 : vector<2x32xf32>
    %1155 = vector.extract_strided_slice %627 {offsets = [7, 0, 0], sizes = [1, 2, 32], strides = [1, 1, 1]} : vector<8x2x32xf32> to vector<1x2x32xf32>
    %1156 = vector.shape_cast %1155 : vector<1x2x32xf32> to vector<2x32xf32>
    %1157 = vector.broadcast %654 : vector<1x32xf32> to vector<2x32xf32>
    %1158 = arith.addf %1135, %1157 : vector<2x32xf32>
    %1159 = arith.mulf %1146, %1158 : vector<2x32xf32>
    %1160 = arith.addf %1156, %1159 : vector<2x32xf32>
    %1161 = math.tanh %1160 : vector<2x32xf32>
    %cst_317 = arith.constant 1.000000e+00 : f32
    %1162 = vector.broadcast %cst_317 : f32 to vector<2x32xf32>
    %1163 = arith.subf %1162, %1154 : vector<2x32xf32>
    %1164 = arith.mulf %1163, %1161 : vector<2x32xf32>
    %1165 = arith.mulf %1154, %1098 : vector<2x32xf32>
    %1166 = arith.addf %1164, %1165 : vector<2x32xf32>
    %1167 = vector.extract_strided_slice %636 {offsets = [0, 0, 0], sizes = [1, 2, 32], strides = [1, 1, 1]} : vector<8x2x32xf32> to vector<1x2x32xf32>
    %1168 = vector.shape_cast %1167 : vector<1x2x32xf32> to vector<2x32xf32>
    %1169 = arith.addf %1168, %1136 : vector<2x32xf32>
    %1170 = arith.negf %1169 : vector<2x32xf32>
    %1171 = math.exp %1170 : vector<2x32xf32>
    %cst_318 = arith.constant 1.000000e+00 : f32
    %1172 = vector.broadcast %cst_318 : f32 to vector<2x32xf32>
    %1173 = arith.addf %1172, %1171 : vector<2x32xf32>
    %1174 = arith.divf %1172, %1173 : vector<2x32xf32>
    %1175 = vector.extract_strided_slice %638 {offsets = [0, 0, 0], sizes = [1, 2, 32], strides = [1, 1, 1]} : vector<8x2x32xf32> to vector<1x2x32xf32>
    %1176 = vector.shape_cast %1175 : vector<1x2x32xf32> to vector<2x32xf32>
    %1177 = arith.addf %1176, %1137 : vector<2x32xf32>
    %1178 = arith.negf %1177 : vector<2x32xf32>
    %1179 = math.exp %1178 : vector<2x32xf32>
    %cst_319 = arith.constant 1.000000e+00 : f32
    %1180 = vector.broadcast %cst_319 : f32 to vector<2x32xf32>
    %1181 = arith.addf %1180, %1179 : vector<2x32xf32>
    %1182 = arith.divf %1180, %1181 : vector<2x32xf32>
    %1183 = vector.extract_strided_slice %640 {offsets = [0, 0, 0], sizes = [1, 2, 32], strides = [1, 1, 1]} : vector<8x2x32xf32> to vector<1x2x32xf32>
    %1184 = vector.shape_cast %1183 : vector<1x2x32xf32> to vector<2x32xf32>
    %1185 = vector.broadcast %656 : vector<1x32xf32> to vector<2x32xf32>
    %1186 = arith.addf %1138, %1185 : vector<2x32xf32>
    %1187 = arith.mulf %1174, %1186 : vector<2x32xf32>
    %1188 = arith.addf %1184, %1187 : vector<2x32xf32>
    %1189 = math.tanh %1188 : vector<2x32xf32>
    %cst_320 = arith.constant 1.000000e+00 : f32
    %1190 = vector.broadcast %cst_320 : f32 to vector<2x32xf32>
    %1191 = arith.subf %1190, %1182 : vector<2x32xf32>
    %1192 = arith.mulf %1191, %1189 : vector<2x32xf32>
    %1193 = arith.mulf %1182, %1126 : vector<2x32xf32>
    %1194 = arith.addf %1192, %1193 : vector<2x32xf32>
    %c7_321 = arith.constant 7 : index
    %c0_322 = arith.constant 0 : index
    %c0_323 = arith.constant 0 : index
    %1195 = vector.load %arg16[%c7_321, %c0_322, %c0_323] : memref<8x2x32xf32, #tpu.memory_space<vmem>>, vector<1x2x32xf32>
    %1196 = vector.shape_cast %1195 : vector<1x2x32xf32> to vector<2x32xf32>
    %1197 = vector.shape_cast %1166 : vector<2x32xf32> to vector<1x2x32xf32>
    tpu.vector_store %arg16[%c7_321, %c0_322, %c0_323], %1197 {strides = array<i32>} : memref<8x2x32xf32, #tpu.memory_space<vmem>>, vector<1x2x32xf32>,
    %c0_324 = arith.constant 0 : index
    %c0_325 = arith.constant 0 : index
    %c0_326 = arith.constant 0 : index
    %1198 = vector.load %arg17[%c0_324, %c0_325, %c0_326] : memref<8x2x32xf32, #tpu.memory_space<vmem>>, vector<1x2x32xf32>
    %1199 = vector.shape_cast %1198 : vector<1x2x32xf32> to vector<2x32xf32>
    %1200 = vector.shape_cast %1194 : vector<2x32xf32> to vector<1x2x32xf32>
    tpu.vector_store %arg17[%c0_324, %c0_325, %c0_326], %1200 {strides = array<i32>} : memref<8x2x32xf32, #tpu.memory_space<vmem>>, vector<1x2x32xf32>,
    %c2_327 = arith.constant 2 : index
    %c0_328 = arith.constant 0 : index
    %c0_329 = arith.constant 0 : index
    %1201 = vector.load %arg13[%c2_327, %c0_328, %c0_329] : memref<4x2x32xf32, #tpu.memory_space<vmem>>, vector<1x2x32xf32>
    %1202 = vector.shape_cast %1201 : vector<1x2x32xf32> to vector<2x32xf32>
    %1203 = vector.shape_cast %1166 : vector<2x32xf32> to vector<1x2x32xf32>
    tpu.vector_store %arg13[%c2_327, %c0_328, %c0_329], %1203 {strides = array<i32>} : memref<4x2x32xf32, #tpu.memory_space<vmem>>, vector<1x2x32xf32>,
    %c3_330 = arith.constant 3 : index
    %c0_331 = arith.constant 0 : index
    %c0_332 = arith.constant 0 : index
    %1204 = vector.load %arg13[%c3_330, %c0_331, %c0_332] : memref<4x2x32xf32, #tpu.memory_space<vmem>>, vector<1x2x32xf32>
    %1205 = vector.shape_cast %1204 : vector<1x2x32xf32> to vector<2x32xf32>
    %1206 = vector.shape_cast %1194 : vector<2x32xf32> to vector<1x2x32xf32>
    tpu.vector_store %arg13[%c3_330, %c0_331, %c0_332], %1206 {strides = array<i32>} : memref<4x2x32xf32, #tpu.memory_space<vmem>>, vector<1x2x32xf32>,
    %c0_333 = arith.constant 0 : index
    %c0_334 = arith.constant 0 : index
    %c0_335 = arith.constant 0 : index
    %1207 = vector.load %arg16[%c0_333, %c0_334, %c0_335] : memref<8x2x32xf32, #tpu.memory_space<vmem>>, vector<8x2x32xf32>
    %c0_336 = arith.constant 0 : index
    %c0_337 = arith.constant 0 : index
    %c0_338 = arith.constant 0 : index
    %1208 = vector.load %arg17[%c0_336, %c0_337, %c0_338] : memref<8x2x32xf32, #tpu.memory_space<vmem>>, vector<8x2x32xf32>
    %1209 = tpu.concatenate %1207, %1208 in 2 : vector<8x2x32xf32>, vector<8x2x32xf32> -> vector<8x2x64xf32>
    %c0_339 = arith.constant 0 : index
    %c0_340 = arith.constant 0 : index
    %1210 = vector.load %arg9[%c0_339, %c0_340] : memref<1x64xf32, #tpu.memory_space<vmem>>, vector<1x64xf32>
    %1211 = vector.shape_cast %1210 : vector<1x64xf32> to vector<1x1x64xf32>
    %1212 = vector.broadcast %1211 : vector<1x1x64xf32> to vector<8x2x64xf32>
    %1213 = arith.mulf %1209, %1212 : vector<8x2x64xf32>
    %cst_341 = arith.constant dense<0.000000e+00> : vector<8x2xf32>
    %1214 = vector.multi_reduction <add>, %1213, %cst_341 [2] : vector<8x2x64xf32> to vector<8x2xf32>
    %c0_342 = arith.constant 0 : index
    %c0_343 = arith.constant 0 : index
    %1215 = vector.load %arg10[%c0_342, %c0_343] : memref<1x1xf32, #tpu.memory_space<vmem>>, vector<1x1xf32>
    %1216 = vector.broadcast %1215 : vector<1x1xf32> to vector<8x2xf32>
    %1217 = arith.addf %1214, %1216 : vector<8x2xf32>
    %c0_344 = arith.constant 0 : index
    %c0_345 = arith.constant 0 : index
    %1218 = vector.load %arg12[%c0_344, %c0_345] : memref<8x2xf32, #tpu.memory_space<vmem>>, vector<8x2xf32>
    tpu.vector_store %arg12[%c0_344, %c0_345], %1217 {strides = array<i32>} : memref<8x2xf32, #tpu.memory_space<vmem>>, vector<8x2xf32>,
    return
  }
}

</mosaic_0001>

<llo_original>
// kernel: tpu_custom_call.1
$region0: #{tpu_custom_call.1}
  #allocation0 [shape = 'u32[]', space=smem, size = 0x4, offset = 0x4, fixed_abs, tag = 'smem constant byte address 0x4 - core index']
  #allocation1 [shape = 'u32[72,128]{1,0:T(1,128)}', space=vmem, size = 0x9000, scoped, tag = 'internal scratch']
  #allocation2 [shape = 'f32[8,2,32]{2,1,0:T(2,128)}', space=vmem, size = 0x2000, scoped, tag = 'scratch operand']
  #allocation3 [shape = 'f32[8,2,32]{2,1,0:T(2,128)}', space=vmem, size = 0x2000, scoped, tag = 'scratch operand']
  #allocation4 [shape = 'f32[8,2,32]{2,1,0:T(2,128)}', space=vmem, size = 0x2000, scoped, tag = 'scratch operand']
  #allocation5 [shape = 'f32[8,2,32]{2,1,0:T(2,128)}', space=vmem, size = 0x2000, scoped, tag = 'scratch operand']
  #allocation6 [shape = 'f32[1,1]{1,0:T(1,128)S(1)}', space=vmem, size = 0x200, scoped, tag = 'scoped memory for tpu_custom_call.1']
  %s0 = inlined_call_operand.vmem [shape: f32[8,2,1], index: 0, kind: input, shape index: {}]
  %s1 = inlined_call_operand.vmem [shape: f32[2,1,96], index: 1, kind: input, shape index: {}]
  %s2 = inlined_call_operand.hbm [shape: f32[2,3,32,32], index: 2, kind: input, shape index: {}]
  %s3 = inlined_call_operand.vmem [shape: f32[2,1,96], index: 3, kind: input, shape index: {}]
  %s4 = inlined_call_operand.vmem [shape: f32[2,1,32], index: 4, kind: input, shape index: {}]
  %s5 = inlined_call_operand.hbm [shape: f32[2,64,96], index: 5, kind: input, shape index: {}]
  %s6 = inlined_call_operand.hbm [shape: f32[2,3,32,32], index: 6, kind: input, shape index: {}]
  %s7 = inlined_call_operand.vmem [shape: f32[2,1,96], index: 7, kind: input, shape index: {}]
  %s8 = inlined_call_operand.vmem [shape: f32[2,1,32], index: 8, kind: input, shape index: {}]
  %s9 = inlined_call_operand.vmem [shape: f32[1,64], index: 9, kind: input, shape index: {}]
  %s10 = inlined_call_operand.<no memory space> [shape: f32[1,1], index: 10, kind: input, shape index: {}]
  %s11 = inlined_call_operand.vmem [shape: f32[4,2,32], index: 11, kind: input, shape index: {}]
  %s12 = inlined_call_operand.vmem [shape: f32[8,2], index: 12, kind: output, shape index: {0}]
  %s13 = inlined_call_operand.hbm [shape: f32[4,2,32], index: 13, kind: output, shape index: {1}]
  %14 = xla_tuple %s12, %s13
  %s15 = sld [smem:[#allocation0]]
  $region78: #{tpu_custom_call.1} parent=0
    _
  %s17 = ssub.s32 1, %s15
  %s18 = scalar_select 0, %s17, %s15
  %v19 = vstv %s10
  %20 = vst [vmem:[#allocation6] sm:$0x1] %v19
  $region1: #{tpu_custom_call.1} parent=0
    #allocation7 [shape = 'u8[98304]{0}', space=vmem, size = 0x18000, scoped, tag = 'input window, operand 2, single buffered']
    #allocation8 [shape = 's32[1]{0}', space=sflag, size = 0x4, scoped, tag = 'scoped memory for tpu_custom_call.1']
    #allocation9 [shape = 's32[1]{0}', space=sflag, size = 0x4, scoped, tag = 'scoped memory for tpu_custom_call.1']
    #allocation10 [shape = 'u8[65536]{0}', space=vmem, size = 0x10000, scoped, tag = 'input window, operand 5, single buffered']
    #allocation11 [shape = 's32[1]{0}', space=sflag, size = 0x4, scoped, tag = 'scoped memory for tpu_custom_call.1']
    #allocation12 [shape = 'u8[98304]{0}', space=vmem, size = 0x18000, scoped, tag = 'input window, operand 6, single buffered']
    #allocation13 [shape = 'u8[4096]{0}', space=vmem, size = 0x1000, scoped, tag = 'output window, operand 1, single buffered']
    %21 = vsyncpa [#allocation8], 0
    %22 = vsyncpa [#allocation11], 0
    %23 = vsyncpa [#allocation9], 0
    // Predicated region
    $region2: #{tpu_custom_call.1} parent=1 // pred_check
      _
    $region3: #{tpu_custom_call.1} parent=1 // pred_check_branch
      %25 = sbr.rel (0) target = $region5
    $region4: #{tpu_custom_call.1} parent=1 // pred_region
      _
    $region5: #{tpu_custom_call.1} parent=1 // pred_fallthru
      _
    // Predicated region
    $region6: #{tpu_custom_call.1} parent=1 // pred_check
      _
    $region7: #{tpu_custom_call.1} parent=1 // pred_check_branch
      %27 = sbr.rel (0) target = $region9
    $region8: #{tpu_custom_call.1} parent=1 // pred_region
      _
    $region9: #{tpu_custom_call.1} parent=1 // pred_fallthru
      _
    // Predicated region
    $region10: #{tpu_custom_call.1} parent=1 // pred_check
      _
    $region11: #{tpu_custom_call.1} parent=1 // pred_check_branch
      %29 = sbr.rel (0) target = $region13
    $region12: #{tpu_custom_call.1} parent=1 // pred_region
      %31 = vsyncadd [#allocation8], 0
      %s32 = sshll.u32 %s2, 4
      %s33 = int_to_ptr.hbm [resolvable:$true] %s32
      %s34 = sshll.u32 [#allocation7], 4
      %s35 = int_to_ptr.vmem [resolvable:$true] %s34
      %40 = dma.hbm_to_vmem [thread:$0]  %s33, 3072, %s35, [#allocation8], 128, 128, 8
    $region13: #{tpu_custom_call.1} parent=1 // pred_fallthru
      _
    // Predicated region
    $region14: #{tpu_custom_call.1} parent=1 // pred_check
      _
    $region15: #{tpu_custom_call.1} parent=1 // pred_check_branch
      %42 = sbr.rel (0) target = $region17
    $region16: #{tpu_custom_call.1} parent=1 // pred_region
      _
    $region17: #{tpu_custom_call.1} parent=1 // pred_fallthru
      _
    // Predicated region
    $region18: #{tpu_custom_call.1} parent=1 // pred_check
      _
    $region19: #{tpu_custom_call.1} parent=1 // pred_check_branch
      %44 = sbr.rel (0) target = $region21
    $region20: #{tpu_custom_call.1} parent=1 // pred_region
      _
    $region21: #{tpu_custom_call.1} parent=1 // pred_fallthru
      _
    // Predicated region
    $region22: #{tpu_custom_call.1} parent=1 // pred_check
      _
    $region23: #{tpu_custom_call.1} parent=1 // pred_check_branch
      %46 = sbr.rel (0) target = $region25
    $region24: #{tpu_custom_call.1} parent=1 // pred_region
      %48 = vsyncadd [#allocation11], 0
      %s49 = sshll.u32 %s5, 4
      %s50 = int_to_ptr.hbm [resolvable:$true] %s49
      %s51 = sshll.u32 [#allocation10], 4
      %s52 = int_to_ptr.vmem [resolvable:$true] %s51
      %57 = dma.hbm_to_vmem [thread:$0]  %s50, 2048, %s52, [#allocation11], 128, 128, 8
    $region25: #{tpu_custom_call.1} parent=1 // pred_fallthru
      _
    // Predicated region
    $region26: #{tpu_custom_call.1} parent=1 // pred_check
      _
    $region27: #{tpu_custom_call.1} parent=1 // pred_check_branch
      %59 = sbr.rel (0) target = $region29
    $region28: #{tpu_custom_call.1} parent=1 // pred_region
      %61 = vsyncadd [#allocation11], 0
      %s62 = sshll.u32 %s6, 4
      %s63 = int_to_ptr.hbm [resolvable:$true] %s62
      %s64 = sshll.u32 [#allocation12], 4
      %s65 = int_to_ptr.vmem [resolvable:$true] %s64
      %70 = dma.hbm_to_vmem [thread:$0]  %s63, 3072, %s65, [#allocation11], 128, 128, 8
    $region29: #{tpu_custom_call.1} parent=1 // pred_fallthru
      _
    // Predicated region
    $region30: #{tpu_custom_call.1} parent=1 // pred_check
      _
    $region31: #{tpu_custom_call.1} parent=1 // pred_check_branch
      %72 = sbr.rel (0) target = $region33
    $region32: #{tpu_custom_call.1} parent=1 // pred_region
      _
    $region33: #{tpu_custom_call.1} parent=1 // pred_fallthru
      _
    // Predicated region
    $region34: #{tpu_custom_call.1} parent=1 // pred_check
      _
    $region35: #{tpu_custom_call.1} parent=1 // pred_check_branch
      %74 = sbr.rel (0) target = $region37
    $region36: #{tpu_custom_call.1} parent=1 // pred_region
      _
    $region37: #{tpu_custom_call.1} parent=1 // pred_fallthru
      _
    // Predicated region
    $region38: #{tpu_custom_call.1} parent=1 // pred_check
      _
    $region39: #{tpu_custom_call.1} parent=1 // pred_check_branch
      %76 = sbr.rel (0) target = $region41
    $region40: #{tpu_custom_call.1} parent=1 // pred_region
      _
    $region41: #{tpu_custom_call.1} parent=1 // pred_fallthru
      _
    // Predicated region
    $region42: #{tpu_custom_call.1} parent=1 // pred_check
      _
    $region43: #{tpu_custom_call.1} parent=1 // pred_check_branch
      %78 = sbr.rel (0) target = $region45
    $region44: #{tpu_custom_call.1} parent=1 // pred_region
      _
    $region45: #{tpu_custom_call.1} parent=1 // pred_fallthru
      _
    // Predicated region
    $region46: #{tpu_custom_call.1} parent=1 // pred_check
      _
    $region47: #{tpu_custom_call.1} parent=1 // pred_check_branch
      %80 = sbr.rel (0) target = $region49
    $region48: #{tpu_custom_call.1} parent=1 // pred_region
      _
    $region49: #{tpu_custom_call.1} parent=1 // pred_fallthru
      _
    // Predicated region
    $region50: #{tpu_custom_call.1} parent=1 // pred_check
      _
    $region51: #{tpu_custom_call.1} parent=1 // pred_check_branch
      %82 = sbr.rel (0) target = $region53
    $region52: #{tpu_custom_call.1} parent=1 // pred_region
      %84 = dma.done [#allocation8], 3072
    $region53: #{tpu_custom_call.1} parent=1 // pred_fallthru
      _
    // Predicated region
    $region54: #{tpu_custom_call.1} parent=1 // pred_check
      _
    $region55: #{tpu_custom_call.1} parent=1 // pred_check_branch
      %86 = sbr.rel (0) target = $region57
    $region56: #{tpu_custom_call.1} parent=1 // pred_region
      %88 = dma.done [#allocation11], 2048
    $region57: #{tpu_custom_call.1} parent=1 // pred_fallthru
      _
    // Predicated region
    $region58: #{tpu_custom_call.1} parent=1 // pred_check
      _
    $region59: #{tpu_custom_call.1} parent=1 // pred_check_branch
      %90 = sbr.rel (0) target = $region61
    $region60: #{tpu_custom_call.1} parent=1 // pred_region
      %92 = dma.done [#allocation11], 3072
    $region61: #{tpu_custom_call.1} parent=1 // pred_fallthru
      _
    %v93 = vld [vmem:[%s11] sm:$0x3]
    %v94 = vld [vmem:[%s11 + $0x2] sm:$0x3]
    %v95 = vld [vmem:[%s11 + $0x4] sm:$0x3]
    %v96 = vld [vmem:[%s11 + $0x6] sm:$0x3]
    %v97 = vld [vmem:[%s0] sm:$0x3]
    %v98 = vld [vmem:[%s0 + $0x2] sm:$0x3]
    %v99 = vld [vmem:[%s0 + $0x4] sm:$0x3]
    %v100 = vld [vmem:[%s0 + $0x6] sm:$0x3]
    %v101 = vld [vmem:[%s0 + $0x8] sm:$0x3]
    %v102 = vld [vmem:[%s0 + $0xa] sm:$0x3]
    %v103 = vld [vmem:[%s0 + $0xc] sm:$0x3]
    %v104 = vld [vmem:[%s0 + $0xe] sm:$0x3]
    %v105 = vld [vmem:[%s1] sm:$0x1]
    %v106 = vld [vmem:[%s1 + $0x1] sm:$0x1]
    %v107 = vld [vmem:[#allocation7] sm:$0xff]
    %v108 = vld [vmem:[#allocation7 + $0x8] sm:$0xff]
    %v109 = vld [vmem:[#allocation7 + $0x10] sm:$0xff]
    %v110 = vld [vmem:[#allocation7 + $0x18] sm:$0xff]
    %v111 = vld [vmem:[#allocation7 + $0x20] sm:$0xff]
    %v112 = vld [vmem:[#allocation7 + $0x28] sm:$0xff]
    %v113 = vld [vmem:[#allocation7 + $0x30] sm:$0xff]
    %v114 = vld [vmem:[#allocation7 + $0x38] sm:$0xff]
    %v115 = vld [vmem:[#allocation7 + $0x40] sm:$0xff]
    %v116 = vld [vmem:[#allocation7 + $0x48] sm:$0xff]
    %v117 = vld [vmem:[#allocation7 + $0x50] sm:$0xff]
    %v118 = vld [vmem:[#allocation7 + $0x58] sm:$0xff]
    %v119 = vld [vmem:[#allocation7 + $0x60] sm:$0xff]
    %v120 = vld [vmem:[#allocation7 + $0x68] sm:$0xff]
    %v121 = vld [vmem:[#allocation7 + $0x70] sm:$0xff]
    %v122 = vld [vmem:[#allocation7 + $0x78] sm:$0xff]
    %v123 = vld [vmem:[#allocation7 + $0x80] sm:$0xff]
    %v124 = vld [vmem:[#allocation7 + $0x88] sm:$0xff]
    %v125 = vld [vmem:[#allocation7 + $0x90] sm:$0xff]
    %v126 = vld [vmem:[#allocation7 + $0x98] sm:$0xff]
    %v127 = vld [vmem:[#allocation7 + $0xa0] sm:$0xff]
    %v128 = vld [vmem:[#allocation7 + $0xa8] sm:$0xff]
    %v129 = vld [vmem:[#allocation7 + $0xb0] sm:$0xff]
    %v130 = vld [vmem:[#allocation7 + $0xb8] sm:$0xff]
    %v131 = vld [vmem:[%s3] sm:$0x1]
    %v132 = vld [vmem:[%s3 + $0x1] sm:$0x1]
    %v133 = vld [vmem:[%s4] sm:$0x1]
    %v134 = vld [vmem:[%s4 + $0x1] sm:$0x1]
    %v136 = vperm.slane %v131, 0
    %146 = vst [vmem:[#allocation1] ss:$4 sm:$0xff] %v97
    %s147 = scalar_lea.vmem [#allocation1], 1
    %148 = vst [vmem:[%s147] ss:$4 sm:$0xff] %v98
    %s149 = scalar_lea.vmem [#allocation1], 2
    %150 = vst [vmem:[%s149] ss:$4 sm:$0xff] %v99
    %s151 = scalar_lea.vmem [#allocation1], 3
    %152 = vst [vmem:[%s151] ss:$4 sm:$0xff] %v100
    %s153 = scalar_lea.vmem [#allocation1], 32
    %154 = vst [vmem:[%s153] ss:$4 sm:$0xff] %v101
    %s155 = scalar_lea.vmem [#allocation1], 33
    %156 = vst [vmem:[%s155] ss:$4 sm:$0xff] %v102
    %s157 = scalar_lea.vmem [#allocation1], 34
    %158 = vst [vmem:[%s157] ss:$4 sm:$0xff] %v103
    %s159 = scalar_lea.vmem [#allocation1], 35
    %160 = vst [vmem:[%s159] ss:$4 sm:$0xff] %v104
    %v161 = vld.sshfl [vmem:[#allocation1] sm:$0xff pattern:$0x73625140]
    %v162 = vld.sshfl [vmem:[#allocation1 + $0x20] sm:$0xff pattern:$0x73625140]
    %vm163 = vcmask 7168
    %v164 = vsel %vm163, %v161, 0
    %v166 = vsel %vm163, %v162, 0
    %vm168 = vcmask 1040384
    %v170 = vsel %vm168, %v105, 0
    %172 = vmatpush.msra.mxu0 0.0
    %173 = vmatpush.msra.mxu0 0.0
    %174 = vmatpush.msra.mxu0 0.0
    %175 = vmatpush.msra.mxu0 0.0
    %176 = vmatpush.msra.mxu0 0.0
    %177 = vmatpush.msra.mxu0 0.0
    %178 = vmatpush.msra.mxu0 0.0
    %179 = vmatpush.msra.mxu0 0.0
    %180 = vmatpush.msra.mxu0 0.0
    %181 = vmatpush.msra.mxu0 0.0
    %182 = vmatpush.msra.mxu0 0.0
    %183 = vmatpush.msra.mxu0 0.0
    %184 = vmatpush.msra.mxu0 0.0
    %185 = vmatpush.msra.mxu0 0.0
    %186 = vmatpush.msra.mxu0 0.0
    %187 = vmatpush.msra.mxu0 %v170
    %188 = vmatmul.f32.gmra.mxu0 %v164
    %v189 = vpop.f32.mrf.mxu0
    %v190 = vadd.f32 %v136, %v189
    %191 = vmatmul.f32.gmra.mxu0 %v166
    %v192 = vpop.f32.mrf.mxu0
    %v193 = vadd.f32 %v136, %v192
    %194 = vdwg.mxu0
    %v197 = vrot.slane %v190, 2
    %v198 = vrot.slane %v190, 4
    %v199 = vrot.slane %v190, 6
    %v200 = vrot.slane %v193, 2
    %v201 = vrot.slane %v193, 4
    %v202 = vrot.slane %v193, 6
    %v210 = vperm.slane %v132, 0
    %212 = vst [vmem:[#allocation1] ss:$4 sm:$0xff] %v97
    %s213 = scalar_lea.vmem [#allocation1], 1
    %214 = vst [vmem:[%s213] ss:$4 sm:$0xff] %v98
    %s215 = scalar_lea.vmem [#allocation1], 2
    %216 = vst [vmem:[%s215] ss:$4 sm:$0xff] %v99
    %s217 = scalar_lea.vmem [#allocation1], 3
    %218 = vst [vmem:[%s217] ss:$4 sm:$0xff] %v100
    %s219 = scalar_lea.vmem [#allocation1], 32
    %220 = vst [vmem:[%s219] ss:$4 sm:$0xff] %v101
    %s221 = scalar_lea.vmem [#allocation1], 33
    %222 = vst [vmem:[%s221] ss:$4 sm:$0xff] %v102
    %s223 = scalar_lea.vmem [#allocation1], 34
    %224 = vst [vmem:[%s223] ss:$4 sm:$0xff] %v103
    %s225 = scalar_lea.vmem [#allocation1], 35
    %226 = vst [vmem:[%s225] ss:$4 sm:$0xff] %v104
    %v227 = vld.sshfl [vmem:[#allocation1] sm:$0xff pattern:$0x73625140]
    %v228 = vld.sshfl [vmem:[#allocation1 + $0x20] sm:$0xff pattern:$0x73625140]
    %v229 = vsel %vm163, %v227, 0
    %v231 = vsel %vm163, %v228, 0
    %v234 = vsel %vm168, %v106, 0
    %236 = vmatpush.msra.mxu0 0.0
    %237 = vmatpush.msra.mxu0 0.0
    %238 = vmatpush.msra.mxu0 0.0
    %239 = vmatpush.msra.mxu0 0.0
    %240 = vmatpush.msra.mxu0 0.0
    %241 = vmatpush.msra.mxu0 0.0
    %242 = vmatpush.msra.mxu0 0.0
    %243 = vmatpush.msra.mxu0 0.0
    %244 = vmatpush.msra.mxu0 0.0
    %245 = vmatpush.msra.mxu0 0.0
    %246 = vmatpush.msra.mxu0 0.0
    %247 = vmatpush.msra.mxu0 0.0
    %248 = vmatpush.msra.mxu0 0.0
    %249 = vmatpush.msra.mxu0 0.0
    %250 = vmatpush.msra.mxu0 0.0
    %251 = vmatpush.msra.mxu0 %v234
    %252 = vmatmul.f32.gmra.mxu0 %v229
    %v253 = vpop.f32.mrf.mxu0
    %v254 = vadd.f32 %v210, %v253
    %255 = vmatmul.f32.gmra.mxu0 %v231
    %v256 = vpop.f32.mrf.mxu0
    %v257 = vadd.f32 %v210, %v256
    %258 = vdwg.mxu0
    %v261 = vrot.slane %v254, 2
    %v262 = vrot.slane %v254, 4
    %v263 = vrot.slane %v254, 6
    %v264 = vrot.slane %v257, 2
    %v265 = vrot.slane %v257, 4
    %v266 = vrot.slane %v257, 6
    %vm273 = vcmask 261120
    %v275 = vsel %vm273, %v93, 0
    %277 = vmatpush.msra.mxu0 0.0
    %278 = vmatpush.msra.mxu0 0.0
    %279 = vmatpush.msra.mxu0 0.0
    %280 = vmatpush.msra.mxu0 0.0
    %281 = vmatpush.msra.mxu0 0.0
    %282 = vmatpush.msra.mxu0 0.0
    %283 = vmatpush.msra.mxu0 0.0
    %284 = vmatpush.msra.mxu0 0.0
    %285 = vmatpush.msra.mxu0 0.0
    %286 = vmatpush.msra.mxu0 0.0
    %287 = vmatpush.msra.mxu0 0.0
    %288 = vmatpush.msra.mxu0 0.0
    %289 = vmatpush.msra.mxu0 %v110
    %290 = vmatpush.msra.mxu0 %v109
    %291 = vmatpush.msra.mxu0 %v108
    %292 = vmatpush.msra.mxu0 %v107
    %293 = vmatmul.f32.gmra.mxu0 %v275
    %v294 = vpop.f32.mrf.mxu0
    %v295 = vadd.f32 0.0, %v294
    %296 = vdwg.mxu0
    %297 = vmatpush.msra.mxu0 0.0
    %298 = vmatpush.msra.mxu0 0.0
    %299 = vmatpush.msra.mxu0 0.0
    %300 = vmatpush.msra.mxu0 0.0
    %301 = vmatpush.msra.mxu0 0.0
    %302 = vmatpush.msra.mxu0 0.0
    %303 = vmatpush.msra.mxu0 0.0
    %304 = vmatpush.msra.mxu0 0.0
    %305 = vmatpush.msra.mxu0 0.0
    %306 = vmatpush.msra.mxu0 0.0
    %307 = vmatpush.msra.mxu0 0.0
    %308 = vmatpush.msra.mxu0 0.0
    %309 = vmatpush.msra.mxu0 %v114
    %310 = vmatpush.msra.mxu0 %v113
    %311 = vmatpush.msra.mxu0 %v112
    %312 = vmatpush.msra.mxu0 %v111
    %313 = vmatmul.f32.gmra.mxu0 %v275
    %v314 = vpop.f32.mrf.mxu0
    %v315 = vadd.f32 0.0, %v314
    %316 = vdwg.mxu0
    %v318 = vsel %vm273, %v94, 0
    %320 = vmatpush.msra.mxu0 0.0
    %321 = vmatpush.msra.mxu0 0.0
    %322 = vmatpush.msra.mxu0 0.0
    %323 = vmatpush.msra.mxu0 0.0
    %324 = vmatpush.msra.mxu0 0.0
    %325 = vmatpush.msra.mxu0 0.0
    %326 = vmatpush.msra.mxu0 0.0
    %327 = vmatpush.msra.mxu0 0.0
    %328 = vmatpush.msra.mxu0 0.0
    %329 = vmatpush.msra.mxu0 0.0
    %330 = vmatpush.msra.mxu0 0.0
    %331 = vmatpush.msra.mxu0 0.0
    %332 = vmatpush.msra.mxu0 %v122
    %333 = vmatpush.msra.mxu0 %v121
    %334 = vmatpush.msra.mxu0 %v120
    %335 = vmatpush.msra.mxu0 %v119
    %336 = vmatmul.f32.gmra.mxu0 %v318
    %v337 = vpop.f32.mrf.mxu0
    %v338 = vadd.f32 0.0, %v337
    %339 = vdwg.mxu0
    %340 = vmatpush.msra.mxu0 0.0
    %341 = vmatpush.msra.mxu0 0.0
    %342 = vmatpush.msra.mxu0 0.0
    %343 = vmatpush.msra.mxu0 0.0
    %344 = vmatpush.msra.mxu0 0.0
    %345 = vmatpush.msra.mxu0 0.0
    %346 = vmatpush.msra.mxu0 0.0
    %347 = vmatpush.msra.mxu0 0.0
    %348 = vmatpush.msra.mxu0 0.0
    %349 = vmatpush.msra.mxu0 0.0
    %350 = vmatpush.msra.mxu0 0.0
    %351 = vmatpush.msra.mxu0 0.0
    %352 = vmatpush.msra.mxu0 %v126
    %353 = vmatpush.msra.mxu0 %v125
    %354 = vmatpush.msra.mxu0 %v124
    %355 = vmatpush.msra.mxu0 %v123
    %356 = vmatmul.f32.gmra.mxu0 %v318
    %v357 = vpop.f32.mrf.mxu0
    %v358 = vadd.f32 0.0, %v357
    %359 = vdwg.mxu0
    %v360 = vadd.f32 %v190, %v295
    %v361 = vxor.u32 %v360, 2147483648
    %v362 = vmul.f32 %v361, 1.442695
    %v363 = vpow.pop %v362
    %v364 = vadd.f32 %v363, 1.0
    %v365 = vrcp.pop %v364
    %v366 = vmul.f32 %v364, %v365
    %v367 = vsub.f32 1.0, %v366
    %v368 = vmul.f32 %v365, %v367
    %v369 = vadd.f32 %v365, %v368
    %vm370 = vweird.f32 %v364
    %vm371 = vweird.f32 %v365
    %vm372 = vmor %vm370, %vm371
    %v373 = vsel %vm372, %v365, %v369
    %v374 = vand.u32 2147483647, %v364
    %vm375 = vcmp.eq.f32.partialorder %v374, 8.507059e+37
    %v376 = vand.u32 %v364, 2147483648
    %v377 = vor.u32 1.1754944e-38, %v376
    %v378 = vsel %vm375, %v377, %v373
    %v379 = vmul.f32 1.0, %v378
    %381 = vrot.lane.b32.xlu0 %v315, 32
    %v382 = vpop.permute.xlu0 %381
    %v384 = vadd.f32 %v190, %v382
    %v385 = vxor.u32 %v384, 2147483648
    %v386 = vmul.f32 %v385, 1.442695
    %v387 = vpow.pop %v386
    %v388 = vadd.f32 %v387, 1.0
    %v389 = vrcp.pop %v388
    %v390 = vmul.f32 %v388, %v389
    %v391 = vsub.f32 1.0, %v390
    %v392 = vmul.f32 %v389, %v391
    %v393 = vadd.f32 %v389, %v392
    %vm394 = vweird.f32 %v388
    %vm395 = vweird.f32 %v389
    %vm396 = vmor %vm394, %vm395
    %v397 = vsel %vm396, %v389, %v393
    %v398 = vand.u32 2147483647, %v388
    %vm399 = vcmp.eq.f32.partialorder %v398, 8.507059e+37
    %v400 = vand.u32 %v388, 2147483648
    %v401 = vor.u32 1.1754944e-38, %v400
    %v402 = vsel %vm399, %v401, %v397
    %v403 = vmul.f32 1.0, %v402
    %v405 = vperm.slane %v133, 0
    %407 = vmatpush.msra.mxu0 0.0
    %408 = vmatpush.msra.mxu0 0.0
    %409 = vmatpush.msra.mxu0 0.0
    %410 = vmatpush.msra.mxu0 0.0
    %411 = vmatpush.msra.mxu0 0.0
    %412 = vmatpush.msra.mxu0 0.0
    %413 = vmatpush.msra.mxu0 0.0
    %414 = vmatpush.msra.mxu0 0.0
    %415 = vmatpush.msra.mxu0 0.0
    %416 = vmatpush.msra.mxu0 0.0
    %417 = vmatpush.msra.mxu0 0.0
    %418 = vmatpush.msra.mxu0 0.0
    %419 = vmatpush.msra.mxu0 %v118
    %420 = vmatpush.msra.mxu0 %v117
    %421 = vmatpush.msra.mxu0 %v116
    %422 = vmatpush.msra.mxu0 %v115
    %423 = vmatmul.f32.gmra.mxu0 %v275
    %v424 = vpop.f32.mrf.mxu0
    %v425 = vadd.f32 %v405, %v424
    %426 = vdwg.mxu0
    %v427 = vmul.f32 %v379, %v425
    %429 = vrot.lane.b32.xlu0 %v427, 64
    %v430 = vpop.permute.xlu0 %429
    %v432 = vadd.f32 %v190, %v430
    %v433 = vtanh.pop %v432
    %v434 = vsub.f32 1.0, %v403
    %436 = vrot.lane.b32.xlu0 %v433, 96
    %v437 = vpop.permute.xlu0 %436
    %v439 = vmul.f32 %v434, %v437
    %440 = vrot.lane.b32.xlu0 %v93, 32
    %v441 = vpop.permute.xlu0 %440
    %v443 = vmul.f32 %v403, %v441
    %v444 = vadd.f32 %v439, %v443
    %v445 = vadd.f32 %v266, %v338
    %v446 = vxor.u32 %v445, 2147483648
    %v447 = vmul.f32 %v446, 1.442695
    %v448 = vpow.pop %v447
    %v449 = vadd.f32 %v448, 1.0
    %v450 = vrcp.pop %v449
    %v451 = vmul.f32 %v449, %v450
    %v452 = vsub.f32 1.0, %v451
    %v453 = vmul.f32 %v450, %v452
    %v454 = vadd.f32 %v450, %v453
    %vm455 = vweird.f32 %v449
    %vm456 = vweird.f32 %v450
    %vm457 = vmor %vm455, %vm456
    %v458 = vsel %vm457, %v450, %v454
    %v459 = vand.u32 2147483647, %v449
    %vm460 = vcmp.eq.f32.partialorder %v459, 8.507059e+37
    %v461 = vand.u32 %v449, 2147483648
    %v462 = vor.u32 1.1754944e-38, %v461
    %v463 = vsel %vm460, %v462, %v458
    %v464 = vmul.f32 1.0, %v463
    %466 = vrot.lane.b32.xlu0 %v358, 32
    %v467 = vpop.permute.xlu0 %466
    %v469 = vadd.f32 %v266, %v467
    %v470 = vxor.u32 %v469, 2147483648
    %v471 = vmul.f32 %v470, 1.442695
    %v472 = vpow.pop %v471
    %v473 = vadd.f32 %v472, 1.0
    %v474 = vrcp.pop %v473
    %v475 = vmul.f32 %v473, %v474
    %v476 = vsub.f32 1.0, %v475
    %v477 = vmul.f32 %v474, %v476
    %v478 = vadd.f32 %v474, %v477
    %vm479 = vweird.f32 %v473
    %vm480 = vweird.f32 %v474
    %vm481 = vmor %vm479, %vm480
    %v482 = vsel %vm481, %v474, %v478
    %v483 = vand.u32 2147483647, %v473
    %vm484 = vcmp.eq.f32.partialorder %v483, 8.507059e+37
    %v485 = vand.u32 %v473, 2147483648
    %v486 = vor.u32 1.1754944e-38, %v485
    %v487 = vsel %vm484, %v486, %v482
    %v488 = vmul.f32 1.0, %v487
    %v490 = vperm.slane %v134, 0
    %492 = vmatpush.msra.mxu0 0.0
    %493 = vmatpush.msra.mxu0 0.0
    %494 = vmatpush.msra.mxu0 0.0
    %495 = vmatpush.msra.mxu0 0.0
    %496 = vmatpush.msra.mxu0 0.0
    %497 = vmatpush.msra.mxu0 0.0
    %498 = vmatpush.msra.mxu0 0.0
    %499 = vmatpush.msra.mxu0 0.0
    %500 = vmatpush.msra.mxu0 0.0
    %501 = vmatpush.msra.mxu0 0.0
    %502 = vmatpush.msra.mxu0 0.0
    %503 = vmatpush.msra.mxu0 0.0
    %504 = vmatpush.msra.mxu0 %v130
    %505 = vmatpush.msra.mxu0 %v129
    %506 = vmatpush.msra.mxu0 %v128
    %507 = vmatpush.msra.mxu0 %v127
    %508 = vmatmul.f32.gmra.mxu0 %v318
    %v509 = vpop.f32.mrf.mxu0
    %v510 = vadd.f32 %v490, %v509
    %511 = vdwg.mxu0
    %v512 = vmul.f32 %v464, %v510
    %514 = vrot.lane.b32.xlu0 %v512, 64
    %v515 = vpop.permute.xlu0 %514
    %v517 = vadd.f32 %v266, %v515
    %v518 = vtanh.pop %v517
    %v519 = vsub.f32 1.0, %v488
    %521 = vrot.lane.b32.xlu0 %v518, 96
    %v522 = vpop.permute.xlu0 %521
    %v524 = vmul.f32 %v519, %v522
    %525 = vrot.lane.b32.xlu0 %v94, 32
    %v526 = vpop.permute.xlu0 %525
    %v528 = vmul.f32 %v488, %v526
    %v529 = vadd.f32 %v524, %v528
    %531 = vst [vmem:[#allocation1] ss:$4 sm:$0xff] %v444
    %v532 = vld.sshfl [vmem:[#allocation1] sm:$0xff pattern:$0x73625140]
    %533 = vrot.lane.b32.xlu0 %v532, 96
    %v534 = vpop.permute.xlu0 %533
    %vm536 = vcmask 254976
    %537 = vst.msk [vmem:[#allocation2] sm:$0x3] %vm536, %v534
    %539 = vst [vmem:[#allocation1] ss:$4 sm:$0xff] %v529
    %v540 = vld.sshfl [vmem:[#allocation1] sm:$0xff pattern:$0x73625140]
    %541 = vrot.lane.b32.xlu0 %v540, 96
    %v542 = vpop.permute.xlu0 %541
    %s544 = scalar_lea.vmem [#allocation3], 14
    %545 = vst.msk [vmem:[%s544] sm:$0x3] %vm536, %v542
    %546 = vst [vmem:[#allocation1] ss:$4 sm:$0xff] %v444
    %v547 = vld.sshfl [vmem:[#allocation1] sm:$0xff pattern:$0x73625140]
    %548 = vrot.lane.b32.xlu0 %v547, 96
    %v549 = vpop.permute.xlu0 %548
    %v550 = vsel %vm273, %v549, 0
    %552 = vmatpush.msra.mxu0 0.0
    %553 = vmatpush.msra.mxu0 0.0
    %554 = vmatpush.msra.mxu0 0.0
    %555 = vmatpush.msra.mxu0 0.0
    %556 = vmatpush.msra.mxu0 0.0
    %557 = vmatpush.msra.mxu0 0.0
    %558 = vmatpush.msra.mxu0 0.0
    %559 = vmatpush.msra.mxu0 0.0
    %560 = vmatpush.msra.mxu0 0.0
    %561 = vmatpush.msra.mxu0 0.0
    %562 = vmatpush.msra.mxu0 0.0
    %563 = vmatpush.msra.mxu0 0.0
    %564 = vmatpush.msra.mxu0 %v110
    %565 = vmatpush.msra.mxu0 %v109
    %566 = vmatpush.msra.mxu0 %v108
    %567 = vmatpush.msra.mxu0 %v107
    %568 = vmatmul.f32.gmra.mxu0 %v550
    %v569 = vpop.f32.mrf.mxu0
    %v570 = vadd.f32 0.0, %v569
    %571 = vdwg.mxu0
    %572 = vst [vmem:[#allocation1] ss:$4 sm:$0xff] %v444
    %v573 = vld.sshfl [vmem:[#allocation1] sm:$0xff pattern:$0x73625140]
    %574 = vrot.lane.b32.xlu0 %v573, 96
    %v575 = vpop.permute.xlu0 %574
    %v576 = vsel %vm273, %v575, 0
    %578 = vmatpush.msra.mxu0 0.0
    %579 = vmatpush.msra.mxu0 0.0
    %580 = vmatpush.msra.mxu0 0.0
    %581 = vmatpush.msra.mxu0 0.0
    %582 = vmatpush.msra.mxu0 0.0
    %583 = vmatpush.msra.mxu0 0.0
    %584 = vmatpush.msra.mxu0 0.0
    %585 = vmatpush.msra.mxu0 0.0
    %586 = vmatpush.msra.mxu0 0.0
    %587 = vmatpush.msra.mxu0 0.0
    %588 = vmatpush.msra.mxu0 0.0
    %589 = vmatpush.msra.mxu0 0.0
    %590 = vmatpush.msra.mxu0 %v114
    %591 = vmatpush.msra.mxu0 %v113
    %592 = vmatpush.msra.mxu0 %v112
    %593 = vmatpush.msra.mxu0 %v111
    %594 = vmatmul.f32.gmra.mxu0 %v576
    %v595 = vpop.f32.mrf.mxu0
    %v596 = vadd.f32 0.0, %v595
    %597 = vdwg.mxu0
    %598 = vst [vmem:[#allocation1] ss:$4 sm:$0xff] %v529
    %v599 = vld.sshfl [vmem:[#allocation1] sm:$0xff pattern:$0x73625140]
    %600 = vrot.lane.b32.xlu0 %v599, 96
    %v601 = vpop.permute.xlu0 %600
    %v602 = vsel %vm273, %v601, 0
    %604 = vmatpush.msra.mxu0 0.0
    %605 = vmatpush.msra.mxu0 0.0
    %606 = vmatpush.msra.mxu0 0.0
    %607 = vmatpush.msra.mxu0 0.0
    %608 = vmatpush.msra.mxu0 0.0
    %609 = vmatpush.msra.mxu0 0.0
    %610 = vmatpush.msra.mxu0 0.0
    %611 = vmatpush.msra.mxu0 0.0
    %612 = vmatpush.msra.mxu0 0.0
    %613 = vmatpush.msra.mxu0 0.0
    %614 = vmatpush.msra.mxu0 0.0
    %615 = vmatpush.msra.mxu0 0.0
    %616 = vmatpush.msra.mxu0 %v122
    %617 = vmatpush.msra.mxu0 %v121
    %618 = vmatpush.msra.mxu0 %v120
    %619 = vmatpush.msra.mxu0 %v119
    %620 = vmatmul.f32.gmra.mxu0 %v602
    %v621 = vpop.f32.mrf.mxu0
    %v622 = vadd.f32 0.0, %v621
    %623 = vdwg.mxu0
    %624 = vst [vmem:[#allocation1] ss:$4 sm:$0xff] %v529
    %v625 = vld.sshfl [vmem:[#allocation1] sm:$0xff pattern:$0x73625140]
    %626 = vrot.lane.b32.xlu0 %v625, 96
    %v627 = vpop.permute.xlu0 %626
    %v628 = vsel %vm273, %v627, 0
    %630 = vmatpush.msra.mxu0 0.0
    %631 = vmatpush.msra.mxu0 0.0
    %632 = vmatpush.msra.mxu0 0.0
    %633 = vmatpush.msra.mxu0 0.0
    %634 = vmatpush.msra.mxu0 0.0
    %635 = vmatpush.msra.mxu0 0.0
    %636 = vmatpush.msra.mxu0 0.0
    %637 = vmatpush.msra.mxu0 0.0
    %638 = vmatpush.msra.mxu0 0.0
    %639 = vmatpush.msra.mxu0 0.0
    %640 = vmatpush.msra.mxu0 0.0
    %641 = vmatpush.msra.mxu0 0.0
    %642 = vmatpush.msra.mxu0 %v126
    %643 = vmatpush.msra.mxu0 %v125
    %644 = vmatpush.msra.mxu0 %v124
    %645 = vmatpush.msra.mxu0 %v123
    %646 = vmatmul.f32.gmra.mxu0 %v628
    %v647 = vpop.f32.mrf.mxu0
    %v648 = vadd.f32 0.0, %v647
    %649 = vdwg.mxu0
    %v650 = vadd.f32 %v197, %v570
    %v651 = vxor.u32 %v650, 2147483648
    %v652 = vmul.f32 %v651, 1.442695
    %v653 = vpow.pop %v652
    %v654 = vadd.f32 %v653, 1.0
    %v655 = vrcp.pop %v654
    %v656 = vmul.f32 %v654, %v655
    %v657 = vsub.f32 1.0, %v656
    %v658 = vmul.f32 %v655, %v657
    %v659 = vadd.f32 %v655, %v658
    %vm660 = vweird.f32 %v654
    %vm661 = vweird.f32 %v655
    %vm662 = vmor %vm660, %vm661
    %v663 = vsel %vm662, %v655, %v659
    %v664 = vand.u32 2147483647, %v654
    %vm665 = vcmp.eq.f32.partialorder %v664, 8.507059e+37
    %v666 = vand.u32 %v654, 2147483648
    %v667 = vor.u32 1.1754944e-38, %v666
    %v668 = vsel %vm665, %v667, %v663
    %v669 = vmul.f32 1.0, %v668
    %671 = vrot.lane.b32.xlu0 %v596, 32
    %v672 = vpop.permute.xlu0 %671
    %v674 = vadd.f32 %v197, %v672
    %v675 = vxor.u32 %v674, 2147483648
    %v676 = vmul.f32 %v675, 1.442695
    %v677 = vpow.pop %v676
    %v678 = vadd.f32 %v677, 1.0
    %v679 = vrcp.pop %v678
    %v680 = vmul.f32 %v678, %v679
    %v681 = vsub.f32 1.0, %v680
    %v682 = vmul.f32 %v679, %v681
    %v683 = vadd.f32 %v679, %v682
    %vm684 = vweird.f32 %v678
    %vm685 = vweird.f32 %v679
    %vm686 = vmor %vm684, %vm685
    %v687 = vsel %vm686, %v679, %v683
    %v688 = vand.u32 2147483647, %v678
    %vm689 = vcmp.eq.f32.partialorder %v688, 8.507059e+37
    %v690 = vand.u32 %v678, 2147483648
    %v691 = vor.u32 1.1754944e-38, %v690
    %v692 = vsel %vm689, %v691, %v687
    %v693 = vmul.f32 1.0, %v692
    %694 = vst [vmem:[#allocation1] ss:$4 sm:$0xff] %v444
    %v695 = vld.sshfl [vmem:[#allocation1] sm:$0xff pattern:$0x73625140]
    %696 = vrot.lane.b32.xlu0 %v695, 96
    %v697 = vpop.permute.xlu0 %696
    %v698 = vsel %vm273, %v697, 0
    %700 = vmatpush.msra.mxu0 0.0
    %701 = vmatpush.msra.mxu0 0.0
    %702 = vmatpush.msra.mxu0 0.0
    %703 = vmatpush.msra.mxu0 0.0
    %704 = vmatpush.msra.mxu0 0.0
    %705 = vmatpush.msra.mxu0 0.0
    %706 = vmatpush.msra.mxu0 0.0
    %707 = vmatpush.msra.mxu0 0.0
    %708 = vmatpush.msra.mxu0 0.0
    %709 = vmatpush.msra.mxu0 0.0
    %710 = vmatpush.msra.mxu0 0.0
    %711 = vmatpush.msra.mxu0 0.0
    %712 = vmatpush.msra.mxu0 %v118
    %713 = vmatpush.msra.mxu0 %v117
    %714 = vmatpush.msra.mxu0 %v116
    %715 = vmatpush.msra.mxu0 %v115
    %716 = vmatmul.f32.gmra.mxu0 %v698
    %v717 = vpop.f32.mrf.mxu0
    %v718 = vadd.f32 %v405, %v717
    %719 = vdwg.mxu0
    %v720 = vmul.f32 %v669, %v718
    %722 = vrot.lane.b32.xlu0 %v720, 64
    %v723 = vpop.permute.xlu0 %722
    %v725 = vadd.f32 %v197, %v723
    %v726 = vtanh.pop %v725
    %v727 = vsub.f32 1.0, %v693
    %729 = vrot.lane.b32.xlu0 %v726, 96
    %v730 = vpop.permute.xlu0 %729
    %v732 = vmul.f32 %v727, %v730
    %v733 = vmul.f32 %v693, %v444
    %v734 = vadd.f32 %v732, %v733
    %v735 = vadd.f32 %v265, %v622
    %v736 = vxor.u32 %v735, 2147483648
    %v737 = vmul.f32 %v736, 1.442695
    %v738 = vpow.pop %v737
    %v739 = vadd.f32 %v738, 1.0
    %v740 = vrcp.pop %v739
    %v741 = vmul.f32 %v739, %v740
    %v742 = vsub.f32 1.0, %v741
    %v743 = vmul.f32 %v740, %v742
    %v744 = vadd.f32 %v740, %v743
    %vm745 = vweird.f32 %v739
    %vm746 = vweird.f32 %v740
    %vm747 = vmor %vm745, %vm746
    %v748 = vsel %vm747, %v740, %v744
    %v749 = vand.u32 2147483647, %v739
    %vm750 = vcmp.eq.f32.partialorder %v749, 8.507059e+37
    %v751 = vand.u32 %v739, 2147483648
    %v752 = vor.u32 1.1754944e-38, %v751
    %v753 = vsel %vm750, %v752, %v748
    %v754 = vmul.f32 1.0, %v753
    %756 = vrot.lane.b32.xlu0 %v648, 32
    %v757 = vpop.permute.xlu0 %756
    %v759 = vadd.f32 %v265, %v757
    %v760 = vxor.u32 %v759, 2147483648
    %v761 = vmul.f32 %v760, 1.442695
    %v762 = vpow.pop %v761
    %v763 = vadd.f32 %v762, 1.0
    %v764 = vrcp.pop %v763
    %v765 = vmul.f32 %v763, %v764
    %v766 = vsub.f32 1.0, %v765
    %v767 = vmul.f32 %v764, %v766
    %v768 = vadd.f32 %v764, %v767
    %vm769 = vweird.f32 %v763
    %vm770 = vweird.f32 %v764
    %vm771 = vmor %vm769, %vm770
    %v772 = vsel %vm771, %v764, %v768
    %v773 = vand.u32 2147483647, %v763
    %vm774 = vcmp.eq.f32.partialorder %v773, 8.507059e+37
    %v775 = vand.u32 %v763, 2147483648
    %v776 = vor.u32 1.1754944e-38, %v775
    %v777 = vsel %vm774, %v776, %v772
    %v778 = vmul.f32 1.0, %v777
    %779 = vst [vmem:[#allocation1] ss:$4 sm:$0xff] %v529
    %v780 = vld.sshfl [vmem:[#allocation1] sm:$0xff pattern:$0x73625140]
    %781 = vrot.lane.b32.xlu0 %v780, 96
    %v782 = vpop.permute.xlu0 %781
    %v783 = vsel %vm273, %v782, 0
    %785 = vmatpush.msra.mxu0 0.0
    %786 = vmatpush.msra.mxu0 0.0
    %787 = vmatpush.msra.mxu0 0.0
    %788 = vmatpush.msra.mxu0 0.0
    %789 = vmatpush.msra.mxu0 0.0
    %790 = vmatpush.msra.mxu0 0.0
    %791 = vmatpush.msra.mxu0 0.0
    %792 = vmatpush.msra.mxu0 0.0
    %793 = vmatpush.msra.mxu0 0.0
    %794 = vmatpush.msra.mxu0 0.0
    %795 = vmatpush.msra.mxu0 0.0
    %796 = vmatpush.msra.mxu0 0.0
    %797 = vmatpush.msra.mxu0 %v130
    %798 = vmatpush.msra.mxu0 %v129
    %799 = vmatpush.msra.mxu0 %v128
    %800 = vmatpush.msra.mxu0 %v127
    %801 = vmatmul.f32.gmra.mxu0 %v783
    %v802 = vpop.f32.mrf.mxu0
    %v803 = vadd.f32 %v490, %v802
    %804 = vdwg.mxu0
    %v805 = vmul.f32 %v754, %v803
    %807 = vrot.lane.b32.xlu0 %v805, 64
    %v808 = vpop.permute.xlu0 %807
    %v810 = vadd.f32 %v265, %v808
    %v811 = vtanh.pop %v810
    %v812 = vsub.f32 1.0, %v778
    %814 = vrot.lane.b32.xlu0 %v811, 96
    %v815 = vpop.permute.xlu0 %814
    %v817 = vmul.f32 %v812, %v815
    %v818 = vmul.f32 %v778, %v529
    %v819 = vadd.f32 %v817, %v818
    %821 = vst [vmem:[#allocation1] ss:$4 sm:$0xff] %v734
    %v822 = vld.sshfl [vmem:[#allocation1] sm:$0xff pattern:$0x73625140]
    %823 = vrot.lane.b32.xlu0 %v822, 96
    %v824 = vpop.permute.xlu0 %823
    %s826 = scalar_lea.vmem [#allocation2], 2
    %827 = vst.msk [vmem:[%s826] sm:$0x3] %vm536, %v824
    %829 = vst [vmem:[#allocation1] ss:$4 sm:$0xff] %v819
    %v830 = vld.sshfl [vmem:[#allocation1] sm:$0xff pattern:$0x73625140]
    %831 = vrot.lane.b32.xlu0 %v830, 96
    %v832 = vpop.permute.xlu0 %831
    %s834 = scalar_lea.vmem [#allocation3], 12
    %835 = vst.msk [vmem:[%s834] sm:$0x3] %vm536, %v832
    %836 = vst [vmem:[#allocation1] ss:$4 sm:$0xff] %v734
    %v837 = vld.sshfl [vmem:[#allocation1] sm:$0xff pattern:$0x73625140]
    %838 = vrot.lane.b32.xlu0 %v837, 96
    %v839 = vpop.permute.xlu0 %838
    %v840 = vsel %vm273, %v839, 0
    %842 = vmatpush.msra.mxu0 0.0
    %843 = vmatpush.msra.mxu0 0.0
    %844 = vmatpush.msra.mxu0 0.0
    %845 = vmatpush.msra.mxu0 0.0
    %846 = vmatpush.msra.mxu0 0.0
    %847 = vmatpush.msra.mxu0 0.0
    %848 = vmatpush.msra.mxu0 0.0
    %849 = vmatpush.msra.mxu0 0.0
    %850 = vmatpush.msra.mxu0 0.0
    %851 = vmatpush.msra.mxu0 0.0
    %852 = vmatpush.msra.mxu0 0.0
    %853 = vmatpush.msra.mxu0 0.0
    %854 = vmatpush.msra.mxu0 %v110
    %855 = vmatpush.msra.mxu0 %v109
    %856 = vmatpush.msra.mxu0 %v108
    %857 = vmatpush.msra.mxu0 %v107
    %858 = vmatmul.f32.gmra.mxu0 %v840
    %v859 = vpop.f32.mrf.mxu0
    %v860 = vadd.f32 0.0, %v859
    %861 = vdwg.mxu0
    %862 = vst [vmem:[#allocation1] ss:$4 sm:$0xff] %v734
    %v863 = vld.sshfl [vmem:[#allocation1] sm:$0xff pattern:$0x73625140]
    %864 = vrot.lane.b32.xlu0 %v863, 96
    %v865 = vpop.permute.xlu0 %864
    %v866 = vsel %vm273, %v865, 0
    %868 = vmatpush.msra.mxu0 0.0
    %869 = vmatpush.msra.mxu0 0.0
    %870 = vmatpush.msra.mxu0 0.0
    %871 = vmatpush.msra.mxu0 0.0
    %872 = vmatpush.msra.mxu0 0.0
    %873 = vmatpush.msra.mxu0 0.0
    %874 = vmatpush.msra.mxu0 0.0
    %875 = vmatpush.msra.mxu0 0.0
    %876 = vmatpush.msra.mxu0 0.0
    %877 = vmatpush.msra.mxu0 0.0
    %878 = vmatpush.msra.mxu0 0.0
    %879 = vmatpush.msra.mxu0 0.0
    %880 = vmatpush.msra.mxu0 %v114
    %881 = vmatpush.msra.mxu0 %v113
    %882 = vmatpush.msra.mxu0 %v112
    %883 = vmatpush.msra.mxu0 %v111
    %884 = vmatmul.f32.gmra.mxu0 %v866
    %v885 = vpop.f32.mrf.mxu0
    %v886 = vadd.f32 0.0, %v885
    %887 = vdwg.mxu0
    %888 = vst [vmem:[#allocation1] ss:$4 sm:$0xff] %v819
    %v889 = vld.sshfl [vmem:[#allocation1] sm:$0xff pattern:$0x73625140]
    %890 = vrot.lane.b32.xlu0 %v889, 96
    %v891 = vpop.permute.xlu0 %890
    %v892 = vsel %vm273, %v891, 0
    %894 = vmatpush.msra.mxu0 0.0
    %895 = vmatpush.msra.mxu0 0.0
    %896 = vmatpush.msra.mxu0 0.0
    %897 = vmatpush.msra.mxu0 0.0
    %898 = vmatpush.msra.mxu0 0.0
    %899 = vmatpush.msra.mxu0 0.0
    %900 = vmatpush.msra.mxu0 0.0
    %901 = vmatpush.msra.mxu0 0.0
    %902 = vmatpush.msra.mxu0 0.0
    %903 = vmatpush.msra.mxu0 0.0
    %904 = vmatpush.msra.mxu0 0.0
    %905 = vmatpush.msra.mxu0 0.0
    %906 = vmatpush.msra.mxu0 %v122
    %907 = vmatpush.msra.mxu0 %v121
    %908 = vmatpush.msra.mxu0 %v120
    %909 = vmatpush.msra.mxu0 %v119
    %910 = vmatmul.f32.gmra.mxu0 %v892
    %v911 = vpop.f32.mrf.mxu0
    %v912 = vadd.f32 0.0, %v911
    %913 = vdwg.mxu0
    %914 = vst [vmem:[#allocation1] ss:$4 sm:$0xff] %v819
    %v915 = vld.sshfl [vmem:[#allocation1] sm:$0xff pattern:$0x73625140]
    %916 = vrot.lane.b32.xlu0 %v915, 96
    %v917 = vpop.permute.xlu0 %916
    %v918 = vsel %vm273, %v917, 0
    %920 = vmatpush.msra.mxu0 0.0
    %921 = vmatpush.msra.mxu0 0.0
    %922 = vmatpush.msra.mxu0 0.0
    %923 = vmatpush.msra.mxu0 0.0
    %924 = vmatpush.msra.mxu0 0.0
    %925 = vmatpush.msra.mxu0 0.0
    %926 = vmatpush.msra.mxu0 0.0
    %927 = vmatpush.msra.mxu0 0.0
    %928 = vmatpush.msra.mxu0 0.0
    %929 = vmatpush.msra.mxu0 0.0
    %930 = vmatpush.msra.mxu0 0.0
    %931 = vmatpush.msra.mxu0 0.0
    %932 = vmatpush.msra.mxu0 %v126
    %933 = vmatpush.msra.mxu0 %v125
    %934 = vmatpush.msra.mxu0 %v124
    %935 = vmatpush.msra.mxu0 %v123
    %936 = vmatmul.f32.gmra.mxu0 %v918
    %v937 = vpop.f32.mrf.mxu0
    %v938 = vadd.f32 0.0, %v937
    %939 = vdwg.mxu0
    %v940 = vadd.f32 %v198, %v860
    %v941 = vxor.u32 %v940, 2147483648
    %v942 = vmul.f32 %v941, 1.442695
    %v943 = vpow.pop %v942
    %v944 = vadd.f32 %v943, 1.0
    %v945 = vrcp.pop %v944
    %v946 = vmul.f32 %v944, %v945
    %v947 = vsub.f32 1.0, %v946
    %v948 = vmul.f32 %v945, %v947
    %v949 = vadd.f32 %v945, %v948
    %vm950 = vweird.f32 %v944
    %vm951 = vweird.f32 %v945
    %vm952 = vmor %vm950, %vm951
    %v953 = vsel %vm952, %v945, %v949
    %v954 = vand.u32 2147483647, %v944
    %vm955 = vcmp.eq.f32.partialorder %v954, 8.507059e+37
    %v956 = vand.u32 %v944, 2147483648
    %v957 = vor.u32 1.1754944e-38, %v956
    %v958 = vsel %vm955, %v957, %v953
    %v959 = vmul.f32 1.0, %v958
    %961 = vrot.lane.b32.xlu0 %v886, 32
    %v962 = vpop.permute.xlu0 %961
    %v964 = vadd.f32 %v198, %v962
    %v965 = vxor.u32 %v964, 2147483648
    %v966 = vmul.f32 %v965, 1.442695
    %v967 = vpow.pop %v966
    %v968 = vadd.f32 %v967, 1.0
    %v969 = vrcp.pop %v968
    %v970 = vmul.f32 %v968, %v969
    %v971 = vsub.f32 1.0, %v970
    %v972 = vmul.f32 %v969, %v971
    %v973 = vadd.f32 %v969, %v972
    %vm974 = vweird.f32 %v968
    %vm975 = vweird.f32 %v969
    %vm976 = vmor %vm974, %vm975
    %v977 = vsel %vm976, %v969, %v973
    %v978 = vand.u32 2147483647, %v968
    %vm979 = vcmp.eq.f32.partialorder %v978, 8.507059e+37
    %v980 = vand.u32 %v968, 2147483648
    %v981 = vor.u32 1.1754944e-38, %v980
    %v982 = vsel %vm979, %v981, %v977
    %v983 = vmul.f32 1.0, %v982
    %984 = vst [vmem:[#allocation1] ss:$4 sm:$0xff] %v734
    %v985 = vld.sshfl [vmem:[#allocation1] sm:$0xff pattern:$0x73625140]
    %986 = vrot.lane.b32.xlu0 %v985, 96
    %v987 = vpop.permute.xlu0 %986
    %v988 = vsel %vm273, %v987, 0
    %990 = vmatpush.msra.mxu0 0.0
    %991 = vmatpush.msra.mxu0 0.0
    %992 = vmatpush.msra.mxu0 0.0
    %993 = vmatpush.msra.mxu0 0.0
    %994 = vmatpush.msra.mxu0 0.0
    %995 = vmatpush.msra.mxu0 0.0
    %996 = vmatpush.msra.mxu0 0.0
    %997 = vmatpush.msra.mxu0 0.0
    %998 = vmatpush.msra.mxu0 0.0
    %999 = vmatpush.msra.mxu0 0.0
    %1000 = vmatpush.msra.mxu0 0.0
    %1001 = vmatpush.msra.mxu0 0.0
    %1002 = vmatpush.msra.mxu0 %v118
    %1003 = vmatpush.msra.mxu0 %v117
    %1004 = vmatpush.msra.mxu0 %v116
    %1005 = vmatpush.msra.mxu0 %v115
    %1006 = vmatmul.f32.gmra.mxu0 %v988
    %v1007 = vpop.f32.mrf.mxu0
    %v1008 = vadd.f32 %v405, %v1007
    %1009 = vdwg.mxu0
    %v1010 = vmul.f32 %v959, %v1008
    %1012 = vrot.lane.b32.xlu0 %v1010, 64
    %v1013 = vpop.permute.xlu0 %1012
    %v1015 = vadd.f32 %v198, %v1013
    %v1016 = vtanh.pop %v1015
    %v1017 = vsub.f32 1.0, %v983
    %1019 = vrot.lane.b32.xlu0 %v1016, 96
    %v1020 = vpop.permute.xlu0 %1019
    %v1022 = vmul.f32 %v1017, %v1020
    %v1023 = vmul.f32 %v983, %v734
    %v1024 = vadd.f32 %v1022, %v1023
    %v1025 = vadd.f32 %v264, %v912
    %v1026 = vxor.u32 %v1025, 2147483648
    %v1027 = vmul.f32 %v1026, 1.442695
    %v1028 = vpow.pop %v1027
    %v1029 = vadd.f32 %v1028, 1.0
    %v1030 = vrcp.pop %v1029
    %v1031 = vmul.f32 %v1029, %v1030
    %v1032 = vsub.f32 1.0, %v1031
    %v1033 = vmul.f32 %v1030, %v1032
    %v1034 = vadd.f32 %v1030, %v1033
    %vm1035 = vweird.f32 %v1029
    %vm1036 = vweird.f32 %v1030
    %vm1037 = vmor %vm1035, %vm1036
    %v1038 = vsel %vm1037, %v1030, %v1034
    %v1039 = vand.u32 2147483647, %v1029
    %vm1040 = vcmp.eq.f32.partialorder %v1039, 8.507059e+37
    %v1041 = vand.u32 %v1029, 2147483648
    %v1042 = vor.u32 1.1754944e-38, %v1041
    %v1043 = vsel %vm1040, %v1042, %v1038
    %v1044 = vmul.f32 1.0, %v1043
    %1046 = vrot.lane.b32.xlu0 %v938, 32
    %v1047 = vpop.permute.xlu0 %1046
    %v1049 = vadd.f32 %v264, %v1047
    %v1050 = vxor.u32 %v1049, 2147483648
    %v1051 = vmul.f32 %v1050, 1.442695
    %v1052 = vpow.pop %v1051
    %v1053 = vadd.f32 %v1052, 1.0
    %v1054 = vrcp.pop %v1053
    %v1055 = vmul.f32 %v1053, %v1054
    %v1056 = vsub.f32 1.0, %v1055
    %v1057 = vmul.f32 %v1054, %v1056
    %v1058 = vadd.f32 %v1054, %v1057
    %vm1059 = vweird.f32 %v1053
    %vm1060 = vweird.f32 %v1054
    %vm1061 = vmor %vm1059, %vm1060
    %v1062 = vsel %vm1061, %v1054, %v1058
    %v1063 = vand.u32 2147483647, %v1053
    %vm1064 = vcmp.eq.f32.partialorder %v1063, 8.507059e+37
    %v1065 = vand.u32 %v1053, 2147483648
    %v1066 = vor.u32 1.1754944e-38, %v1065
    %v1067 = vsel %vm1064, %v1066, %v1062
    %v1068 = vmul.f32 1.0, %v1067
    %1069 = vst [vmem:[#allocation1] ss:$4 sm:$0xff] %v819
    %v1070 = vld.sshfl [vmem:[#allocation1] sm:$0xff pattern:$0x73625140]
    %1071 = vrot.lane.b32.xlu0 %v1070, 96
    %v1072 = vpop.permute.xlu0 %1071
    %v1073 = vsel %vm273, %v1072, 0
    %1075 = vmatpush.msra.mxu0 0.0
    %1076 = vmatpush.msra.mxu0 0.0
    %1077 = vmatpush.msra.mxu0 0.0
    %1078 = vmatpush.msra.mxu0 0.0
    %1079 = vmatpush.msra.mxu0 0.0
    %1080 = vmatpush.msra.mxu0 0.0
    %1081 = vmatpush.msra.mxu0 0.0
    %1082 = vmatpush.msra.mxu0 0.0
    %1083 = vmatpush.msra.mxu0 0.0
    %1084 = vmatpush.msra.mxu0 0.0
    %1085 = vmatpush.msra.mxu0 0.0
    %1086 = vmatpush.msra.mxu0 0.0
    %1087 = vmatpush.msra.mxu0 %v130
    %1088 = vmatpush.msra.mxu0 %v129
    %1089 = vmatpush.msra.mxu0 %v128
    %1090 = vmatpush.msra.mxu0 %v127
    %1091 = vmatmul.f32.gmra.mxu0 %v1073
    %v1092 = vpop.f32.mrf.mxu0
    %v1093 = vadd.f32 %v490, %v1092
    %1094 = vdwg.mxu0
    %v1095 = vmul.f32 %v1044, %v1093
    %1097 = vrot.lane.b32.xlu0 %v1095, 64
    %v1098 = vpop.permute.xlu0 %1097
    %v1100 = vadd.f32 %v264, %v1098
    %v1101 = vtanh.pop %v1100
    %v1102 = vsub.f32 1.0, %v1068
    %1104 = vrot.lane.b32.xlu0 %v1101, 96
    %v1105 = vpop.permute.xlu0 %1104
    %v1107 = vmul.f32 %v1102, %v1105
    %v1108 = vmul.f32 %v1068, %v819
    %v1109 = vadd.f32 %v1107, %v1108
    %1111 = vst [vmem:[#allocation1] ss:$4 sm:$0xff] %v1024
    %v1112 = vld.sshfl [vmem:[#allocation1] sm:$0xff pattern:$0x73625140]
    %1113 = vrot.lane.b32.xlu0 %v1112, 96
    %v1114 = vpop.permute.xlu0 %1113
    %s1116 = scalar_lea.vmem [#allocation2], 4
    %1117 = vst.msk [vmem:[%s1116] sm:$0x3] %vm536, %v1114
    %1119 = vst [vmem:[#allocation1] ss:$4 sm:$0xff] %v1109
    %v1120 = vld.sshfl [vmem:[#allocation1] sm:$0xff pattern:$0x73625140]
    %1121 = vrot.lane.b32.xlu0 %v1120, 96
    %v1122 = vpop.permute.xlu0 %1121
    %s1124 = scalar_lea.vmem [#allocation3], 10
    %1125 = vst.msk [vmem:[%s1124] sm:$0x3] %vm536, %v1122
    %1126 = vst [vmem:[#allocation1] ss:$4 sm:$0xff] %v1024
    %v1127 = vld.sshfl [vmem:[#allocation1] sm:$0xff pattern:$0x73625140]
    %1128 = vrot.lane.b32.xlu0 %v1127, 96
    %v1129 = vpop.permute.xlu0 %1128
    %v1130 = vsel %vm273, %v1129, 0
    %1132 = vmatpush.msra.mxu0 0.0
    %1133 = vmatpush.msra.mxu0 0.0
    %1134 = vmatpush.msra.mxu0 0.0
    %1135 = vmatpush.msra.mxu0 0.0
    %1136 = vmatpush.msra.mxu0 0.0
    %1137 = vmatpush.msra.mxu0 0.0
    %1138 = vmatpush.msra.mxu0 0.0
    %1139 = vmatpush.msra.mxu0 0.0
    %1140 = vmatpush.msra.mxu0 0.0
    %1141 = vmatpush.msra.mxu0 0.0
    %1142 = vmatpush.msra.mxu0 0.0
    %1143 = vmatpush.msra.mxu0 0.0
    %1144 = vmatpush.msra.mxu0 %v110
    %1145 = vmatpush.msra.mxu0 %v109
    %1146 = vmatpush.msra.mxu0 %v108
    %1147 = vmatpush.msra.mxu0 %v107
    %1148 = vmatmul.f32.gmra.mxu0 %v1130
    %v1149 = vpop.f32.mrf.mxu0
    %v1150 = vadd.f32 0.0, %v1149
    %1151 = vdwg.mxu0
    %1152 = vst [vmem:[#allocation1] ss:$4 sm:$0xff] %v1024
    %v1153 = vld.sshfl [vmem:[#allocation1] sm:$0xff pattern:$0x73625140]
    %1154 = vrot.lane.b32.xlu0 %v1153, 96
    %v1155 = vpop.permute.xlu0 %1154
    %v1156 = vsel %vm273, %v1155, 0
    %1158 = vmatpush.msra.mxu0 0.0
    %1159 = vmatpush.msra.mxu0 0.0
    %1160 = vmatpush.msra.mxu0 0.0
    %1161 = vmatpush.msra.mxu0 0.0
    %1162 = vmatpush.msra.mxu0 0.0
    %1163 = vmatpush.msra.mxu0 0.0
    %1164 = vmatpush.msra.mxu0 0.0
    %1165 = vmatpush.msra.mxu0 0.0
    %1166 = vmatpush.msra.mxu0 0.0
    %1167 = vmatpush.msra.mxu0 0.0
    %1168 = vmatpush.msra.mxu0 0.0
    %1169 = vmatpush.msra.mxu0 0.0
    %1170 = vmatpush.msra.mxu0 %v114
    %1171 = vmatpush.msra.mxu0 %v113
    %1172 = vmatpush.msra.mxu0 %v112
    %1173 = vmatpush.msra.mxu0 %v111
    %1174 = vmatmul.f32.gmra.mxu0 %v1156
    %v1175 = vpop.f32.mrf.mxu0
    %v1176 = vadd.f32 0.0, %v1175
    %1177 = vdwg.mxu0
    %1178 = vst [vmem:[#allocation1] ss:$4 sm:$0xff] %v1109
    %v1179 = vld.sshfl [vmem:[#allocation1] sm:$0xff pattern:$0x73625140]
    %1180 = vrot.lane.b32.xlu0 %v1179, 96
    %v1181 = vpop.permute.xlu0 %1180
    %v1182 = vsel %vm273, %v1181, 0
    %1184 = vmatpush.msra.mxu0 0.0
    %1185 = vmatpush.msra.mxu0 0.0
    %1186 = vmatpush.msra.mxu0 0.0
    %1187 = vmatpush.msra.mxu0 0.0
    %1188 = vmatpush.msra.mxu0 0.0
    %1189 = vmatpush.msra.mxu0 0.0
    %1190 = vmatpush.msra.mxu0 0.0
    %1191 = vmatpush.msra.mxu0 0.0
    %1192 = vmatpush.msra.mxu0 0.0
    %1193 = vmatpush.msra.mxu0 0.0
    %1194 = vmatpush.msra.mxu0 0.0
    %1195 = vmatpush.msra.mxu0 0.0
    %1196 = vmatpush.msra.mxu0 %v122
    %1197 = vmatpush.msra.mxu0 %v121
    %1198 = vmatpush.msra.mxu0 %v120
    %1199 = vmatpush.msra.mxu0 %v119
    %1200 = vmatmul.f32.gmra.mxu0 %v1182
    %v1201 = vpop.f32.mrf.mxu0
    %v1202 = vadd.f32 0.0, %v1201
    %1203 = vdwg.mxu0
    %1204 = vst [vmem:[#allocation1] ss:$4 sm:$0xff] %v1109
    %v1205 = vld.sshfl [vmem:[#allocation1] sm:$0xff pattern:$0x73625140]
    %1206 = vrot.lane.b32.xlu0 %v1205, 96
    %v1207 = vpop.permute.xlu0 %1206
    %v1208 = vsel %vm273, %v1207, 0
    %1210 = vmatpush.msra.mxu0 0.0
    %1211 = vmatpush.msra.mxu0 0.0
    %1212 = vmatpush.msra.mxu0 0.0
    %1213 = vmatpush.msra.mxu0 0.0
    %1214 = vmatpush.msra.mxu0 0.0
    %1215 = vmatpush.msra.mxu0 0.0
    %1216 = vmatpush.msra.mxu0 0.0
    %1217 = vmatpush.msra.mxu0 0.0
    %1218 = vmatpush.msra.mxu0 0.0
    %1219 = vmatpush.msra.mxu0 0.0
    %1220 = vmatpush.msra.mxu0 0.0
    %1221 = vmatpush.msra.mxu0 0.0
    %1222 = vmatpush.msra.mxu0 %v126
    %1223 = vmatpush.msra.mxu0 %v125
    %1224 = vmatpush.msra.mxu0 %v124
    %1225 = vmatpush.msra.mxu0 %v123
    %1226 = vmatmul.f32.gmra.mxu0 %v1208
    %v1227 = vpop.f32.mrf.mxu0
    %v1228 = vadd.f32 0.0, %v1227
    %1229 = vdwg.mxu0
    %v1230 = vadd.f32 %v199, %v1150
    %v1231 = vxor.u32 %v1230, 2147483648
    %v1232 = vmul.f32 %v1231, 1.442695
    %v1233 = vpow.pop %v1232
    %v1234 = vadd.f32 %v1233, 1.0
    %v1235 = vrcp.pop %v1234
    %v1236 = vmul.f32 %v1234, %v1235
    %v1237 = vsub.f32 1.0, %v1236
    %v1238 = vmul.f32 %v1235, %v1237
    %v1239 = vadd.f32 %v1235, %v1238
    %vm1240 = vweird.f32 %v1234
    %vm1241 = vweird.f32 %v1235
    %vm1242 = vmor %vm1240, %vm1241
    %v1243 = vsel %vm1242, %v1235, %v1239
    %v1244 = vand.u32 2147483647, %v1234
    %vm1245 = vcmp.eq.f32.partialorder %v1244, 8.507059e+37
    %v1246 = vand.u32 %v1234, 2147483648
    %v1247 = vor.u32 1.1754944e-38, %v1246
    %v1248 = vsel %vm1245, %v1247, %v1243
    %v1249 = vmul.f32 1.0, %v1248
    %1251 = vrot.lane.b32.xlu0 %v1176, 32
    %v1252 = vpop.permute.xlu0 %1251
    %v1254 = vadd.f32 %v199, %v1252
    %v1255 = vxor.u32 %v1254, 2147483648
    %v1256 = vmul.f32 %v1255, 1.442695
    %v1257 = vpow.pop %v1256
    %v1258 = vadd.f32 %v1257, 1.0
    %v1259 = vrcp.pop %v1258
    %v1260 = vmul.f32 %v1258, %v1259
    %v1261 = vsub.f32 1.0, %v1260
    %v1262 = vmul.f32 %v1259, %v1261
    %v1263 = vadd.f32 %v1259, %v1262
    %vm1264 = vweird.f32 %v1258
    %vm1265 = vweird.f32 %v1259
    %vm1266 = vmor %vm1264, %vm1265
    %v1267 = vsel %vm1266, %v1259, %v1263
    %v1268 = vand.u32 2147483647, %v1258
    %vm1269 = vcmp.eq.f32.partialorder %v1268, 8.507059e+37
    %v1270 = vand.u32 %v1258, 2147483648
    %v1271 = vor.u32 1.1754944e-38, %v1270
    %v1272 = vsel %vm1269, %v1271, %v1267
    %v1273 = vmul.f32 1.0, %v1272
    %1274 = vst [vmem:[#allocation1] ss:$4 sm:$0xff] %v1024
    %v1275 = vld.sshfl [vmem:[#allocation1] sm:$0xff pattern:$0x73625140]
    %1276 = vrot.lane.b32.xlu0 %v1275, 96
    %v1277 = vpop.permute.xlu0 %1276
    %v1278 = vsel %vm273, %v1277, 0
    %1280 = vmatpush.msra.mxu0 0.0
    %1281 = vmatpush.msra.mxu0 0.0
    %1282 = vmatpush.msra.mxu0 0.0
    %1283 = vmatpush.msra.mxu0 0.0
    %1284 = vmatpush.msra.mxu0 0.0
    %1285 = vmatpush.msra.mxu0 0.0
    %1286 = vmatpush.msra.mxu0 0.0
    %1287 = vmatpush.msra.mxu0 0.0
    %1288 = vmatpush.msra.mxu0 0.0
    %1289 = vmatpush.msra.mxu0 0.0
    %1290 = vmatpush.msra.mxu0 0.0
    %1291 = vmatpush.msra.mxu0 0.0
    %1292 = vmatpush.msra.mxu0 %v118
    %1293 = vmatpush.msra.mxu0 %v117
    %1294 = vmatpush.msra.mxu0 %v116
    %1295 = vmatpush.msra.mxu0 %v115
    %1296 = vmatmul.f32.gmra.mxu0 %v1278
    %v1297 = vpop.f32.mrf.mxu0
    %v1298 = vadd.f32 %v405, %v1297
    %1299 = vdwg.mxu0
    %v1300 = vmul.f32 %v1249, %v1298
    %1302 = vrot.lane.b32.xlu0 %v1300, 64
    %v1303 = vpop.permute.xlu0 %1302
    %v1305 = vadd.f32 %v199, %v1303
    %v1306 = vtanh.pop %v1305
    %v1307 = vsub.f32 1.0, %v1273
    %1309 = vrot.lane.b32.xlu0 %v1306, 96
    %v1310 = vpop.permute.xlu0 %1309
    %v1312 = vmul.f32 %v1307, %v1310
    %v1313 = vmul.f32 %v1273, %v1024
    %v1314 = vadd.f32 %v1312, %v1313
    %v1315 = vadd.f32 %v257, %v1202
    %v1316 = vxor.u32 %v1315, 2147483648
    %v1317 = vmul.f32 %v1316, 1.442695
    %v1318 = vpow.pop %v1317
    %v1319 = vadd.f32 %v1318, 1.0
    %v1320 = vrcp.pop %v1319
    %v1321 = vmul.f32 %v1319, %v1320
    %v1322 = vsub.f32 1.0, %v1321
    %v1323 = vmul.f32 %v1320, %v1322
    %v1324 = vadd.f32 %v1320, %v1323
    %vm1325 = vweird.f32 %v1319
    %vm1326 = vweird.f32 %v1320
    %vm1327 = vmor %vm1325, %vm1326
    %v1328 = vsel %vm1327, %v1320, %v1324
    %v1329 = vand.u32 2147483647, %v1319
    %vm1330 = vcmp.eq.f32.partialorder %v1329, 8.507059e+37
    %v1331 = vand.u32 %v1319, 2147483648
    %v1332 = vor.u32 1.1754944e-38, %v1331
    %v1333 = vsel %vm1330, %v1332, %v1328
    %v1334 = vmul.f32 1.0, %v1333
    %1336 = vrot.lane.b32.xlu0 %v1228, 32
    %v1337 = vpop.permute.xlu0 %1336
    %v1339 = vadd.f32 %v257, %v1337
    %v1340 = vxor.u32 %v1339, 2147483648
    %v1341 = vmul.f32 %v1340, 1.442695
    %v1342 = vpow.pop %v1341
    %v1343 = vadd.f32 %v1342, 1.0
    %v1344 = vrcp.pop %v1343
    %v1345 = vmul.f32 %v1343, %v1344
    %v1346 = vsub.f32 1.0, %v1345
    %v1347 = vmul.f32 %v1344, %v1346
    %v1348 = vadd.f32 %v1344, %v1347
    %vm1349 = vweird.f32 %v1343
    %vm1350 = vweird.f32 %v1344
    %vm1351 = vmor %vm1349, %vm1350
    %v1352 = vsel %vm1351, %v1344, %v1348
    %v1353 = vand.u32 2147483647, %v1343
    %vm1354 = vcmp.eq.f32.partialorder %v1353, 8.507059e+37
    %v1355 = vand.u32 %v1343, 2147483648
    %v1356 = vor.u32 1.1754944e-38, %v1355
    %v1357 = vsel %vm1354, %v1356, %v1352
    %v1358 = vmul.f32 1.0, %v1357
    %1359 = vst [vmem:[#allocation1] ss:$4 sm:$0xff] %v1109
    %v1360 = vld.sshfl [vmem:[#allocation1] sm:$0xff pattern:$0x73625140]
    %1361 = vrot.lane.b32.xlu0 %v1360, 96
    %v1362 = vpop.permute.xlu0 %1361
    %v1363 = vsel %vm273, %v1362, 0
    %1365 = vmatpush.msra.mxu0 0.0
    %1366 = vmatpush.msra.mxu0 0.0
    %1367 = vmatpush.msra.mxu0 0.0
    %1368 = vmatpush.msra.mxu0 0.0
    %1369 = vmatpush.msra.mxu0 0.0
    %1370 = vmatpush.msra.mxu0 0.0
    %1371 = vmatpush.msra.mxu0 0.0
    %1372 = vmatpush.msra.mxu0 0.0
    %1373 = vmatpush.msra.mxu0 0.0
    %1374 = vmatpush.msra.mxu0 0.0
    %1375 = vmatpush.msra.mxu0 0.0
    %1376 = vmatpush.msra.mxu0 0.0
    %1377 = vmatpush.msra.mxu0 %v130
    %1378 = vmatpush.msra.mxu0 %v129
    %1379 = vmatpush.msra.mxu0 %v128
    %1380 = vmatpush.msra.mxu0 %v127
    %1381 = vmatmul.f32.gmra.mxu0 %v1363
    %v1382 = vpop.f32.mrf.mxu0
    %v1383 = vadd.f32 %v490, %v1382
    %1384 = vdwg.mxu0
    %v1385 = vmul.f32 %v1334, %v1383
    %1387 = vrot.lane.b32.xlu0 %v1385, 64
    %v1388 = vpop.permute.xlu0 %1387
    %v1390 = vadd.f32 %v257, %v1388
    %v1391 = vtanh.pop %v1390
    %v1392 = vsub.f32 1.0, %v1358
    %1394 = vrot.lane.b32.xlu0 %v1391, 96
    %v1395 = vpop.permute.xlu0 %1394
    %v1397 = vmul.f32 %v1392, %v1395
    %v1398 = vmul.f32 %v1358, %v1109
    %v1399 = vadd.f32 %v1397, %v1398
    %1401 = vst [vmem:[#allocation1] ss:$4 sm:$0xff] %v1314
    %v1402 = vld.sshfl [vmem:[#allocation1] sm:$0xff pattern:$0x73625140]
    %1403 = vrot.lane.b32.xlu0 %v1402, 96
    %v1404 = vpop.permute.xlu0 %1403
    %s1406 = scalar_lea.vmem [#allocation2], 6
    %1407 = vst.msk [vmem:[%s1406] sm:$0x3] %vm536, %v1404
    %1409 = vst [vmem:[#allocation1] ss:$4 sm:$0xff] %v1399
    %v1410 = vld.sshfl [vmem:[#allocation1] sm:$0xff pattern:$0x73625140]
    %1411 = vrot.lane.b32.xlu0 %v1410, 96
    %v1412 = vpop.permute.xlu0 %1411
    %s1414 = scalar_lea.vmem [#allocation3], 8
    %1415 = vst.msk [vmem:[%s1414] sm:$0x3] %vm536, %v1412
    %1416 = vst [vmem:[#allocation1] ss:$4 sm:$0xff] %v1314
    %v1417 = vld.sshfl [vmem:[#allocation1] sm:$0xff pattern:$0x73625140]
    %1418 = vrot.lane.b32.xlu0 %v1417, 96
    %v1419 = vpop.permute.xlu0 %1418
    %v1420 = vsel %vm273, %v1419, 0
    %1422 = vmatpush.msra.mxu0 0.0
    %1423 = vmatpush.msra.mxu0 0.0
    %1424 = vmatpush.msra.mxu0 0.0
    %1425 = vmatpush.msra.mxu0 0.0
    %1426 = vmatpush.msra.mxu0 0.0
    %1427 = vmatpush.msra.mxu0 0.0
    %1428 = vmatpush.msra.mxu0 0.0
    %1429 = vmatpush.msra.mxu0 0.0
    %1430 = vmatpush.msra.mxu0 0.0
    %1431 = vmatpush.msra.mxu0 0.0
    %1432 = vmatpush.msra.mxu0 0.0
    %1433 = vmatpush.msra.mxu0 0.0
    %1434 = vmatpush.msra.mxu0 %v110
    %1435 = vmatpush.msra.mxu0 %v109
    %1436 = vmatpush.msra.mxu0 %v108
    %1437 = vmatpush.msra.mxu0 %v107
    %1438 = vmatmul.f32.gmra.mxu0 %v1420
    %v1439 = vpop.f32.mrf.mxu0
    %v1440 = vadd.f32 0.0, %v1439
    %1441 = vdwg.mxu0
    %1442 = vst [vmem:[#allocation1] ss:$4 sm:$0xff] %v1314
    %v1443 = vld.sshfl [vmem:[#allocation1] sm:$0xff pattern:$0x73625140]
    %1444 = vrot.lane.b32.xlu0 %v1443, 96
    %v1445 = vpop.permute.xlu0 %1444
    %v1446 = vsel %vm273, %v1445, 0
    %1448 = vmatpush.msra.mxu0 0.0
    %1449 = vmatpush.msra.mxu0 0.0
    %1450 = vmatpush.msra.mxu0 0.0
    %1451 = vmatpush.msra.mxu0 0.0
    %1452 = vmatpush.msra.mxu0 0.0
    %1453 = vmatpush.msra.mxu0 0.0
    %1454 = vmatpush.msra.mxu0 0.0
    %1455 = vmatpush.msra.mxu0 0.0
    %1456 = vmatpush.msra.mxu0 0.0
    %1457 = vmatpush.msra.mxu0 0.0
    %1458 = vmatpush.msra.mxu0 0.0
    %1459 = vmatpush.msra.mxu0 0.0
    %1460 = vmatpush.msra.mxu0 %v114
    %1461 = vmatpush.msra.mxu0 %v113
    %1462 = vmatpush.msra.mxu0 %v112
    %1463 = vmatpush.msra.mxu0 %v111
    %1464 = vmatmul.f32.gmra.mxu0 %v1446
    %v1465 = vpop.f32.mrf.mxu0
    %v1466 = vadd.f32 0.0, %v1465
    %1467 = vdwg.mxu0
    %1468 = vst [vmem:[#allocation1] ss:$4 sm:$0xff] %v1399
    %v1469 = vld.sshfl [vmem:[#allocation1] sm:$0xff pattern:$0x73625140]
    %1470 = vrot.lane.b32.xlu0 %v1469, 96
    %v1471 = vpop.permute.xlu0 %1470
    %v1472 = vsel %vm273, %v1471, 0
    %1474 = vmatpush.msra.mxu0 0.0
    %1475 = vmatpush.msra.mxu0 0.0
    %1476 = vmatpush.msra.mxu0 0.0
    %1477 = vmatpush.msra.mxu0 0.0
    %1478 = vmatpush.msra.mxu0 0.0
    %1479 = vmatpush.msra.mxu0 0.0
    %1480 = vmatpush.msra.mxu0 0.0
    %1481 = vmatpush.msra.mxu0 0.0
    %1482 = vmatpush.msra.mxu0 0.0
    %1483 = vmatpush.msra.mxu0 0.0
    %1484 = vmatpush.msra.mxu0 0.0
    %1485 = vmatpush.msra.mxu0 0.0
    %1486 = vmatpush.msra.mxu0 %v122
    %1487 = vmatpush.msra.mxu0 %v121
    %1488 = vmatpush.msra.mxu0 %v120
    %1489 = vmatpush.msra.mxu0 %v119
    %1490 = vmatmul.f32.gmra.mxu0 %v1472
    %v1491 = vpop.f32.mrf.mxu0
    %v1492 = vadd.f32 0.0, %v1491
    %1493 = vdwg.mxu0
    %1494 = vst [vmem:[#allocation1] ss:$4 sm:$0xff] %v1399
    %v1495 = vld.sshfl [vmem:[#allocation1] sm:$0xff pattern:$0x73625140]
    %1496 = vrot.lane.b32.xlu0 %v1495, 96
    %v1497 = vpop.permute.xlu0 %1496
    %v1498 = vsel %vm273, %v1497, 0
    %1500 = vmatpush.msra.mxu0 0.0
    %1501 = vmatpush.msra.mxu0 0.0
    %1502 = vmatpush.msra.mxu0 0.0
    %1503 = vmatpush.msra.mxu0 0.0
    %1504 = vmatpush.msra.mxu0 0.0
    %1505 = vmatpush.msra.mxu0 0.0
    %1506 = vmatpush.msra.mxu0 0.0
    %1507 = vmatpush.msra.mxu0 0.0
    %1508 = vmatpush.msra.mxu0 0.0
    %1509 = vmatpush.msra.mxu0 0.0
    %1510 = vmatpush.msra.mxu0 0.0
    %1511 = vmatpush.msra.mxu0 0.0
    %1512 = vmatpush.msra.mxu0 %v126
    %1513 = vmatpush.msra.mxu0 %v125
    %1514 = vmatpush.msra.mxu0 %v124
    %1515 = vmatpush.msra.mxu0 %v123
    %1516 = vmatmul.f32.gmra.mxu0 %v1498
    %v1517 = vpop.f32.mrf.mxu0
    %v1518 = vadd.f32 0.0, %v1517
    %1519 = vdwg.mxu0
    %v1520 = vadd.f32 %v193, %v1440
    %v1521 = vxor.u32 %v1520, 2147483648
    %v1522 = vmul.f32 %v1521, 1.442695
    %v1523 = vpow.pop %v1522
    %v1524 = vadd.f32 %v1523, 1.0
    %v1525 = vrcp.pop %v1524
    %v1526 = vmul.f32 %v1524, %v1525
    %v1527 = vsub.f32 1.0, %v1526
    %v1528 = vmul.f32 %v1525, %v1527
    %v1529 = vadd.f32 %v1525, %v1528
    %vm1530 = vweird.f32 %v1524
    %vm1531 = vweird.f32 %v1525
    %vm1532 = vmor %vm1530, %vm1531
    %v1533 = vsel %vm1532, %v1525, %v1529
    %v1534 = vand.u32 2147483647, %v1524
    %vm1535 = vcmp.eq.f32.partialorder %v1534, 8.507059e+37
    %v1536 = vand.u32 %v1524, 2147483648
    %v1537 = vor.u32 1.1754944e-38, %v1536
    %v1538 = vsel %vm1535, %v1537, %v1533
    %v1539 = vmul.f32 1.0, %v1538
    %1541 = vrot.lane.b32.xlu0 %v1466, 32
    %v1542 = vpop.permute.xlu0 %1541
    %v1544 = vadd.f32 %v193, %v1542
    %v1545 = vxor.u32 %v1544, 2147483648
    %v1546 = vmul.f32 %v1545, 1.442695
    %v1547 = vpow.pop %v1546
    %v1548 = vadd.f32 %v1547, 1.0
    %v1549 = vrcp.pop %v1548
    %v1550 = vmul.f32 %v1548, %v1549
    %v1551 = vsub.f32 1.0, %v1550
    %v1552 = vmul.f32 %v1549, %v1551
    %v1553 = vadd.f32 %v1549, %v1552
    %vm1554 = vweird.f32 %v1548
    %vm1555 = vweird.f32 %v1549
    %vm1556 = vmor %vm1554, %vm1555
    %v1557 = vsel %vm1556, %v1549, %v1553
    %v1558 = vand.u32 2147483647, %v1548
    %vm1559 = vcmp.eq.f32.partialorder %v1558, 8.507059e+37
    %v1560 = vand.u32 %v1548, 2147483648
    %v1561 = vor.u32 1.1754944e-38, %v1560
    %v1562 = vsel %vm1559, %v1561, %v1557
    %v1563 = vmul.f32 1.0, %v1562
    %1564 = vst [vmem:[#allocation1] ss:$4 sm:$0xff] %v1314
    %v1565 = vld.sshfl [vmem:[#allocation1] sm:$0xff pattern:$0x73625140]
    %1566 = vrot.lane.b32.xlu0 %v1565, 96
    %v1567 = vpop.permute.xlu0 %1566
    %v1568 = vsel %vm273, %v1567, 0
    %1570 = vmatpush.msra.mxu0 0.0
    %1571 = vmatpush.msra.mxu0 0.0
    %1572 = vmatpush.msra.mxu0 0.0
    %1573 = vmatpush.msra.mxu0 0.0
    %1574 = vmatpush.msra.mxu0 0.0
    %1575 = vmatpush.msra.mxu0 0.0
    %1576 = vmatpush.msra.mxu0 0.0
    %1577 = vmatpush.msra.mxu0 0.0
    %1578 = vmatpush.msra.mxu0 0.0
    %1579 = vmatpush.msra.mxu0 0.0
    %1580 = vmatpush.msra.mxu0 0.0
    %1581 = vmatpush.msra.mxu0 0.0
    %1582 = vmatpush.msra.mxu0 %v118
    %1583 = vmatpush.msra.mxu0 %v117
    %1584 = vmatpush.msra.mxu0 %v116
    %1585 = vmatpush.msra.mxu0 %v115
    %1586 = vmatmul.f32.gmra.mxu0 %v1568
    %v1587 = vpop.f32.mrf.mxu0
    %v1588 = vadd.f32 %v405, %v1587
    %1589 = vdwg.mxu0
    %v1590 = vmul.f32 %v1539, %v1588
    %1592 = vrot.lane.b32.xlu0 %v1590, 64
    %v1593 = vpop.permute.xlu0 %1592
    %v1595 = vadd.f32 %v193, %v1593
    %v1596 = vtanh.pop %v1595
    %v1597 = vsub.f32 1.0, %v1563
    %1599 = vrot.lane.b32.xlu0 %v1596, 96
    %v1600 = vpop.permute.xlu0 %1599
    %v1602 = vmul.f32 %v1597, %v1600
    %v1603 = vmul.f32 %v1563, %v1314
    %v1604 = vadd.f32 %v1602, %v1603
    %v1605 = vadd.f32 %v263, %v1492
    %v1606 = vxor.u32 %v1605, 2147483648
    %v1607 = vmul.f32 %v1606, 1.442695
    %v1608 = vpow.pop %v1607
    %v1609 = vadd.f32 %v1608, 1.0
    %v1610 = vrcp.pop %v1609
    %v1611 = vmul.f32 %v1609, %v1610
    %v1612 = vsub.f32 1.0, %v1611
    %v1613 = vmul.f32 %v1610, %v1612
    %v1614 = vadd.f32 %v1610, %v1613
    %vm1615 = vweird.f32 %v1609
    %vm1616 = vweird.f32 %v1610
    %vm1617 = vmor %vm1615, %vm1616
    %v1618 = vsel %vm1617, %v1610, %v1614
    %v1619 = vand.u32 2147483647, %v1609
    %vm1620 = vcmp.eq.f32.partialorder %v1619, 8.507059e+37
    %v1621 = vand.u32 %v1609, 2147483648
    %v1622 = vor.u32 1.1754944e-38, %v1621
    %v1623 = vsel %vm1620, %v1622, %v1618
    %v1624 = vmul.f32 1.0, %v1623
    %1626 = vrot.lane.b32.xlu0 %v1518, 32
    %v1627 = vpop.permute.xlu0 %1626
    %v1629 = vadd.f32 %v263, %v1627
    %v1630 = vxor.u32 %v1629, 2147483648
    %v1631 = vmul.f32 %v1630, 1.442695
    %v1632 = vpow.pop %v1631
    %v1633 = vadd.f32 %v1632, 1.0
    %v1634 = vrcp.pop %v1633
    %v1635 = vmul.f32 %v1633, %v1634
    %v1636 = vsub.f32 1.0, %v1635
    %v1637 = vmul.f32 %v1634, %v1636
    %v1638 = vadd.f32 %v1634, %v1637
    %vm1639 = vweird.f32 %v1633
    %vm1640 = vweird.f32 %v1634
    %vm1641 = vmor %vm1639, %vm1640
    %v1642 = vsel %vm1641, %v1634, %v1638
    %v1643 = vand.u32 2147483647, %v1633
    %vm1644 = vcmp.eq.f32.partialorder %v1643, 8.507059e+37
    %v1645 = vand.u32 %v1633, 2147483648
    %v1646 = vor.u32 1.1754944e-38, %v1645
    %v1647 = vsel %vm1644, %v1646, %v1642
    %v1648 = vmul.f32 1.0, %v1647
    %1649 = vst [vmem:[#allocation1] ss:$4 sm:$0xff] %v1399
    %v1650 = vld.sshfl [vmem:[#allocation1] sm:$0xff pattern:$0x73625140]
    %1651 = vrot.lane.b32.xlu0 %v1650, 96
    %v1652 = vpop.permute.xlu0 %1651
    %v1653 = vsel %vm273, %v1652, 0
    %1655 = vmatpush.msra.mxu0 0.0
    %1656 = vmatpush.msra.mxu0 0.0
    %1657 = vmatpush.msra.mxu0 0.0
    %1658 = vmatpush.msra.mxu0 0.0
    %1659 = vmatpush.msra.mxu0 0.0
    %1660 = vmatpush.msra.mxu0 0.0
    %1661 = vmatpush.msra.mxu0 0.0
    %1662 = vmatpush.msra.mxu0 0.0
    %1663 = vmatpush.msra.mxu0 0.0
    %1664 = vmatpush.msra.mxu0 0.0
    %1665 = vmatpush.msra.mxu0 0.0
    %1666 = vmatpush.msra.mxu0 0.0
    %1667 = vmatpush.msra.mxu0 %v130
    %1668 = vmatpush.msra.mxu0 %v129
    %1669 = vmatpush.msra.mxu0 %v128
    %1670 = vmatpush.msra.mxu0 %v127
    %1671 = vmatmul.f32.gmra.mxu0 %v1653
    %v1672 = vpop.f32.mrf.mxu0
    %v1673 = vadd.f32 %v490, %v1672
    %1674 = vdwg.mxu0
    %v1675 = vmul.f32 %v1624, %v1673
    %1677 = vrot.lane.b32.xlu0 %v1675, 64
    %v1678 = vpop.permute.xlu0 %1677
    %v1680 = vadd.f32 %v263, %v1678
    %v1681 = vtanh.pop %v1680
    %v1682 = vsub.f32 1.0, %v1648
    %1684 = vrot.lane.b32.xlu0 %v1681, 96
    %v1685 = vpop.permute.xlu0 %1684
    %v1687 = vmul.f32 %v1682, %v1685
    %v1688 = vmul.f32 %v1648, %v1399
    %v1689 = vadd.f32 %v1687, %v1688
    %1691 = vst [vmem:[#allocation1] ss:$4 sm:$0xff] %v1604
    %v1692 = vld.sshfl [vmem:[#allocation1] sm:$0xff pattern:$0x73625140]
    %1693 = vrot.lane.b32.xlu0 %v1692, 96
    %v1694 = vpop.permute.xlu0 %1693
    %s1696 = scalar_lea.vmem [#allocation2], 8
    %1697 = vst.msk [vmem:[%s1696] sm:$0x3] %vm536, %v1694
    %1699 = vst [vmem:[#allocation1] ss:$4 sm:$0xff] %v1689
    %v1700 = vld.sshfl [vmem:[#allocation1] sm:$0xff pattern:$0x73625140]
    %1701 = vrot.lane.b32.xlu0 %v1700, 96
    %v1702 = vpop.permute.xlu0 %1701
    %s1704 = scalar_lea.vmem [#allocation3], 6
    %1705 = vst.msk [vmem:[%s1704] sm:$0x3] %vm536, %v1702
    %1706 = vst [vmem:[#allocation1] ss:$4 sm:$0xff] %v1604
    %v1707 = vld.sshfl [vmem:[#allocation1] sm:$0xff pattern:$0x73625140]
    %1708 = vrot.lane.b32.xlu0 %v1707, 96
    %v1709 = vpop.permute.xlu0 %1708
    %v1710 = vsel %vm273, %v1709, 0
    %1712 = vmatpush.msra.mxu0 0.0
    %1713 = vmatpush.msra.mxu0 0.0
    %1714 = vmatpush.msra.mxu0 0.0
    %1715 = vmatpush.msra.mxu0 0.0
    %1716 = vmatpush.msra.mxu0 0.0
    %1717 = vmatpush.msra.mxu0 0.0
    %1718 = vmatpush.msra.mxu0 0.0
    %1719 = vmatpush.msra.mxu0 0.0
    %1720 = vmatpush.msra.mxu0 0.0
    %1721 = vmatpush.msra.mxu0 0.0
    %1722 = vmatpush.msra.mxu0 0.0
    %1723 = vmatpush.msra.mxu0 0.0
    %1724 = vmatpush.msra.mxu0 %v110
    %1725 = vmatpush.msra.mxu0 %v109
    %1726 = vmatpush.msra.mxu0 %v108
    %1727 = vmatpush.msra.mxu0 %v107
    %1728 = vmatmul.f32.gmra.mxu0 %v1710
    %v1729 = vpop.f32.mrf.mxu0
    %v1730 = vadd.f32 0.0, %v1729
    %1731 = vdwg.mxu0
    %1732 = vst [vmem:[#allocation1] ss:$4 sm:$0xff] %v1604
    %v1733 = vld.sshfl [vmem:[#allocation1] sm:$0xff pattern:$0x73625140]
    %1734 = vrot.lane.b32.xlu0 %v1733, 96
    %v1735 = vpop.permute.xlu0 %1734
    %v1736 = vsel %vm273, %v1735, 0
    %1738 = vmatpush.msra.mxu0 0.0
    %1739 = vmatpush.msra.mxu0 0.0
    %1740 = vmatpush.msra.mxu0 0.0
    %1741 = vmatpush.msra.mxu0 0.0
    %1742 = vmatpush.msra.mxu0 0.0
    %1743 = vmatpush.msra.mxu0 0.0
    %1744 = vmatpush.msra.mxu0 0.0
    %1745 = vmatpush.msra.mxu0 0.0
    %1746 = vmatpush.msra.mxu0 0.0
    %1747 = vmatpush.msra.mxu0 0.0
    %1748 = vmatpush.msra.mxu0 0.0
    %1749 = vmatpush.msra.mxu0 0.0
    %1750 = vmatpush.msra.mxu0 %v114
    %1751 = vmatpush.msra.mxu0 %v113
    %1752 = vmatpush.msra.mxu0 %v112
    %1753 = vmatpush.msra.mxu0 %v111
    %1754 = vmatmul.f32.gmra.mxu0 %v1736
    %v1755 = vpop.f32.mrf.mxu0
    %v1756 = vadd.f32 0.0, %v1755
    %1757 = vdwg.mxu0
    %1758 = vst [vmem:[#allocation1] ss:$4 sm:$0xff] %v1689
    %v1759 = vld.sshfl [vmem:[#allocation1] sm:$0xff pattern:$0x73625140]
    %1760 = vrot.lane.b32.xlu0 %v1759, 96
    %v1761 = vpop.permute.xlu0 %1760
    %v1762 = vsel %vm273, %v1761, 0
    %1764 = vmatpush.msra.mxu0 0.0
    %1765 = vmatpush.msra.mxu0 0.0
    %1766 = vmatpush.msra.mxu0 0.0
    %1767 = vmatpush.msra.mxu0 0.0
    %1768 = vmatpush.msra.mxu0 0.0
    %1769 = vmatpush.msra.mxu0 0.0
    %1770 = vmatpush.msra.mxu0 0.0
    %1771 = vmatpush.msra.mxu0 0.0
    %1772 = vmatpush.msra.mxu0 0.0
    %1773 = vmatpush.msra.mxu0 0.0
    %1774 = vmatpush.msra.mxu0 0.0
    %1775 = vmatpush.msra.mxu0 0.0
    %1776 = vmatpush.msra.mxu0 %v122
    %1777 = vmatpush.msra.mxu0 %v121
    %1778 = vmatpush.msra.mxu0 %v120
    %1779 = vmatpush.msra.mxu0 %v119
    %1780 = vmatmul.f32.gmra.mxu0 %v1762
    %v1781 = vpop.f32.mrf.mxu0
    %v1782 = vadd.f32 0.0, %v1781
    %1783 = vdwg.mxu0
    %1784 = vst [vmem:[#allocation1] ss:$4 sm:$0xff] %v1689
    %v1785 = vld.sshfl [vmem:[#allocation1] sm:$0xff pattern:$0x73625140]
    %1786 = vrot.lane.b32.xlu0 %v1785, 96
    %v1787 = vpop.permute.xlu0 %1786
    %v1788 = vsel %vm273, %v1787, 0
    %1790 = vmatpush.msra.mxu0 0.0
    %1791 = vmatpush.msra.mxu0 0.0
    %1792 = vmatpush.msra.mxu0 0.0
    %1793 = vmatpush.msra.mxu0 0.0
    %1794 = vmatpush.msra.mxu0 0.0
    %1795 = vmatpush.msra.mxu0 0.0
    %1796 = vmatpush.msra.mxu0 0.0
    %1797 = vmatpush.msra.mxu0 0.0
    %1798 = vmatpush.msra.mxu0 0.0
    %1799 = vmatpush.msra.mxu0 0.0
    %1800 = vmatpush.msra.mxu0 0.0
    %1801 = vmatpush.msra.mxu0 0.0
    %1802 = vmatpush.msra.mxu0 %v126
    %1803 = vmatpush.msra.mxu0 %v125
    %1804 = vmatpush.msra.mxu0 %v124
    %1805 = vmatpush.msra.mxu0 %v123
    %1806 = vmatmul.f32.gmra.mxu0 %v1788
    %v1807 = vpop.f32.mrf.mxu0
    %v1808 = vadd.f32 0.0, %v1807
    %1809 = vdwg.mxu0
    %v1810 = vadd.f32 %v200, %v1730
    %v1811 = vxor.u32 %v1810, 2147483648
    %v1812 = vmul.f32 %v1811, 1.442695
    %v1813 = vpow.pop %v1812
    %v1814 = vadd.f32 %v1813, 1.0
    %v1815 = vrcp.pop %v1814
    %v1816 = vmul.f32 %v1814, %v1815
    %v1817 = vsub.f32 1.0, %v1816
    %v1818 = vmul.f32 %v1815, %v1817
    %v1819 = vadd.f32 %v1815, %v1818
    %vm1820 = vweird.f32 %v1814
    %vm1821 = vweird.f32 %v1815
    %vm1822 = vmor %vm1820, %vm1821
    %v1823 = vsel %vm1822, %v1815, %v1819
    %v1824 = vand.u32 2147483647, %v1814
    %vm1825 = vcmp.eq.f32.partialorder %v1824, 8.507059e+37
    %v1826 = vand.u32 %v1814, 2147483648
    %v1827 = vor.u32 1.1754944e-38, %v1826
    %v1828 = vsel %vm1825, %v1827, %v1823
    %v1829 = vmul.f32 1.0, %v1828
    %1831 = vrot.lane.b32.xlu0 %v1756, 32
    %v1832 = vpop.permute.xlu0 %1831
    %v1834 = vadd.f32 %v200, %v1832
    %v1835 = vxor.u32 %v1834, 2147483648
    %v1836 = vmul.f32 %v1835, 1.442695
    %v1837 = vpow.pop %v1836
    %v1838 = vadd.f32 %v1837, 1.0
    %v1839 = vrcp.pop %v1838
    %v1840 = vmul.f32 %v1838, %v1839
    %v1841 = vsub.f32 1.0, %v1840
    %v1842 = vmul.f32 %v1839, %v1841
    %v1843 = vadd.f32 %v1839, %v1842
    %vm1844 = vweird.f32 %v1838
    %vm1845 = vweird.f32 %v1839
    %vm1846 = vmor %vm1844, %vm1845
    %v1847 = vsel %vm1846, %v1839, %v1843
    %v1848 = vand.u32 2147483647, %v1838
    %vm1849 = vcmp.eq.f32.partialorder %v1848, 8.507059e+37
    %v1850 = vand.u32 %v1838, 2147483648
    %v1851 = vor.u32 1.1754944e-38, %v1850
    %v1852 = vsel %vm1849, %v1851, %v1847
    %v1853 = vmul.f32 1.0, %v1852
    %1854 = vst [vmem:[#allocation1] ss:$4 sm:$0xff] %v1604
    %v1855 = vld.sshfl [vmem:[#allocation1] sm:$0xff pattern:$0x73625140]
    %1856 = vrot.lane.b32.xlu0 %v1855, 96
    %v1857 = vpop.permute.xlu0 %1856
    %v1858 = vsel %vm273, %v1857, 0
    %1860 = vmatpush.msra.mxu0 0.0
    %1861 = vmatpush.msra.mxu0 0.0
    %1862 = vmatpush.msra.mxu0 0.0
    %1863 = vmatpush.msra.mxu0 0.0
    %1864 = vmatpush.msra.mxu0 0.0
    %1865 = vmatpush.msra.mxu0 0.0
    %1866 = vmatpush.msra.mxu0 0.0
    %1867 = vmatpush.msra.mxu0 0.0
    %1868 = vmatpush.msra.mxu0 0.0
    %1869 = vmatpush.msra.mxu0 0.0
    %1870 = vmatpush.msra.mxu0 0.0
    %1871 = vmatpush.msra.mxu0 0.0
    %1872 = vmatpush.msra.mxu0 %v118
    %1873 = vmatpush.msra.mxu0 %v117
    %1874 = vmatpush.msra.mxu0 %v116
    %1875 = vmatpush.msra.mxu0 %v115
    %1876 = vmatmul.f32.gmra.mxu0 %v1858
    %v1877 = vpop.f32.mrf.mxu0
    %v1878 = vadd.f32 %v405, %v1877
    %1879 = vdwg.mxu0
    %v1880 = vmul.f32 %v1829, %v1878
    %1882 = vrot.lane.b32.xlu0 %v1880, 64
    %v1883 = vpop.permute.xlu0 %1882
    %v1885 = vadd.f32 %v200, %v1883
    %v1886 = vtanh.pop %v1885
    %v1887 = vsub.f32 1.0, %v1853
    %1889 = vrot.lane.b32.xlu0 %v1886, 96
    %v1890 = vpop.permute.xlu0 %1889
    %v1892 = vmul.f32 %v1887, %v1890
    %v1893 = vmul.f32 %v1853, %v1604
    %v1894 = vadd.f32 %v1892, %v1893
    %v1895 = vadd.f32 %v262, %v1782
    %v1896 = vxor.u32 %v1895, 2147483648
    %v1897 = vmul.f32 %v1896, 1.442695
    %v1898 = vpow.pop %v1897
    %v1899 = vadd.f32 %v1898, 1.0
    %v1900 = vrcp.pop %v1899
    %v1901 = vmul.f32 %v1899, %v1900
    %v1902 = vsub.f32 1.0, %v1901
    %v1903 = vmul.f32 %v1900, %v1902
    %v1904 = vadd.f32 %v1900, %v1903
    %vm1905 = vweird.f32 %v1899
    %vm1906 = vweird.f32 %v1900
    %vm1907 = vmor %vm1905, %vm1906
    %v1908 = vsel %vm1907, %v1900, %v1904
    %v1909 = vand.u32 2147483647, %v1899
    %vm1910 = vcmp.eq.f32.partialorder %v1909, 8.507059e+37
    %v1911 = vand.u32 %v1899, 2147483648
    %v1912 = vor.u32 1.1754944e-38, %v1911
    %v1913 = vsel %vm1910, %v1912, %v1908
    %v1914 = vmul.f32 1.0, %v1913
    %1916 = vrot.lane.b32.xlu0 %v1808, 32
    %v1917 = vpop.permute.xlu0 %1916
    %v1919 = vadd.f32 %v262, %v1917
    %v1920 = vxor.u32 %v1919, 2147483648
    %v1921 = vmul.f32 %v1920, 1.442695
    %v1922 = vpow.pop %v1921
    %v1923 = vadd.f32 %v1922, 1.0
    %v1924 = vrcp.pop %v1923
    %v1925 = vmul.f32 %v1923, %v1924
    %v1926 = vsub.f32 1.0, %v1925
    %v1927 = vmul.f32 %v1924, %v1926
    %v1928 = vadd.f32 %v1924, %v1927
    %vm1929 = vweird.f32 %v1923
    %vm1930 = vweird.f32 %v1924
    %vm1931 = vmor %vm1929, %vm1930
    %v1932 = vsel %vm1931, %v1924, %v1928
    %v1933 = vand.u32 2147483647, %v1923
    %vm1934 = vcmp.eq.f32.partialorder %v1933, 8.507059e+37
    %v1935 = vand.u32 %v1923, 2147483648
    %v1936 = vor.u32 1.1754944e-38, %v1935
    %v1937 = vsel %vm1934, %v1936, %v1932
    %v1938 = vmul.f32 1.0, %v1937
    %1939 = vst [vmem:[#allocation1] ss:$4 sm:$0xff] %v1689
    %v1940 = vld.sshfl [vmem:[#allocation1] sm:$0xff pattern:$0x73625140]
    %1941 = vrot.lane.b32.xlu0 %v1940, 96
    %v1942 = vpop.permute.xlu0 %1941
    %v1943 = vsel %vm273, %v1942, 0
    %1945 = vmatpush.msra.mxu0 0.0
    %1946 = vmatpush.msra.mxu0 0.0
    %1947 = vmatpush.msra.mxu0 0.0
    %1948 = vmatpush.msra.mxu0 0.0
    %1949 = vmatpush.msra.mxu0 0.0
    %1950 = vmatpush.msra.mxu0 0.0
    %1951 = vmatpush.msra.mxu0 0.0
    %1952 = vmatpush.msra.mxu0 0.0
    %1953 = vmatpush.msra.mxu0 0.0
    %1954 = vmatpush.msra.mxu0 0.0
    %1955 = vmatpush.msra.mxu0 0.0
    %1956 = vmatpush.msra.mxu0 0.0
    %1957 = vmatpush.msra.mxu0 %v130
    %1958 = vmatpush.msra.mxu0 %v129
    %1959 = vmatpush.msra.mxu0 %v128
    %1960 = vmatpush.msra.mxu0 %v127
    %1961 = vmatmul.f32.gmra.mxu0 %v1943
    %v1962 = vpop.f32.mrf.mxu0
    %v1963 = vadd.f32 %v490, %v1962
    %1964 = vdwg.mxu0
    %v1965 = vmul.f32 %v1914, %v1963
    %1967 = vrot.lane.b32.xlu0 %v1965, 64
    %v1968 = vpop.permute.xlu0 %1967
    %v1970 = vadd.f32 %v262, %v1968
    %v1971 = vtanh.pop %v1970
    %v1972 = vsub.f32 1.0, %v1938
    %1974 = vrot.lane.b32.xlu0 %v1971, 96
    %v1975 = vpop.permute.xlu0 %1974
    %v1977 = vmul.f32 %v1972, %v1975
    %v1978 = vmul.f32 %v1938, %v1689
    %v1979 = vadd.f32 %v1977, %v1978
    %1981 = vst [vmem:[#allocation1] ss:$4 sm:$0xff] %v1894
    %v1982 = vld.sshfl [vmem:[#allocation1] sm:$0xff pattern:$0x73625140]
    %1983 = vrot.lane.b32.xlu0 %v1982, 96
    %v1984 = vpop.permute.xlu0 %1983
    %s1986 = scalar_lea.vmem [#allocation2], 10
    %1987 = vst.msk [vmem:[%s1986] sm:$0x3] %vm536, %v1984
    %1989 = vst [vmem:[#allocation1] ss:$4 sm:$0xff] %v1979
    %v1990 = vld.sshfl [vmem:[#allocation1] sm:$0xff pattern:$0x73625140]
    %1991 = vrot.lane.b32.xlu0 %v1990, 96
    %v1992 = vpop.permute.xlu0 %1991
    %s1994 = scalar_lea.vmem [#allocation3], 4
    %1995 = vst.msk [vmem:[%s1994] sm:$0x3] %vm536, %v1992
    %1996 = vst [vmem:[#allocation1] ss:$4 sm:$0xff] %v1894
    %v1997 = vld.sshfl [vmem:[#allocation1] sm:$0xff pattern:$0x73625140]
    %1998 = vrot.lane.b32.xlu0 %v1997, 96
    %v1999 = vpop.permute.xlu0 %1998
    %v2000 = vsel %vm273, %v1999, 0
    %2002 = vmatpush.msra.mxu0 0.0
    %2003 = vmatpush.msra.mxu0 0.0
    %2004 = vmatpush.msra.mxu0 0.0
    %2005 = vmatpush.msra.mxu0 0.0
    %2006 = vmatpush.msra.mxu0 0.0
    %2007 = vmatpush.msra.mxu0 0.0
    %2008 = vmatpush.msra.mxu0 0.0
    %2009 = vmatpush.msra.mxu0 0.0
    %2010 = vmatpush.msra.mxu0 0.0
    %2011 = vmatpush.msra.mxu0 0.0
    %2012 = vmatpush.msra.mxu0 0.0
    %2013 = vmatpush.msra.mxu0 0.0
    %2014 = vmatpush.msra.mxu0 %v110
    %2015 = vmatpush.msra.mxu0 %v109
    %2016 = vmatpush.msra.mxu0 %v108
    %2017 = vmatpush.msra.mxu0 %v107
    %2018 = vmatmul.f32.gmra.mxu0 %v2000
    %v2019 = vpop.f32.mrf.mxu0
    %v2020 = vadd.f32 0.0, %v2019
    %2021 = vdwg.mxu0
    %2022 = vst [vmem:[#allocation1] ss:$4 sm:$0xff] %v1894
    %v2023 = vld.sshfl [vmem:[#allocation1] sm:$0xff pattern:$0x73625140]
    %2024 = vrot.lane.b32.xlu0 %v2023, 96
    %v2025 = vpop.permute.xlu0 %2024
    %v2026 = vsel %vm273, %v2025, 0
    %2028 = vmatpush.msra.mxu0 0.0
    %2029 = vmatpush.msra.mxu0 0.0
    %2030 = vmatpush.msra.mxu0 0.0
    %2031 = vmatpush.msra.mxu0 0.0
    %2032 = vmatpush.msra.mxu0 0.0
    %2033 = vmatpush.msra.mxu0 0.0
    %2034 = vmatpush.msra.mxu0 0.0
    %2035 = vmatpush.msra.mxu0 0.0
    %2036 = vmatpush.msra.mxu0 0.0
    %2037 = vmatpush.msra.mxu0 0.0
    %2038 = vmatpush.msra.mxu0 0.0
    %2039 = vmatpush.msra.mxu0 0.0
    %2040 = vmatpush.msra.mxu0 %v114
    %2041 = vmatpush.msra.mxu0 %v113
    %2042 = vmatpush.msra.mxu0 %v112
    %2043 = vmatpush.msra.mxu0 %v111
    %2044 = vmatmul.f32.gmra.mxu0 %v2026
    %v2045 = vpop.f32.mrf.mxu0
    %v2046 = vadd.f32 0.0, %v2045
    %2047 = vdwg.mxu0
    %2048 = vst [vmem:[#allocation1] ss:$4 sm:$0xff] %v1979
    %v2049 = vld.sshfl [vmem:[#allocation1] sm:$0xff pattern:$0x73625140]
    %2050 = vrot.lane.b32.xlu0 %v2049, 96
    %v2051 = vpop.permute.xlu0 %2050
    %v2052 = vsel %vm273, %v2051, 0
    %2054 = vmatpush.msra.mxu0 0.0
    %2055 = vmatpush.msra.mxu0 0.0
    %2056 = vmatpush.msra.mxu0 0.0
    %2057 = vmatpush.msra.mxu0 0.0
    %2058 = vmatpush.msra.mxu0 0.0
    %2059 = vmatpush.msra.mxu0 0.0
    %2060 = vmatpush.msra.mxu0 0.0
    %2061 = vmatpush.msra.mxu0 0.0
    %2062 = vmatpush.msra.mxu0 0.0
    %2063 = vmatpush.msra.mxu0 0.0
    %2064 = vmatpush.msra.mxu0 0.0
    %2065 = vmatpush.msra.mxu0 0.0
    %2066 = vmatpush.msra.mxu0 %v122
    %2067 = vmatpush.msra.mxu0 %v121
    %2068 = vmatpush.msra.mxu0 %v120
    %2069 = vmatpush.msra.mxu0 %v119
    %2070 = vmatmul.f32.gmra.mxu0 %v2052
    %v2071 = vpop.f32.mrf.mxu0
    %v2072 = vadd.f32 0.0, %v2071
    %2073 = vdwg.mxu0
    %2074 = vst [vmem:[#allocation1] ss:$4 sm:$0xff] %v1979
    %v2075 = vld.sshfl [vmem:[#allocation1] sm:$0xff pattern:$0x73625140]
    %2076 = vrot.lane.b32.xlu0 %v2075, 96
    %v2077 = vpop.permute.xlu0 %2076
    %v2078 = vsel %vm273, %v2077, 0
    %2080 = vmatpush.msra.mxu0 0.0
    %2081 = vmatpush.msra.mxu0 0.0
    %2082 = vmatpush.msra.mxu0 0.0
    %2083 = vmatpush.msra.mxu0 0.0
    %2084 = vmatpush.msra.mxu0 0.0
    %2085 = vmatpush.msra.mxu0 0.0
    %2086 = vmatpush.msra.mxu0 0.0
    %2087 = vmatpush.msra.mxu0 0.0
    %2088 = vmatpush.msra.mxu0 0.0
    %2089 = vmatpush.msra.mxu0 0.0
    %2090 = vmatpush.msra.mxu0 0.0
    %2091 = vmatpush.msra.mxu0 0.0
    %2092 = vmatpush.msra.mxu0 %v126
    %2093 = vmatpush.msra.mxu0 %v125
    %2094 = vmatpush.msra.mxu0 %v124
    %2095 = vmatpush.msra.mxu0 %v123
    %2096 = vmatmul.f32.gmra.mxu0 %v2078
    %v2097 = vpop.f32.mrf.mxu0
    %v2098 = vadd.f32 0.0, %v2097
    %2099 = vdwg.mxu0
    %v2100 = vadd.f32 %v201, %v2020
    %v2101 = vxor.u32 %v2100, 2147483648
    %v2102 = vmul.f32 %v2101, 1.442695
    %v2103 = vpow.pop %v2102
    %v2104 = vadd.f32 %v2103, 1.0
    %v2105 = vrcp.pop %v2104
    %v2106 = vmul.f32 %v2104, %v2105
    %v2107 = vsub.f32 1.0, %v2106
    %v2108 = vmul.f32 %v2105, %v2107
    %v2109 = vadd.f32 %v2105, %v2108
    %vm2110 = vweird.f32 %v2104
    %vm2111 = vweird.f32 %v2105
    %vm2112 = vmor %vm2110, %vm2111
    %v2113 = vsel %vm2112, %v2105, %v2109
    %v2114 = vand.u32 2147483647, %v2104
    %vm2115 = vcmp.eq.f32.partialorder %v2114, 8.507059e+37
    %v2116 = vand.u32 %v2104, 2147483648
    %v2117 = vor.u32 1.1754944e-38, %v2116
    %v2118 = vsel %vm2115, %v2117, %v2113
    %v2119 = vmul.f32 1.0, %v2118
    %2121 = vrot.lane.b32.xlu0 %v2046, 32
    %v2122 = vpop.permute.xlu0 %2121
    %v2124 = vadd.f32 %v201, %v2122
    %v2125 = vxor.u32 %v2124, 2147483648
    %v2126 = vmul.f32 %v2125, 1.442695
    %v2127 = vpow.pop %v2126
    %v2128 = vadd.f32 %v2127, 1.0
    %v2129 = vrcp.pop %v2128
    %v2130 = vmul.f32 %v2128, %v2129
    %v2131 = vsub.f32 1.0, %v2130
    %v2132 = vmul.f32 %v2129, %v2131
    %v2133 = vadd.f32 %v2129, %v2132
    %vm2134 = vweird.f32 %v2128
    %vm2135 = vweird.f32 %v2129
    %vm2136 = vmor %vm2134, %vm2135
    %v2137 = vsel %vm2136, %v2129, %v2133
    %v2138 = vand.u32 2147483647, %v2128
    %vm2139 = vcmp.eq.f32.partialorder %v2138, 8.507059e+37
    %v2140 = vand.u32 %v2128, 2147483648
    %v2141 = vor.u32 1.1754944e-38, %v2140
    %v2142 = vsel %vm2139, %v2141, %v2137
    %v2143 = vmul.f32 1.0, %v2142
    %2144 = vst [vmem:[#allocation1] ss:$4 sm:$0xff] %v1894
    %v2145 = vld.sshfl [vmem:[#allocation1] sm:$0xff pattern:$0x73625140]
    %2146 = vrot.lane.b32.xlu0 %v2145, 96
    %v2147 = vpop.permute.xlu0 %2146
    %v2148 = vsel %vm273, %v2147, 0
    %2150 = vmatpush.msra.mxu0 0.0
    %2151 = vmatpush.msra.mxu0 0.0
    %2152 = vmatpush.msra.mxu0 0.0
    %2153 = vmatpush.msra.mxu0 0.0
    %2154 = vmatpush.msra.mxu0 0.0
    %2155 = vmatpush.msra.mxu0 0.0
    %2156 = vmatpush.msra.mxu0 0.0
    %2157 = vmatpush.msra.mxu0 0.0
    %2158 = vmatpush.msra.mxu0 0.0
    %2159 = vmatpush.msra.mxu0 0.0
    %2160 = vmatpush.msra.mxu0 0.0
    %2161 = vmatpush.msra.mxu0 0.0
    %2162 = vmatpush.msra.mxu0 %v118
    %2163 = vmatpush.msra.mxu0 %v117
    %2164 = vmatpush.msra.mxu0 %v116
    %2165 = vmatpush.msra.mxu0 %v115
    %2166 = vmatmul.f32.gmra.mxu0 %v2148
    %v2167 = vpop.f32.mrf.mxu0
    %v2168 = vadd.f32 %v405, %v2167
    %2169 = vdwg.mxu0
    %v2170 = vmul.f32 %v2119, %v2168
    %2172 = vrot.lane.b32.xlu0 %v2170, 64
    %v2173 = vpop.permute.xlu0 %2172
    %v2175 = vadd.f32 %v201, %v2173
    %v2176 = vtanh.pop %v2175
    %v2177 = vsub.f32 1.0, %v2143
    %2179 = vrot.lane.b32.xlu0 %v2176, 96
    %v2180 = vpop.permute.xlu0 %2179
    %v2182 = vmul.f32 %v2177, %v2180
    %v2183 = vmul.f32 %v2143, %v1894
    %v2184 = vadd.f32 %v2182, %v2183
    %v2185 = vadd.f32 %v261, %v2072
    %v2186 = vxor.u32 %v2185, 2147483648
    %v2187 = vmul.f32 %v2186, 1.442695
    %v2188 = vpow.pop %v2187
    %v2189 = vadd.f32 %v2188, 1.0
    %v2190 = vrcp.pop %v2189
    %v2191 = vmul.f32 %v2189, %v2190
    %v2192 = vsub.f32 1.0, %v2191
    %v2193 = vmul.f32 %v2190, %v2192
    %v2194 = vadd.f32 %v2190, %v2193
    %vm2195 = vweird.f32 %v2189
    %vm2196 = vweird.f32 %v2190
    %vm2197 = vmor %vm2195, %vm2196
    %v2198 = vsel %vm2197, %v2190, %v2194
    %v2199 = vand.u32 2147483647, %v2189
    %vm2200 = vcmp.eq.f32.partialorder %v2199, 8.507059e+37
    %v2201 = vand.u32 %v2189, 2147483648
    %v2202 = vor.u32 1.1754944e-38, %v2201
    %v2203 = vsel %vm2200, %v2202, %v2198
    %v2204 = vmul.f32 1.0, %v2203
    %2206 = vrot.lane.b32.xlu0 %v2098, 32
    %v2207 = vpop.permute.xlu0 %2206
    %v2209 = vadd.f32 %v261, %v2207
    %v2210 = vxor.u32 %v2209, 2147483648
    %v2211 = vmul.f32 %v2210, 1.442695
    %v2212 = vpow.pop %v2211
    %v2213 = vadd.f32 %v2212, 1.0
    %v2214 = vrcp.pop %v2213
    %v2215 = vmul.f32 %v2213, %v2214
    %v2216 = vsub.f32 1.0, %v2215
    %v2217 = vmul.f32 %v2214, %v2216
    %v2218 = vadd.f32 %v2214, %v2217
    %vm2219 = vweird.f32 %v2213
    %vm2220 = vweird.f32 %v2214
    %vm2221 = vmor %vm2219, %vm2220
    %v2222 = vsel %vm2221, %v2214, %v2218
    %v2223 = vand.u32 2147483647, %v2213
    %vm2224 = vcmp.eq.f32.partialorder %v2223, 8.507059e+37
    %v2225 = vand.u32 %v2213, 2147483648
    %v2226 = vor.u32 1.1754944e-38, %v2225
    %v2227 = vsel %vm2224, %v2226, %v2222
    %v2228 = vmul.f32 1.0, %v2227
    %2229 = vst [vmem:[#allocation1] ss:$4 sm:$0xff] %v1979
    %v2230 = vld.sshfl [vmem:[#allocation1] sm:$0xff pattern:$0x73625140]
    %2231 = vrot.lane.b32.xlu0 %v2230, 96
    %v2232 = vpop.permute.xlu0 %2231
    %v2233 = vsel %vm273, %v2232, 0
    %2235 = vmatpush.msra.mxu0 0.0
    %2236 = vmatpush.msra.mxu0 0.0
    %2237 = vmatpush.msra.mxu0 0.0
    %2238 = vmatpush.msra.mxu0 0.0
    %2239 = vmatpush.msra.mxu0 0.0
    %2240 = vmatpush.msra.mxu0 0.0
    %2241 = vmatpush.msra.mxu0 0.0
    %2242 = vmatpush.msra.mxu0 0.0
    %2243 = vmatpush.msra.mxu0 0.0
    %2244 = vmatpush.msra.mxu0 0.0
    %2245 = vmatpush.msra.mxu0 0.0
    %2246 = vmatpush.msra.mxu0 0.0
    %2247 = vmatpush.msra.mxu0 %v130
    %2248 = vmatpush.msra.mxu0 %v129
    %2249 = vmatpush.msra.mxu0 %v128
    %2250 = vmatpush.msra.mxu0 %v127
    %2251 = vmatmul.f32.gmra.mxu0 %v2233
    %v2252 = vpop.f32.mrf.mxu0
    %v2253 = vadd.f32 %v490, %v2252
    %2254 = vdwg.mxu0
    %v2255 = vmul.f32 %v2204, %v2253
    %2257 = vrot.lane.b32.xlu0 %v2255, 64
    %v2258 = vpop.permute.xlu0 %2257
    %v2260 = vadd.f32 %v261, %v2258
    %v2261 = vtanh.pop %v2260
    %v2262 = vsub.f32 1.0, %v2228
    %2264 = vrot.lane.b32.xlu0 %v2261, 96
    %v2265 = vpop.permute.xlu0 %2264
    %v2267 = vmul.f32 %v2262, %v2265
    %v2268 = vmul.f32 %v2228, %v1979
    %v2269 = vadd.f32 %v2267, %v2268
    %2271 = vst [vmem:[#allocation1] ss:$4 sm:$0xff] %v2184
    %v2272 = vld.sshfl [vmem:[#allocation1] sm:$0xff pattern:$0x73625140]
    %2273 = vrot.lane.b32.xlu0 %v2272, 96
    %v2274 = vpop.permute.xlu0 %2273
    %s2276 = scalar_lea.vmem [#allocation2], 12
    %2277 = vst.msk [vmem:[%s2276] sm:$0x3] %vm536, %v2274
    %2279 = vst [vmem:[#allocation1] ss:$4 sm:$0xff] %v2269
    %v2280 = vld.sshfl [vmem:[#allocation1] sm:$0xff pattern:$0x73625140]
    %2281 = vrot.lane.b32.xlu0 %v2280, 96
    %v2282 = vpop.permute.xlu0 %2281
    %s2284 = scalar_lea.vmem [#allocation3], 2
    %2285 = vst.msk [vmem:[%s2284] sm:$0x3] %vm536, %v2282
    %2286 = vst [vmem:[#allocation1] ss:$4 sm:$0xff] %v2184
    %v2287 = vld.sshfl [vmem:[#allocation1] sm:$0xff pattern:$0x73625140]
    %2288 = vrot.lane.b32.xlu0 %v2287, 96
    %v2289 = vpop.permute.xlu0 %2288
    %v2290 = vsel %vm273, %v2289, 0
    %2292 = vmatpush.msra.mxu0 0.0
    %2293 = vmatpush.msra.mxu0 0.0
    %2294 = vmatpush.msra.mxu0 0.0
    %2295 = vmatpush.msra.mxu0 0.0
    %2296 = vmatpush.msra.mxu0 0.0
    %2297 = vmatpush.msra.mxu0 0.0
    %2298 = vmatpush.msra.mxu0 0.0
    %2299 = vmatpush.msra.mxu0 0.0
    %2300 = vmatpush.msra.mxu0 0.0
    %2301 = vmatpush.msra.mxu0 0.0
    %2302 = vmatpush.msra.mxu0 0.0
    %2303 = vmatpush.msra.mxu0 0.0
    %2304 = vmatpush.msra.mxu0 %v110
    %2305 = vmatpush.msra.mxu0 %v109
    %2306 = vmatpush.msra.mxu0 %v108
    %2307 = vmatpush.msra.mxu0 %v107
    %2308 = vmatmul.f32.gmra.mxu0 %v2290
    %v2309 = vpop.f32.mrf.mxu0
    %v2310 = vadd.f32 0.0, %v2309
    %2311 = vdwg.mxu0
    %2312 = vst [vmem:[#allocation1] ss:$4 sm:$0xff] %v2184
    %v2313 = vld.sshfl [vmem:[#allocation1] sm:$0xff pattern:$0x73625140]
    %2314 = vrot.lane.b32.xlu0 %v2313, 96
    %v2315 = vpop.permute.xlu0 %2314
    %v2316 = vsel %vm273, %v2315, 0
    %2318 = vmatpush.msra.mxu0 0.0
    %2319 = vmatpush.msra.mxu0 0.0
    %2320 = vmatpush.msra.mxu0 0.0
    %2321 = vmatpush.msra.mxu0 0.0
    %2322 = vmatpush.msra.mxu0 0.0
    %2323 = vmatpush.msra.mxu0 0.0
    %2324 = vmatpush.msra.mxu0 0.0
    %2325 = vmatpush.msra.mxu0 0.0
    %2326 = vmatpush.msra.mxu0 0.0
    %2327 = vmatpush.msra.mxu0 0.0
    %2328 = vmatpush.msra.mxu0 0.0
    %2329 = vmatpush.msra.mxu0 0.0
    %2330 = vmatpush.msra.mxu0 %v114
    %2331 = vmatpush.msra.mxu0 %v113
    %2332 = vmatpush.msra.mxu0 %v112
    %2333 = vmatpush.msra.mxu0 %v111
    %2334 = vmatmul.f32.gmra.mxu0 %v2316
    %v2335 = vpop.f32.mrf.mxu0
    %v2336 = vadd.f32 0.0, %v2335
    %2337 = vdwg.mxu0
    %2338 = vst [vmem:[#allocation1] ss:$4 sm:$0xff] %v2269
    %v2339 = vld.sshfl [vmem:[#allocation1] sm:$0xff pattern:$0x73625140]
    %2340 = vrot.lane.b32.xlu0 %v2339, 96
    %v2341 = vpop.permute.xlu0 %2340
    %v2342 = vsel %vm273, %v2341, 0
    %2344 = vmatpush.msra.mxu0 0.0
    %2345 = vmatpush.msra.mxu0 0.0
    %2346 = vmatpush.msra.mxu0 0.0
    %2347 = vmatpush.msra.mxu0 0.0
    %2348 = vmatpush.msra.mxu0 0.0
    %2349 = vmatpush.msra.mxu0 0.0
    %2350 = vmatpush.msra.mxu0 0.0
    %2351 = vmatpush.msra.mxu0 0.0
    %2352 = vmatpush.msra.mxu0 0.0
    %2353 = vmatpush.msra.mxu0 0.0
    %2354 = vmatpush.msra.mxu0 0.0
    %2355 = vmatpush.msra.mxu0 0.0
    %2356 = vmatpush.msra.mxu0 %v122
    %2357 = vmatpush.msra.mxu0 %v121
    %2358 = vmatpush.msra.mxu0 %v120
    %2359 = vmatpush.msra.mxu0 %v119
    %2360 = vmatmul.f32.gmra.mxu0 %v2342
    %v2361 = vpop.f32.mrf.mxu0
    %v2362 = vadd.f32 0.0, %v2361
    %2363 = vdwg.mxu0
    %2364 = vst [vmem:[#allocation1] ss:$4 sm:$0xff] %v2269
    %v2365 = vld.sshfl [vmem:[#allocation1] sm:$0xff pattern:$0x73625140]
    %2366 = vrot.lane.b32.xlu0 %v2365, 96
    %v2367 = vpop.permute.xlu0 %2366
    %v2368 = vsel %vm273, %v2367, 0
    %2370 = vmatpush.msra.mxu0 0.0
    %2371 = vmatpush.msra.mxu0 0.0
    %2372 = vmatpush.msra.mxu0 0.0
    %2373 = vmatpush.msra.mxu0 0.0
    %2374 = vmatpush.msra.mxu0 0.0
    %2375 = vmatpush.msra.mxu0 0.0
    %2376 = vmatpush.msra.mxu0 0.0
    %2377 = vmatpush.msra.mxu0 0.0
    %2378 = vmatpush.msra.mxu0 0.0
    %2379 = vmatpush.msra.mxu0 0.0
    %2380 = vmatpush.msra.mxu0 0.0
    %2381 = vmatpush.msra.mxu0 0.0
    %2382 = vmatpush.msra.mxu0 %v126
    %2383 = vmatpush.msra.mxu0 %v125
    %2384 = vmatpush.msra.mxu0 %v124
    %2385 = vmatpush.msra.mxu0 %v123
    %2386 = vmatmul.f32.gmra.mxu0 %v2368
    %v2387 = vpop.f32.mrf.mxu0
    %v2388 = vadd.f32 0.0, %v2387
    %2389 = vdwg.mxu0
    %v2390 = vadd.f32 %v202, %v2310
    %v2391 = vxor.u32 %v2390, 2147483648
    %v2392 = vmul.f32 %v2391, 1.442695
    %v2393 = vpow.pop %v2392
    %v2394 = vadd.f32 %v2393, 1.0
    %v2395 = vrcp.pop %v2394
    %v2396 = vmul.f32 %v2394, %v2395
    %v2397 = vsub.f32 1.0, %v2396
    %v2398 = vmul.f32 %v2395, %v2397
    %v2399 = vadd.f32 %v2395, %v2398
    %vm2400 = vweird.f32 %v2394
    %vm2401 = vweird.f32 %v2395
    %vm2402 = vmor %vm2400, %vm2401
    %v2403 = vsel %vm2402, %v2395, %v2399
    %v2404 = vand.u32 2147483647, %v2394
    %vm2405 = vcmp.eq.f32.partialorder %v2404, 8.507059e+37
    %v2406 = vand.u32 %v2394, 2147483648
    %v2407 = vor.u32 1.1754944e-38, %v2406
    %v2408 = vsel %vm2405, %v2407, %v2403
    %v2409 = vmul.f32 1.0, %v2408
    %2411 = vrot.lane.b32.xlu0 %v2336, 32
    %v2412 = vpop.permute.xlu0 %2411
    %v2414 = vadd.f32 %v202, %v2412
    %v2415 = vxor.u32 %v2414, 2147483648
    %v2416 = vmul.f32 %v2415, 1.442695
    %v2417 = vpow.pop %v2416
    %v2418 = vadd.f32 %v2417, 1.0
    %v2419 = vrcp.pop %v2418
    %v2420 = vmul.f32 %v2418, %v2419
    %v2421 = vsub.f32 1.0, %v2420
    %v2422 = vmul.f32 %v2419, %v2421
    %v2423 = vadd.f32 %v2419, %v2422
    %vm2424 = vweird.f32 %v2418
    %vm2425 = vweird.f32 %v2419
    %vm2426 = vmor %vm2424, %vm2425
    %v2427 = vsel %vm2426, %v2419, %v2423
    %v2428 = vand.u32 2147483647, %v2418
    %vm2429 = vcmp.eq.f32.partialorder %v2428, 8.507059e+37
    %v2430 = vand.u32 %v2418, 2147483648
    %v2431 = vor.u32 1.1754944e-38, %v2430
    %v2432 = vsel %vm2429, %v2431, %v2427
    %v2433 = vmul.f32 1.0, %v2432
    %2434 = vst [vmem:[#allocation1] ss:$4 sm:$0xff] %v2184
    %v2435 = vld.sshfl [vmem:[#allocation1] sm:$0xff pattern:$0x73625140]
    %2436 = vrot.lane.b32.xlu0 %v2435, 96
    %v2437 = vpop.permute.xlu0 %2436
    %v2438 = vsel %vm273, %v2437, 0
    %2440 = vmatpush.msra.mxu0 0.0
    %2441 = vmatpush.msra.mxu0 0.0
    %2442 = vmatpush.msra.mxu0 0.0
    %2443 = vmatpush.msra.mxu0 0.0
    %2444 = vmatpush.msra.mxu0 0.0
    %2445 = vmatpush.msra.mxu0 0.0
    %2446 = vmatpush.msra.mxu0 0.0
    %2447 = vmatpush.msra.mxu0 0.0
    %2448 = vmatpush.msra.mxu0 0.0
    %2449 = vmatpush.msra.mxu0 0.0
    %2450 = vmatpush.msra.mxu0 0.0
    %2451 = vmatpush.msra.mxu0 0.0
    %2452 = vmatpush.msra.mxu0 %v118
    %2453 = vmatpush.msra.mxu0 %v117
    %2454 = vmatpush.msra.mxu0 %v116
    %2455 = vmatpush.msra.mxu0 %v115
    %2456 = vmatmul.f32.gmra.mxu0 %v2438
    %v2457 = vpop.f32.mrf.mxu0
    %v2458 = vadd.f32 %v405, %v2457
    %2459 = vdwg.mxu0
    %v2460 = vmul.f32 %v2409, %v2458
    %2462 = vrot.lane.b32.xlu0 %v2460, 64
    %v2463 = vpop.permute.xlu0 %2462
    %v2465 = vadd.f32 %v202, %v2463
    %v2466 = vtanh.pop %v2465
    %v2467 = vsub.f32 1.0, %v2433
    %2469 = vrot.lane.b32.xlu0 %v2466, 96
    %v2470 = vpop.permute.xlu0 %2469
    %v2472 = vmul.f32 %v2467, %v2470
    %v2473 = vmul.f32 %v2433, %v2184
    %v2474 = vadd.f32 %v2472, %v2473
    %v2475 = vadd.f32 %v254, %v2362
    %v2476 = vxor.u32 %v2475, 2147483648
    %v2477 = vmul.f32 %v2476, 1.442695
    %v2478 = vpow.pop %v2477
    %v2479 = vadd.f32 %v2478, 1.0
    %v2480 = vrcp.pop %v2479
    %v2481 = vmul.f32 %v2479, %v2480
    %v2482 = vsub.f32 1.0, %v2481
    %v2483 = vmul.f32 %v2480, %v2482
    %v2484 = vadd.f32 %v2480, %v2483
    %vm2485 = vweird.f32 %v2479
    %vm2486 = vweird.f32 %v2480
    %vm2487 = vmor %vm2485, %vm2486
    %v2488 = vsel %vm2487, %v2480, %v2484
    %v2489 = vand.u32 2147483647, %v2479
    %vm2490 = vcmp.eq.f32.partialorder %v2489, 8.507059e+37
    %v2491 = vand.u32 %v2479, 2147483648
    %v2492 = vor.u32 1.1754944e-38, %v2491
    %v2493 = vsel %vm2490, %v2492, %v2488
    %v2494 = vmul.f32 1.0, %v2493
    %2496 = vrot.lane.b32.xlu0 %v2388, 32
    %v2497 = vpop.permute.xlu0 %2496
    %v2499 = vadd.f32 %v254, %v2497
    %v2500 = vxor.u32 %v2499, 2147483648
    %v2501 = vmul.f32 %v2500, 1.442695
    %v2502 = vpow.pop %v2501
    %v2503 = vadd.f32 %v2502, 1.0
    %v2504 = vrcp.pop %v2503
    %v2505 = vmul.f32 %v2503, %v2504
    %v2506 = vsub.f32 1.0, %v2505
    %v2507 = vmul.f32 %v2504, %v2506
    %v2508 = vadd.f32 %v2504, %v2507
    %vm2509 = vweird.f32 %v2503
    %vm2510 = vweird.f32 %v2504
    %vm2511 = vmor %vm2509, %vm2510
    %v2512 = vsel %vm2511, %v2504, %v2508
    %v2513 = vand.u32 2147483647, %v2503
    %vm2514 = vcmp.eq.f32.partialorder %v2513, 8.507059e+37
    %v2515 = vand.u32 %v2503, 2147483648
    %v2516 = vor.u32 1.1754944e-38, %v2515
    %v2517 = vsel %vm2514, %v2516, %v2512
    %v2518 = vmul.f32 1.0, %v2517
    %2519 = vst [vmem:[#allocation1] ss:$4 sm:$0xff] %v2269
    %v2520 = vld.sshfl [vmem:[#allocation1] sm:$0xff pattern:$0x73625140]
    %2521 = vrot.lane.b32.xlu0 %v2520, 96
    %v2522 = vpop.permute.xlu0 %2521
    %v2523 = vsel %vm273, %v2522, 0
    %2525 = vmatpush.msra.mxu0 0.0
    %2526 = vmatpush.msra.mxu0 0.0
    %2527 = vmatpush.msra.mxu0 0.0
    %2528 = vmatpush.msra.mxu0 0.0
    %2529 = vmatpush.msra.mxu0 0.0
    %2530 = vmatpush.msra.mxu0 0.0
    %2531 = vmatpush.msra.mxu0 0.0
    %2532 = vmatpush.msra.mxu0 0.0
    %2533 = vmatpush.msra.mxu0 0.0
    %2534 = vmatpush.msra.mxu0 0.0
    %2535 = vmatpush.msra.mxu0 0.0
    %2536 = vmatpush.msra.mxu0 0.0
    %2537 = vmatpush.msra.mxu0 %v130
    %2538 = vmatpush.msra.mxu0 %v129
    %2539 = vmatpush.msra.mxu0 %v128
    %2540 = vmatpush.msra.mxu0 %v127
    %2541 = vmatmul.f32.gmra.mxu0 %v2523
    %v2542 = vpop.f32.mrf.mxu0
    %v2543 = vadd.f32 %v490, %v2542
    %2544 = vdwg.mxu0
    %v2545 = vmul.f32 %v2494, %v2543
    %2547 = vrot.lane.b32.xlu0 %v2545, 64
    %v2548 = vpop.permute.xlu0 %2547
    %v2550 = vadd.f32 %v254, %v2548
    %v2551 = vtanh.pop %v2550
    %v2552 = vsub.f32 1.0, %v2518
    %2554 = vrot.lane.b32.xlu0 %v2551, 96
    %v2555 = vpop.permute.xlu0 %2554
    %v2557 = vmul.f32 %v2552, %v2555
    %v2558 = vmul.f32 %v2518, %v2269
    %v2559 = vadd.f32 %v2557, %v2558
    %2561 = vst [vmem:[#allocation1] ss:$4 sm:$0xff] %v2474
    %v2562 = vld.sshfl [vmem:[#allocation1] sm:$0xff pattern:$0x73625140]
    %2563 = vrot.lane.b32.xlu0 %v2562, 96
    %v2564 = vpop.permute.xlu0 %2563
    %s2566 = scalar_lea.vmem [#allocation2], 14
    %2567 = vst.msk [vmem:[%s2566] sm:$0x3] %vm536, %v2564
    %2569 = vst [vmem:[#allocation1] ss:$4 sm:$0xff] %v2559
    %v2570 = vld.sshfl [vmem:[#allocation1] sm:$0xff pattern:$0x73625140]
    %2571 = vrot.lane.b32.xlu0 %v2570, 96
    %v2572 = vpop.permute.xlu0 %2571
    %2574 = vst.msk [vmem:[#allocation3] sm:$0x3] %vm536, %v2572
    %2575 = vst [vmem:[#allocation1] ss:$4 sm:$0xff] %v2474
    %v2576 = vld.sshfl [vmem:[#allocation1] sm:$0xff pattern:$0x73625140]
    %2577 = vrot.lane.b32.xlu0 %v2576, 96
    %v2578 = vpop.permute.xlu0 %2577
    %2580 = vst.msk [vmem:[#allocation13] sm:$0x3] %vm536, %v2578
    %2581 = vst [vmem:[#allocation1] ss:$4 sm:$0xff] %v2559
    %v2582 = vld.sshfl [vmem:[#allocation1] sm:$0xff pattern:$0x73625140]
    %2583 = vrot.lane.b32.xlu0 %v2582, 96
    %v2584 = vpop.permute.xlu0 %2583
    %s2586 = scalar_lea.vmem [#allocation13], 2
    %2587 = vst.msk [vmem:[%s2586] sm:$0x3] %vm536, %v2584
    %v2588 = vld [vmem:[#allocation2] sm:$0x3]
    %v2589 = vld [vmem:[#allocation2 + $0x2] sm:$0x3]
    %v2590 = vld [vmem:[#allocation2 + $0x4] sm:$0x3]
    %v2591 = vld [vmem:[#allocation2 + $0x6] sm:$0x3]
    %v2592 = vld [vmem:[#allocation2 + $0x8] sm:$0x3]
    %v2593 = vld [vmem:[#allocation2 + $0xa] sm:$0x3]
    %v2594 = vld [vmem:[#allocation2 + $0xc] sm:$0x3]
    %v2595 = vld [vmem:[#allocation2 + $0xe] sm:$0x3]
    %v2596 = vld [vmem:[#allocation3] sm:$0x3]
    %v2597 = vld [vmem:[#allocation3 + $0x2] sm:$0x3]
    %v2598 = vld [vmem:[#allocation3 + $0x4] sm:$0x3]
    %v2599 = vld [vmem:[#allocation3 + $0x6] sm:$0x3]
    %v2600 = vld [vmem:[#allocation3 + $0x8] sm:$0x3]
    %v2601 = vld [vmem:[#allocation3 + $0xa] sm:$0x3]
    %v2602 = vld [vmem:[#allocation3 + $0xc] sm:$0x3]
    %v2603 = vld [vmem:[#allocation3 + $0xe] sm:$0x3]
    %2612 = vrot.lane.b32.xlu0 %v2596, 32
    %v2613 = vpop.permute.xlu0 %2612
    %2614 = vrot.lane.b32.xlu0 %v2597, 32
    %v2615 = vpop.permute.xlu0 %2614
    %2616 = vrot.lane.b32.xlu0 %v2598, 32
    %v2617 = vpop.permute.xlu0 %2616
    %2618 = vrot.lane.b32.xlu0 %v2599, 32
    %v2619 = vpop.permute.xlu0 %2618
    %2620 = vrot.lane.b32.xlu0 %v2600, 32
    %v2621 = vpop.permute.xlu0 %2620
    %2622 = vrot.lane.b32.xlu0 %v2601, 32
    %v2623 = vpop.permute.xlu0 %2622
    %2624 = vrot.lane.b32.xlu0 %v2602, 32
    %v2625 = vpop.permute.xlu0 %2624
    %2626 = vrot.lane.b32.xlu0 %v2603, 32
    %v2627 = vpop.permute.xlu0 %2626
    %v2636 = vsel %vm273, %v2588, %v2613
    %v2637 = vsel %vm273, %v2589, %v2615
    %v2638 = vsel %vm273, %v2590, %v2617
    %v2639 = vsel %vm273, %v2591, %v2619
    %v2640 = vsel %vm273, %v2592, %v2621
    %v2641 = vsel %vm273, %v2593, %v2623
    %v2642 = vsel %vm273, %v2594, %v2625
    %v2643 = vsel %vm273, %v2595, %v2627
    %v2644 = vld [vmem:[#allocation10] sm:$0xff]
    %v2645 = vld [vmem:[#allocation10 + $0x8] sm:$0xff]
    %v2646 = vld [vmem:[#allocation10 + $0x10] sm:$0xff]
    %v2647 = vld [vmem:[#allocation10 + $0x18] sm:$0xff]
    %v2648 = vld [vmem:[#allocation10 + $0x20] sm:$0xff]
    %v2649 = vld [vmem:[#allocation10 + $0x28] sm:$0xff]
    %v2650 = vld [vmem:[#allocation10 + $0x30] sm:$0xff]
    %v2651 = vld [vmem:[#allocation10 + $0x38] sm:$0xff]
    %v2652 = vld [vmem:[#allocation10 + $0x40] sm:$0xff]
    %v2653 = vld [vmem:[#allocation10 + $0x48] sm:$0xff]
    %v2654 = vld [vmem:[#allocation10 + $0x50] sm:$0xff]
    %v2655 = vld [vmem:[#allocation10 + $0x58] sm:$0xff]
    %v2656 = vld [vmem:[#allocation10 + $0x60] sm:$0xff]
    %v2657 = vld [vmem:[#allocation10 + $0x68] sm:$0xff]
    %v2658 = vld [vmem:[#allocation10 + $0x70] sm:$0xff]
    %v2659 = vld [vmem:[#allocation10 + $0x78] sm:$0xff]
    %v2660 = vld [vmem:[#allocation12] sm:$0xff]
    %v2661 = vld [vmem:[#allocation12 + $0x8] sm:$0xff]
    %v2662 = vld [vmem:[#allocation12 + $0x10] sm:$0xff]
    %v2663 = vld [vmem:[#allocation12 + $0x18] sm:$0xff]
    %v2664 = vld [vmem:[#allocation12 + $0x20] sm:$0xff]
    %v2665 = vld [vmem:[#allocation12 + $0x28] sm:$0xff]
    %v2666 = vld [vmem:[#allocation12 + $0x30] sm:$0xff]
    %v2667 = vld [vmem:[#allocation12 + $0x38] sm:$0xff]
    %v2668 = vld [vmem:[#allocation12 + $0x40] sm:$0xff]
    %v2669 = vld [vmem:[#allocation12 + $0x48] sm:$0xff]
    %v2670 = vld [vmem:[#allocation12 + $0x50] sm:$0xff]
    %v2671 = vld [vmem:[#allocation12 + $0x58] sm:$0xff]
    %v2672 = vld [vmem:[#allocation12 + $0x60] sm:$0xff]
    %v2673 = vld [vmem:[#allocation12 + $0x68] sm:$0xff]
    %v2674 = vld [vmem:[#allocation12 + $0x70] sm:$0xff]
    %v2675 = vld [vmem:[#allocation12 + $0x78] sm:$0xff]
    %v2676 = vld [vmem:[#allocation12 + $0x80] sm:$0xff]
    %v2677 = vld [vmem:[#allocation12 + $0x88] sm:$0xff]
    %v2678 = vld [vmem:[#allocation12 + $0x90] sm:$0xff]
    %v2679 = vld [vmem:[#allocation12 + $0x98] sm:$0xff]
    %v2680 = vld [vmem:[#allocation12 + $0xa0] sm:$0xff]
    %v2681 = vld [vmem:[#allocation12 + $0xa8] sm:$0xff]
    %v2682 = vld [vmem:[#allocation12 + $0xb0] sm:$0xff]
    %v2683 = vld [vmem:[#allocation12 + $0xb8] sm:$0xff]
    %v2684 = vld [vmem:[%s7] sm:$0x1]
    %v2685 = vld [vmem:[%s7 + $0x1] sm:$0x1]
    %v2686 = vld [vmem:[%s8] sm:$0x1]
    %v2687 = vld [vmem:[%s8 + $0x1] sm:$0x1]
    %v2689 = vperm.slane %v2684, 0
    %2699 = vst [vmem:[#allocation1] ss:$4 sm:$0xff] %v2636
    %s2700 = scalar_lea.vmem [#allocation1], 1
    %2701 = vst [vmem:[%s2700] ss:$4 sm:$0xff] %v2637
    %s2702 = scalar_lea.vmem [#allocation1], 2
    %2703 = vst [vmem:[%s2702] ss:$4 sm:$0xff] %v2638
    %s2704 = scalar_lea.vmem [#allocation1], 3
    %2705 = vst [vmem:[%s2704] ss:$4 sm:$0xff] %v2639
    %s2706 = scalar_lea.vmem [#allocation1], 32
    %2707 = vst [vmem:[%s2706] ss:$4 sm:$0xff] %v2640
    %s2708 = scalar_lea.vmem [#allocation1], 33
    %2709 = vst [vmem:[%s2708] ss:$4 sm:$0xff] %v2641
    %s2710 = scalar_lea.vmem [#allocation1], 34
    %2711 = vst [vmem:[%s2710] ss:$4 sm:$0xff] %v2642
    %s2712 = scalar_lea.vmem [#allocation1], 35
    %2713 = vst [vmem:[%s2712] ss:$4 sm:$0xff] %v2643
    %v2714 = vld.sshfl [vmem:[#allocation1] sm:$0xff pattern:$0x73625140]
    %v2715 = vld.sshfl [vmem:[#allocation1 + $0x20] sm:$0xff pattern:$0x73625140]
    %vm2716 = vcmask 523264
    %v2717 = vsel %vm2716, %v2714, 0
    %v2719 = vsel %vm2716, %v2715, 0
    %2721 = vmatpush.msra.mxu0 0.0
    %2722 = vmatpush.msra.mxu0 0.0
    %2723 = vmatpush.msra.mxu0 0.0
    %2724 = vmatpush.msra.mxu0 0.0
    %2725 = vmatpush.msra.mxu0 0.0
    %2726 = vmatpush.msra.mxu0 0.0
    %2727 = vmatpush.msra.mxu0 0.0
    %2728 = vmatpush.msra.mxu0 0.0
    %2729 = vmatpush.msra.mxu0 %v2651
    %2730 = vmatpush.msra.mxu0 %v2650
    %2731 = vmatpush.msra.mxu0 %v2649
    %2732 = vmatpush.msra.mxu0 %v2648
    %2733 = vmatpush.msra.mxu0 %v2647
    %2734 = vmatpush.msra.mxu0 %v2646
    %2735 = vmatpush.msra.mxu0 %v2645
    %2736 = vmatpush.msra.mxu0 %v2644
    %2737 = vmatmul.f32.gmra.mxu0 %v2717
    %v2738 = vpop.f32.mrf.mxu0
    %v2739 = vadd.f32 %v2689, %v2738
    %2740 = vmatmul.f32.gmra.mxu0 %v2719
    %v2741 = vpop.f32.mrf.mxu0
    %v2742 = vadd.f32 %v2689, %v2741
    %2743 = vdwg.mxu0
    %v2746 = vrot.slane %v2739, 2
    %v2747 = vrot.slane %v2739, 4
    %v2748 = vrot.slane %v2739, 6
    %v2749 = vrot.slane %v2742, 2
    %v2750 = vrot.slane %v2742, 4
    %v2751 = vrot.slane %v2742, 6
    %v2759 = vperm.slane %v2685, 0
    %2761 = vst [vmem:[#allocation1] ss:$4 sm:$0xff] %v2636
    %s2762 = scalar_lea.vmem [#allocation1], 1
    %2763 = vst [vmem:[%s2762] ss:$4 sm:$0xff] %v2637
    %s2764 = scalar_lea.vmem [#allocation1], 2
    %2765 = vst [vmem:[%s2764] ss:$4 sm:$0xff] %v2638
    %s2766 = scalar_lea.vmem [#allocation1], 3
    %2767 = vst [vmem:[%s2766] ss:$4 sm:$0xff] %v2639
    %s2768 = scalar_lea.vmem [#allocation1], 32
    %2769 = vst [vmem:[%s2768] ss:$4 sm:$0xff] %v2640
    %s2770 = scalar_lea.vmem [#allocation1], 33
    %2771 = vst [vmem:[%s2770] ss:$4 sm:$0xff] %v2641
    %s2772 = scalar_lea.vmem [#allocation1], 34
    %2773 = vst [vmem:[%s2772] ss:$4 sm:$0xff] %v2642
    %s2774 = scalar_lea.vmem [#allocation1], 35
    %2775 = vst [vmem:[%s2774] ss:$4 sm:$0xff] %v2643
    %v2776 = vld.sshfl [vmem:[#allocation1] sm:$0xff pattern:$0x73625140]
    %v2777 = vld.sshfl [vmem:[#allocation1 + $0x20] sm:$0xff pattern:$0x73625140]
    %v2778 = vsel %vm2716, %v2776, 0
    %v2780 = vsel %vm2716, %v2777, 0
    %2782 = vmatpush.msra.mxu0 0.0
    %2783 = vmatpush.msra.mxu0 0.0
    %2784 = vmatpush.msra.mxu0 0.0
    %2785 = vmatpush.msra.mxu0 0.0
    %2786 = vmatpush.msra.mxu0 0.0
    %2787 = vmatpush.msra.mxu0 0.0
    %2788 = vmatpush.msra.mxu0 0.0
    %2789 = vmatpush.msra.mxu0 0.0
    %2790 = vmatpush.msra.mxu0 %v2659
    %2791 = vmatpush.msra.mxu0 %v2658
    %2792 = vmatpush.msra.mxu0 %v2657
    %2793 = vmatpush.msra.mxu0 %v2656
    %2794 = vmatpush.msra.mxu0 %v2655
    %2795 = vmatpush.msra.mxu0 %v2654
    %2796 = vmatpush.msra.mxu0 %v2653
    %2797 = vmatpush.msra.mxu0 %v2652
    %2798 = vmatmul.f32.gmra.mxu0 %v2778
    %v2799 = vpop.f32.mrf.mxu0
    %v2800 = vadd.f32 %v2759, %v2799
    %2801 = vmatmul.f32.gmra.mxu0 %v2780
    %v2802 = vpop.f32.mrf.mxu0
    %v2803 = vadd.f32 %v2759, %v2802
    %2804 = vdwg.mxu0
    %v2807 = vrot.slane %v2800, 2
    %v2808 = vrot.slane %v2800, 4
    %v2809 = vrot.slane %v2800, 6
    %v2810 = vrot.slane %v2803, 2
    %v2811 = vrot.slane %v2803, 4
    %v2812 = vrot.slane %v2803, 6
    %v2820 = vsel %vm273, %v95, 0
    %2822 = vmatpush.msra.mxu0 0.0
    %2823 = vmatpush.msra.mxu0 0.0
    %2824 = vmatpush.msra.mxu0 0.0
    %2825 = vmatpush.msra.mxu0 0.0
    %2826 = vmatpush.msra.mxu0 0.0
    %2827 = vmatpush.msra.mxu0 0.0
    %2828 = vmatpush.msra.mxu0 0.0
    %2829 = vmatpush.msra.mxu0 0.0
    %2830 = vmatpush.msra.mxu0 0.0
    %2831 = vmatpush.msra.mxu0 0.0
    %2832 = vmatpush.msra.mxu0 0.0
    %2833 = vmatpush.msra.mxu0 0.0
    %2834 = vmatpush.msra.mxu0 %v2663
    %2835 = vmatpush.msra.mxu0 %v2662
    %2836 = vmatpush.msra.mxu0 %v2661
    %2837 = vmatpush.msra.mxu0 %v2660
    %2838 = vmatmul.f32.gmra.mxu0 %v2820
    %v2839 = vpop.f32.mrf.mxu0
    %v2840 = vadd.f32 0.0, %v2839
    %2841 = vdwg.mxu0
    %2842 = vmatpush.msra.mxu0 0.0
    %2843 = vmatpush.msra.mxu0 0.0
    %2844 = vmatpush.msra.mxu0 0.0
    %2845 = vmatpush.msra.mxu0 0.0
    %2846 = vmatpush.msra.mxu0 0.0
    %2847 = vmatpush.msra.mxu0 0.0
    %2848 = vmatpush.msra.mxu0 0.0
    %2849 = vmatpush.msra.mxu0 0.0
    %2850 = vmatpush.msra.mxu0 0.0
    %2851 = vmatpush.msra.mxu0 0.0
    %2852 = vmatpush.msra.mxu0 0.0
    %2853 = vmatpush.msra.mxu0 0.0
    %2854 = vmatpush.msra.mxu0 %v2667
    %2855 = vmatpush.msra.mxu0 %v2666
    %2856 = vmatpush.msra.mxu0 %v2665
    %2857 = vmatpush.msra.mxu0 %v2664
    %2858 = vmatmul.f32.gmra.mxu0 %v2820
    %v2859 = vpop.f32.mrf.mxu0
    %v2860 = vadd.f32 0.0, %v2859
    %2861 = vdwg.mxu0
    %v2863 = vsel %vm273, %v96, 0
    %2865 = vmatpush.msra.mxu0 0.0
    %2866 = vmatpush.msra.mxu0 0.0
    %2867 = vmatpush.msra.mxu0 0.0
    %2868 = vmatpush.msra.mxu0 0.0
    %2869 = vmatpush.msra.mxu0 0.0
    %2870 = vmatpush.msra.mxu0 0.0
    %2871 = vmatpush.msra.mxu0 0.0
    %2872 = vmatpush.msra.mxu0 0.0
    %2873 = vmatpush.msra.mxu0 0.0
    %2874 = vmatpush.msra.mxu0 0.0
    %2875 = vmatpush.msra.mxu0 0.0
    %2876 = vmatpush.msra.mxu0 0.0
    %2877 = vmatpush.msra.mxu0 %v2675
    %2878 = vmatpush.msra.mxu0 %v2674
    %2879 = vmatpush.msra.mxu0 %v2673
    %2880 = vmatpush.msra.mxu0 %v2672
    %2881 = vmatmul.f32.gmra.mxu0 %v2863
    %v2882 = vpop.f32.mrf.mxu0
    %v2883 = vadd.f32 0.0, %v2882
    %2884 = vdwg.mxu0
    %2885 = vmatpush.msra.mxu0 0.0
    %2886 = vmatpush.msra.mxu0 0.0
    %2887 = vmatpush.msra.mxu0 0.0
    %2888 = vmatpush.msra.mxu0 0.0
    %2889 = vmatpush.msra.mxu0 0.0
    %2890 = vmatpush.msra.mxu0 0.0
    %2891 = vmatpush.msra.mxu0 0.0
    %2892 = vmatpush.msra.mxu0 0.0
    %2893 = vmatpush.msra.mxu0 0.0
    %2894 = vmatpush.msra.mxu0 0.0
    %2895 = vmatpush.msra.mxu0 0.0
    %2896 = vmatpush.msra.mxu0 0.0
    %2897 = vmatpush.msra.mxu0 %v2679
    %2898 = vmatpush.msra.mxu0 %v2678
    %2899 = vmatpush.msra.mxu0 %v2677
    %2900 = vmatpush.msra.mxu0 %v2676
    %2901 = vmatmul.f32.gmra.mxu0 %v2863
    %v2902 = vpop.f32.mrf.mxu0
    %v2903 = vadd.f32 0.0, %v2902
    %2904 = vdwg.mxu0
    %v2905 = vadd.f32 %v2739, %v2840
    %v2906 = vxor.u32 %v2905, 2147483648
    %v2907 = vmul.f32 %v2906, 1.442695
    %v2908 = vpow.pop %v2907
    %v2909 = vadd.f32 %v2908, 1.0
    %v2910 = vrcp.pop %v2909
    %v2911 = vmul.f32 %v2909, %v2910
    %v2912 = vsub.f32 1.0, %v2911
    %v2913 = vmul.f32 %v2910, %v2912
    %v2914 = vadd.f32 %v2910, %v2913
    %vm2915 = vweird.f32 %v2909
    %vm2916 = vweird.f32 %v2910
    %vm2917 = vmor %vm2915, %vm2916
    %v2918 = vsel %vm2917, %v2910, %v2914
    %v2919 = vand.u32 2147483647, %v2909
    %vm2920 = vcmp.eq.f32.partialorder %v2919, 8.507059e+37
    %v2921 = vand.u32 %v2909, 2147483648
    %v2922 = vor.u32 1.1754944e-38, %v2921
    %v2923 = vsel %vm2920, %v2922, %v2918
    %v2924 = vmul.f32 1.0, %v2923
    %2926 = vrot.lane.b32.xlu0 %v2860, 32
    %v2927 = vpop.permute.xlu0 %2926
    %v2929 = vadd.f32 %v2739, %v2927
    %v2930 = vxor.u32 %v2929, 2147483648
    %v2931 = vmul.f32 %v2930, 1.442695
    %v2932 = vpow.pop %v2931
    %v2933 = vadd.f32 %v2932, 1.0
    %v2934 = vrcp.pop %v2933
    %v2935 = vmul.f32 %v2933, %v2934
    %v2936 = vsub.f32 1.0, %v2935
    %v2937 = vmul.f32 %v2934, %v2936
    %v2938 = vadd.f32 %v2934, %v2937
    %vm2939 = vweird.f32 %v2933
    %vm2940 = vweird.f32 %v2934
    %vm2941 = vmor %vm2939, %vm2940
    %v2942 = vsel %vm2941, %v2934, %v2938
    %v2943 = vand.u32 2147483647, %v2933
    %vm2944 = vcmp.eq.f32.partialorder %v2943, 8.507059e+37
    %v2945 = vand.u32 %v2933, 2147483648
    %v2946 = vor.u32 1.1754944e-38, %v2945
    %v2947 = vsel %vm2944, %v2946, %v2942
    %v2948 = vmul.f32 1.0, %v2947
    %v2950 = vperm.slane %v2686, 0
    %2952 = vmatpush.msra.mxu0 0.0
    %2953 = vmatpush.msra.mxu0 0.0
    %2954 = vmatpush.msra.mxu0 0.0
    %2955 = vmatpush.msra.mxu0 0.0
    %2956 = vmatpush.msra.mxu0 0.0
    %2957 = vmatpush.msra.mxu0 0.0
    %2958 = vmatpush.msra.mxu0 0.0
    %2959 = vmatpush.msra.mxu0 0.0
    %2960 = vmatpush.msra.mxu0 0.0
    %2961 = vmatpush.msra.mxu0 0.0
    %2962 = vmatpush.msra.mxu0 0.0
    %2963 = vmatpush.msra.mxu0 0.0
    %2964 = vmatpush.msra.mxu0 %v2671
    %2965 = vmatpush.msra.mxu0 %v2670
    %2966 = vmatpush.msra.mxu0 %v2669
    %2967 = vmatpush.msra.mxu0 %v2668
    %2968 = vmatmul.f32.gmra.mxu0 %v2820
    %v2969 = vpop.f32.mrf.mxu0
    %v2970 = vadd.f32 %v2950, %v2969
    %2971 = vdwg.mxu0
    %v2972 = vmul.f32 %v2924, %v2970
    %2974 = vrot.lane.b32.xlu0 %v2972, 64
    %v2975 = vpop.permute.xlu0 %2974
    %v2977 = vadd.f32 %v2739, %v2975
    %v2978 = vtanh.pop %v2977
    %v2979 = vsub.f32 1.0, %v2948
    %2981 = vrot.lane.b32.xlu0 %v2978, 96
    %v2982 = vpop.permute.xlu0 %2981
    %v2984 = vmul.f32 %v2979, %v2982
    %2985 = vrot.lane.b32.xlu0 %v95, 32
    %v2986 = vpop.permute.xlu0 %2985
    %v2988 = vmul.f32 %v2948, %v2986
    %v2989 = vadd.f32 %v2984, %v2988
    %v2990 = vadd.f32 %v2812, %v2883
    %v2991 = vxor.u32 %v2990, 2147483648
    %v2992 = vmul.f32 %v2991, 1.442695
    %v2993 = vpow.pop %v2992
    %v2994 = vadd.f32 %v2993, 1.0
    %v2995 = vrcp.pop %v2994
    %v2996 = vmul.f32 %v2994, %v2995
    %v2997 = vsub.f32 1.0, %v2996
    %v2998 = vmul.f32 %v2995, %v2997
    %v2999 = vadd.f32 %v2995, %v2998
    %vm3000 = vweird.f32 %v2994
    %vm3001 = vweird.f32 %v2995
    %vm3002 = vmor %vm3000, %vm3001
    %v3003 = vsel %vm3002, %v2995, %v2999
    %v3004 = vand.u32 2147483647, %v2994
    %vm3005 = vcmp.eq.f32.partialorder %v3004, 8.507059e+37
    %v3006 = vand.u32 %v2994, 2147483648
    %v3007 = vor.u32 1.1754944e-38, %v3006
    %v3008 = vsel %vm3005, %v3007, %v3003
    %v3009 = vmul.f32 1.0, %v3008
    %3011 = vrot.lane.b32.xlu0 %v2903, 32
    %v3012 = vpop.permute.xlu0 %3011
    %v3014 = vadd.f32 %v2812, %v3012
    %v3015 = vxor.u32 %v3014, 2147483648
    %v3016 = vmul.f32 %v3015, 1.442695
    %v3017 = vpow.pop %v3016
    %v3018 = vadd.f32 %v3017, 1.0
    %v3019 = vrcp.pop %v3018
    %v3020 = vmul.f32 %v3018, %v3019
    %v3021 = vsub.f32 1.0, %v3020
    %v3022 = vmul.f32 %v3019, %v3021
    %v3023 = vadd.f32 %v3019, %v3022
    %vm3024 = vweird.f32 %v3018
    %vm3025 = vweird.f32 %v3019
    %vm3026 = vmor %vm3024, %vm3025
    %v3027 = vsel %vm3026, %v3019, %v3023
    %v3028 = vand.u32 2147483647, %v3018
    %vm3029 = vcmp.eq.f32.partialorder %v3028, 8.507059e+37
    %v3030 = vand.u32 %v3018, 2147483648
    %v3031 = vor.u32 1.1754944e-38, %v3030
    %v3032 = vsel %vm3029, %v3031, %v3027
    %v3033 = vmul.f32 1.0, %v3032
    %v3035 = vperm.slane %v2687, 0
    %3037 = vmatpush.msra.mxu0 0.0
    %3038 = vmatpush.msra.mxu0 0.0
    %3039 = vmatpush.msra.mxu0 0.0
    %3040 = vmatpush.msra.mxu0 0.0
    %3041 = vmatpush.msra.mxu0 0.0
    %3042 = vmatpush.msra.mxu0 0.0
    %3043 = vmatpush.msra.mxu0 0.0
    %3044 = vmatpush.msra.mxu0 0.0
    %3045 = vmatpush.msra.mxu0 0.0
    %3046 = vmatpush.msra.mxu0 0.0
    %3047 = vmatpush.msra.mxu0 0.0
    %3048 = vmatpush.msra.mxu0 0.0
    %3049 = vmatpush.msra.mxu0 %v2683
    %3050 = vmatpush.msra.mxu0 %v2682
    %3051 = vmatpush.msra.mxu0 %v2681
    %3052 = vmatpush.msra.mxu0 %v2680
    %3053 = vmatmul.f32.gmra.mxu0 %v2863
    %v3054 = vpop.f32.mrf.mxu0
    %v3055 = vadd.f32 %v3035, %v3054
    %3056 = vdwg.mxu0
    %v3057 = vmul.f32 %v3009, %v3055
    %3059 = vrot.lane.b32.xlu0 %v3057, 64
    %v3060 = vpop.permute.xlu0 %3059
    %v3062 = vadd.f32 %v2812, %v3060
    %v3063 = vtanh.pop %v3062
    %v3064 = vsub.f32 1.0, %v3033
    %3066 = vrot.lane.b32.xlu0 %v3063, 96
    %v3067 = vpop.permute.xlu0 %3066
    %v3069 = vmul.f32 %v3064, %v3067
    %3070 = vrot.lane.b32.xlu0 %v96, 32
    %v3071 = vpop.permute.xlu0 %3070
    %v3073 = vmul.f32 %v3033, %v3071
    %v3074 = vadd.f32 %v3069, %v3073
    %3076 = vst [vmem:[#allocation1] ss:$4 sm:$0xff] %v2989
    %v3077 = vld.sshfl [vmem:[#allocation1] sm:$0xff pattern:$0x73625140]
    %3078 = vrot.lane.b32.xlu0 %v3077, 96
    %v3079 = vpop.permute.xlu0 %3078
    %3081 = vst.msk [vmem:[#allocation4] sm:$0x3] %vm536, %v3079
    %3083 = vst [vmem:[#allocation1] ss:$4 sm:$0xff] %v3074
    %v3084 = vld.sshfl [vmem:[#allocation1] sm:$0xff pattern:$0x73625140]
    %3085 = vrot.lane.b32.xlu0 %v3084, 96
    %v3086 = vpop.permute.xlu0 %3085
    %s3088 = scalar_lea.vmem [#allocation5], 14
    %3089 = vst.msk [vmem:[%s3088] sm:$0x3] %vm536, %v3086
    %3090 = vst [vmem:[#allocation1] ss:$4 sm:$0xff] %v2989
    %v3091 = vld.sshfl [vmem:[#allocation1] sm:$0xff pattern:$0x73625140]
    %3092 = vrot.lane.b32.xlu0 %v3091, 96
    %v3093 = vpop.permute.xlu0 %3092
    %v3094 = vsel %vm273, %v3093, 0
    %3096 = vmatpush.msra.mxu0 0.0
    %3097 = vmatpush.msra.mxu0 0.0
    %3098 = vmatpush.msra.mxu0 0.0
    %3099 = vmatpush.msra.mxu0 0.0
    %3100 = vmatpush.msra.mxu0 0.0
    %3101 = vmatpush.msra.mxu0 0.0
    %3102 = vmatpush.msra.mxu0 0.0
    %3103 = vmatpush.msra.mxu0 0.0
    %3104 = vmatpush.msra.mxu0 0.0
    %3105 = vmatpush.msra.mxu0 0.0
    %3106 = vmatpush.msra.mxu0 0.0
    %3107 = vmatpush.msra.mxu0 0.0
    %3108 = vmatpush.msra.mxu0 %v2663
    %3109 = vmatpush.msra.mxu0 %v2662
    %3110 = vmatpush.msra.mxu0 %v2661
    %3111 = vmatpush.msra.mxu0 %v2660
    %3112 = vmatmul.f32.gmra.mxu0 %v3094
    %v3113 = vpop.f32.mrf.mxu0
    %v3114 = vadd.f32 0.0, %v3113
    %3115 = vdwg.mxu0
    %3116 = vst [vmem:[#allocation1] ss:$4 sm:$0xff] %v2989
    %v3117 = vld.sshfl [vmem:[#allocation1] sm:$0xff pattern:$0x73625140]
    %3118 = vrot.lane.b32.xlu0 %v3117, 96
    %v3119 = vpop.permute.xlu0 %3118
    %v3120 = vsel %vm273, %v3119, 0
    %3122 = vmatpush.msra.mxu0 0.0
    %3123 = vmatpush.msra.mxu0 0.0
    %3124 = vmatpush.msra.mxu0 0.0
    %3125 = vmatpush.msra.mxu0 0.0
    %3126 = vmatpush.msra.mxu0 0.0
    %3127 = vmatpush.msra.mxu0 0.0
    %3128 = vmatpush.msra.mxu0 0.0
    %3129 = vmatpush.msra.mxu0 0.0
    %3130 = vmatpush.msra.mxu0 0.0
    %3131 = vmatpush.msra.mxu0 0.0
    %3132 = vmatpush.msra.mxu0 0.0
    %3133 = vmatpush.msra.mxu0 0.0
    %3134 = vmatpush.msra.mxu0 %v2667
    %3135 = vmatpush.msra.mxu0 %v2666
    %3136 = vmatpush.msra.mxu0 %v2665
    %3137 = vmatpush.msra.mxu0 %v2664
    %3138 = vmatmul.f32.gmra.mxu0 %v3120
    %v3139 = vpop.f32.mrf.mxu0
    %v3140 = vadd.f32 0.0, %v3139
    %3141 = vdwg.mxu0
    %3142 = vst [vmem:[#allocation1] ss:$4 sm:$0xff] %v3074
    %v3143 = vld.sshfl [vmem:[#allocation1] sm:$0xff pattern:$0x73625140]
    %3144 = vrot.lane.b32.xlu0 %v3143, 96
    %v3145 = vpop.permute.xlu0 %3144
    %v3146 = vsel %vm273, %v3145, 0
    %3148 = vmatpush.msra.mxu0 0.0
    %3149 = vmatpush.msra.mxu0 0.0
    %3150 = vmatpush.msra.mxu0 0.0
    %3151 = vmatpush.msra.mxu0 0.0
    %3152 = vmatpush.msra.mxu0 0.0
    %3153 = vmatpush.msra.mxu0 0.0
    %3154 = vmatpush.msra.mxu0 0.0
    %3155 = vmatpush.msra.mxu0 0.0
    %3156 = vmatpush.msra.mxu0 0.0
    %3157 = vmatpush.msra.mxu0 0.0
    %3158 = vmatpush.msra.mxu0 0.0
    %3159 = vmatpush.msra.mxu0 0.0
    %3160 = vmatpush.msra.mxu0 %v2675
    %3161 = vmatpush.msra.mxu0 %v2674
    %3162 = vmatpush.msra.mxu0 %v2673
    %3163 = vmatpush.msra.mxu0 %v2672
    %3164 = vmatmul.f32.gmra.mxu0 %v3146
    %v3165 = vpop.f32.mrf.mxu0
    %v3166 = vadd.f32 0.0, %v3165
    %3167 = vdwg.mxu0
    %3168 = vst [vmem:[#allocation1] ss:$4 sm:$0xff] %v3074
    %v3169 = vld.sshfl [vmem:[#allocation1] sm:$0xff pattern:$0x73625140]
    %3170 = vrot.lane.b32.xlu0 %v3169, 96
    %v3171 = vpop.permute.xlu0 %3170
    %v3172 = vsel %vm273, %v3171, 0
    %3174 = vmatpush.msra.mxu0 0.0
    %3175 = vmatpush.msra.mxu0 0.0
    %3176 = vmatpush.msra.mxu0 0.0
    %3177 = vmatpush.msra.mxu0 0.0
    %3178 = vmatpush.msra.mxu0 0.0
    %3179 = vmatpush.msra.mxu0 0.0
    %3180 = vmatpush.msra.mxu0 0.0
    %3181 = vmatpush.msra.mxu0 0.0
    %3182 = vmatpush.msra.mxu0 0.0
    %3183 = vmatpush.msra.mxu0 0.0
    %3184 = vmatpush.msra.mxu0 0.0
    %3185 = vmatpush.msra.mxu0 0.0
    %3186 = vmatpush.msra.mxu0 %v2679
    %3187 = vmatpush.msra.mxu0 %v2678
    %3188 = vmatpush.msra.mxu0 %v2677
    %3189 = vmatpush.msra.mxu0 %v2676
    %3190 = vmatmul.f32.gmra.mxu0 %v3172
    %v3191 = vpop.f32.mrf.mxu0
    %v3192 = vadd.f32 0.0, %v3191
    %3193 = vdwg.mxu0
    %v3194 = vadd.f32 %v2746, %v3114
    %v3195 = vxor.u32 %v3194, 2147483648
    %v3196 = vmul.f32 %v3195, 1.442695
    %v3197 = vpow.pop %v3196
    %v3198 = vadd.f32 %v3197, 1.0
    %v3199 = vrcp.pop %v3198
    %v3200 = vmul.f32 %v3198, %v3199
    %v3201 = vsub.f32 1.0, %v3200
    %v3202 = vmul.f32 %v3199, %v3201
    %v3203 = vadd.f32 %v3199, %v3202
    %vm3204 = vweird.f32 %v3198
    %vm3205 = vweird.f32 %v3199
    %vm3206 = vmor %vm3204, %vm3205
    %v3207 = vsel %vm3206, %v3199, %v3203
    %v3208 = vand.u32 2147483647, %v3198
    %vm3209 = vcmp.eq.f32.partialorder %v3208, 8.507059e+37
    %v3210 = vand.u32 %v3198, 2147483648
    %v3211 = vor.u32 1.1754944e-38, %v3210
    %v3212 = vsel %vm3209, %v3211, %v3207
    %v3213 = vmul.f32 1.0, %v3212
    %3215 = vrot.lane.b32.xlu0 %v3140, 32
    %v3216 = vpop.permute.xlu0 %3215
    %v3218 = vadd.f32 %v2746, %v3216
    %v3219 = vxor.u32 %v3218, 2147483648
    %v3220 = vmul.f32 %v3219, 1.442695
    %v3221 = vpow.pop %v3220
    %v3222 = vadd.f32 %v3221, 1.0
    %v3223 = vrcp.pop %v3222
    %v3224 = vmul.f32 %v3222, %v3223
    %v3225 = vsub.f32 1.0, %v3224
    %v3226 = vmul.f32 %v3223, %v3225
    %v3227 = vadd.f32 %v3223, %v3226
    %vm3228 = vweird.f32 %v3222
    %vm3229 = vweird.f32 %v3223
    %vm3230 = vmor %vm3228, %vm3229
    %v3231 = vsel %vm3230, %v3223, %v3227
    %v3232 = vand.u32 2147483647, %v3222
    %vm3233 = vcmp.eq.f32.partialorder %v3232, 8.507059e+37
    %v3234 = vand.u32 %v3222, 2147483648
    %v3235 = vor.u32 1.1754944e-38, %v3234
    %v3236 = vsel %vm3233, %v3235, %v3231
    %v3237 = vmul.f32 1.0, %v3236
    %3238 = vst [vmem:[#allocation1] ss:$4 sm:$0xff] %v2989
    %v3239 = vld.sshfl [vmem:[#allocation1] sm:$0xff pattern:$0x73625140]
    %3240 = vrot.lane.b32.xlu0 %v3239, 96
    %v3241 = vpop.permute.xlu0 %3240
    %v3242 = vsel %vm273, %v3241, 0
    %3244 = vmatpush.msra.mxu0 0.0
    %3245 = vmatpush.msra.mxu0 0.0
    %3246 = vmatpush.msra.mxu0 0.0
    %3247 = vmatpush.msra.mxu0 0.0
    %3248 = vmatpush.msra.mxu0 0.0
    %3249 = vmatpush.msra.mxu0 0.0
    %3250 = vmatpush.msra.mxu0 0.0
    %3251 = vmatpush.msra.mxu0 0.0
    %3252 = vmatpush.msra.mxu0 0.0
    %3253 = vmatpush.msra.mxu0 0.0
    %3254 = vmatpush.msra.mxu0 0.0
    %3255 = vmatpush.msra.mxu0 0.0
    %3256 = vmatpush.msra.mxu0 %v2671
    %3257 = vmatpush.msra.mxu0 %v2670
    %3258 = vmatpush.msra.mxu0 %v2669
    %3259 = vmatpush.msra.mxu0 %v2668
    %3260 = vmatmul.f32.gmra.mxu0 %v3242
    %v3261 = vpop.f32.mrf.mxu0
    %v3262 = vadd.f32 %v2950, %v3261
    %3263 = vdwg.mxu0
    %v3264 = vmul.f32 %v3213, %v3262
    %3266 = vrot.lane.b32.xlu0 %v3264, 64
    %v3267 = vpop.permute.xlu0 %3266
    %v3269 = vadd.f32 %v2746, %v3267
    %v3270 = vtanh.pop %v3269
    %v3271 = vsub.f32 1.0, %v3237
    %3273 = vrot.lane.b32.xlu0 %v3270, 96
    %v3274 = vpop.permute.xlu0 %3273
    %v3276 = vmul.f32 %v3271, %v3274
    %v3277 = vmul.f32 %v3237, %v2989
    %v3278 = vadd.f32 %v3276, %v3277
    %v3279 = vadd.f32 %v2811, %v3166
    %v3280 = vxor.u32 %v3279, 2147483648
    %v3281 = vmul.f32 %v3280, 1.442695
    %v3282 = vpow.pop %v3281
    %v3283 = vadd.f32 %v3282, 1.0
    %v3284 = vrcp.pop %v3283
    %v3285 = vmul.f32 %v3283, %v3284
    %v3286 = vsub.f32 1.0, %v3285
    %v3287 = vmul.f32 %v3284, %v3286
    %v3288 = vadd.f32 %v3284, %v3287
    %vm3289 = vweird.f32 %v3283
    %vm3290 = vweird.f32 %v3284
    %vm3291 = vmor %vm3289, %vm3290
    %v3292 = vsel %vm3291, %v3284, %v3288
    %v3293 = vand.u32 2147483647, %v3283
    %vm3294 = vcmp.eq.f32.partialorder %v3293, 8.507059e+37
    %v3295 = vand.u32 %v3283, 2147483648
    %v3296 = vor.u32 1.1754944e-38, %v3295
    %v3297 = vsel %vm3294, %v3296, %v3292
    %v3298 = vmul.f32 1.0, %v3297
    %3300 = vrot.lane.b32.xlu0 %v3192, 32
    %v3301 = vpop.permute.xlu0 %3300
    %v3303 = vadd.f32 %v2811, %v3301
    %v3304 = vxor.u32 %v3303, 2147483648
    %v3305 = vmul.f32 %v3304, 1.442695
    %v3306 = vpow.pop %v3305
    %v3307 = vadd.f32 %v3306, 1.0
    %v3308 = vrcp.pop %v3307
    %v3309 = vmul.f32 %v3307, %v3308
    %v3310 = vsub.f32 1.0, %v3309
    %v3311 = vmul.f32 %v3308, %v3310
    %v3312 = vadd.f32 %v3308, %v3311
    %vm3313 = vweird.f32 %v3307
    %vm3314 = vweird.f32 %v3308
    %vm3315 = vmor %vm3313, %vm3314
    %v3316 = vsel %vm3315, %v3308, %v3312
    %v3317 = vand.u32 2147483647, %v3307
    %vm3318 = vcmp.eq.f32.partialorder %v3317, 8.507059e+37
    %v3319 = vand.u32 %v3307, 2147483648
    %v3320 = vor.u32 1.1754944e-38, %v3319
    %v3321 = vsel %vm3318, %v3320, %v3316
    %v3322 = vmul.f32 1.0, %v3321
    %3323 = vst [vmem:[#allocation1] ss:$4 sm:$0xff] %v3074
    %v3324 = vld.sshfl [vmem:[#allocation1] sm:$0xff pattern:$0x73625140]
    %3325 = vrot.lane.b32.xlu0 %v3324, 96
    %v3326 = vpop.permute.xlu0 %3325
    %v3327 = vsel %vm273, %v3326, 0
    %3329 = vmatpush.msra.mxu0 0.0
    %3330 = vmatpush.msra.mxu0 0.0
    %3331 = vmatpush.msra.mxu0 0.0
    %3332 = vmatpush.msra.mxu0 0.0
    %3333 = vmatpush.msra.mxu0 0.0
    %3334 = vmatpush.msra.mxu0 0.0
    %3335 = vmatpush.msra.mxu0 0.0
    %3336 = vmatpush.msra.mxu0 0.0
    %3337 = vmatpush.msra.mxu0 0.0
    %3338 = vmatpush.msra.mxu0 0.0
    %3339 = vmatpush.msra.mxu0 0.0
    %3340 = vmatpush.msra.mxu0 0.0
    %3341 = vmatpush.msra.mxu0 %v2683
    %3342 = vmatpush.msra.mxu0 %v2682
    %3343 = vmatpush.msra.mxu0 %v2681
    %3344 = vmatpush.msra.mxu0 %v2680
    %3345 = vmatmul.f32.gmra.mxu0 %v3327
    %v3346 = vpop.f32.mrf.mxu0
    %v3347 = vadd.f32 %v3035, %v3346
    %3348 = vdwg.mxu0
    %v3349 = vmul.f32 %v3298, %v3347
    %3351 = vrot.lane.b32.xlu0 %v3349, 64
    %v3352 = vpop.permute.xlu0 %3351
    %v3354 = vadd.f32 %v2811, %v3352
    %v3355 = vtanh.pop %v3354
    %v3356 = vsub.f32 1.0, %v3322
    %3358 = vrot.lane.b32.xlu0 %v3355, 96
    %v3359 = vpop.permute.xlu0 %3358
    %v3361 = vmul.f32 %v3356, %v3359
    %v3362 = vmul.f32 %v3322, %v3074
    %v3363 = vadd.f32 %v3361, %v3362
    %3365 = vst [vmem:[#allocation1] ss:$4 sm:$0xff] %v3278
    %v3366 = vld.sshfl [vmem:[#allocation1] sm:$0xff pattern:$0x73625140]
    %3367 = vrot.lane.b32.xlu0 %v3366, 96
    %v3368 = vpop.permute.xlu0 %3367
    %s3370 = scalar_lea.vmem [#allocation4], 2
    %3371 = vst.msk [vmem:[%s3370] sm:$0x3] %vm536, %v3368
    %3373 = vst [vmem:[#allocation1] ss:$4 sm:$0xff] %v3363
    %v3374 = vld.sshfl [vmem:[#allocation1] sm:$0xff pattern:$0x73625140]
    %3375 = vrot.lane.b32.xlu0 %v3374, 96
    %v3376 = vpop.permute.xlu0 %3375
    %s3378 = scalar_lea.vmem [#allocation5], 12
    %3379 = vst.msk [vmem:[%s3378] sm:$0x3] %vm536, %v3376
    %3380 = vst [vmem:[#allocation1] ss:$4 sm:$0xff] %v3278
    %v3381 = vld.sshfl [vmem:[#allocation1] sm:$0xff pattern:$0x73625140]
    %3382 = vrot.lane.b32.xlu0 %v3381, 96
    %v3383 = vpop.permute.xlu0 %3382
    %v3384 = vsel %vm273, %v3383, 0
    %3386 = vmatpush.msra.mxu0 0.0
    %3387 = vmatpush.msra.mxu0 0.0
    %3388 = vmatpush.msra.mxu0 0.0
    %3389 = vmatpush.msra.mxu0 0.0
    %3390 = vmatpush.msra.mxu0 0.0
    %3391 = vmatpush.msra.mxu0 0.0
    %3392 = vmatpush.msra.mxu0 0.0
    %3393 = vmatpush.msra.mxu0 0.0
    %3394 = vmatpush.msra.mxu0 0.0
    %3395 = vmatpush.msra.mxu0 0.0
    %3396 = vmatpush.msra.mxu0 0.0
    %3397 = vmatpush.msra.mxu0 0.0
    %3398 = vmatpush.msra.mxu0 %v2663
    %3399 = vmatpush.msra.mxu0 %v2662
    %3400 = vmatpush.msra.mxu0 %v2661
    %3401 = vmatpush.msra.mxu0 %v2660
    %3402 = vmatmul.f32.gmra.mxu0 %v3384
    %v3403 = vpop.f32.mrf.mxu0
    %v3404 = vadd.f32 0.0, %v3403
    %3405 = vdwg.mxu0
    %3406 = vst [vmem:[#allocation1] ss:$4 sm:$0xff] %v3278
    %v3407 = vld.sshfl [vmem:[#allocation1] sm:$0xff pattern:$0x73625140]
    %3408 = vrot.lane.b32.xlu0 %v3407, 96
    %v3409 = vpop.permute.xlu0 %3408
    %v3410 = vsel %vm273, %v3409, 0
    %3412 = vmatpush.msra.mxu0 0.0
    %3413 = vmatpush.msra.mxu0 0.0
    %3414 = vmatpush.msra.mxu0 0.0
    %3415 = vmatpush.msra.mxu0 0.0
    %3416 = vmatpush.msra.mxu0 0.0
    %3417 = vmatpush.msra.mxu0 0.0
    %3418 = vmatpush.msra.mxu0 0.0
    %3419 = vmatpush.msra.mxu0 0.0
    %3420 = vmatpush.msra.mxu0 0.0
    %3421 = vmatpush.msra.mxu0 0.0
    %3422 = vmatpush.msra.mxu0 0.0
    %3423 = vmatpush.msra.mxu0 0.0
    %3424 = vmatpush.msra.mxu0 %v2667
    %3425 = vmatpush.msra.mxu0 %v2666
    %3426 = vmatpush.msra.mxu0 %v2665
    %3427 = vmatpush.msra.mxu0 %v2664
    %3428 = vmatmul.f32.gmra.mxu0 %v3410
    %v3429 = vpop.f32.mrf.mxu0
    %v3430 = vadd.f32 0.0, %v3429
    %3431 = vdwg.mxu0
    %3432 = vst [vmem:[#allocation1] ss:$4 sm:$0xff] %v3363
    %v3433 = vld.sshfl [vmem:[#allocation1] sm:$0xff pattern:$0x73625140]
    %3434 = vrot.lane.b32.xlu0 %v3433, 96
    %v3435 = vpop.permute.xlu0 %3434
    %v3436 = vsel %vm273, %v3435, 0
    %3438 = vmatpush.msra.mxu0 0.0
    %3439 = vmatpush.msra.mxu0 0.0
    %3440 = vmatpush.msra.mxu0 0.0
    %3441 = vmatpush.msra.mxu0 0.0
    %3442 = vmatpush.msra.mxu0 0.0
    %3443 = vmatpush.msra.mxu0 0.0
    %3444 = vmatpush.msra.mxu0 0.0
    %3445 = vmatpush.msra.mxu0 0.0
    %3446 = vmatpush.msra.mxu0 0.0
    %3447 = vmatpush.msra.mxu0 0.0
    %3448 = vmatpush.msra.mxu0 0.0
    %3449 = vmatpush.msra.mxu0 0.0
    %3450 = vmatpush.msra.mxu0 %v2675
    %3451 = vmatpush.msra.mxu0 %v2674
    %3452 = vmatpush.msra.mxu0 %v2673
    %3453 = vmatpush.msra.mxu0 %v2672
    %3454 = vmatmul.f32.gmra.mxu0 %v3436
    %v3455 = vpop.f32.mrf.mxu0
    %v3456 = vadd.f32 0.0, %v3455
    %3457 = vdwg.mxu0
    %3458 = vst [vmem:[#allocation1] ss:$4 sm:$0xff] %v3363
    %v3459 = vld.sshfl [vmem:[#allocation1] sm:$0xff pattern:$0x73625140]
    %3460 = vrot.lane.b32.xlu0 %v3459, 96
    %v3461 = vpop.permute.xlu0 %3460
    %v3462 = vsel %vm273, %v3461, 0
    %3464 = vmatpush.msra.mxu0 0.0
    %3465 = vmatpush.msra.mxu0 0.0
    %3466 = vmatpush.msra.mxu0 0.0
    %3467 = vmatpush.msra.mxu0 0.0
    %3468 = vmatpush.msra.mxu0 0.0
    %3469 = vmatpush.msra.mxu0 0.0
    %3470 = vmatpush.msra.mxu0 0.0
    %3471 = vmatpush.msra.mxu0 0.0
    %3472 = vmatpush.msra.mxu0 0.0
    %3473 = vmatpush.msra.mxu0 0.0
    %3474 = vmatpush.msra.mxu0 0.0
    %3475 = vmatpush.msra.mxu0 0.0
    %3476 = vmatpush.msra.mxu0 %v2679
    %3477 = vmatpush.msra.mxu0 %v2678
    %3478 = vmatpush.msra.mxu0 %v2677
    %3479 = vmatpush.msra.mxu0 %v2676
    %3480 = vmatmul.f32.gmra.mxu0 %v3462
    %v3481 = vpop.f32.mrf.mxu0
    %v3482 = vadd.f32 0.0, %v3481
    %3483 = vdwg.mxu0
    %v3484 = vadd.f32 %v2747, %v3404
    %v3485 = vxor.u32 %v3484, 2147483648
    %v3486 = vmul.f32 %v3485, 1.442695
    %v3487 = vpow.pop %v3486
    %v3488 = vadd.f32 %v3487, 1.0
    %v3489 = vrcp.pop %v3488
    %v3490 = vmul.f32 %v3488, %v3489
    %v3491 = vsub.f32 1.0, %v3490
    %v3492 = vmul.f32 %v3489, %v3491
    %v3493 = vadd.f32 %v3489, %v3492
    %vm3494 = vweird.f32 %v3488
    %vm3495 = vweird.f32 %v3489
    %vm3496 = vmor %vm3494, %vm3495
    %v3497 = vsel %vm3496, %v3489, %v3493
    %v3498 = vand.u32 2147483647, %v3488
    %vm3499 = vcmp.eq.f32.partialorder %v3498, 8.507059e+37
    %v3500 = vand.u32 %v3488, 2147483648
    %v3501 = vor.u32 1.1754944e-38, %v3500
    %v3502 = vsel %vm3499, %v3501, %v3497
    %v3503 = vmul.f32 1.0, %v3502
    %3505 = vrot.lane.b32.xlu0 %v3430, 32
    %v3506 = vpop.permute.xlu0 %3505
    %v3508 = vadd.f32 %v2747, %v3506
    %v3509 = vxor.u32 %v3508, 2147483648
    %v3510 = vmul.f32 %v3509, 1.442695
    %v3511 = vpow.pop %v3510
    %v3512 = vadd.f32 %v3511, 1.0
    %v3513 = vrcp.pop %v3512
    %v3514 = vmul.f32 %v3512, %v3513
    %v3515 = vsub.f32 1.0, %v3514
    %v3516 = vmul.f32 %v3513, %v3515
    %v3517 = vadd.f32 %v3513, %v3516
    %vm3518 = vweird.f32 %v3512
    %vm3519 = vweird.f32 %v3513
    %vm3520 = vmor %vm3518, %vm3519
    %v3521 = vsel %vm3520, %v3513, %v3517
    %v3522 = vand.u32 2147483647, %v3512
    %vm3523 = vcmp.eq.f32.partialorder %v3522, 8.507059e+37
    %v3524 = vand.u32 %v3512, 2147483648
    %v3525 = vor.u32 1.1754944e-38, %v3524
    %v3526 = vsel %vm3523, %v3525, %v3521
    %v3527 = vmul.f32 1.0, %v3526
    %3528 = vst [vmem:[#allocation1] ss:$4 sm:$0xff] %v3278
    %v3529 = vld.sshfl [vmem:[#allocation1] sm:$0xff pattern:$0x73625140]
    %3530 = vrot.lane.b32.xlu0 %v3529, 96
    %v3531 = vpop.permute.xlu0 %3530
    %v3532 = vsel %vm273, %v3531, 0
    %3534 = vmatpush.msra.mxu0 0.0
    %3535 = vmatpush.msra.mxu0 0.0
    %3536 = vmatpush.msra.mxu0 0.0
    %3537 = vmatpush.msra.mxu0 0.0
    %3538 = vmatpush.msra.mxu0 0.0
    %3539 = vmatpush.msra.mxu0 0.0
    %3540 = vmatpush.msra.mxu0 0.0
    %3541 = vmatpush.msra.mxu0 0.0
    %3542 = vmatpush.msra.mxu0 0.0
    %3543 = vmatpush.msra.mxu0 0.0
    %3544 = vmatpush.msra.mxu0 0.0
    %3545 = vmatpush.msra.mxu0 0.0
    %3546 = vmatpush.msra.mxu0 %v2671
    %3547 = vmatpush.msra.mxu0 %v2670
    %3548 = vmatpush.msra.mxu0 %v2669
    %3549 = vmatpush.msra.mxu0 %v2668
    %3550 = vmatmul.f32.gmra.mxu0 %v3532
    %v3551 = vpop.f32.mrf.mxu0
    %v3552 = vadd.f32 %v2950, %v3551
    %3553 = vdwg.mxu0
    %v3554 = vmul.f32 %v3503, %v3552
    %3556 = vrot.lane.b32.xlu0 %v3554, 64
    %v3557 = vpop.permute.xlu0 %3556
    %v3559 = vadd.f32 %v2747, %v3557
    %v3560 = vtanh.pop %v3559
    %v3561 = vsub.f32 1.0, %v3527
    %3563 = vrot.lane.b32.xlu0 %v3560, 96
    %v3564 = vpop.permute.xlu0 %3563
    %v3566 = vmul.f32 %v3561, %v3564
    %v3567 = vmul.f32 %v3527, %v3278
    %v3568 = vadd.f32 %v3566, %v3567
    %v3569 = vadd.f32 %v2810, %v3456
    %v3570 = vxor.u32 %v3569, 2147483648
    %v3571 = vmul.f32 %v3570, 1.442695
    %v3572 = vpow.pop %v3571
    %v3573 = vadd.f32 %v3572, 1.0
    %v3574 = vrcp.pop %v3573
    %v3575 = vmul.f32 %v3573, %v3574
    %v3576 = vsub.f32 1.0, %v3575
    %v3577 = vmul.f32 %v3574, %v3576
    %v3578 = vadd.f32 %v3574, %v3577
    %vm3579 = vweird.f32 %v3573
    %vm3580 = vweird.f32 %v3574
    %vm3581 = vmor %vm3579, %vm3580
    %v3582 = vsel %vm3581, %v3574, %v3578
    %v3583 = vand.u32 2147483647, %v3573
    %vm3584 = vcmp.eq.f32.partialorder %v3583, 8.507059e+37
    %v3585 = vand.u32 %v3573, 2147483648
    %v3586 = vor.u32 1.1754944e-38, %v3585
    %v3587 = vsel %vm3584, %v3586, %v3582
    %v3588 = vmul.f32 1.0, %v3587
    %3590 = vrot.lane.b32.xlu0 %v3482, 32
    %v3591 = vpop.permute.xlu0 %3590
    %v3593 = vadd.f32 %v2810, %v3591
    %v3594 = vxor.u32 %v3593, 2147483648
    %v3595 = vmul.f32 %v3594, 1.442695
    %v3596 = vpow.pop %v3595
    %v3597 = vadd.f32 %v3596, 1.0
    %v3598 = vrcp.pop %v3597
    %v3599 = vmul.f32 %v3597, %v3598
    %v3600 = vsub.f32 1.0, %v3599
    %v3601 = vmul.f32 %v3598, %v3600
    %v3602 = vadd.f32 %v3598, %v3601
    %vm3603 = vweird.f32 %v3597
    %vm3604 = vweird.f32 %v3598
    %vm3605 = vmor %vm3603, %vm3604
    %v3606 = vsel %vm3605, %v3598, %v3602
    %v3607 = vand.u32 2147483647, %v3597
    %vm3608 = vcmp.eq.f32.partialorder %v3607, 8.507059e+37
    %v3609 = vand.u32 %v3597, 2147483648
    %v3610 = vor.u32 1.1754944e-38, %v3609
    %v3611 = vsel %vm3608, %v3610, %v3606
    %v3612 = vmul.f32 1.0, %v3611
    %3613 = vst [vmem:[#allocation1] ss:$4 sm:$0xff] %v3363
    %v3614 = vld.sshfl [vmem:[#allocation1] sm:$0xff pattern:$0x73625140]
    %3615 = vrot.lane.b32.xlu0 %v3614, 96
    %v3616 = vpop.permute.xlu0 %3615
    %v3617 = vsel %vm273, %v3616, 0
    %3619 = vmatpush.msra.mxu0 0.0
    %3620 = vmatpush.msra.mxu0 0.0
    %3621 = vmatpush.msra.mxu0 0.0
    %3622 = vmatpush.msra.mxu0 0.0
    %3623 = vmatpush.msra.mxu0 0.0
    %3624 = vmatpush.msra.mxu0 0.0
    %3625 = vmatpush.msra.mxu0 0.0
    %3626 = vmatpush.msra.mxu0 0.0
    %3627 = vmatpush.msra.mxu0 0.0
    %3628 = vmatpush.msra.mxu0 0.0
    %3629 = vmatpush.msra.mxu0 0.0
    %3630 = vmatpush.msra.mxu0 0.0
    %3631 = vmatpush.msra.mxu0 %v2683
    %3632 = vmatpush.msra.mxu0 %v2682
    %3633 = vmatpush.msra.mxu0 %v2681
    %3634 = vmatpush.msra.mxu0 %v2680
    %3635 = vmatmul.f32.gmra.mxu0 %v3617
    %v3636 = vpop.f32.mrf.mxu0
    %v3637 = vadd.f32 %v3035, %v3636
    %3638 = vdwg.mxu0
    %v3639 = vmul.f32 %v3588, %v3637
    %3641 = vrot.lane.b32.xlu0 %v3639, 64
    %v3642 = vpop.permute.xlu0 %3641
    %v3644 = vadd.f32 %v2810, %v3642
    %v3645 = vtanh.pop %v3644
    %v3646 = vsub.f32 1.0, %v3612
    %3648 = vrot.lane.b32.xlu0 %v3645, 96
    %v3649 = vpop.permute.xlu0 %3648
    %v3651 = vmul.f32 %v3646, %v3649
    %v3652 = vmul.f32 %v3612, %v3363
    %v3653 = vadd.f32 %v3651, %v3652
    %3655 = vst [vmem:[#allocation1] ss:$4 sm:$0xff] %v3568
    %v3656 = vld.sshfl [vmem:[#allocation1] sm:$0xff pattern:$0x73625140]
    %3657 = vrot.lane.b32.xlu0 %v3656, 96
    %v3658 = vpop.permute.xlu0 %3657
    %s3660 = scalar_lea.vmem [#allocation4], 4
    %3661 = vst.msk [vmem:[%s3660] sm:$0x3] %vm536, %v3658
    %3663 = vst [vmem:[#allocation1] ss:$4 sm:$0xff] %v3653
    %v3664 = vld.sshfl [vmem:[#allocation1] sm:$0xff pattern:$0x73625140]
    %3665 = vrot.lane.b32.xlu0 %v3664, 96
    %v3666 = vpop.permute.xlu0 %3665
    %s3668 = scalar_lea.vmem [#allocation5], 10
    %3669 = vst.msk [vmem:[%s3668] sm:$0x3] %vm536, %v3666
    %3670 = vst [vmem:[#allocation1] ss:$4 sm:$0xff] %v3568
    %v3671 = vld.sshfl [vmem:[#allocation1] sm:$0xff pattern:$0x73625140]
    %3672 = vrot.lane.b32.xlu0 %v3671, 96
    %v3673 = vpop.permute.xlu0 %3672
    %v3674 = vsel %vm273, %v3673, 0
    %3676 = vmatpush.msra.mxu0 0.0
    %3677 = vmatpush.msra.mxu0 0.0
    %3678 = vmatpush.msra.mxu0 0.0
    %3679 = vmatpush.msra.mxu0 0.0
    %3680 = vmatpush.msra.mxu0 0.0
    %3681 = vmatpush.msra.mxu0 0.0
    %3682 = vmatpush.msra.mxu0 0.0
    %3683 = vmatpush.msra.mxu0 0.0
    %3684 = vmatpush.msra.mxu0 0.0
    %3685 = vmatpush.msra.mxu0 0.0
    %3686 = vmatpush.msra.mxu0 0.0
    %3687 = vmatpush.msra.mxu0 0.0
    %3688 = vmatpush.msra.mxu0 %v2663
    %3689 = vmatpush.msra.mxu0 %v2662
    %3690 = vmatpush.msra.mxu0 %v2661
    %3691 = vmatpush.msra.mxu0 %v2660
    %3692 = vmatmul.f32.gmra.mxu0 %v3674
    %v3693 = vpop.f32.mrf.mxu0
    %v3694 = vadd.f32 0.0, %v3693
    %3695 = vdwg.mxu0
    %3696 = vst [vmem:[#allocation1] ss:$4 sm:$0xff] %v3568
    %v3697 = vld.sshfl [vmem:[#allocation1] sm:$0xff pattern:$0x73625140]
    %3698 = vrot.lane.b32.xlu0 %v3697, 96
    %v3699 = vpop.permute.xlu0 %3698
    %v3700 = vsel %vm273, %v3699, 0
    %3702 = vmatpush.msra.mxu0 0.0
    %3703 = vmatpush.msra.mxu0 0.0
    %3704 = vmatpush.msra.mxu0 0.0
    %3705 = vmatpush.msra.mxu0 0.0
    %3706 = vmatpush.msra.mxu0 0.0
    %3707 = vmatpush.msra.mxu0 0.0
    %3708 = vmatpush.msra.mxu0 0.0
    %3709 = vmatpush.msra.mxu0 0.0
    %3710 = vmatpush.msra.mxu0 0.0
    %3711 = vmatpush.msra.mxu0 0.0
    %3712 = vmatpush.msra.mxu0 0.0
    %3713 = vmatpush.msra.mxu0 0.0
    %3714 = vmatpush.msra.mxu0 %v2667
    %3715 = vmatpush.msra.mxu0 %v2666
    %3716 = vmatpush.msra.mxu0 %v2665
    %3717 = vmatpush.msra.mxu0 %v2664
    %3718 = vmatmul.f32.gmra.mxu0 %v3700
    %v3719 = vpop.f32.mrf.mxu0
    %v3720 = vadd.f32 0.0, %v3719
    %3721 = vdwg.mxu0
    %3722 = vst [vmem:[#allocation1] ss:$4 sm:$0xff] %v3653
    %v3723 = vld.sshfl [vmem:[#allocation1] sm:$0xff pattern:$0x73625140]
    %3724 = vrot.lane.b32.xlu0 %v3723, 96
    %v3725 = vpop.permute.xlu0 %3724
    %v3726 = vsel %vm273, %v3725, 0
    %3728 = vmatpush.msra.mxu0 0.0
    %3729 = vmatpush.msra.mxu0 0.0
    %3730 = vmatpush.msra.mxu0 0.0
    %3731 = vmatpush.msra.mxu0 0.0
    %3732 = vmatpush.msra.mxu0 0.0
    %3733 = vmatpush.msra.mxu0 0.0
    %3734 = vmatpush.msra.mxu0 0.0
    %3735 = vmatpush.msra.mxu0 0.0
    %3736 = vmatpush.msra.mxu0 0.0
    %3737 = vmatpush.msra.mxu0 0.0
    %3738 = vmatpush.msra.mxu0 0.0
    %3739 = vmatpush.msra.mxu0 0.0
    %3740 = vmatpush.msra.mxu0 %v2675
    %3741 = vmatpush.msra.mxu0 %v2674
    %3742 = vmatpush.msra.mxu0 %v2673
    %3743 = vmatpush.msra.mxu0 %v2672
    %3744 = vmatmul.f32.gmra.mxu0 %v3726
    %v3745 = vpop.f32.mrf.mxu0
    %v3746 = vadd.f32 0.0, %v3745
    %3747 = vdwg.mxu0
    %3748 = vst [vmem:[#allocation1] ss:$4 sm:$0xff] %v3653
    %v3749 = vld.sshfl [vmem:[#allocation1] sm:$0xff pattern:$0x73625140]
    %3750 = vrot.lane.b32.xlu0 %v3749, 96
    %v3751 = vpop.permute.xlu0 %3750
    %v3752 = vsel %vm273, %v3751, 0
    %3754 = vmatpush.msra.mxu0 0.0
    %3755 = vmatpush.msra.mxu0 0.0
    %3756 = vmatpush.msra.mxu0 0.0
    %3757 = vmatpush.msra.mxu0 0.0
    %3758 = vmatpush.msra.mxu0 0.0
    %3759 = vmatpush.msra.mxu0 0.0
    %3760 = vmatpush.msra.mxu0 0.0
    %3761 = vmatpush.msra.mxu0 0.0
    %3762 = vmatpush.msra.mxu0 0.0
    %3763 = vmatpush.msra.mxu0 0.0
    %3764 = vmatpush.msra.mxu0 0.0
    %3765 = vmatpush.msra.mxu0 0.0
    %3766 = vmatpush.msra.mxu0 %v2679
    %3767 = vmatpush.msra.mxu0 %v2678
    %3768 = vmatpush.msra.mxu0 %v2677
    %3769 = vmatpush.msra.mxu0 %v2676
    %3770 = vmatmul.f32.gmra.mxu0 %v3752
    %v3771 = vpop.f32.mrf.mxu0
    %v3772 = vadd.f32 0.0, %v3771
    %3773 = vdwg.mxu0
    %v3774 = vadd.f32 %v2748, %v3694
    %v3775 = vxor.u32 %v3774, 2147483648
    %v3776 = vmul.f32 %v3775, 1.442695
    %v3777 = vpow.pop %v3776
    %v3778 = vadd.f32 %v3777, 1.0
    %v3779 = vrcp.pop %v3778
    %v3780 = vmul.f32 %v3778, %v3779
    %v3781 = vsub.f32 1.0, %v3780
    %v3782 = vmul.f32 %v3779, %v3781
    %v3783 = vadd.f32 %v3779, %v3782
    %vm3784 = vweird.f32 %v3778
    %vm3785 = vweird.f32 %v3779
    %vm3786 = vmor %vm3784, %vm3785
    %v3787 = vsel %vm3786, %v3779, %v3783
    %v3788 = vand.u32 2147483647, %v3778
    %vm3789 = vcmp.eq.f32.partialorder %v3788, 8.507059e+37
    %v3790 = vand.u32 %v3778, 2147483648
    %v3791 = vor.u32 1.1754944e-38, %v3790
    %v3792 = vsel %vm3789, %v3791, %v3787
    %v3793 = vmul.f32 1.0, %v3792
    %3795 = vrot.lane.b32.xlu0 %v3720, 32
    %v3796 = vpop.permute.xlu0 %3795
    %v3798 = vadd.f32 %v2748, %v3796
    %v3799 = vxor.u32 %v3798, 2147483648
    %v3800 = vmul.f32 %v3799, 1.442695
    %v3801 = vpow.pop %v3800
    %v3802 = vadd.f32 %v3801, 1.0
    %v3803 = vrcp.pop %v3802
    %v3804 = vmul.f32 %v3802, %v3803
    %v3805 = vsub.f32 1.0, %v3804
    %v3806 = vmul.f32 %v3803, %v3805
    %v3807 = vadd.f32 %v3803, %v3806
    %vm3808 = vweird.f32 %v3802
    %vm3809 = vweird.f32 %v3803
    %vm3810 = vmor %vm3808, %vm3809
    %v3811 = vsel %vm3810, %v3803, %v3807
    %v3812 = vand.u32 2147483647, %v3802
    %vm3813 = vcmp.eq.f32.partialorder %v3812, 8.507059e+37
    %v3814 = vand.u32 %v3802, 2147483648
    %v3815 = vor.u32 1.1754944e-38, %v3814
    %v3816 = vsel %vm3813, %v3815, %v3811
    %v3817 = vmul.f32 1.0, %v3816
    %3818 = vst [vmem:[#allocation1] ss:$4 sm:$0xff] %v3568
    %v3819 = vld.sshfl [vmem:[#allocation1] sm:$0xff pattern:$0x73625140]
    %3820 = vrot.lane.b32.xlu0 %v3819, 96
    %v3821 = vpop.permute.xlu0 %3820
    %v3822 = vsel %vm273, %v3821, 0
    %3824 = vmatpush.msra.mxu0 0.0
    %3825 = vmatpush.msra.mxu0 0.0
    %3826 = vmatpush.msra.mxu0 0.0
    %3827 = vmatpush.msra.mxu0 0.0
    %3828 = vmatpush.msra.mxu0 0.0
    %3829 = vmatpush.msra.mxu0 0.0
    %3830 = vmatpush.msra.mxu0 0.0
    %3831 = vmatpush.msra.mxu0 0.0
    %3832 = vmatpush.msra.mxu0 0.0
    %3833 = vmatpush.msra.mxu0 0.0
    %3834 = vmatpush.msra.mxu0 0.0
    %3835 = vmatpush.msra.mxu0 0.0
    %3836 = vmatpush.msra.mxu0 %v2671
    %3837 = vmatpush.msra.mxu0 %v2670
    %3838 = vmatpush.msra.mxu0 %v2669
    %3839 = vmatpush.msra.mxu0 %v2668
    %3840 = vmatmul.f32.gmra.mxu0 %v3822
    %v3841 = vpop.f32.mrf.mxu0
    %v3842 = vadd.f32 %v2950, %v3841
    %3843 = vdwg.mxu0
    %v3844 = vmul.f32 %v3793, %v3842
    %3846 = vrot.lane.b32.xlu0 %v3844, 64
    %v3847 = vpop.permute.xlu0 %3846
    %v3849 = vadd.f32 %v2748, %v3847
    %v3850 = vtanh.pop %v3849
    %v3851 = vsub.f32 1.0, %v3817
    %3853 = vrot.lane.b32.xlu0 %v3850, 96
    %v3854 = vpop.permute.xlu0 %3853
    %v3856 = vmul.f32 %v3851, %v3854
    %v3857 = vmul.f32 %v3817, %v3568
    %v3858 = vadd.f32 %v3856, %v3857
    %v3859 = vadd.f32 %v2803, %v3746
    %v3860 = vxor.u32 %v3859, 2147483648
    %v3861 = vmul.f32 %v3860, 1.442695
    %v3862 = vpow.pop %v3861
    %v3863 = vadd.f32 %v3862, 1.0
    %v3864 = vrcp.pop %v3863
    %v3865 = vmul.f32 %v3863, %v3864
    %v3866 = vsub.f32 1.0, %v3865
    %v3867 = vmul.f32 %v3864, %v3866
    %v3868 = vadd.f32 %v3864, %v3867
    %vm3869 = vweird.f32 %v3863
    %vm3870 = vweird.f32 %v3864
    %vm3871 = vmor %vm3869, %vm3870
    %v3872 = vsel %vm3871, %v3864, %v3868
    %v3873 = vand.u32 2147483647, %v3863
    %vm3874 = vcmp.eq.f32.partialorder %v3873, 8.507059e+37
    %v3875 = vand.u32 %v3863, 2147483648
    %v3876 = vor.u32 1.1754944e-38, %v3875
    %v3877 = vsel %vm3874, %v3876, %v3872
    %v3878 = vmul.f32 1.0, %v3877
    %3880 = vrot.lane.b32.xlu0 %v3772, 32
    %v3881 = vpop.permute.xlu0 %3880
    %v3883 = vadd.f32 %v2803, %v3881
    %v3884 = vxor.u32 %v3883, 2147483648
    %v3885 = vmul.f32 %v3884, 1.442695
    %v3886 = vpow.pop %v3885
    %v3887 = vadd.f32 %v3886, 1.0
    %v3888 = vrcp.pop %v3887
    %v3889 = vmul.f32 %v3887, %v3888
    %v3890 = vsub.f32 1.0, %v3889
    %v3891 = vmul.f32 %v3888, %v3890
    %v3892 = vadd.f32 %v3888, %v3891
    %vm3893 = vweird.f32 %v3887
    %vm3894 = vweird.f32 %v3888
    %vm3895 = vmor %vm3893, %vm3894
    %v3896 = vsel %vm3895, %v3888, %v3892
    %v3897 = vand.u32 2147483647, %v3887
    %vm3898 = vcmp.eq.f32.partialorder %v3897, 8.507059e+37
    %v3899 = vand.u32 %v3887, 2147483648
    %v3900 = vor.u32 1.1754944e-38, %v3899
    %v3901 = vsel %vm3898, %v3900, %v3896
    %v3902 = vmul.f32 1.0, %v3901
    %3903 = vst [vmem:[#allocation1] ss:$4 sm:$0xff] %v3653
    %v3904 = vld.sshfl [vmem:[#allocation1] sm:$0xff pattern:$0x73625140]
    %3905 = vrot.lane.b32.xlu0 %v3904, 96
    %v3906 = vpop.permute.xlu0 %3905
    %v3907 = vsel %vm273, %v3906, 0
    %3909 = vmatpush.msra.mxu0 0.0
    %3910 = vmatpush.msra.mxu0 0.0
    %3911 = vmatpush.msra.mxu0 0.0
    %3912 = vmatpush.msra.mxu0 0.0
    %3913 = vmatpush.msra.mxu0 0.0
    %3914 = vmatpush.msra.mxu0 0.0
    %3915 = vmatpush.msra.mxu0 0.0
    %3916 = vmatpush.msra.mxu0 0.0
    %3917 = vmatpush.msra.mxu0 0.0
    %3918 = vmatpush.msra.mxu0 0.0
    %3919 = vmatpush.msra.mxu0 0.0
    %3920 = vmatpush.msra.mxu0 0.0
    %3921 = vmatpush.msra.mxu0 %v2683
    %3922 = vmatpush.msra.mxu0 %v2682
    %3923 = vmatpush.msra.mxu0 %v2681
    %3924 = vmatpush.msra.mxu0 %v2680
    %3925 = vmatmul.f32.gmra.mxu0 %v3907
    %v3926 = vpop.f32.mrf.mxu0
    %v3927 = vadd.f32 %v3035, %v3926
    %3928 = vdwg.mxu0
    %v3929 = vmul.f32 %v3878, %v3927
    %3931 = vrot.lane.b32.xlu0 %v3929, 64
    %v3932 = vpop.permute.xlu0 %3931
    %v3934 = vadd.f32 %v2803, %v3932
    %v3935 = vtanh.pop %v3934
    %v3936 = vsub.f32 1.0, %v3902
    %3938 = vrot.lane.b32.xlu0 %v3935, 96
    %v3939 = vpop.permute.xlu0 %3938
    %v3941 = vmul.f32 %v3936, %v3939
    %v3942 = vmul.f32 %v3902, %v3653
    %v3943 = vadd.f32 %v3941, %v3942
    %3945 = vst [vmem:[#allocation1] ss:$4 sm:$0xff] %v3858
    %v3946 = vld.sshfl [vmem:[#allocation1] sm:$0xff pattern:$0x73625140]
    %3947 = vrot.lane.b32.xlu0 %v3946, 96
    %v3948 = vpop.permute.xlu0 %3947
    %s3950 = scalar_lea.vmem [#allocation4], 6
    %3951 = vst.msk [vmem:[%s3950] sm:$0x3] %vm536, %v3948
    %3953 = vst [vmem:[#allocation1] ss:$4 sm:$0xff] %v3943
    %v3954 = vld.sshfl [vmem:[#allocation1] sm:$0xff pattern:$0x73625140]
    %3955 = vrot.lane.b32.xlu0 %v3954, 96
    %v3956 = vpop.permute.xlu0 %3955
    %s3958 = scalar_lea.vmem [#allocation5], 8
    %3959 = vst.msk [vmem:[%s3958] sm:$0x3] %vm536, %v3956
    %3960 = vst [vmem:[#allocation1] ss:$4 sm:$0xff] %v3858
    %v3961 = vld.sshfl [vmem:[#allocation1] sm:$0xff pattern:$0x73625140]
    %3962 = vrot.lane.b32.xlu0 %v3961, 96
    %v3963 = vpop.permute.xlu0 %3962
    %v3964 = vsel %vm273, %v3963, 0
    %3966 = vmatpush.msra.mxu0 0.0
    %3967 = vmatpush.msra.mxu0 0.0
    %3968 = vmatpush.msra.mxu0 0.0
    %3969 = vmatpush.msra.mxu0 0.0
    %3970 = vmatpush.msra.mxu0 0.0
    %3971 = vmatpush.msra.mxu0 0.0
    %3972 = vmatpush.msra.mxu0 0.0
    %3973 = vmatpush.msra.mxu0 0.0
    %3974 = vmatpush.msra.mxu0 0.0
    %3975 = vmatpush.msra.mxu0 0.0
    %3976 = vmatpush.msra.mxu0 0.0
    %3977 = vmatpush.msra.mxu0 0.0
    %3978 = vmatpush.msra.mxu0 %v2663
    %3979 = vmatpush.msra.mxu0 %v2662
    %3980 = vmatpush.msra.mxu0 %v2661
    %3981 = vmatpush.msra.mxu0 %v2660
    %3982 = vmatmul.f32.gmra.mxu0 %v3964
    %v3983 = vpop.f32.mrf.mxu0
    %v3984 = vadd.f32 0.0, %v3983
    %3985 = vdwg.mxu0
    %3986 = vst [vmem:[#allocation1] ss:$4 sm:$0xff] %v3858
    %v3987 = vld.sshfl [vmem:[#allocation1] sm:$0xff pattern:$0x73625140]
    %3988 = vrot.lane.b32.xlu0 %v3987, 96
    %v3989 = vpop.permute.xlu0 %3988
    %v3990 = vsel %vm273, %v3989, 0
    %3992 = vmatpush.msra.mxu0 0.0
    %3993 = vmatpush.msra.mxu0 0.0
    %3994 = vmatpush.msra.mxu0 0.0
    %3995 = vmatpush.msra.mxu0 0.0
    %3996 = vmatpush.msra.mxu0 0.0
    %3997 = vmatpush.msra.mxu0 0.0
    %3998 = vmatpush.msra.mxu0 0.0
    %3999 = vmatpush.msra.mxu0 0.0
    %4000 = vmatpush.msra.mxu0 0.0
    %4001 = vmatpush.msra.mxu0 0.0
    %4002 = vmatpush.msra.mxu0 0.0
    %4003 = vmatpush.msra.mxu0 0.0
    %4004 = vmatpush.msra.mxu0 %v2667
    %4005 = vmatpush.msra.mxu0 %v2666
    %4006 = vmatpush.msra.mxu0 %v2665
    %4007 = vmatpush.msra.mxu0 %v2664
    %4008 = vmatmul.f32.gmra.mxu0 %v3990
    %v4009 = vpop.f32.mrf.mxu0
    %v4010 = vadd.f32 0.0, %v4009
    %4011 = vdwg.mxu0
    %4012 = vst [vmem:[#allocation1] ss:$4 sm:$0xff] %v3943
    %v4013 = vld.sshfl [vmem:[#allocation1] sm:$0xff pattern:$0x73625140]
    %4014 = vrot.lane.b32.xlu0 %v4013, 96
    %v4015 = vpop.permute.xlu0 %4014
    %v4016 = vsel %vm273, %v4015, 0
    %4018 = vmatpush.msra.mxu0 0.0
    %4019 = vmatpush.msra.mxu0 0.0
    %4020 = vmatpush.msra.mxu0 0.0
    %4021 = vmatpush.msra.mxu0 0.0
    %4022 = vmatpush.msra.mxu0 0.0
    %4023 = vmatpush.msra.mxu0 0.0
    %4024 = vmatpush.msra.mxu0 0.0
    %4025 = vmatpush.msra.mxu0 0.0
    %4026 = vmatpush.msra.mxu0 0.0
    %4027 = vmatpush.msra.mxu0 0.0
    %4028 = vmatpush.msra.mxu0 0.0
    %4029 = vmatpush.msra.mxu0 0.0
    %4030 = vmatpush.msra.mxu0 %v2675
    %4031 = vmatpush.msra.mxu0 %v2674
    %4032 = vmatpush.msra.mxu0 %v2673
    %4033 = vmatpush.msra.mxu0 %v2672
    %4034 = vmatmul.f32.gmra.mxu0 %v4016
    %v4035 = vpop.f32.mrf.mxu0
    %v4036 = vadd.f32 0.0, %v4035
    %4037 = vdwg.mxu0
    %4038 = vst [vmem:[#allocation1] ss:$4 sm:$0xff] %v3943
    %v4039 = vld.sshfl [vmem:[#allocation1] sm:$0xff pattern:$0x73625140]
    %4040 = vrot.lane.b32.xlu0 %v4039, 96
    %v4041 = vpop.permute.xlu0 %4040
    %v4042 = vsel %vm273, %v4041, 0
    %4044 = vmatpush.msra.mxu0 0.0
    %4045 = vmatpush.msra.mxu0 0.0
    %4046 = vmatpush.msra.mxu0 0.0
    %4047 = vmatpush.msra.mxu0 0.0
    %4048 = vmatpush.msra.mxu0 0.0
    %4049 = vmatpush.msra.mxu0 0.0
    %4050 = vmatpush.msra.mxu0 0.0
    %4051 = vmatpush.msra.mxu0 0.0
    %4052 = vmatpush.msra.mxu0 0.0
    %4053 = vmatpush.msra.mxu0 0.0
    %4054 = vmatpush.msra.mxu0 0.0
    %4055 = vmatpush.msra.mxu0 0.0
    %4056 = vmatpush.msra.mxu0 %v2679
    %4057 = vmatpush.msra.mxu0 %v2678
    %4058 = vmatpush.msra.mxu0 %v2677
    %4059 = vmatpush.msra.mxu0 %v2676
    %4060 = vmatmul.f32.gmra.mxu0 %v4042
    %v4061 = vpop.f32.mrf.mxu0
    %v4062 = vadd.f32 0.0, %v4061
    %4063 = vdwg.mxu0
    %v4064 = vadd.f32 %v2742, %v3984
    %v4065 = vxor.u32 %v4064, 2147483648
    %v4066 = vmul.f32 %v4065, 1.442695
    %v4067 = vpow.pop %v4066
    %v4068 = vadd.f32 %v4067, 1.0
    %v4069 = vrcp.pop %v4068
    %v4070 = vmul.f32 %v4068, %v4069
    %v4071 = vsub.f32 1.0, %v4070
    %v4072 = vmul.f32 %v4069, %v4071
    %v4073 = vadd.f32 %v4069, %v4072
    %vm4074 = vweird.f32 %v4068
    %vm4075 = vweird.f32 %v4069
    %vm4076 = vmor %vm4074, %vm4075
    %v4077 = vsel %vm4076, %v4069, %v4073
    %v4078 = vand.u32 2147483647, %v4068
    %vm4079 = vcmp.eq.f32.partialorder %v4078, 8.507059e+37
    %v4080 = vand.u32 %v4068, 2147483648
    %v4081 = vor.u32 1.1754944e-38, %v4080
    %v4082 = vsel %vm4079, %v4081, %v4077
    %v4083 = vmul.f32 1.0, %v4082
    %4085 = vrot.lane.b32.xlu0 %v4010, 32
    %v4086 = vpop.permute.xlu0 %4085
    %v4088 = vadd.f32 %v2742, %v4086
    %v4089 = vxor.u32 %v4088, 2147483648
    %v4090 = vmul.f32 %v4089, 1.442695
    %v4091 = vpow.pop %v4090
    %v4092 = vadd.f32 %v4091, 1.0
    %v4093 = vrcp.pop %v4092
    %v4094 = vmul.f32 %v4092, %v4093
    %v4095 = vsub.f32 1.0, %v4094
    %v4096 = vmul.f32 %v4093, %v4095
    %v4097 = vadd.f32 %v4093, %v4096
    %vm4098 = vweird.f32 %v4092
    %vm4099 = vweird.f32 %v4093
    %vm4100 = vmor %vm4098, %vm4099
    %v4101 = vsel %vm4100, %v4093, %v4097
    %v4102 = vand.u32 2147483647, %v4092
    %vm4103 = vcmp.eq.f32.partialorder %v4102, 8.507059e+37
    %v4104 = vand.u32 %v4092, 2147483648
    %v4105 = vor.u32 1.1754944e-38, %v4104
    %v4106 = vsel %vm4103, %v4105, %v4101
    %v4107 = vmul.f32 1.0, %v4106
    %4108 = vst [vmem:[#allocation1] ss:$4 sm:$0xff] %v3858
    %v4109 = vld.sshfl [vmem:[#allocation1] sm:$0xff pattern:$0x73625140]
    %4110 = vrot.lane.b32.xlu0 %v4109, 96
    %v4111 = vpop.permute.xlu0 %4110
    %v4112 = vsel %vm273, %v4111, 0
    %4114 = vmatpush.msra.mxu0 0.0
    %4115 = vmatpush.msra.mxu0 0.0
    %4116 = vmatpush.msra.mxu0 0.0
    %4117 = vmatpush.msra.mxu0 0.0
    %4118 = vmatpush.msra.mxu0 0.0
    %4119 = vmatpush.msra.mxu0 0.0
    %4120 = vmatpush.msra.mxu0 0.0
    %4121 = vmatpush.msra.mxu0 0.0
    %4122 = vmatpush.msra.mxu0 0.0
    %4123 = vmatpush.msra.mxu0 0.0
    %4124 = vmatpush.msra.mxu0 0.0
    %4125 = vmatpush.msra.mxu0 0.0
    %4126 = vmatpush.msra.mxu0 %v2671
    %4127 = vmatpush.msra.mxu0 %v2670
    %4128 = vmatpush.msra.mxu0 %v2669
    %4129 = vmatpush.msra.mxu0 %v2668
    %4130 = vmatmul.f32.gmra.mxu0 %v4112
    %v4131 = vpop.f32.mrf.mxu0
    %v4132 = vadd.f32 %v2950, %v4131
    %4133 = vdwg.mxu0
    %v4134 = vmul.f32 %v4083, %v4132
    %4136 = vrot.lane.b32.xlu0 %v4134, 64
    %v4137 = vpop.permute.xlu0 %4136
    %v4139 = vadd.f32 %v2742, %v4137
    %v4140 = vtanh.pop %v4139
    %v4141 = vsub.f32 1.0, %v4107
    %4143 = vrot.lane.b32.xlu0 %v4140, 96
    %v4144 = vpop.permute.xlu0 %4143
    %v4146 = vmul.f32 %v4141, %v4144
    %v4147 = vmul.f32 %v4107, %v3858
    %v4148 = vadd.f32 %v4146, %v4147
    %v4149 = vadd.f32 %v2809, %v4036
    %v4150 = vxor.u32 %v4149, 2147483648
    %v4151 = vmul.f32 %v4150, 1.442695
    %v4152 = vpow.pop %v4151
    %v4153 = vadd.f32 %v4152, 1.0
    %v4154 = vrcp.pop %v4153
    %v4155 = vmul.f32 %v4153, %v4154
    %v4156 = vsub.f32 1.0, %v4155
    %v4157 = vmul.f32 %v4154, %v4156
    %v4158 = vadd.f32 %v4154, %v4157
    %vm4159 = vweird.f32 %v4153
    %vm4160 = vweird.f32 %v4154
    %vm4161 = vmor %vm4159, %vm4160
    %v4162 = vsel %vm4161, %v4154, %v4158
    %v4163 = vand.u32 2147483647, %v4153
    %vm4164 = vcmp.eq.f32.partialorder %v4163, 8.507059e+37
    %v4165 = vand.u32 %v4153, 2147483648
    %v4166 = vor.u32 1.1754944e-38, %v4165
    %v4167 = vsel %vm4164, %v4166, %v4162
    %v4168 = vmul.f32 1.0, %v4167
    %4170 = vrot.lane.b32.xlu0 %v4062, 32
    %v4171 = vpop.permute.xlu0 %4170
    %v4173 = vadd.f32 %v2809, %v4171
    %v4174 = vxor.u32 %v4173, 2147483648
    %v4175 = vmul.f32 %v4174, 1.442695
    %v4176 = vpow.pop %v4175
    %v4177 = vadd.f32 %v4176, 1.0
    %v4178 = vrcp.pop %v4177
    %v4179 = vmul.f32 %v4177, %v4178
    %v4180 = vsub.f32 1.0, %v4179
    %v4181 = vmul.f32 %v4178, %v4180
    %v4182 = vadd.f32 %v4178, %v4181
    %vm4183 = vweird.f32 %v4177
    %vm4184 = vweird.f32 %v4178
    %vm4185 = vmor %vm4183, %vm4184
    %v4186 = vsel %vm4185, %v4178, %v4182
    %v4187 = vand.u32 2147483647, %v4177
    %vm4188 = vcmp.eq.f32.partialorder %v4187, 8.507059e+37
    %v4189 = vand.u32 %v4177, 2147483648
    %v4190 = vor.u32 1.1754944e-38, %v4189
    %v4191 = vsel %vm4188, %v4190, %v4186
    %v4192 = vmul.f32 1.0, %v4191
    %4193 = vst [vmem:[#allocation1] ss:$4 sm:$0xff] %v3943
    %v4194 = vld.sshfl [vmem:[#allocation1] sm:$0xff pattern:$0x73625140]
    %4195 = vrot.lane.b32.xlu0 %v4194, 96
    %v4196 = vpop.permute.xlu0 %4195
    %v4197 = vsel %vm273, %v4196, 0
    %4199 = vmatpush.msra.mxu0 0.0
    %4200 = vmatpush.msra.mxu0 0.0
    %4201 = vmatpush.msra.mxu0 0.0
    %4202 = vmatpush.msra.mxu0 0.0
    %4203 = vmatpush.msra.mxu0 0.0
    %4204 = vmatpush.msra.mxu0 0.0
    %4205 = vmatpush.msra.mxu0 0.0
    %4206 = vmatpush.msra.mxu0 0.0
    %4207 = vmatpush.msra.mxu0 0.0
    %4208 = vmatpush.msra.mxu0 0.0
    %4209 = vmatpush.msra.mxu0 0.0
    %4210 = vmatpush.msra.mxu0 0.0
    %4211 = vmatpush.msra.mxu0 %v2683
    %4212 = vmatpush.msra.mxu0 %v2682
    %4213 = vmatpush.msra.mxu0 %v2681
    %4214 = vmatpush.msra.mxu0 %v2680
    %4215 = vmatmul.f32.gmra.mxu0 %v4197
    %v4216 = vpop.f32.mrf.mxu0
    %v4217 = vadd.f32 %v3035, %v4216
    %4218 = vdwg.mxu0
    %v4219 = vmul.f32 %v4168, %v4217
    %4221 = vrot.lane.b32.xlu0 %v4219, 64
    %v4222 = vpop.permute.xlu0 %4221
    %v4224 = vadd.f32 %v2809, %v4222
    %v4225 = vtanh.pop %v4224
    %v4226 = vsub.f32 1.0, %v4192
    %4228 = vrot.lane.b32.xlu0 %v4225, 96
    %v4229 = vpop.permute.xlu0 %4228
    %v4231 = vmul.f32 %v4226, %v4229
    %v4232 = vmul.f32 %v4192, %v3943
    %v4233 = vadd.f32 %v4231, %v4232
    %4235 = vst [vmem:[#allocation1] ss:$4 sm:$0xff] %v4148
    %v4236 = vld.sshfl [vmem:[#allocation1] sm:$0xff pattern:$0x73625140]
    %4237 = vrot.lane.b32.xlu0 %v4236, 96
    %v4238 = vpop.permute.xlu0 %4237
    %s4240 = scalar_lea.vmem [#allocation4], 8
    %4241 = vst.msk [vmem:[%s4240] sm:$0x3] %vm536, %v4238
    %4243 = vst [vmem:[#allocation1] ss:$4 sm:$0xff] %v4233
    %v4244 = vld.sshfl [vmem:[#allocation1] sm:$0xff pattern:$0x73625140]
    %4245 = vrot.lane.b32.xlu0 %v4244, 96
    %v4246 = vpop.permute.xlu0 %4245
    %s4248 = scalar_lea.vmem [#allocation5], 6
    %4249 = vst.msk [vmem:[%s4248] sm:$0x3] %vm536, %v4246
    %4250 = vst [vmem:[#allocation1] ss:$4 sm:$0xff] %v4148
    %v4251 = vld.sshfl [vmem:[#allocation1] sm:$0xff pattern:$0x73625140]
    %4252 = vrot.lane.b32.xlu0 %v4251, 96
    %v4253 = vpop.permute.xlu0 %4252
    %v4254 = vsel %vm273, %v4253, 0
    %4256 = vmatpush.msra.mxu0 0.0
    %4257 = vmatpush.msra.mxu0 0.0
    %4258 = vmatpush.msra.mxu0 0.0
    %4259 = vmatpush.msra.mxu0 0.0
    %4260 = vmatpush.msra.mxu0 0.0
    %4261 = vmatpush.msra.mxu0 0.0
    %4262 = vmatpush.msra.mxu0 0.0
    %4263 = vmatpush.msra.mxu0 0.0
    %4264 = vmatpush.msra.mxu0 0.0
    %4265 = vmatpush.msra.mxu0 0.0
    %4266 = vmatpush.msra.mxu0 0.0
    %4267 = vmatpush.msra.mxu0 0.0
    %4268 = vmatpush.msra.mxu0 %v2663
    %4269 = vmatpush.msra.mxu0 %v2662
    %4270 = vmatpush.msra.mxu0 %v2661
    %4271 = vmatpush.msra.mxu0 %v2660
    %4272 = vmatmul.f32.gmra.mxu0 %v4254
    %v4273 = vpop.f32.mrf.mxu0
    %v4274 = vadd.f32 0.0, %v4273
    %4275 = vdwg.mxu0
    %4276 = vst [vmem:[#allocation1] ss:$4 sm:$0xff] %v4148
    %v4277 = vld.sshfl [vmem:[#allocation1] sm:$0xff pattern:$0x73625140]
    %4278 = vrot.lane.b32.xlu0 %v4277, 96
    %v4279 = vpop.permute.xlu0 %4278
    %v4280 = vsel %vm273, %v4279, 0
    %4282 = vmatpush.msra.mxu0 0.0
    %4283 = vmatpush.msra.mxu0 0.0
    %4284 = vmatpush.msra.mxu0 0.0
    %4285 = vmatpush.msra.mxu0 0.0
    %4286 = vmatpush.msra.mxu0 0.0
    %4287 = vmatpush.msra.mxu0 0.0
    %4288 = vmatpush.msra.mxu0 0.0
    %4289 = vmatpush.msra.mxu0 0.0
    %4290 = vmatpush.msra.mxu0 0.0
    %4291 = vmatpush.msra.mxu0 0.0
    %4292 = vmatpush.msra.mxu0 0.0
    %4293 = vmatpush.msra.mxu0 0.0
    %4294 = vmatpush.msra.mxu0 %v2667
    %4295 = vmatpush.msra.mxu0 %v2666
    %4296 = vmatpush.msra.mxu0 %v2665
    %4297 = vmatpush.msra.mxu0 %v2664
    %4298 = vmatmul.f32.gmra.mxu0 %v4280
    %v4299 = vpop.f32.mrf.mxu0
    %v4300 = vadd.f32 0.0, %v4299
    %4301 = vdwg.mxu0
    %4302 = vst [vmem:[#allocation1] ss:$4 sm:$0xff] %v4233
    %v4303 = vld.sshfl [vmem:[#allocation1] sm:$0xff pattern:$0x73625140]
    %4304 = vrot.lane.b32.xlu0 %v4303, 96
    %v4305 = vpop.permute.xlu0 %4304
    %v4306 = vsel %vm273, %v4305, 0
    %4308 = vmatpush.msra.mxu0 0.0
    %4309 = vmatpush.msra.mxu0 0.0
    %4310 = vmatpush.msra.mxu0 0.0
    %4311 = vmatpush.msra.mxu0 0.0
    %4312 = vmatpush.msra.mxu0 0.0
    %4313 = vmatpush.msra.mxu0 0.0
    %4314 = vmatpush.msra.mxu0 0.0
    %4315 = vmatpush.msra.mxu0 0.0
    %4316 = vmatpush.msra.mxu0 0.0
    %4317 = vmatpush.msra.mxu0 0.0
    %4318 = vmatpush.msra.mxu0 0.0
    %4319 = vmatpush.msra.mxu0 0.0
    %4320 = vmatpush.msra.mxu0 %v2675
    %4321 = vmatpush.msra.mxu0 %v2674
    %4322 = vmatpush.msra.mxu0 %v2673
    %4323 = vmatpush.msra.mxu0 %v2672
    %4324 = vmatmul.f32.gmra.mxu0 %v4306
    %v4325 = vpop.f32.mrf.mxu0
    %v4326 = vadd.f32 0.0, %v4325
    %4327 = vdwg.mxu0
    %4328 = vst [vmem:[#allocation1] ss:$4 sm:$0xff] %v4233
    %v4329 = vld.sshfl [vmem:[#allocation1] sm:$0xff pattern:$0x73625140]
    %4330 = vrot.lane.b32.xlu0 %v4329, 96
    %v4331 = vpop.permute.xlu0 %4330
    %v4332 = vsel %vm273, %v4331, 0
    %4334 = vmatpush.msra.mxu0 0.0
    %4335 = vmatpush.msra.mxu0 0.0
    %4336 = vmatpush.msra.mxu0 0.0
    %4337 = vmatpush.msra.mxu0 0.0
    %4338 = vmatpush.msra.mxu0 0.0
    %4339 = vmatpush.msra.mxu0 0.0
    %4340 = vmatpush.msra.mxu0 0.0
    %4341 = vmatpush.msra.mxu0 0.0
    %4342 = vmatpush.msra.mxu0 0.0
    %4343 = vmatpush.msra.mxu0 0.0
    %4344 = vmatpush.msra.mxu0 0.0
    %4345 = vmatpush.msra.mxu0 0.0
    %4346 = vmatpush.msra.mxu0 %v2679
    %4347 = vmatpush.msra.mxu0 %v2678
    %4348 = vmatpush.msra.mxu0 %v2677
    %4349 = vmatpush.msra.mxu0 %v2676
    %4350 = vmatmul.f32.gmra.mxu0 %v4332
    %v4351 = vpop.f32.mrf.mxu0
    %v4352 = vadd.f32 0.0, %v4351
    %4353 = vdwg.mxu0
    %v4354 = vadd.f32 %v2749, %v4274
    %v4355 = vxor.u32 %v4354, 2147483648
    %v4356 = vmul.f32 %v4355, 1.442695
    %v4357 = vpow.pop %v4356
    %v4358 = vadd.f32 %v4357, 1.0
    %v4359 = vrcp.pop %v4358
    %v4360 = vmul.f32 %v4358, %v4359
    %v4361 = vsub.f32 1.0, %v4360
    %v4362 = vmul.f32 %v4359, %v4361
    %v4363 = vadd.f32 %v4359, %v4362
    %vm4364 = vweird.f32 %v4358
    %vm4365 = vweird.f32 %v4359
    %vm4366 = vmor %vm4364, %vm4365
    %v4367 = vsel %vm4366, %v4359, %v4363
    %v4368 = vand.u32 2147483647, %v4358
    %vm4369 = vcmp.eq.f32.partialorder %v4368, 8.507059e+37
    %v4370 = vand.u32 %v4358, 2147483648
    %v4371 = vor.u32 1.1754944e-38, %v4370
    %v4372 = vsel %vm4369, %v4371, %v4367
    %v4373 = vmul.f32 1.0, %v4372
    %4375 = vrot.lane.b32.xlu0 %v4300, 32
    %v4376 = vpop.permute.xlu0 %4375
    %v4378 = vadd.f32 %v2749, %v4376
    %v4379 = vxor.u32 %v4378, 2147483648
    %v4380 = vmul.f32 %v4379, 1.442695
    %v4381 = vpow.pop %v4380
    %v4382 = vadd.f32 %v4381, 1.0
    %v4383 = vrcp.pop %v4382
    %v4384 = vmul.f32 %v4382, %v4383
    %v4385 = vsub.f32 1.0, %v4384
    %v4386 = vmul.f32 %v4383, %v4385
    %v4387 = vadd.f32 %v4383, %v4386
    %vm4388 = vweird.f32 %v4382
    %vm4389 = vweird.f32 %v4383
    %vm4390 = vmor %vm4388, %vm4389
    %v4391 = vsel %vm4390, %v4383, %v4387
    %v4392 = vand.u32 2147483647, %v4382
    %vm4393 = vcmp.eq.f32.partialorder %v4392, 8.507059e+37
    %v4394 = vand.u32 %v4382, 2147483648
    %v4395 = vor.u32 1.1754944e-38, %v4394
    %v4396 = vsel %vm4393, %v4395, %v4391
    %v4397 = vmul.f32 1.0, %v4396
    %4398 = vst [vmem:[#allocation1] ss:$4 sm:$0xff] %v4148
    %v4399 = vld.sshfl [vmem:[#allocation1] sm:$0xff pattern:$0x73625140]
    %4400 = vrot.lane.b32.xlu0 %v4399, 96
    %v4401 = vpop.permute.xlu0 %4400
    %v4402 = vsel %vm273, %v4401, 0
    %4404 = vmatpush.msra.mxu0 0.0
    %4405 = vmatpush.msra.mxu0 0.0
    %4406 = vmatpush.msra.mxu0 0.0
    %4407 = vmatpush.msra.mxu0 0.0
    %4408 = vmatpush.msra.mxu0 0.0
    %4409 = vmatpush.msra.mxu0 0.0
    %4410 = vmatpush.msra.mxu0 0.0
    %4411 = vmatpush.msra.mxu0 0.0
    %4412 = vmatpush.msra.mxu0 0.0
    %4413 = vmatpush.msra.mxu0 0.0
    %4414 = vmatpush.msra.mxu0 0.0
    %4415 = vmatpush.msra.mxu0 0.0
    %4416 = vmatpush.msra.mxu0 %v2671
    %4417 = vmatpush.msra.mxu0 %v2670
    %4418 = vmatpush.msra.mxu0 %v2669
    %4419 = vmatpush.msra.mxu0 %v2668
    %4420 = vmatmul.f32.gmra.mxu0 %v4402
    %v4421 = vpop.f32.mrf.mxu0
    %v4422 = vadd.f32 %v2950, %v4421
    %4423 = vdwg.mxu0
    %v4424 = vmul.f32 %v4373, %v4422
    %4426 = vrot.lane.b32.xlu0 %v4424, 64
    %v4427 = vpop.permute.xlu0 %4426
    %v4429 = vadd.f32 %v2749, %v4427
    %v4430 = vtanh.pop %v4429
    %v4431 = vsub.f32 1.0, %v4397
    %4433 = vrot.lane.b32.xlu0 %v4430, 96
    %v4434 = vpop.permute.xlu0 %4433
    %v4436 = vmul.f32 %v4431, %v4434
    %v4437 = vmul.f32 %v4397, %v4148
    %v4438 = vadd.f32 %v4436, %v4437
    %v4439 = vadd.f32 %v2808, %v4326
    %v4440 = vxor.u32 %v4439, 2147483648
    %v4441 = vmul.f32 %v4440, 1.442695
    %v4442 = vpow.pop %v4441
    %v4443 = vadd.f32 %v4442, 1.0
    %v4444 = vrcp.pop %v4443
    %v4445 = vmul.f32 %v4443, %v4444
    %v4446 = vsub.f32 1.0, %v4445
    %v4447 = vmul.f32 %v4444, %v4446
    %v4448 = vadd.f32 %v4444, %v4447
    %vm4449 = vweird.f32 %v4443
    %vm4450 = vweird.f32 %v4444
    %vm4451 = vmor %vm4449, %vm4450
    %v4452 = vsel %vm4451, %v4444, %v4448
    %v4453 = vand.u32 2147483647, %v4443
    %vm4454 = vcmp.eq.f32.partialorder %v4453, 8.507059e+37
    %v4455 = vand.u32 %v4443, 2147483648
    %v4456 = vor.u32 1.1754944e-38, %v4455
    %v4457 = vsel %vm4454, %v4456, %v4452
    %v4458 = vmul.f32 1.0, %v4457
    %4460 = vrot.lane.b32.xlu0 %v4352, 32
    %v4461 = vpop.permute.xlu0 %4460
    %v4463 = vadd.f32 %v2808, %v4461
    %v4464 = vxor.u32 %v4463, 2147483648
    %v4465 = vmul.f32 %v4464, 1.442695
    %v4466 = vpow.pop %v4465
    %v4467 = vadd.f32 %v4466, 1.0
    %v4468 = vrcp.pop %v4467
    %v4469 = vmul.f32 %v4467, %v4468
    %v4470 = vsub.f32 1.0, %v4469
    %v4471 = vmul.f32 %v4468, %v4470
    %v4472 = vadd.f32 %v4468, %v4471
    %vm4473 = vweird.f32 %v4467
    %vm4474 = vweird.f32 %v4468
    %vm4475 = vmor %vm4473, %vm4474
    %v4476 = vsel %vm4475, %v4468, %v4472
    %v4477 = vand.u32 2147483647, %v4467
    %vm4478 = vcmp.eq.f32.partialorder %v4477, 8.507059e+37
    %v4479 = vand.u32 %v4467, 2147483648
    %v4480 = vor.u32 1.1754944e-38, %v4479
    %v4481 = vsel %vm4478, %v4480, %v4476
    %v4482 = vmul.f32 1.0, %v4481
    %4483 = vst [vmem:[#allocation1] ss:$4 sm:$0xff] %v4233
    %v4484 = vld.sshfl [vmem:[#allocation1] sm:$0xff pattern:$0x73625140]
    %4485 = vrot.lane.b32.xlu0 %v4484, 96
    %v4486 = vpop.permute.xlu0 %4485
    %v4487 = vsel %vm273, %v4486, 0
    %4489 = vmatpush.msra.mxu0 0.0
    %4490 = vmatpush.msra.mxu0 0.0
    %4491 = vmatpush.msra.mxu0 0.0
    %4492 = vmatpush.msra.mxu0 0.0
    %4493 = vmatpush.msra.mxu0 0.0
    %4494 = vmatpush.msra.mxu0 0.0
    %4495 = vmatpush.msra.mxu0 0.0
    %4496 = vmatpush.msra.mxu0 0.0
    %4497 = vmatpush.msra.mxu0 0.0
    %4498 = vmatpush.msra.mxu0 0.0
    %4499 = vmatpush.msra.mxu0 0.0
    %4500 = vmatpush.msra.mxu0 0.0
    %4501 = vmatpush.msra.mxu0 %v2683
    %4502 = vmatpush.msra.mxu0 %v2682
    %4503 = vmatpush.msra.mxu0 %v2681
    %4504 = vmatpush.msra.mxu0 %v2680
    %4505 = vmatmul.f32.gmra.mxu0 %v4487
    %v4506 = vpop.f32.mrf.mxu0
    %v4507 = vadd.f32 %v3035, %v4506
    %4508 = vdwg.mxu0
    %v4509 = vmul.f32 %v4458, %v4507
    %4511 = vrot.lane.b32.xlu0 %v4509, 64
    %v4512 = vpop.permute.xlu0 %4511
    %v4514 = vadd.f32 %v2808, %v4512
    %v4515 = vtanh.pop %v4514
    %v4516 = vsub.f32 1.0, %v4482
    %4518 = vrot.lane.b32.xlu0 %v4515, 96
    %v4519 = vpop.permute.xlu0 %4518
    %v4521 = vmul.f32 %v4516, %v4519
    %v4522 = vmul.f32 %v4482, %v4233
    %v4523 = vadd.f32 %v4521, %v4522
    %4525 = vst [vmem:[#allocation1] ss:$4 sm:$0xff] %v4438
    %v4526 = vld.sshfl [vmem:[#allocation1] sm:$0xff pattern:$0x73625140]
    %4527 = vrot.lane.b32.xlu0 %v4526, 96
    %v4528 = vpop.permute.xlu0 %4527
    %s4530 = scalar_lea.vmem [#allocation4], 10
    %4531 = vst.msk [vmem:[%s4530] sm:$0x3] %vm536, %v4528
    %4533 = vst [vmem:[#allocation1] ss:$4 sm:$0xff] %v4523
    %v4534 = vld.sshfl [vmem:[#allocation1] sm:$0xff pattern:$0x73625140]
    %4535 = vrot.lane.b32.xlu0 %v4534, 96
    %v4536 = vpop.permute.xlu0 %4535
    %s4538 = scalar_lea.vmem [#allocation5], 4
    %4539 = vst.msk [vmem:[%s4538] sm:$0x3] %vm536, %v4536
    %4540 = vst [vmem:[#allocation1] ss:$4 sm:$0xff] %v4438
    %v4541 = vld.sshfl [vmem:[#allocation1] sm:$0xff pattern:$0x73625140]
    %4542 = vrot.lane.b32.xlu0 %v4541, 96
    %v4543 = vpop.permute.xlu0 %4542
    %v4544 = vsel %vm273, %v4543, 0
    %4546 = vmatpush.msra.mxu0 0.0
    %4547 = vmatpush.msra.mxu0 0.0
    %4548 = vmatpush.msra.mxu0 0.0
    %4549 = vmatpush.msra.mxu0 0.0
    %4550 = vmatpush.msra.mxu0 0.0
    %4551 = vmatpush.msra.mxu0 0.0
    %4552 = vmatpush.msra.mxu0 0.0
    %4553 = vmatpush.msra.mxu0 0.0
    %4554 = vmatpush.msra.mxu0 0.0
    %4555 = vmatpush.msra.mxu0 0.0
    %4556 = vmatpush.msra.mxu0 0.0
    %4557 = vmatpush.msra.mxu0 0.0
    %4558 = vmatpush.msra.mxu0 %v2663
    %4559 = vmatpush.msra.mxu0 %v2662
    %4560 = vmatpush.msra.mxu0 %v2661
    %4561 = vmatpush.msra.mxu0 %v2660
    %4562 = vmatmul.f32.gmra.mxu0 %v4544
    %v4563 = vpop.f32.mrf.mxu0
    %v4564 = vadd.f32 0.0, %v4563
    %4565 = vdwg.mxu0
    %4566 = vst [vmem:[#allocation1] ss:$4 sm:$0xff] %v4438
    %v4567 = vld.sshfl [vmem:[#allocation1] sm:$0xff pattern:$0x73625140]
    %4568 = vrot.lane.b32.xlu0 %v4567, 96
    %v4569 = vpop.permute.xlu0 %4568
    %v4570 = vsel %vm273, %v4569, 0
    %4572 = vmatpush.msra.mxu0 0.0
    %4573 = vmatpush.msra.mxu0 0.0
    %4574 = vmatpush.msra.mxu0 0.0
    %4575 = vmatpush.msra.mxu0 0.0
    %4576 = vmatpush.msra.mxu0 0.0
    %4577 = vmatpush.msra.mxu0 0.0
    %4578 = vmatpush.msra.mxu0 0.0
    %4579 = vmatpush.msra.mxu0 0.0
    %4580 = vmatpush.msra.mxu0 0.0
    %4581 = vmatpush.msra.mxu0 0.0
    %4582 = vmatpush.msra.mxu0 0.0
    %4583 = vmatpush.msra.mxu0 0.0
    %4584 = vmatpush.msra.mxu0 %v2667
    %4585 = vmatpush.msra.mxu0 %v2666
    %4586 = vmatpush.msra.mxu0 %v2665
    %4587 = vmatpush.msra.mxu0 %v2664
    %4588 = vmatmul.f32.gmra.mxu0 %v4570
    %v4589 = vpop.f32.mrf.mxu0
    %v4590 = vadd.f32 0.0, %v4589
    %4591 = vdwg.mxu0
    %4592 = vst [vmem:[#allocation1] ss:$4 sm:$0xff] %v4523
    %v4593 = vld.sshfl [vmem:[#allocation1] sm:$0xff pattern:$0x73625140]
    %4594 = vrot.lane.b32.xlu0 %v4593, 96
    %v4595 = vpop.permute.xlu0 %4594
    %v4596 = vsel %vm273, %v4595, 0
    %4598 = vmatpush.msra.mxu0 0.0
    %4599 = vmatpush.msra.mxu0 0.0
    %4600 = vmatpush.msra.mxu0 0.0
    %4601 = vmatpush.msra.mxu0 0.0
    %4602 = vmatpush.msra.mxu0 0.0
    %4603 = vmatpush.msra.mxu0 0.0
    %4604 = vmatpush.msra.mxu0 0.0
    %4605 = vmatpush.msra.mxu0 0.0
    %4606 = vmatpush.msra.mxu0 0.0
    %4607 = vmatpush.msra.mxu0 0.0
    %4608 = vmatpush.msra.mxu0 0.0
    %4609 = vmatpush.msra.mxu0 0.0
    %4610 = vmatpush.msra.mxu0 %v2675
    %4611 = vmatpush.msra.mxu0 %v2674
    %4612 = vmatpush.msra.mxu0 %v2673
    %4613 = vmatpush.msra.mxu0 %v2672
    %4614 = vmatmul.f32.gmra.mxu0 %v4596
    %v4615 = vpop.f32.mrf.mxu0
    %v4616 = vadd.f32 0.0, %v4615
    %4617 = vdwg.mxu0
    %4618 = vst [vmem:[#allocation1] ss:$4 sm:$0xff] %v4523
    %v4619 = vld.sshfl [vmem:[#allocation1] sm:$0xff pattern:$0x73625140]
    %4620 = vrot.lane.b32.xlu0 %v4619, 96
    %v4621 = vpop.permute.xlu0 %4620
    %v4622 = vsel %vm273, %v4621, 0
    %4624 = vmatpush.msra.mxu0 0.0
    %4625 = vmatpush.msra.mxu0 0.0
    %4626 = vmatpush.msra.mxu0 0.0
    %4627 = vmatpush.msra.mxu0 0.0
    %4628 = vmatpush.msra.mxu0 0.0
    %4629 = vmatpush.msra.mxu0 0.0
    %4630 = vmatpush.msra.mxu0 0.0
    %4631 = vmatpush.msra.mxu0 0.0
    %4632 = vmatpush.msra.mxu0 0.0
    %4633 = vmatpush.msra.mxu0 0.0
    %4634 = vmatpush.msra.mxu0 0.0
    %4635 = vmatpush.msra.mxu0 0.0
    %4636 = vmatpush.msra.mxu0 %v2679
    %4637 = vmatpush.msra.mxu0 %v2678
    %4638 = vmatpush.msra.mxu0 %v2677
    %4639 = vmatpush.msra.mxu0 %v2676
    %4640 = vmatmul.f32.gmra.mxu0 %v4622
    %v4641 = vpop.f32.mrf.mxu0
    %v4642 = vadd.f32 0.0, %v4641
    %4643 = vdwg.mxu0
    %v4644 = vadd.f32 %v2750, %v4564
    %v4645 = vxor.u32 %v4644, 2147483648
    %v4646 = vmul.f32 %v4645, 1.442695
    %v4647 = vpow.pop %v4646
    %v4648 = vadd.f32 %v4647, 1.0
    %v4649 = vrcp.pop %v4648
    %v4650 = vmul.f32 %v4648, %v4649
    %v4651 = vsub.f32 1.0, %v4650
    %v4652 = vmul.f32 %v4649, %v4651
    %v4653 = vadd.f32 %v4649, %v4652
    %vm4654 = vweird.f32 %v4648
    %vm4655 = vweird.f32 %v4649
    %vm4656 = vmor %vm4654, %vm4655
    %v4657 = vsel %vm4656, %v4649, %v4653
    %v4658 = vand.u32 2147483647, %v4648
    %vm4659 = vcmp.eq.f32.partialorder %v4658, 8.507059e+37
    %v4660 = vand.u32 %v4648, 2147483648
    %v4661 = vor.u32 1.1754944e-38, %v4660
    %v4662 = vsel %vm4659, %v4661, %v4657
    %v4663 = vmul.f32 1.0, %v4662
    %4665 = vrot.lane.b32.xlu0 %v4590, 32
    %v4666 = vpop.permute.xlu0 %4665
    %v4668 = vadd.f32 %v2750, %v4666
    %v4669 = vxor.u32 %v4668, 2147483648
    %v4670 = vmul.f32 %v4669, 1.442695
    %v4671 = vpow.pop %v4670
    %v4672 = vadd.f32 %v4671, 1.0
    %v4673 = vrcp.pop %v4672
    %v4674 = vmul.f32 %v4672, %v4673
    %v4675 = vsub.f32 1.0, %v4674
    %v4676 = vmul.f32 %v4673, %v4675
    %v4677 = vadd.f32 %v4673, %v4676
    %vm4678 = vweird.f32 %v4672
    %vm4679 = vweird.f32 %v4673
    %vm4680 = vmor %vm4678, %vm4679
    %v4681 = vsel %vm4680, %v4673, %v4677
    %v4682 = vand.u32 2147483647, %v4672
    %vm4683 = vcmp.eq.f32.partialorder %v4682, 8.507059e+37
    %v4684 = vand.u32 %v4672, 2147483648
    %v4685 = vor.u32 1.1754944e-38, %v4684
    %v4686 = vsel %vm4683, %v4685, %v4681
    %v4687 = vmul.f32 1.0, %v4686
    %4688 = vst [vmem:[#allocation1] ss:$4 sm:$0xff] %v4438
    %v4689 = vld.sshfl [vmem:[#allocation1] sm:$0xff pattern:$0x73625140]
    %4690 = vrot.lane.b32.xlu0 %v4689, 96
    %v4691 = vpop.permute.xlu0 %4690
    %v4692 = vsel %vm273, %v4691, 0
    %4694 = vmatpush.msra.mxu0 0.0
    %4695 = vmatpush.msra.mxu0 0.0
    %4696 = vmatpush.msra.mxu0 0.0
    %4697 = vmatpush.msra.mxu0 0.0
    %4698 = vmatpush.msra.mxu0 0.0
    %4699 = vmatpush.msra.mxu0 0.0
    %4700 = vmatpush.msra.mxu0 0.0
    %4701 = vmatpush.msra.mxu0 0.0
    %4702 = vmatpush.msra.mxu0 0.0
    %4703 = vmatpush.msra.mxu0 0.0
    %4704 = vmatpush.msra.mxu0 0.0
    %4705 = vmatpush.msra.mxu0 0.0
    %4706 = vmatpush.msra.mxu0 %v2671
    %4707 = vmatpush.msra.mxu0 %v2670
    %4708 = vmatpush.msra.mxu0 %v2669
    %4709 = vmatpush.msra.mxu0 %v2668
    %4710 = vmatmul.f32.gmra.mxu0 %v4692
    %v4711 = vpop.f32.mrf.mxu0
    %v4712 = vadd.f32 %v2950, %v4711
    %4713 = vdwg.mxu0
    %v4714 = vmul.f32 %v4663, %v4712
    %4716 = vrot.lane.b32.xlu0 %v4714, 64
    %v4717 = vpop.permute.xlu0 %4716
    %v4719 = vadd.f32 %v2750, %v4717
    %v4720 = vtanh.pop %v4719
    %v4721 = vsub.f32 1.0, %v4687
    %4723 = vrot.lane.b32.xlu0 %v4720, 96
    %v4724 = vpop.permute.xlu0 %4723
    %v4726 = vmul.f32 %v4721, %v4724
    %v4727 = vmul.f32 %v4687, %v4438
    %v4728 = vadd.f32 %v4726, %v4727
    %v4729 = vadd.f32 %v2807, %v4616
    %v4730 = vxor.u32 %v4729, 2147483648
    %v4731 = vmul.f32 %v4730, 1.442695
    %v4732 = vpow.pop %v4731
    %v4733 = vadd.f32 %v4732, 1.0
    %v4734 = vrcp.pop %v4733
    %v4735 = vmul.f32 %v4733, %v4734
    %v4736 = vsub.f32 1.0, %v4735
    %v4737 = vmul.f32 %v4734, %v4736
    %v4738 = vadd.f32 %v4734, %v4737
    %vm4739 = vweird.f32 %v4733
    %vm4740 = vweird.f32 %v4734
    %vm4741 = vmor %vm4739, %vm4740
    %v4742 = vsel %vm4741, %v4734, %v4738
    %v4743 = vand.u32 2147483647, %v4733
    %vm4744 = vcmp.eq.f32.partialorder %v4743, 8.507059e+37
    %v4745 = vand.u32 %v4733, 2147483648
    %v4746 = vor.u32 1.1754944e-38, %v4745
    %v4747 = vsel %vm4744, %v4746, %v4742
    %v4748 = vmul.f32 1.0, %v4747
    %4750 = vrot.lane.b32.xlu0 %v4642, 32
    %v4751 = vpop.permute.xlu0 %4750
    %v4753 = vadd.f32 %v2807, %v4751
    %v4754 = vxor.u32 %v4753, 2147483648
    %v4755 = vmul.f32 %v4754, 1.442695
    %v4756 = vpow.pop %v4755
    %v4757 = vadd.f32 %v4756, 1.0
    %v4758 = vrcp.pop %v4757
    %v4759 = vmul.f32 %v4757, %v4758
    %v4760 = vsub.f32 1.0, %v4759
    %v4761 = vmul.f32 %v4758, %v4760
    %v4762 = vadd.f32 %v4758, %v4761
    %vm4763 = vweird.f32 %v4757
    %vm4764 = vweird.f32 %v4758
    %vm4765 = vmor %vm4763, %vm4764
    %v4766 = vsel %vm4765, %v4758, %v4762
    %v4767 = vand.u32 2147483647, %v4757
    %vm4768 = vcmp.eq.f32.partialorder %v4767, 8.507059e+37
    %v4769 = vand.u32 %v4757, 2147483648
    %v4770 = vor.u32 1.1754944e-38, %v4769
    %v4771 = vsel %vm4768, %v4770, %v4766
    %v4772 = vmul.f32 1.0, %v4771
    %4773 = vst [vmem:[#allocation1] ss:$4 sm:$0xff] %v4523
    %v4774 = vld.sshfl [vmem:[#allocation1] sm:$0xff pattern:$0x73625140]
    %4775 = vrot.lane.b32.xlu0 %v4774, 96
    %v4776 = vpop.permute.xlu0 %4775
    %v4777 = vsel %vm273, %v4776, 0
    %4779 = vmatpush.msra.mxu0 0.0
    %4780 = vmatpush.msra.mxu0 0.0
    %4781 = vmatpush.msra.mxu0 0.0
    %4782 = vmatpush.msra.mxu0 0.0
    %4783 = vmatpush.msra.mxu0 0.0
    %4784 = vmatpush.msra.mxu0 0.0
    %4785 = vmatpush.msra.mxu0 0.0
    %4786 = vmatpush.msra.mxu0 0.0
    %4787 = vmatpush.msra.mxu0 0.0
    %4788 = vmatpush.msra.mxu0 0.0
    %4789 = vmatpush.msra.mxu0 0.0
    %4790 = vmatpush.msra.mxu0 0.0
    %4791 = vmatpush.msra.mxu0 %v2683
    %4792 = vmatpush.msra.mxu0 %v2682
    %4793 = vmatpush.msra.mxu0 %v2681
    %4794 = vmatpush.msra.mxu0 %v2680
    %4795 = vmatmul.f32.gmra.mxu0 %v4777
    %v4796 = vpop.f32.mrf.mxu0
    %v4797 = vadd.f32 %v3035, %v4796
    %4798 = vdwg.mxu0
    %v4799 = vmul.f32 %v4748, %v4797
    %4801 = vrot.lane.b32.xlu0 %v4799, 64
    %v4802 = vpop.permute.xlu0 %4801
    %v4804 = vadd.f32 %v2807, %v4802
    %v4805 = vtanh.pop %v4804
    %v4806 = vsub.f32 1.0, %v4772
    %4808 = vrot.lane.b32.xlu0 %v4805, 96
    %v4809 = vpop.permute.xlu0 %4808
    %v4811 = vmul.f32 %v4806, %v4809
    %v4812 = vmul.f32 %v4772, %v4523
    %v4813 = vadd.f32 %v4811, %v4812
    %4815 = vst [vmem:[#allocation1] ss:$4 sm:$0xff] %v4728
    %v4816 = vld.sshfl [vmem:[#allocation1] sm:$0xff pattern:$0x73625140]
    %4817 = vrot.lane.b32.xlu0 %v4816, 96
    %v4818 = vpop.permute.xlu0 %4817
    %s4820 = scalar_lea.vmem [#allocation4], 12
    %4821 = vst.msk [vmem:[%s4820] sm:$0x3] %vm536, %v4818
    %4823 = vst [vmem:[#allocation1] ss:$4 sm:$0xff] %v4813
    %v4824 = vld.sshfl [vmem:[#allocation1] sm:$0xff pattern:$0x73625140]
    %4825 = vrot.lane.b32.xlu0 %v4824, 96
    %v4826 = vpop.permute.xlu0 %4825
    %s4828 = scalar_lea.vmem [#allocation5], 2
    %4829 = vst.msk [vmem:[%s4828] sm:$0x3] %vm536, %v4826
    %4830 = vst [vmem:[#allocation1] ss:$4 sm:$0xff] %v4728
    %v4831 = vld.sshfl [vmem:[#allocation1] sm:$0xff pattern:$0x73625140]
    %4832 = vrot.lane.b32.xlu0 %v4831, 96
    %v4833 = vpop.permute.xlu0 %4832
    %v4834 = vsel %vm273, %v4833, 0
    %4836 = vmatpush.msra.mxu0 0.0
    %4837 = vmatpush.msra.mxu0 0.0
    %4838 = vmatpush.msra.mxu0 0.0
    %4839 = vmatpush.msra.mxu0 0.0
    %4840 = vmatpush.msra.mxu0 0.0
    %4841 = vmatpush.msra.mxu0 0.0
    %4842 = vmatpush.msra.mxu0 0.0
    %4843 = vmatpush.msra.mxu0 0.0
    %4844 = vmatpush.msra.mxu0 0.0
    %4845 = vmatpush.msra.mxu0 0.0
    %4846 = vmatpush.msra.mxu0 0.0
    %4847 = vmatpush.msra.mxu0 0.0
    %4848 = vmatpush.msra.mxu0 %v2663
    %4849 = vmatpush.msra.mxu0 %v2662
    %4850 = vmatpush.msra.mxu0 %v2661
    %4851 = vmatpush.msra.mxu0 %v2660
    %4852 = vmatmul.f32.gmra.mxu0 %v4834
    %v4853 = vpop.f32.mrf.mxu0
    %v4854 = vadd.f32 0.0, %v4853
    %4855 = vdwg.mxu0
    %4856 = vst [vmem:[#allocation1] ss:$4 sm:$0xff] %v4728
    %v4857 = vld.sshfl [vmem:[#allocation1] sm:$0xff pattern:$0x73625140]
    %4858 = vrot.lane.b32.xlu0 %v4857, 96
    %v4859 = vpop.permute.xlu0 %4858
    %v4860 = vsel %vm273, %v4859, 0
    %4862 = vmatpush.msra.mxu0 0.0
    %4863 = vmatpush.msra.mxu0 0.0
    %4864 = vmatpush.msra.mxu0 0.0
    %4865 = vmatpush.msra.mxu0 0.0
    %4866 = vmatpush.msra.mxu0 0.0
    %4867 = vmatpush.msra.mxu0 0.0
    %4868 = vmatpush.msra.mxu0 0.0
    %4869 = vmatpush.msra.mxu0 0.0
    %4870 = vmatpush.msra.mxu0 0.0
    %4871 = vmatpush.msra.mxu0 0.0
    %4872 = vmatpush.msra.mxu0 0.0
    %4873 = vmatpush.msra.mxu0 0.0
    %4874 = vmatpush.msra.mxu0 %v2667
    %4875 = vmatpush.msra.mxu0 %v2666
    %4876 = vmatpush.msra.mxu0 %v2665
    %4877 = vmatpush.msra.mxu0 %v2664
    %4878 = vmatmul.f32.gmra.mxu0 %v4860
    %v4879 = vpop.f32.mrf.mxu0
    %v4880 = vadd.f32 0.0, %v4879
    %4881 = vdwg.mxu0
    %4882 = vst [vmem:[#allocation1] ss:$4 sm:$0xff] %v4813
    %v4883 = vld.sshfl [vmem:[#allocation1] sm:$0xff pattern:$0x73625140]
    %4884 = vrot.lane.b32.xlu0 %v4883, 96
    %v4885 = vpop.permute.xlu0 %4884
    %v4886 = vsel %vm273, %v4885, 0
    %4888 = vmatpush.msra.mxu0 0.0
    %4889 = vmatpush.msra.mxu0 0.0
    %4890 = vmatpush.msra.mxu0 0.0
    %4891 = vmatpush.msra.mxu0 0.0
    %4892 = vmatpush.msra.mxu0 0.0
    %4893 = vmatpush.msra.mxu0 0.0
    %4894 = vmatpush.msra.mxu0 0.0
    %4895 = vmatpush.msra.mxu0 0.0
    %4896 = vmatpush.msra.mxu0 0.0
    %4897 = vmatpush.msra.mxu0 0.0
    %4898 = vmatpush.msra.mxu0 0.0
    %4899 = vmatpush.msra.mxu0 0.0
    %4900 = vmatpush.msra.mxu0 %v2675
    %4901 = vmatpush.msra.mxu0 %v2674
    %4902 = vmatpush.msra.mxu0 %v2673
    %4903 = vmatpush.msra.mxu0 %v2672
    %4904 = vmatmul.f32.gmra.mxu0 %v4886
    %v4905 = vpop.f32.mrf.mxu0
    %v4906 = vadd.f32 0.0, %v4905
    %4907 = vdwg.mxu0
    %4908 = vst [vmem:[#allocation1] ss:$4 sm:$0xff] %v4813
    %v4909 = vld.sshfl [vmem:[#allocation1] sm:$0xff pattern:$0x73625140]
    %4910 = vrot.lane.b32.xlu0 %v4909, 96
    %v4911 = vpop.permute.xlu0 %4910
    %v4912 = vsel %vm273, %v4911, 0
    %4914 = vmatpush.msra.mxu0 0.0
    %4915 = vmatpush.msra.mxu0 0.0
    %4916 = vmatpush.msra.mxu0 0.0
    %4917 = vmatpush.msra.mxu0 0.0
    %4918 = vmatpush.msra.mxu0 0.0
    %4919 = vmatpush.msra.mxu0 0.0
    %4920 = vmatpush.msra.mxu0 0.0
    %4921 = vmatpush.msra.mxu0 0.0
    %4922 = vmatpush.msra.mxu0 0.0
    %4923 = vmatpush.msra.mxu0 0.0
    %4924 = vmatpush.msra.mxu0 0.0
    %4925 = vmatpush.msra.mxu0 0.0
    %4926 = vmatpush.msra.mxu0 %v2679
    %4927 = vmatpush.msra.mxu0 %v2678
    %4928 = vmatpush.msra.mxu0 %v2677
    %4929 = vmatpush.msra.mxu0 %v2676
    %4930 = vmatmul.f32.gmra.mxu0 %v4912
    %v4931 = vpop.f32.mrf.mxu0
    %v4932 = vadd.f32 0.0, %v4931
    %4933 = vdwg.mxu0
    %v4934 = vadd.f32 %v2751, %v4854
    %v4935 = vxor.u32 %v4934, 2147483648
    %v4936 = vmul.f32 %v4935, 1.442695
    %v4937 = vpow.pop %v4936
    %v4938 = vadd.f32 %v4937, 1.0
    %v4939 = vrcp.pop %v4938
    %v4940 = vmul.f32 %v4938, %v4939
    %v4941 = vsub.f32 1.0, %v4940
    %v4942 = vmul.f32 %v4939, %v4941
    %v4943 = vadd.f32 %v4939, %v4942
    %vm4944 = vweird.f32 %v4938
    %vm4945 = vweird.f32 %v4939
    %vm4946 = vmor %vm4944, %vm4945
    %v4947 = vsel %vm4946, %v4939, %v4943
    %v4948 = vand.u32 2147483647, %v4938
    %vm4949 = vcmp.eq.f32.partialorder %v4948, 8.507059e+37
    %v4950 = vand.u32 %v4938, 2147483648
    %v4951 = vor.u32 1.1754944e-38, %v4950
    %v4952 = vsel %vm4949, %v4951, %v4947
    %v4953 = vmul.f32 1.0, %v4952
    %4955 = vrot.lane.b32.xlu0 %v4880, 32
    %v4956 = vpop.permute.xlu0 %4955
    %v4958 = vadd.f32 %v2751, %v4956
    %v4959 = vxor.u32 %v4958, 2147483648
    %v4960 = vmul.f32 %v4959, 1.442695
    %v4961 = vpow.pop %v4960
    %v4962 = vadd.f32 %v4961, 1.0
    %v4963 = vrcp.pop %v4962
    %v4964 = vmul.f32 %v4962, %v4963
    %v4965 = vsub.f32 1.0, %v4964
    %v4966 = vmul.f32 %v4963, %v4965
    %v4967 = vadd.f32 %v4963, %v4966
    %vm4968 = vweird.f32 %v4962
    %vm4969 = vweird.f32 %v4963
    %vm4970 = vmor %vm4968, %vm4969
    %v4971 = vsel %vm4970, %v4963, %v4967
    %v4972 = vand.u32 2147483647, %v4962
    %vm4973 = vcmp.eq.f32.partialorder %v4972, 8.507059e+37
    %v4974 = vand.u32 %v4962, 2147483648
    %v4975 = vor.u32 1.1754944e-38, %v4974
    %v4976 = vsel %vm4973, %v4975, %v4971
    %v4977 = vmul.f32 1.0, %v4976
    %4978 = vst [vmem:[#allocation1] ss:$4 sm:$0xff] %v4728
    %v4979 = vld.sshfl [vmem:[#allocation1] sm:$0xff pattern:$0x73625140]
    %4980 = vrot.lane.b32.xlu0 %v4979, 96
    %v4981 = vpop.permute.xlu0 %4980
    %v4982 = vsel %vm273, %v4981, 0
    %4984 = vmatpush.msra.mxu0 0.0
    %4985 = vmatpush.msra.mxu0 0.0
    %4986 = vmatpush.msra.mxu0 0.0
    %4987 = vmatpush.msra.mxu0 0.0
    %4988 = vmatpush.msra.mxu0 0.0
    %4989 = vmatpush.msra.mxu0 0.0
    %4990 = vmatpush.msra.mxu0 0.0
    %4991 = vmatpush.msra.mxu0 0.0
    %4992 = vmatpush.msra.mxu0 0.0
    %4993 = vmatpush.msra.mxu0 0.0
    %4994 = vmatpush.msra.mxu0 0.0
    %4995 = vmatpush.msra.mxu0 0.0
    %4996 = vmatpush.msra.mxu0 %v2671
    %4997 = vmatpush.msra.mxu0 %v2670
    %4998 = vmatpush.msra.mxu0 %v2669
    %4999 = vmatpush.msra.mxu0 %v2668
    %5000 = vmatmul.f32.gmra.mxu0 %v4982
    %v5001 = vpop.f32.mrf.mxu0
    %v5002 = vadd.f32 %v2950, %v5001
    %5003 = vdwg.mxu0
    %v5004 = vmul.f32 %v4953, %v5002
    %5006 = vrot.lane.b32.xlu0 %v5004, 64
    %v5007 = vpop.permute.xlu0 %5006
    %v5009 = vadd.f32 %v2751, %v5007
    %v5010 = vtanh.pop %v5009
    %v5011 = vsub.f32 1.0, %v4977
    %5013 = vrot.lane.b32.xlu0 %v5010, 96
    %v5014 = vpop.permute.xlu0 %5013
    %v5016 = vmul.f32 %v5011, %v5014
    %v5017 = vmul.f32 %v4977, %v4728
    %v5018 = vadd.f32 %v5016, %v5017
    %v5019 = vadd.f32 %v2800, %v4906
    %v5020 = vxor.u32 %v5019, 2147483648
    %v5021 = vmul.f32 %v5020, 1.442695
    %v5022 = vpow.pop %v5021
    %v5023 = vadd.f32 %v5022, 1.0
    %v5024 = vrcp.pop %v5023
    %v5025 = vmul.f32 %v5023, %v5024
    %v5026 = vsub.f32 1.0, %v5025
    %v5027 = vmul.f32 %v5024, %v5026
    %v5028 = vadd.f32 %v5024, %v5027
    %vm5029 = vweird.f32 %v5023
    %vm5030 = vweird.f32 %v5024
    %vm5031 = vmor %vm5029, %vm5030
    %v5032 = vsel %vm5031, %v5024, %v5028
    %v5033 = vand.u32 2147483647, %v5023
    %vm5034 = vcmp.eq.f32.partialorder %v5033, 8.507059e+37
    %v5035 = vand.u32 %v5023, 2147483648
    %v5036 = vor.u32 1.1754944e-38, %v5035
    %v5037 = vsel %vm5034, %v5036, %v5032
    %v5038 = vmul.f32 1.0, %v5037
    %5040 = vrot.lane.b32.xlu0 %v4932, 32
    %v5041 = vpop.permute.xlu0 %5040
    %v5043 = vadd.f32 %v2800, %v5041
    %v5044 = vxor.u32 %v5043, 2147483648
    %v5045 = vmul.f32 %v5044, 1.442695
    %v5046 = vpow.pop %v5045
    %v5047 = vadd.f32 %v5046, 1.0
    %v5048 = vrcp.pop %v5047
    %v5049 = vmul.f32 %v5047, %v5048
    %v5050 = vsub.f32 1.0, %v5049
    %v5051 = vmul.f32 %v5048, %v5050
    %v5052 = vadd.f32 %v5048, %v5051
    %vm5053 = vweird.f32 %v5047
    %vm5054 = vweird.f32 %v5048
    %vm5055 = vmor %vm5053, %vm5054
    %v5056 = vsel %vm5055, %v5048, %v5052
    %v5057 = vand.u32 2147483647, %v5047
    %vm5058 = vcmp.eq.f32.partialorder %v5057, 8.507059e+37
    %v5059 = vand.u32 %v5047, 2147483648
    %v5060 = vor.u32 1.1754944e-38, %v5059
    %v5061 = vsel %vm5058, %v5060, %v5056
    %v5062 = vmul.f32 1.0, %v5061
    %5063 = vst [vmem:[#allocation1] ss:$4 sm:$0xff] %v4813
    %v5064 = vld.sshfl [vmem:[#allocation1] sm:$0xff pattern:$0x73625140]
    %5065 = vrot.lane.b32.xlu0 %v5064, 96
    %v5066 = vpop.permute.xlu0 %5065
    %v5067 = vsel %vm273, %v5066, 0
    %5069 = vmatpush.msra.mxu0 0.0
    %5070 = vmatpush.msra.mxu0 0.0
    %5071 = vmatpush.msra.mxu0 0.0
    %5072 = vmatpush.msra.mxu0 0.0
    %5073 = vmatpush.msra.mxu0 0.0
    %5074 = vmatpush.msra.mxu0 0.0
    %5075 = vmatpush.msra.mxu0 0.0
    %5076 = vmatpush.msra.mxu0 0.0
    %5077 = vmatpush.msra.mxu0 0.0
    %5078 = vmatpush.msra.mxu0 0.0
    %5079 = vmatpush.msra.mxu0 0.0
    %5080 = vmatpush.msra.mxu0 0.0
    %5081 = vmatpush.msra.mxu0 %v2683
    %5082 = vmatpush.msra.mxu0 %v2682
    %5083 = vmatpush.msra.mxu0 %v2681
    %5084 = vmatpush.msra.mxu0 %v2680
    %5085 = vmatmul.f32.gmra.mxu0 %v5067
    %v5086 = vpop.f32.mrf.mxu0
    %v5087 = vadd.f32 %v3035, %v5086
    %5088 = vdwg.mxu0
    %v5089 = vmul.f32 %v5038, %v5087
    %5091 = vrot.lane.b32.xlu0 %v5089, 64
    %v5092 = vpop.permute.xlu0 %5091
    %v5094 = vadd.f32 %v2800, %v5092
    %v5095 = vtanh.pop %v5094
    %v5096 = vsub.f32 1.0, %v5062
    %5098 = vrot.lane.b32.xlu0 %v5095, 96
    %v5099 = vpop.permute.xlu0 %5098
    %v5101 = vmul.f32 %v5096, %v5099
    %v5102 = vmul.f32 %v5062, %v4813
    %v5103 = vadd.f32 %v5101, %v5102
    %5105 = vst [vmem:[#allocation1] ss:$4 sm:$0xff] %v5018
    %v5106 = vld.sshfl [vmem:[#allocation1] sm:$0xff pattern:$0x73625140]
    %5107 = vrot.lane.b32.xlu0 %v5106, 96
    %v5108 = vpop.permute.xlu0 %5107
    %s5110 = scalar_lea.vmem [#allocation4], 14
    %5111 = vst.msk [vmem:[%s5110] sm:$0x3] %vm536, %v5108
    %5113 = vst [vmem:[#allocation1] ss:$4 sm:$0xff] %v5103
    %v5114 = vld.sshfl [vmem:[#allocation1] sm:$0xff pattern:$0x73625140]
    %5115 = vrot.lane.b32.xlu0 %v5114, 96
    %v5116 = vpop.permute.xlu0 %5115
    %5118 = vst.msk [vmem:[#allocation5] sm:$0x3] %vm536, %v5116
    %5119 = vst [vmem:[#allocation1] ss:$4 sm:$0xff] %v5018
    %v5120 = vld.sshfl [vmem:[#allocation1] sm:$0xff pattern:$0x73625140]
    %5121 = vrot.lane.b32.xlu0 %v5120, 96
    %v5122 = vpop.permute.xlu0 %5121
    %s5124 = scalar_lea.vmem [#allocation13], 4
    %5125 = vst.msk [vmem:[%s5124] sm:$0x3] %vm536, %v5122
    %5126 = vst [vmem:[#allocation1] ss:$4 sm:$0xff] %v5103
    %v5127 = vld.sshfl [vmem:[#allocation1] sm:$0xff pattern:$0x73625140]
    %5128 = vrot.lane.b32.xlu0 %v5127, 96
    %v5129 = vpop.permute.xlu0 %5128
    %s5131 = scalar_lea.vmem [#allocation13], 6
    %5132 = vst.msk [vmem:[%s5131] sm:$0x3] %vm536, %v5129
    %v5133 = vld [vmem:[#allocation4] sm:$0x3]
    %v5134 = vld [vmem:[#allocation4 + $0x2] sm:$0x3]
    %v5135 = vld [vmem:[#allocation4 + $0x4] sm:$0x3]
    %v5136 = vld [vmem:[#allocation4 + $0x6] sm:$0x3]
    %v5137 = vld [vmem:[#allocation4 + $0x8] sm:$0x3]
    %v5138 = vld [vmem:[#allocation4 + $0xa] sm:$0x3]
    %v5139 = vld [vmem:[#allocation4 + $0xc] sm:$0x3]
    %v5140 = vld [vmem:[#allocation4 + $0xe] sm:$0x3]
    %v5141 = vld [vmem:[#allocation5] sm:$0x3]
    %v5142 = vld [vmem:[#allocation5 + $0x2] sm:$0x3]
    %v5143 = vld [vmem:[#allocation5 + $0x4] sm:$0x3]
    %v5144 = vld [vmem:[#allocation5 + $0x6] sm:$0x3]
    %v5145 = vld [vmem:[#allocation5 + $0x8] sm:$0x3]
    %v5146 = vld [vmem:[#allocation5 + $0xa] sm:$0x3]
    %v5147 = vld [vmem:[#allocation5 + $0xc] sm:$0x3]
    %v5148 = vld [vmem:[#allocation5 + $0xe] sm:$0x3]
    %5157 = vrot.lane.b32.xlu0 %v5141, 32
    %v5158 = vpop.permute.xlu0 %5157
    %5159 = vrot.lane.b32.xlu0 %v5142, 32
    %v5160 = vpop.permute.xlu0 %5159
    %5161 = vrot.lane.b32.xlu0 %v5143, 32
    %v5162 = vpop.permute.xlu0 %5161
    %5163 = vrot.lane.b32.xlu0 %v5144, 32
    %v5164 = vpop.permute.xlu0 %5163
    %5165 = vrot.lane.b32.xlu0 %v5145, 32
    %v5166 = vpop.permute.xlu0 %5165
    %5167 = vrot.lane.b32.xlu0 %v5146, 32
    %v5168 = vpop.permute.xlu0 %5167
    %5169 = vrot.lane.b32.xlu0 %v5147, 32
    %v5170 = vpop.permute.xlu0 %5169
    %5171 = vrot.lane.b32.xlu0 %v5148, 32
    %v5172 = vpop.permute.xlu0 %5171
    %v5181 = vsel %vm273, %v5133, %v5158
    %v5182 = vsel %vm273, %v5134, %v5160
    %v5183 = vsel %vm273, %v5135, %v5162
    %v5184 = vsel %vm273, %v5136, %v5164
    %v5185 = vsel %vm273, %v5137, %v5166
    %v5186 = vsel %vm273, %v5138, %v5168
    %v5187 = vsel %vm273, %v5139, %v5170
    %v5188 = vsel %vm273, %v5140, %v5172
    %v5189 = vld [vmem:[%s9] sm:$0x1]
    %v5191 = vperm.slane %v5189, 0
    %v5193 = vmul.f32 %v5181, %v5191
    %v5194 = vmul.f32 %v5182, %v5191
    %v5195 = vmul.f32 %v5183, %v5191
    %v5196 = vmul.f32 %v5184, %v5191
    %v5197 = vmul.f32 %v5185, %v5191
    %v5198 = vmul.f32 %v5186, %v5191
    %v5199 = vmul.f32 %v5187, %v5191
    %v5200 = vmul.f32 %v5188, %v5191
    %vm5201 = vcmask 517120
    %v5202 = vsel %vm5201, %v5193, 0.0
    %5203 = vadd.xlane.f32.xlu0 %v5202
    %v5204 = vpop.xlane.xlu0 %5203
    %v5205 = vsel %vm5201, %v5194, 0.0
    %5206 = vadd.xlane.f32.xlu0 %v5205
    %v5207 = vpop.xlane.xlu0 %5206
    %v5208 = vsel %vm5201, %v5195, 0.0
    %5209 = vadd.xlane.f32.xlu0 %v5208
    %v5210 = vpop.xlane.xlu0 %5209
    %v5211 = vsel %vm5201, %v5196, 0.0
    %5212 = vadd.xlane.f32.xlu0 %v5211
    %v5213 = vpop.xlane.xlu0 %5212
    %v5214 = vsel %vm5201, %v5197, 0.0
    %5215 = vadd.xlane.f32.xlu0 %v5214
    %v5216 = vpop.xlane.xlu0 %5215
    %v5217 = vsel %vm5201, %v5198, 0.0
    %5218 = vadd.xlane.f32.xlu0 %v5217
    %v5219 = vpop.xlane.xlu0 %5218
    %v5220 = vsel %vm5201, %v5199, 0.0
    %5221 = vadd.xlane.f32.xlu0 %v5220
    %v5222 = vpop.xlane.xlu0 %5221
    %v5223 = vsel %vm5201, %v5200, 0.0
    %5224 = vadd.xlane.f32.xlu0 %v5223
    %v5225 = vpop.xlane.xlu0 %5224
    %v5226 = vld [vmem:[#allocation6] sm:$0x1]
    %v5228 = vperm.slane %v5226, 0
    %5229 = vset.pattern.permute.xlu0 0
    %5230 = vperm.xlu0 %5229, %v5228
    %v5231 = vpop.permute.xlu0 %5230
    %v5233 = vadd.f32 %v5204, %v5231
    %v5234 = vadd.f32 %v5207, %v5231
    %v5235 = vadd.f32 %v5210, %v5231
    %v5236 = vadd.f32 %v5213, %v5231
    %v5237 = vadd.f32 %v5216, %v5231
    %v5238 = vadd.f32 %v5219, %v5231
    %v5239 = vadd.f32 %v5222, %v5231
    %v5240 = vadd.f32 %v5225, %v5231
    %v5249 = vlaneseq
    %v5250 = vand.u32 %v5249, 127
    %v5251 = vperm.slane %v5233, %v5250
    %v5252 = vperm.slane %v5234, %v5250
    %v5253 = vperm.slane %v5235, %v5250
    %v5254 = vperm.slane %v5236, %v5250
    %v5255 = vperm.slane %v5237, %v5250
    %v5256 = vperm.slane %v5238, %v5250
    %v5257 = vperm.slane %v5239, %v5250
    %v5258 = vperm.slane %v5240, %v5250
    %vm5259 = vcmask 1041409
    %v5260 = vsel %vm5259, %v5252, %v5251
    %vm5261 = vcmask 1042434
    %v5262 = vsel %vm5261, %v5253, %v5260
    %vm5263 = vcmask 1043459
    %v5264 = vsel %vm5263, %v5254, %v5262
    %vm5265 = vcmask 1044484
    %v5266 = vsel %vm5265, %v5255, %v5264
    %vm5267 = vcmask 1045509
    %v5268 = vsel %vm5267, %v5256, %v5266
    %vm5269 = vcmask 1046534
    %v5270 = vsel %vm5269, %v5257, %v5268
    %vm5271 = vcmask 1047559
    %v5272 = vsel %vm5271, %v5258, %v5270
    %vm5274 = vcmask 15360
    %5275 = vst.msk [vmem:[%s12] sm:$0xff] %vm5274, %v5272
    // Predicated region
    $region62: #{tpu_custom_call.1} parent=1 // pred_check
      _
    $region63: #{tpu_custom_call.1} parent=1 // pred_check_branch
      %5277 = sbr.rel (0) target = $region65
    $region64: #{tpu_custom_call.1} parent=1 // pred_region
      _
    $region65: #{tpu_custom_call.1} parent=1 // pred_fallthru
      _
    // Predicated region
    $region66: #{tpu_custom_call.1} parent=1 // pred_check
      _
    $region67: #{tpu_custom_call.1} parent=1 // pred_check_branch
      %5279 = sbr.rel (0) target = $region69
    $region68: #{tpu_custom_call.1} parent=1 // pred_region
      %5281 = vsyncadd [#allocation9], 0
      %s5282 = sshll.u32 [#allocation13], 4
      %s5283 = int_to_ptr.vmem [resolvable:$true] %s5282
      %s5284 = sshll.u32 %s13, 4
      %s5285 = int_to_ptr.hbm [resolvable:$true] %s5284
      %5290 = dma.vmem_to_hbm [thread:$0]  %s5283, 128, %s5285, [#allocation9], 32, 32, 2
    $region69: #{tpu_custom_call.1} parent=1 // pred_fallthru
      _
    // Predicated region
    $region70: #{tpu_custom_call.1} parent=1 // pred_check
      _
    $region71: #{tpu_custom_call.1} parent=1 // pred_check_branch
      %5292 = sbr.rel (0) target = $region73
    $region72: #{tpu_custom_call.1} parent=1 // pred_region
      _
    $region73: #{tpu_custom_call.1} parent=1 // pred_fallthru
      _
    // Predicated region
    $region74: #{tpu_custom_call.1} parent=1 // pred_check
      _
    $region75: #{tpu_custom_call.1} parent=1 // pred_check_branch
      %5294 = sbr.rel (0) target = $region77
    $region76: #{tpu_custom_call.1} parent=1 // pred_region
      %5296 = dma.done [#allocation9], 128
    $region77: #{tpu_custom_call.1} parent=1 // pred_fallthru
      _
    %5297 = vsyncpa [#allocation8], 1
    %5298 = vsyncpa [#allocation11], 1
    %5299 = vsyncpa [#allocation9], 1

</llo_original>
